<compile_context>
chip_gen: v5e
topology: v5e:2x2
jax: 0.10.0
libtpu: 0.0.40
codegen_flags: <defaults>
</compile_context>

<pallas_src>
import jax
import jax.numpy as jnp
from jax.experimental import pallas as pl
from jax.experimental.pallas import tpu as pltpu

IN_DIM = 512 * 7 * 7     # 25088
HID = 512
HID2 = HID // 2          # 256
NUM_CLASSES = 1

# Layer-1 tiling: NJ=2 N-blocks ("parallel": one per TC on v7x, near-free
# serial loop on single-TC v5e/v6e) x NK=2 K-tiles (reduction, "arbitrary").
TN = 256                 # 512 / 2
TK = 12544               # 25088 / 2, multiple of 128
NJ = HID // TN           # 2
NK = IN_DIM // TK        # 2


def _round_up(v, m):
    return ((v + m - 1) // m) * m


def _layer1_kernel(x_ref, w1_ref, b1_ref, h1_ref, acc_ref):
    """h1[:, j-block] = relu(x @ W1[:, j-block] + b1[j-block]), K-tiled."""
    k = pl.program_id(1)

    @pl.when(k == 0)
    def _():
        acc_ref[...] = jnp.zeros_like(acc_ref)

    # x cast to bf16 per tile (VPU), bf16 x bf16 -> f32 accumulate on the MXU.
    acc_ref[...] += jnp.dot(x_ref[...].astype(jnp.bfloat16), w1_ref[...],
                            preferred_element_type=jnp.float32)

    @pl.when(k == pl.num_programs(1) - 1)
    def _():
        h1_ref[...] = jnp.maximum(acc_ref[...] + b1_ref[...],
                                  0.0).astype(h1_ref.dtype)


def _head_kernel(h1_ref, w2_ref, b2_ref, w3t_ref, b3_ref, out_ref):
    """out = sigmoid(relu(h1 @ W2 + b2) . w3 + b3)  (Dropout = identity)."""
    h2 = jnp.dot(h1_ref[...], w2_ref[...], preferred_element_type=jnp.float32)
    h2 = jnp.maximum(h2 + b2_ref[...], 0.0)
    # Layer 3 as a VPU/XLU reduction: a 1-wide-N matmul would waste an MXU pass.
    h3 = jnp.sum(h2 * w3t_ref[...], axis=-1, keepdims=True) + b3_ref[...]
    out_ref[...] = jax.nn.sigmoid(h3).astype(out_ref.dtype)


def prepare_weights(w1, b1, w2, b2, w3, b3):
    """One-time weight prep, OUTSIDE jit: cast the stream-bound W1 to bf16
    (25.7 MB instead of 51.4 MB per call, no per-call convert pass) and
    pre-shape w3 as a (1, 256) row for the VPU reduction."""
    return (w1.astype(jnp.bfloat16), b1, w2, b2, w3.reshape(1, HID2), b3)


@jax.jit
def model_forward(z, w1_bf, b1, w2, b2, w3t, b3):
    """z: (B, 512, 7, 7) NCHW encoder output; returns (B, 1) sigmoid scores."""
    B = z.shape[0]
    x = z.reshape(B, -1)                         # same as torch .view(B, -1)

    # Honest VMEM budget: double-buffered, sublane-padded tiles + acc + slack.
    B8 = _round_up(B, 8)
    tile_bytes = 2 * (TK * TN * 2        # W1 bf16 tile
                      + B8 * TK * 4      # x f32 tile (padded to 8 sublanes)
                      + 8 * TN * 4       # b1 tile ((1,TN) pads to 8 sublanes)
                      + B8 * TN * 4)     # h1 output tile
    vmem_limit = int(tile_bytes + B8 * TN * 4 + (4 << 20))

    cost = pl.CostEstimate(
        flops=2 * B * IN_DIM * HID,
        transcendentals=0,
        bytes_accessed=(IN_DIM * HID * 2         # bf16 W1 stream (dominant)
                        + NJ * B * IN_DIM * 4    # f32 x, re-read per N block
                        + B * HID * 4 + HID * 4),
    )

    # ---- Kernel 1: layer 1 (K-tiled reduction, N parallel across cores) ----
    layer1 = pl.pallas_call(
        _layer1_kernel,
        out_shape=jax.ShapeDtypeStruct((B, HID), jnp.float32),
        grid_spec=pltpu.PrefetchScalarGridSpec(
            num_scalar_prefetch=0,
            grid=(NJ, NK),
            in_specs=[
                pl.BlockSpec((B, TK), lambda j, k: (0, k)),   # x tile (f32)
                pl.BlockSpec((TK, TN), lambda j, k: (k, j)),  # W1 tile (bf16)
                pl.BlockSpec((1, TN), lambda j, k: (0, j)),   # b1 slice
            ],
            out_specs=pl.BlockSpec((B, TN), lambda j, k: (0, j)),
            scratch_shapes=[pltpu.VMEM((B, TN), jnp.float32)],
        ),
        compiler_params=pltpu.CompilerParams(
            dimension_semantics=("parallel", "arbitrary"),
            vmem_limit_bytes=vmem_limit,
        ),
        cost_estimate=cost,
    )
    h1 = layer1(x, w1_bf, b1)                    # (B, 512) f32

    # ---- Kernel 2: tiny layers 2+3 epilogue (grid-less, whole arrays in
    # VMEM; sub-microsecond compute, avoids a grid wrapper) ----
    head = pl.pallas_call(
        _head_kernel,
        out_shape=jax.ShapeDtypeStruct((B, NUM_CLASSES), jnp.float32),
    )
    return head(h1, w2, b2, w3t, b3)


def _init_linear(key, fan_in, fan_out):
    """Deterministic init mimicking nn.Linear (uniform +/- 1/sqrt(fan_in))."""
    kw, kb = jax.random.split(key)
    bound = 1.0 / jnp.sqrt(fan_in)
    w = jax.random.uniform(kw, (fan_in, fan_out), jnp.float32, -bound, bound)
    b = jax.random.uniform(kb, (1, fan_out), jnp.float32, -bound, bound)
    return w, b


if __name__ == "__main__":
    root = jax.random.PRNGKey(0)
    k_in, k1, k2, k3 = jax.random.split(root, 4)

    # Small batch; spatial/channel dims are fixed by the module (512 x 7 x 7).
    B = 2
    z = jax.random.normal(k_in, (B, 512, 7, 7), jnp.float32)

    w1, b1 = _init_linear(k1, IN_DIM, HID)
    w2, b2 = _init_linear(k2, HID, HID2)
    w3, b3 = _init_linear(k3, HID2, NUM_CLASSES)

    # One-time, out-of-jit weight prep (bf16 W1).
    params = prepare_weights(w1, b1, w2, b2, w3, b3)

    out = model_forward(z, *params)
    out = jax.block_until_ready(out)

    # Pure-JAX reference (eval mode: dropout = identity).  Layer 1 uses the
    # same bf16-cast operands with f32 accumulation as the kernel.
    x = z.reshape(B, -1)
    h1 = jnp.maximum(
        jnp.dot(x.astype(jnp.bfloat16), w1.astype(jnp.bfloat16),
                preferred_element_type=jnp.float32) + b1, 0.0)
    h2 = jnp.maximum(h1 @ w2 + b2, 0.0)
    ref = jax.nn.sigmoid(h2 @ w3 + b3)

    assert out.shape == (B, NUM_CLASSES)
    assert jnp.allclose(out, ref, atol=1e-4, rtol=1e-4), (
        f"max abs diff {jnp.max(jnp.abs(out - ref))}")

    # Sanity vs full-f32 math (looser: bf16 W1/x quantize layer 1).
    h1_f = jnp.maximum(x @ w1 + b1, 0.0)
    h2_f = jnp.maximum(h1_f @ w2 + b2, 0.0)
    ref_f = jax.nn.sigmoid(h2_f @ w3 + b3)
    assert jnp.allclose(out, ref_f, atol=5e-2, rtol=5e-2)

    print("KERNEL_OK")
</pallas_src>

<mosaic_0001>
module attributes {stable_mosaic.version = 11 : i64} {
  func.func @_head_kernel(%arg0: memref<2x512xf32, #tpu.memory_space<vmem>>, %arg1: memref<512x256xf32, #tpu.memory_space<vmem>>, %arg2: memref<1x256xf32, #tpu.memory_space<vmem>>, %arg3: memref<1x256xf32, #tpu.memory_space<vmem>>, %arg4: memref<1x1xf32, #tpu.memory_space<vmem>>, %arg5: memref<2x1xf32, #tpu.memory_space<vmem>>) attributes {dimension_semantics = [], scalar_prefetch = 0 : i64, scratch_operands = 0 : i64, tpu.core_type = #tpu.core_type<tc>} {
    %c0 = arith.constant 0 : index
    %c0_0 = arith.constant 0 : index
    %0 = vector.load %arg0[%c0, %c0_0] : memref<2x512xf32, #tpu.memory_space<vmem>>, vector<2x512xf32>
    %c0_1 = arith.constant 0 : index
    %c0_2 = arith.constant 0 : index
    %1 = vector.load %arg1[%c0_1, %c0_2] : memref<512x256xf32, #tpu.memory_space<vmem>>, vector<512x256xf32>
    %cst = arith.constant dense<0.000000e+00> : vector<2x256xf32>
    %2 = tpu.matmul %0, %1, %cst {dimension_numbers = #tpu.dot_dimension_numbers<[1], [0], [0], [1], [0, 0, 1, 1], [], []>} : vector<2x512xf32>, vector<512x256xf32>, vector<2x256xf32> -> vector<2x256xf32>
    %c0_3 = arith.constant 0 : index
    %c0_4 = arith.constant 0 : index
    %3 = vector.load %arg2[%c0_3, %c0_4] : memref<1x256xf32, #tpu.memory_space<vmem>>, vector<1x256xf32>
    %4 = vector.broadcast %3 : vector<1x256xf32> to vector<2x256xf32>
    %5 = arith.addf %2, %4 : vector<2x256xf32>
    %cst_5 = arith.constant 0.000000e+00 : f32
    %6 = vector.broadcast %cst_5 : f32 to vector<2x256xf32>
    %7 = arith.maximumf %5, %6 : vector<2x256xf32>
    %c0_6 = arith.constant 0 : index
    %c0_7 = arith.constant 0 : index
    %8 = vector.load %arg3[%c0_6, %c0_7] : memref<1x256xf32, #tpu.memory_space<vmem>>, vector<1x256xf32>
    %9 = vector.broadcast %8 : vector<1x256xf32> to vector<2x256xf32>
    %10 = arith.mulf %7, %9 : vector<2x256xf32>
    %cst_8 = arith.constant dense<0.000000e+00> : vector<2xf32>
    %11 = vector.multi_reduction <add>, %10, %cst_8 [1] : vector<2x256xf32> to vector<2xf32>
    %12 = vector.shape_cast %11 : vector<2xf32> to vector<2x1xf32>
    %c0_9 = arith.constant 0 : index
    %c0_10 = arith.constant 0 : index
    %13 = vector.load %arg4[%c0_9, %c0_10] : memref<1x1xf32, #tpu.memory_space<vmem>>, vector<1x1xf32>
    %14 = vector.broadcast %13 : vector<1x1xf32> to vector<2x1xf32>
    %15 = arith.addf %12, %14 : vector<2x1xf32>
    %16 = arith.negf %15 : vector<2x1xf32>
    %17 = math.exp %16 : vector<2x1xf32>
    %cst_11 = arith.constant 1.000000e+00 : f32
    %18 = vector.broadcast %cst_11 : f32 to vector<2x1xf32>
    %19 = arith.addf %18, %17 : vector<2x1xf32>
    %20 = arith.divf %18, %19 : vector<2x1xf32>
    %c0_12 = arith.constant 0 : index
    %c0_13 = arith.constant 0 : index
    %21 = vector.load %arg5[%c0_12, %c0_13] : memref<2x1xf32, #tpu.memory_space<vmem>>, vector<2x1xf32>
    tpu.vector_store %arg5[%c0_12, %c0_13], %20 {strides = array<i32>} : memref<2x1xf32, #tpu.memory_space<vmem>>, vector<2x1xf32>,
    return
  }
}

module attributes {stable_mosaic.version = 11 : i64} {
  func.func @_layer1_kernel(%arg0: i32, %arg1: i32, %arg2: memref<2x12544xf32, #tpu.memory_space<vmem>>, %arg3: memref<12544x256xbf16, #tpu.memory_space<vmem>>, %arg4: memref<1x256xf32, #tpu.memory_space<vmem>>, %arg5: memref<2x256xf32, #tpu.memory_space<vmem>>, %arg6: memref<2x256xf32, #tpu.memory_space<vmem>>) attributes {dimension_semantics = [#tpu.dimension_semantics<parallel>, #tpu.dimension_semantics<arbitrary>], iteration_bounds = array<i64: 2, 2>, scalar_prefetch = 0 : i64, scratch_operands = 1 : i64, tpu.core_type = #tpu.core_type<tc>, window_params = [{transform_indices = @transform_0, window_bounds = array<i64: 2, 12544>}, {transform_indices = @transform_1, window_bounds = array<i64: 12544, 256>}, {transform_indices = @transform_2, window_bounds = array<i64: 1, 256>}, {transform_indices = @transform_3, window_bounds = array<i64: 2, 256>}]} {
    %c0_i32 = arith.constant 0 : i32
    %0 = arith.cmpi eq, %arg1, %c0_i32 : i32
    %1 = arith.extui %0 : i1 to i32
    %c0_i32_0 = arith.constant 0 : i32
    %2 = arith.cmpi ne, %1, %c0_i32_0 : i32
    scf.if %2 {
      %cst_9 = arith.constant 0.000000e+00 : f32
      %13 = vector.broadcast %cst_9 : f32 to vector<2x256xf32>
      %c0_10 = arith.constant 0 : index
      %c0_11 = arith.constant 0 : index
      %14 = vector.load %arg6[%c0_10, %c0_11] : memref<2x256xf32, #tpu.memory_space<vmem>>, vector<2x256xf32>
      tpu.vector_store %arg6[%c0_10, %c0_11], %13 {strides = array<i32>} : memref<2x256xf32, #tpu.memory_space<vmem>>, vector<2x256xf32>,
    } else {
    }
    %c0 = arith.constant 0 : index
    %c0_1 = arith.constant 0 : index
    %3 = vector.load %arg6[%c0, %c0_1] : memref<2x256xf32, #tpu.memory_space<vmem>>, vector<2x256xf32>
    %c0_2 = arith.constant 0 : index
    %c0_3 = arith.constant 0 : index
    %4 = vector.load %arg2[%c0_2, %c0_3] : memref<2x12544xf32, #tpu.memory_space<vmem>>, vector<2x12544xf32>
    %5 = arith.truncf %4 : vector<2x12544xf32> to vector<2x12544xbf16>
    %c0_4 = arith.constant 0 : index
    %c0_5 = arith.constant 0 : index
    %6 = vector.load %arg3[%c0_4, %c0_5] : memref<12544x256xbf16, #tpu.memory_space<vmem>>, vector<12544x256xbf16>
    %cst = arith.constant dense<0.000000e+00> : vector<2x256xf32>
    %7 = tpu.matmul %5, %6, %cst {dimension_numbers = #tpu.dot_dimension_numbers<[1], [0], [0], [1], [0, 0, 1, 1], [], []>} : vector<2x12544xbf16>, vector<12544x256xbf16>, vector<2x256xf32> -> vector<2x256xf32>
    %8 = arith.addf %3, %7 : vector<2x256xf32>
    %c0_6 = arith.constant 0 : index
    %c0_7 = arith.constant 0 : index
    %9 = vector.load %arg6[%c0_6, %c0_7] : memref<2x256xf32, #tpu.memory_space<vmem>>, vector<2x256xf32>
    tpu.vector_store %arg6[%c0_6, %c0_7], %8 {strides = array<i32>} : memref<2x256xf32, #tpu.memory_space<vmem>>, vector<2x256xf32>,
    %c1_i32 = arith.constant 1 : i32
    %10 = arith.cmpi eq, %arg1, %c1_i32 : i32
    %11 = arith.extui %10 : i1 to i32
    %c0_i32_8 = arith.constant 0 : i32
    %12 = arith.cmpi ne, %11, %c0_i32_8 : i32
    scf.if %12 {
      %c0_9 = arith.constant 0 : index
      %c0_10 = arith.constant 0 : index
      %13 = vector.load %arg6[%c0_9, %c0_10] : memref<2x256xf32, #tpu.memory_space<vmem>>, vector<2x256xf32>
      %c0_11 = arith.constant 0 : index
      %c0_12 = arith.constant 0 : index
      %14 = vector.load %arg4[%c0_11, %c0_12] : memref<1x256xf32, #tpu.memory_space<vmem>>, vector<1x256xf32>
      %15 = vector.broadcast %14 : vector<1x256xf32> to vector<2x256xf32>
      %16 = arith.addf %13, %15 : vector<2x256xf32>
      %cst_13 = arith.constant 0.000000e+00 : f32
      %17 = vector.broadcast %cst_13 : f32 to vector<2x256xf32>
      %18 = arith.maximumf %16, %17 : vector<2x256xf32>
      %c0_14 = arith.constant 0 : index
      %c0_15 = arith.constant 0 : index
      %19 = vector.load %arg5[%c0_14, %c0_15] : memref<2x256xf32, #tpu.memory_space<vmem>>, vector<2x256xf32>
      tpu.vector_store %arg5[%c0_14, %c0_15], %18 {strides = array<i32>} : memref<2x256xf32, #tpu.memory_space<vmem>>, vector<2x256xf32>,
    } else {
    }
    return
  }
  func.func @transform_0(%arg0: i32, %arg1: i32) -> (i32, i32) {
    %c0_i32 = arith.constant 0 : i32
    %c0_i32_0 = arith.constant 0 : i32
    return %c0_i32, %arg1 : i32, i32
  }
  func.func @transform_1(%arg0: i32, %arg1: i32) -> (i32, i32) {
    %c0_i32 = arith.constant 0 : i32
    return %arg1, %arg0 : i32, i32
  }
  func.func @transform_2(%arg0: i32, %arg1: i32) -> (i32, i32) {
    %c0_i32 = arith.constant 0 : i32
    %c0_i32_0 = arith.constant 0 : i32
    return %c0_i32, %arg0 : i32, i32
  }
  func.func @transform_3(%arg0: i32, %arg1: i32) -> (i32, i32) {
    %c0_i32 = arith.constant 0 : i32
    %c0_i32_0 = arith.constant 0 : i32
    return %c0_i32, %arg0 : i32, i32
  }
}

</mosaic_0001>

<llo_original>
// kernel: model_forward.3
$region0: #{model_forward.3}
  #allocation0 [shape = 'u32[]', space=smem, size = 0x4, offset = 0x4, fixed_abs, tag = 'smem constant byte address 0x4 - core index']
  #allocation1 [shape = 'u32[72,128]{1,0:T(1,128)}', space=vmem, size = 0x9000, scoped, tag = 'internal scratch']
  #allocation2 [shape = 'f32[1,1]{1,0:T(1,128)S(1)}', space=vmem, size = 0x200, scoped, tag = 'scoped memory for model_forward.3']
  %s0 = inlined_call_operand.vmem [shape: f32[2,512], index: 0, kind: input, shape index: {}]
  %s1 = inlined_call_operand.vmem [shape: f32[512,256], index: 1, kind: input, shape index: {}]
  %s2 = inlined_call_operand.vmem [shape: f32[1,256], index: 2, kind: input, shape index: {}]
  %s3 = inlined_call_operand.vmem [shape: f32[1,256], index: 3, kind: input, shape index: {}]
  %s4 = inlined_call_operand.<no memory space> [shape: f32[1,1], index: 4, kind: input, shape index: {}]
  %s5 = inlined_call_operand.vmem [shape: f32[2,1], index: 5, kind: output, shape index: {}]
  %s6 = sld [smem:[#allocation0]]
  $region30: #{model_forward.3} parent=0
    _
  %s8 = ssub.s32 1, %s6
  %s9 = scalar_select 0, %s8, %s6
  %v10 = vstv %s4
  %11 = vst [vmem:[#allocation2] sm:$0x1] %v10
  // Predicated region
  $region2: #{model_forward.3} parent=0 // pred_check
    _
  $region3: #{model_forward.3} parent=0 // pred_check_branch
    %13 = sbr.rel (0) target = $region5
  $region4: #{model_forward.3} parent=0 // pred_region
    _
  $region5: #{model_forward.3} parent=0 // pred_fallthru
    _
  // Predicated region
  $region6: #{model_forward.3} parent=0 // pred_check
    _
  $region7: #{model_forward.3} parent=0 // pred_check_branch
    %15 = sbr.rel (0) target = $region9
  $region8: #{model_forward.3} parent=0 // pred_region
    _
  $region9: #{model_forward.3} parent=0 // pred_fallthru
    _
  // Predicated region
  $region10: #{model_forward.3} parent=0 // pred_check
    _
  $region11: #{model_forward.3} parent=0 // pred_check_branch
    %17 = sbr.rel (0) target = $region13
  $region12: #{model_forward.3} parent=0 // pred_region
    _
  $region13: #{model_forward.3} parent=0 // pred_fallthru
    _
  // Predicated region
  $region14: #{model_forward.3} parent=0 // pred_check
    _
  $region15: #{model_forward.3} parent=0 // pred_check_branch
    %19 = sbr.rel (0) target = $region17
  $region16: #{model_forward.3} parent=0 // pred_region
    _
  $region17: #{model_forward.3} parent=0 // pred_fallthru
    _
  // Predicated region
  $region18: #{model_forward.3} parent=0 // pred_check
    _
  $region19: #{model_forward.3} parent=0 // pred_check_branch
    %21 = sbr.rel (0) target = $region21
  $region20: #{model_forward.3} parent=0 // pred_region
    _
  $region21: #{model_forward.3} parent=0 // pred_fallthru
    _
  %v22 = vld [vmem:[%s0] sm:$0xff]
  %v23 = vld [vmem:[%s1] sm:$0xff]
  %v24 = vld [vmem:[%s1 + $0x8] sm:$0xff]
  %v25 = vld [vmem:[%s1 + $0x10] sm:$0xff]
  %v26 = vld [vmem:[%s1 + $0x18] sm:$0xff]
  %v27 = vld [vmem:[%s1 + $0x20] sm:$0xff]
  %v28 = vld [vmem:[%s1 + $0x28] sm:$0xff]
  %v29 = vld [vmem:[%s1 + $0x30] sm:$0xff]
  %v30 = vld [vmem:[%s1 + $0x38] sm:$0xff]
  %v31 = vld [vmem:[%s1 + $0x40] sm:$0xff]
  %v32 = vld [vmem:[%s1 + $0x48] sm:$0xff]
  %v33 = vld [vmem:[%s1 + $0x50] sm:$0xff]
  %v34 = vld [vmem:[%s1 + $0x58] sm:$0xff]
  %v35 = vld [vmem:[%s1 + $0x60] sm:$0xff]
  %v36 = vld [vmem:[%s1 + $0x68] sm:$0xff]
  %v37 = vld [vmem:[%s1 + $0x70] sm:$0xff]
  %v38 = vld [vmem:[%s1 + $0x78] sm:$0xff]
  %v39 = vld [vmem:[%s1 + $0x80] sm:$0xff]
  %v40 = vld [vmem:[%s1 + $0x88] sm:$0xff]
  %v41 = vld [vmem:[%s1 + $0x90] sm:$0xff]
  %v42 = vld [vmem:[%s1 + $0x98] sm:$0xff]
  %v43 = vld [vmem:[%s1 + $0xa0] sm:$0xff]
  %v44 = vld [vmem:[%s1 + $0xa8] sm:$0xff]
  %v45 = vld [vmem:[%s1 + $0xb0] sm:$0xff]
  %v46 = vld [vmem:[%s1 + $0xb8] sm:$0xff]
  %v47 = vld [vmem:[%s1 + $0xc0] sm:$0xff]
  %v48 = vld [vmem:[%s1 + $0xc8] sm:$0xff]
  %v49 = vld [vmem:[%s1 + $0xd0] sm:$0xff]
  %v50 = vld [vmem:[%s1 + $0xd8] sm:$0xff]
  %v51 = vld [vmem:[%s1 + $0xe0] sm:$0xff]
  %v52 = vld [vmem:[%s1 + $0xe8] sm:$0xff]
  %v53 = vld [vmem:[%s1 + $0xf0] sm:$0xff]
  %v54 = vld [vmem:[%s1 + $0xf8] sm:$0xff]
  %v55 = vld [vmem:[%s1 + $0x100] sm:$0xff]
  %v56 = vld [vmem:[%s1 + $0x108] sm:$0xff]
  %v57 = vld [vmem:[%s1 + $0x110] sm:$0xff]
  %v58 = vld [vmem:[%s1 + $0x118] sm:$0xff]
  %v59 = vld [vmem:[%s1 + $0x120] sm:$0xff]
  %v60 = vld [vmem:[%s1 + $0x128] sm:$0xff]
  %v61 = vld [vmem:[%s1 + $0x130] sm:$0xff]
  %v62 = vld [vmem:[%s1 + $0x138] sm:$0xff]
  %v63 = vld [vmem:[%s1 + $0x140] sm:$0xff]
  %v64 = vld [vmem:[%s1 + $0x148] sm:$0xff]
  %v65 = vld [vmem:[%s1 + $0x150] sm:$0xff]
  %v66 = vld [vmem:[%s1 + $0x158] sm:$0xff]
  %v67 = vld [vmem:[%s1 + $0x160] sm:$0xff]
  %v68 = vld [vmem:[%s1 + $0x168] sm:$0xff]
  %v69 = vld [vmem:[%s1 + $0x170] sm:$0xff]
  %v70 = vld [vmem:[%s1 + $0x178] sm:$0xff]
  %v71 = vld [vmem:[%s1 + $0x180] sm:$0xff]
  %v72 = vld [vmem:[%s1 + $0x188] sm:$0xff]
  %v73 = vld [vmem:[%s1 + $0x190] sm:$0xff]
  %v74 = vld [vmem:[%s1 + $0x198] sm:$0xff]
  %v75 = vld [vmem:[%s1 + $0x1a0] sm:$0xff]
  %v76 = vld [vmem:[%s1 + $0x1a8] sm:$0xff]
  %v77 = vld [vmem:[%s1 + $0x1b0] sm:$0xff]
  %v78 = vld [vmem:[%s1 + $0x1b8] sm:$0xff]
  %v79 = vld [vmem:[%s1 + $0x1c0] sm:$0xff]
  %v80 = vld [vmem:[%s1 + $0x1c8] sm:$0xff]
  %v81 = vld [vmem:[%s1 + $0x1d0] sm:$0xff]
  %v82 = vld [vmem:[%s1 + $0x1d8] sm:$0xff]
  %v83 = vld [vmem:[%s1 + $0x1e0] sm:$0xff]
  %v84 = vld [vmem:[%s1 + $0x1e8] sm:$0xff]
  %v85 = vld [vmem:[%s1 + $0x1f0] sm:$0xff]
  %v86 = vld [vmem:[%s1 + $0x1f8] sm:$0xff]
  %v87 = vld [vmem:[%s1 + $0x200] sm:$0xff]
  %v88 = vld [vmem:[%s1 + $0x208] sm:$0xff]
  %v89 = vld [vmem:[%s1 + $0x210] sm:$0xff]
  %v90 = vld [vmem:[%s1 + $0x218] sm:$0xff]
  %v91 = vld [vmem:[%s1 + $0x220] sm:$0xff]
  %v92 = vld [vmem:[%s1 + $0x228] sm:$0xff]
  %v93 = vld [vmem:[%s1 + $0x230] sm:$0xff]
  %v94 = vld [vmem:[%s1 + $0x238] sm:$0xff]
  %v95 = vld [vmem:[%s1 + $0x240] sm:$0xff]
  %v96 = vld [vmem:[%s1 + $0x248] sm:$0xff]
  %v97 = vld [vmem:[%s1 + $0x250] sm:$0xff]
  %v98 = vld [vmem:[%s1 + $0x258] sm:$0xff]
  %v99 = vld [vmem:[%s1 + $0x260] sm:$0xff]
  %v100 = vld [vmem:[%s1 + $0x268] sm:$0xff]
  %v101 = vld [vmem:[%s1 + $0x270] sm:$0xff]
  %v102 = vld [vmem:[%s1 + $0x278] sm:$0xff]
  %v103 = vld [vmem:[%s1 + $0x280] sm:$0xff]
  %v104 = vld [vmem:[%s1 + $0x288] sm:$0xff]
  %v105 = vld [vmem:[%s1 + $0x290] sm:$0xff]
  %v106 = vld [vmem:[%s1 + $0x298] sm:$0xff]
  %v107 = vld [vmem:[%s1 + $0x2a0] sm:$0xff]
  %v108 = vld [vmem:[%s1 + $0x2a8] sm:$0xff]
  %v109 = vld [vmem:[%s1 + $0x2b0] sm:$0xff]
  %v110 = vld [vmem:[%s1 + $0x2b8] sm:$0xff]
  %v111 = vld [vmem:[%s1 + $0x2c0] sm:$0xff]
  %v112 = vld [vmem:[%s1 + $0x2c8] sm:$0xff]
  %v113 = vld [vmem:[%s1 + $0x2d0] sm:$0xff]
  %v114 = vld [vmem:[%s1 + $0x2d8] sm:$0xff]
  %v115 = vld [vmem:[%s1 + $0x2e0] sm:$0xff]
  %v116 = vld [vmem:[%s1 + $0x2e8] sm:$0xff]
  %v117 = vld [vmem:[%s1 + $0x2f0] sm:$0xff]
  %v118 = vld [vmem:[%s1 + $0x2f8] sm:$0xff]
  %v119 = vld [vmem:[%s1 + $0x300] sm:$0xff]
  %v120 = vld [vmem:[%s1 + $0x308] sm:$0xff]
  %v121 = vld [vmem:[%s1 + $0x310] sm:$0xff]
  %v122 = vld [vmem:[%s1 + $0x318] sm:$0xff]
  %v123 = vld [vmem:[%s1 + $0x320] sm:$0xff]
  %v124 = vld [vmem:[%s1 + $0x328] sm:$0xff]
  %v125 = vld [vmem:[%s1 + $0x330] sm:$0xff]
  %v126 = vld [vmem:[%s1 + $0x338] sm:$0xff]
  %v127 = vld [vmem:[%s1 + $0x340] sm:$0xff]
  %v128 = vld [vmem:[%s1 + $0x348] sm:$0xff]
  %v129 = vld [vmem:[%s1 + $0x350] sm:$0xff]
  %v130 = vld [vmem:[%s1 + $0x358] sm:$0xff]
  %v131 = vld [vmem:[%s1 + $0x360] sm:$0xff]
  %v132 = vld [vmem:[%s1 + $0x368] sm:$0xff]
  %v133 = vld [vmem:[%s1 + $0x370] sm:$0xff]
  %v134 = vld [vmem:[%s1 + $0x378] sm:$0xff]
  %v135 = vld [vmem:[%s1 + $0x380] sm:$0xff]
  %v136 = vld [vmem:[%s1 + $0x388] sm:$0xff]
  %v137 = vld [vmem:[%s1 + $0x390] sm:$0xff]
  %v138 = vld [vmem:[%s1 + $0x398] sm:$0xff]
  %v139 = vld [vmem:[%s1 + $0x3a0] sm:$0xff]
  %v140 = vld [vmem:[%s1 + $0x3a8] sm:$0xff]
  %v141 = vld [vmem:[%s1 + $0x3b0] sm:$0xff]
  %v142 = vld [vmem:[%s1 + $0x3b8] sm:$0xff]
  %v143 = vld [vmem:[%s1 + $0x3c0] sm:$0xff]
  %v144 = vld [vmem:[%s1 + $0x3c8] sm:$0xff]
  %v145 = vld [vmem:[%s1 + $0x3d0] sm:$0xff]
  %v146 = vld [vmem:[%s1 + $0x3d8] sm:$0xff]
  %v147 = vld [vmem:[%s1 + $0x3e0] sm:$0xff]
  %v148 = vld [vmem:[%s1 + $0x3e8] sm:$0xff]
  %v149 = vld [vmem:[%s1 + $0x3f0] sm:$0xff]
  %v150 = vld [vmem:[%s1 + $0x3f8] sm:$0xff]
  %v151 = vld [vmem:[%s2] sm:$0x3]
  %v153 = vperm.slane %v151, 0
  %v154 = vperm.slane %v151, 1
  %158 = vst [vmem:[#allocation1] ss:$4 sm:$0xff] %v22
  %v159 = vld.sshfl [vmem:[#allocation1] sm:$0xff pattern:$0x73625140]
  %v160 = vld.sshfl [vmem:[#allocation1 + $0x8] sm:$0xff pattern:$0x73625140]
  %v161 = vld.sshfl [vmem:[#allocation1 + $0x10] sm:$0xff pattern:$0x73625140]
  %v162 = vld.sshfl [vmem:[#allocation1 + $0x18] sm:$0xff pattern:$0x73625140]
  %167 = vmatpush.msra.mxu0 %v53
  %168 = vmatpush.msra.mxu0 %v51
  %169 = vmatpush.msra.mxu0 %v49
  %170 = vmatpush.msra.mxu0 %v47
  %171 = vmatpush.msra.mxu0 %v45
  %172 = vmatpush.msra.mxu0 %v43
  %173 = vmatpush.msra.mxu0 %v41
  %174 = vmatpush.msra.mxu0 %v39
  %175 = vmatpush.msra.mxu0 %v37
  %176 = vmatpush.msra.mxu0 %v35
  %177 = vmatpush.msra.mxu0 %v33
  %178 = vmatpush.msra.mxu0 %v31
  %179 = vmatpush.msra.mxu0 %v29
  %180 = vmatpush.msra.mxu0 %v27
  %181 = vmatpush.msra.mxu0 %v25
  %182 = vmatpush.msra.mxu0 %v23
  %183 = vmatmul.f32.gmra.mxu0 %v159
  %v184 = vpop.f32.mrf.mxu0
  %v185 = vadd.f32 %v153, %v184
  %186 = vdwg.mxu0
  %187 = vmatpush.msra.mxu0 %v85
  %188 = vmatpush.msra.mxu0 %v83
  %189 = vmatpush.msra.mxu0 %v81
  %190 = vmatpush.msra.mxu0 %v79
  %191 = vmatpush.msra.mxu0 %v77
  %192 = vmatpush.msra.mxu0 %v75
  %193 = vmatpush.msra.mxu0 %v73
  %194 = vmatpush.msra.mxu0 %v71
  %195 = vmatpush.msra.mxu0 %v69
  %196 = vmatpush.msra.mxu0 %v67
  %197 = vmatpush.msra.mxu0 %v65
  %198 = vmatpush.msra.mxu0 %v63
  %199 = vmatpush.msra.mxu0 %v61
  %200 = vmatpush.msra.mxu0 %v59
  %201 = vmatpush.msra.mxu0 %v57
  %202 = vmatpush.msra.mxu0 %v55
  %203 = vmatmul.f32.gmra.mxu0 %v160
  %v204 = vpop.f32.mrf.mxu0
  %v205 = vadd.f32 %v185, %v204
  %206 = vdwg.mxu0
  %207 = vmatpush.msra.mxu0 %v117
  %208 = vmatpush.msra.mxu0 %v115
  %209 = vmatpush.msra.mxu0 %v113
  %210 = vmatpush.msra.mxu0 %v111
  %211 = vmatpush.msra.mxu0 %v109
  %212 = vmatpush.msra.mxu0 %v107
  %213 = vmatpush.msra.mxu0 %v105
  %214 = vmatpush.msra.mxu0 %v103
  %215 = vmatpush.msra.mxu0 %v101
  %216 = vmatpush.msra.mxu0 %v99
  %217 = vmatpush.msra.mxu0 %v97
  %218 = vmatpush.msra.mxu0 %v95
  %219 = vmatpush.msra.mxu0 %v93
  %220 = vmatpush.msra.mxu0 %v91
  %221 = vmatpush.msra.mxu0 %v89
  %222 = vmatpush.msra.mxu0 %v87
  %223 = vmatmul.f32.gmra.mxu0 %v161
  %v224 = vpop.f32.mrf.mxu0
  %v225 = vadd.f32 %v205, %v224
  %226 = vdwg.mxu0
  %227 = vmatpush.msra.mxu0 %v149
  %228 = vmatpush.msra.mxu0 %v147
  %229 = vmatpush.msra.mxu0 %v145
  %230 = vmatpush.msra.mxu0 %v143
  %231 = vmatpush.msra.mxu0 %v141
  %232 = vmatpush.msra.mxu0 %v139
  %233 = vmatpush.msra.mxu0 %v137
  %234 = vmatpush.msra.mxu0 %v135
  %235 = vmatpush.msra.mxu0 %v133
  %236 = vmatpush.msra.mxu0 %v131
  %237 = vmatpush.msra.mxu0 %v129
  %238 = vmatpush.msra.mxu0 %v127
  %239 = vmatpush.msra.mxu0 %v125
  %240 = vmatpush.msra.mxu0 %v123
  %241 = vmatpush.msra.mxu0 %v121
  %242 = vmatpush.msra.mxu0 %v119
  %243 = vmatmul.f32.gmra.mxu0 %v162
  %v244 = vpop.f32.mrf.mxu0
  %v245 = vadd.f32 %v225, %v244
  %246 = vdwg.mxu0
  %247 = vmatpush.msra.mxu0 %v54
  %248 = vmatpush.msra.mxu0 %v52
  %249 = vmatpush.msra.mxu0 %v50
  %250 = vmatpush.msra.mxu0 %v48
  %251 = vmatpush.msra.mxu0 %v46
  %252 = vmatpush.msra.mxu0 %v44
  %253 = vmatpush.msra.mxu0 %v42
  %254 = vmatpush.msra.mxu0 %v40
  %255 = vmatpush.msra.mxu0 %v38
  %256 = vmatpush.msra.mxu0 %v36
  %257 = vmatpush.msra.mxu0 %v34
  %258 = vmatpush.msra.mxu0 %v32
  %259 = vmatpush.msra.mxu0 %v30
  %260 = vmatpush.msra.mxu0 %v28
  %261 = vmatpush.msra.mxu0 %v26
  %262 = vmatpush.msra.mxu0 %v24
  %263 = vmatmul.f32.gmra.mxu0 %v159
  %v264 = vpop.f32.mrf.mxu0
  %v265 = vadd.f32 %v154, %v264
  %266 = vdwg.mxu0
  %267 = vmatpush.msra.mxu0 %v86
  %268 = vmatpush.msra.mxu0 %v84
  %269 = vmatpush.msra.mxu0 %v82
  %270 = vmatpush.msra.mxu0 %v80
  %271 = vmatpush.msra.mxu0 %v78
  %272 = vmatpush.msra.mxu0 %v76
  %273 = vmatpush.msra.mxu0 %v74
  %274 = vmatpush.msra.mxu0 %v72
  %275 = vmatpush.msra.mxu0 %v70
  %276 = vmatpush.msra.mxu0 %v68
  %277 = vmatpush.msra.mxu0 %v66
  %278 = vmatpush.msra.mxu0 %v64
  %279 = vmatpush.msra.mxu0 %v62
  %280 = vmatpush.msra.mxu0 %v60
  %281 = vmatpush.msra.mxu0 %v58
  %282 = vmatpush.msra.mxu0 %v56
  %283 = vmatmul.f32.gmra.mxu0 %v160
  %v284 = vpop.f32.mrf.mxu0
  %v285 = vadd.f32 %v265, %v284
  %286 = vdwg.mxu0
  %287 = vmatpush.msra.mxu0 %v118
  %288 = vmatpush.msra.mxu0 %v116
  %289 = vmatpush.msra.mxu0 %v114
  %290 = vmatpush.msra.mxu0 %v112
  %291 = vmatpush.msra.mxu0 %v110
  %292 = vmatpush.msra.mxu0 %v108
  %293 = vmatpush.msra.mxu0 %v106
  %294 = vmatpush.msra.mxu0 %v104
  %295 = vmatpush.msra.mxu0 %v102
  %296 = vmatpush.msra.mxu0 %v100
  %297 = vmatpush.msra.mxu0 %v98
  %298 = vmatpush.msra.mxu0 %v96
  %299 = vmatpush.msra.mxu0 %v94
  %300 = vmatpush.msra.mxu0 %v92
  %301 = vmatpush.msra.mxu0 %v90
  %302 = vmatpush.msra.mxu0 %v88
  %303 = vmatmul.f32.gmra.mxu0 %v161
  %v304 = vpop.f32.mrf.mxu0
  %v305 = vadd.f32 %v285, %v304
  %306 = vdwg.mxu0
  %307 = vmatpush.msra.mxu0 %v150
  %308 = vmatpush.msra.mxu0 %v148
  %309 = vmatpush.msra.mxu0 %v146
  %310 = vmatpush.msra.mxu0 %v144
  %311 = vmatpush.msra.mxu0 %v142
  %312 = vmatpush.msra.mxu0 %v140
  %313 = vmatpush.msra.mxu0 %v138
  %314 = vmatpush.msra.mxu0 %v136
  %315 = vmatpush.msra.mxu0 %v134
  %316 = vmatpush.msra.mxu0 %v132
  %317 = vmatpush.msra.mxu0 %v130
  %318 = vmatpush.msra.mxu0 %v128
  %319 = vmatpush.msra.mxu0 %v126
  %320 = vmatpush.msra.mxu0 %v124
  %321 = vmatpush.msra.mxu0 %v122
  %322 = vmatpush.msra.mxu0 %v120
  %323 = vmatmul.f32.gmra.mxu0 %v162
  %v324 = vpop.f32.mrf.mxu0
  %v325 = vadd.f32 %v305, %v324
  %326 = vdwg.mxu0
  %v327 = vmax.f32 %v245, 0.0
  %v328 = vmax.f32 %v325, 0.0
  %v329 = vld [vmem:[%s3] sm:$0x3]
  %v331 = vperm.slane %v329, 0
  %v332 = vperm.slane %v329, 1
  %v335 = vmul.f32 %v327, %v331
  %v336 = vmul.f32 %v328, %v332
  %vm337 = vcmask 1041408
  %v338 = vsel %vm337, %v335, 0.0
  %v339 = vsel %vm337, %v336, 0.0
  %v340 = vadd.f32 %v338, %v339
  %341 = vadd.xlane.f32.xlu0 %v340
  %v342 = vpop.xlane.xlu0 %341
  %v343 = vld [vmem:[#allocation2] sm:$0x1]
  %v345 = vperm.slane %v343, 0
  %v347 = vadd.f32 %v342, %v345
  %v348 = vxor.u32 %v347, 2147483648
  %v349 = vmul.f32 %v348, 1.442695
  %v350 = vpow.pop %v349
  %v351 = vadd.f32 %v350, 1.0
  %v352 = vrcp.pop %v351
  %v353 = vmul.f32 %v351, %v352
  %v354 = vsub.f32 1.0, %v353
  %v355 = vmul.f32 %v352, %v354
  %v356 = vadd.f32 %v352, %v355
  %vm357 = vweird.f32 %v351
  %vm358 = vweird.f32 %v352
  %vm359 = vmor %vm357, %vm358
  %v360 = vsel %vm359, %v352, %v356
  %v361 = vand.u32 2147483647, %v351
  %vm362 = vcmp.eq.f32.partialorder %v361, 8.507059e+37
  %v363 = vand.u32 %v351, 2147483648
  %v364 = vor.u32 1.1754944e-38, %v363
  %v365 = vsel %vm362, %v364, %v360
  %v366 = vmul.f32 1.0, %v365
  %vm367 = vcmask 1024
  %368 = vst.msk [vmem:[%s5] sm:$0x3] %vm367, %v366
  // Predicated region
  $region22: #{model_forward.3} parent=0 // pred_check
    _
  $region23: #{model_forward.3} parent=0 // pred_check_branch
    %370 = sbr.rel (0) target = $region25
  $region24: #{model_forward.3} parent=0 // pred_region
    _
  $region25: #{model_forward.3} parent=0 // pred_fallthru
    _
  // Predicated region
  $region26: #{model_forward.3} parent=0 // pred_check
    _
  $region27: #{model_forward.3} parent=0 // pred_check_branch
    %372 = sbr.rel (0) target = $region29
  $region28: #{model_forward.3} parent=0 // pred_region
    _
  $region29: #{model_forward.3} parent=0 // pred_fallthru
    _

// kernel: model_forward.2
$region0: #{model_forward.2}
  #allocation0 [shape = 'u32[]', space=smem, size = 0x4, offset = 0x4, fixed_abs, tag = 'smem constant byte address 0x4 - core index']
  #allocation1 [shape = 'u32[72,128]{1,0:T(1,128)}', space=vmem, size = 0x9000, scoped, tag = 'internal scratch']
  #allocation2 [shape = 'f32[2,256]{1,0:T(2,128)}', space=vmem, size = 0x800, scoped, tag = 'scratch operand']
  %s0 = inlined_call_operand.vmem [shape: f32[2,25088], index: 0, kind: input, shape index: {}]
  %s1 = inlined_call_operand.hbm [shape: bf16[25088,512], index: 1, kind: input, shape index: {}]
  %s2 = inlined_call_operand.hbm [shape: f32[1,512], index: 2, kind: input, shape index: {}]
  %s3 = inlined_call_operand.vmem [shape: f32[2,512], index: 3, kind: output, shape index: {}]
  %s4 = sld [smem:[#allocation0]]
  $region61: #{model_forward.2} parent=0
    _
  %s6 = ssub.s32 1, %s4
  %s7 = scalar_select 0, %s6, %s4
  $region1: #{model_forward.2} parent=0
    #allocation3 [shape = 'u8[12845056]{0}', space=vmem, size = 0xc40000, scoped, tag = 'input window, operand 1']
    #allocation4 [shape = 's32[2]{0}', space=sflag, size = 0x8, scoped, tag = 'scoped memory for model_forward.2']
    #allocation5 [shape = 'u8[2048]{0}', space=vmem, size = 0x800, scoped, tag = 'input window, operand 2']
    #allocation6 [shape = 's32[2]{0}', space=sflag, size = 0x8, scoped, tag = 'scoped memory for model_forward.2']
    %8 = vsyncpa [#allocation4], 0
    %s9 = scalar_lea.sflag [#allocation4], 1
    %10 = vsyncpa %s9, 0
    %11 = vsyncpa [#allocation6], 0
    %s12 = scalar_lea.sflag [#allocation6], 1
    %13 = vsyncpa %s12, 0
    loop: start=0, step=1, limit=6
    $region2: #{model_forward.2} parent=1 // loop_pre_header
      _
    $region3: #{model_forward.2} parent=1 // loop_header
      %s15 = sphi 0, %s19
      %p16 = scmp.ge.s32.totalorder %s15, 6
      %s22 = sphi 0, %s34
      %s23 = sphi 0, %s30
      %s24 = sphi 0, %s22
      %s25 = sphi 0, %s23
      %s26 = sphi 0, %s24
      %s27 = sphi 0, %s25
      %s37 = sphi 0, %s39
      %s40 = sphi 0, %s37
      %s41 = sphi 0, %s40
      %s57 = sphi 0, %s41
      %s65 = sphi 0, %s67
      %s68 = sphi 0, %s65
      %s69 = sphi 0, %s68
      %s85 = sphi 0, %s69
      %s91 = sphi 0, %s93
      %s94 = sphi 0, %s91
      %s95 = sphi 0, %s94
      %s111 = sphi 0, %s95
      %s117 = sphi 0, %s119
      %s120 = sphi 0, %s117
      %s121 = sphi 0, %s120
      %s137 = sphi 0, %s121
    $region4: #{model_forward.2} parent=1 // loop_header_branch
      %18 = sbr.rel (%p16) target = $region8
    $region5: #{model_forward.2} parent=1 // loop_body
      %s20 = ssub.s32 %s15, 1
      %s21 = ssub.s32 %s15, 2
      %s28 = sadd.s32 1, %s23
      %p29 = scmp.ge.s32.totalorder %s28, 2
      %s30 = scalar_select %p29, 0, %s28
      %s31 = sadd.s32 1, %s22
      %s32 = scalar_select %p29, %s31, %s22
      %p33 = scmp.ge.s32.totalorder %s32, 2
      %s34 = scalar_select %p33, 0, %s32
      %s35 = ssub.s32 %s23, %s30
      %p36 = scmp.eq.s32.totalorder %s35, 0
      %s38 = sadd.s32 %s37, 1
      %s39 = scalar_select %p36, %s37, %s38
      %p42 = pneg %p36
      %p43 = scmp.eq.s32.totalorder %s15, 3
      %p44 = por %p42, %p43
      %p45 = scmp.ne.s32.totalorder %s37, %s40
      %p46 = scmp.eq.s32.totalorder %s15, 0
      %p47 = por %p45, %p46
      %p48 = scmp.ne.s32.totalorder %s37, %s40
      %p49 = scmp.eq.s32.totalorder %s20, 3
      %p50 = por %p48, %p49
      %p51 = scmp.ne.s32.totalorder %s40, %s41
      %p52 = scmp.eq.s32.totalorder %s20, 0
      %p53 = por %p51, %p52
      %p54 = scmp.ne.s32.totalorder %s40, %s41
      %p55 = scmp.eq.s32.totalorder %s21, 3
      %p56 = por %p54, %p55
      %p58 = scmp.ne.s32.totalorder %s41, %s57
      %p59 = scmp.eq.s32.totalorder %s21, 0
      %p60 = por %p58, %p59
      %s61 = ssub.s32 %s23, %s30
      %s62 = ssub.s32 %s22, %s34
      %s63 = sor.u32 %s61, %s62
      %p64 = scmp.eq.s32.totalorder %s63, 0
      %s66 = sadd.s32 %s65, 1
      %s67 = scalar_select %p64, %s65, %s66
      %p70 = pneg %p64
      %p71 = scmp.eq.s32.totalorder %s15, 3
      %p72 = por %p70, %p71
      %p73 = scmp.ne.s32.totalorder %s65, %s68
      %p74 = scmp.eq.s32.totalorder %s15, 0
      %p75 = por %p73, %p74
      %p76 = scmp.ne.s32.totalorder %s65, %s68
      %p77 = scmp.eq.s32.totalorder %s20, 3
      %p78 = por %p76, %p77
      %p79 = scmp.ne.s32.totalorder %s68, %s69
      %p80 = scmp.eq.s32.totalorder %s20, 0
      %p81 = por %p79, %p80
      %p82 = scmp.ne.s32.totalorder %s68, %s69
      %p83 = scmp.eq.s32.totalorder %s21, 3
      %p84 = por %p82, %p83
      %p86 = scmp.ne.s32.totalorder %s69, %s85
      %p87 = scmp.eq.s32.totalorder %s21, 0
      %p88 = por %p86, %p87
      %s89 = ssub.s32 %s22, %s34
      %p90 = scmp.eq.s32.totalorder %s89, 0
      %s92 = sadd.s32 %s91, 1
      %s93 = scalar_select %p90, %s91, %s92
      %p96 = pneg %p90
      %p97 = scmp.eq.s32.totalorder %s15, 3
      %p98 = por %p96, %p97
      %p99 = scmp.ne.s32.totalorder %s91, %s94
      %p100 = scmp.eq.s32.totalorder %s15, 0
      %p101 = por %p99, %p100
      %p102 = scmp.ne.s32.totalorder %s91, %s94
      %p103 = scmp.eq.s32.totalorder %s20, 3
      %p104 = por %p102, %p103
      %p105 = scmp.ne.s32.totalorder %s94, %s95
      %p106 = scmp.eq.s32.totalorder %s20, 0
      %p107 = por %p105, %p106
      %p108 = scmp.ne.s32.totalorder %s94, %s95
      %p109 = scmp.eq.s32.totalorder %s21, 3
      %p110 = por %p108, %p109
      %p112 = scmp.ne.s32.totalorder %s95, %s111
      %p113 = scmp.eq.s32.totalorder %s21, 0
      %p114 = por %p112, %p113
      %s115 = ssub.s32 %s22, %s34
      %p116 = scmp.eq.s32.totalorder %s115, 0
      %s118 = sadd.s32 %s117, 1
      %s119 = scalar_select %p116, %s117, %s118
      %p122 = pneg %p116
      %p123 = scmp.eq.s32.totalorder %s15, 3
      %p124 = por %p122, %p123
      %p125 = scmp.ne.s32.totalorder %s117, %s120
      %p126 = scmp.eq.s32.totalorder %s15, 0
      %p127 = por %p125, %p126
      %p128 = scmp.ne.s32.totalorder %s117, %s120
      %p129 = scmp.eq.s32.totalorder %s20, 3
      %p130 = por %p128, %p129
      %p131 = scmp.ne.s32.totalorder %s120, %s121
      %p132 = scmp.eq.s32.totalorder %s20, 0
      %p133 = por %p131, %p132
      %p134 = scmp.ne.s32.totalorder %s120, %s121
      %p135 = scmp.eq.s32.totalorder %s21, 3
      %p136 = por %p134, %p135
      %p138 = scmp.ne.s32.totalorder %s121, %s137
      %p139 = scmp.eq.s32.totalorder %s21, 0
      %p140 = por %p138, %p139
      %p141 = scmp.le.s32.totalorder 1, %s15
      %p142 = scmp.lt.s32.totalorder %s15, 5
      %p143 = pnand %p141, %p142
      %p144 = pneg %p143
      // Predicated region
      $region9: #{model_forward.2} parent=5 // pred_check
        _
      $region10: #{model_forward.2} parent=5 // pred_check_branch
        %146 = sbr.rel (%p143) target = $region12
      $region11: #{model_forward.2} parent=5 // pred_region
        %s147 = ssub.s32 %s15, 1
      $region12: #{model_forward.2} parent=5 // pred_fallthru
        _
      %p148 = scmp.lt.s32.totalorder %s15, 4
      // Predicated region
      $region13: #{model_forward.2} parent=5 // pred_check
        %p149 = pneg %p148
      $region14: #{model_forward.2} parent=5 // pred_check_branch
        %151 = sbr.rel (%p149) target = $region16
      $region15: #{model_forward.2} parent=5 // pred_region
        // Predicated region
        $region17: #{model_forward.2} parent=15 // pred_check
          %p152 = pneg %p47
        $region18: #{model_forward.2} parent=15 // pred_check_branch
          %154 = sbr.rel (%p152) target = $region20
        $region19: #{model_forward.2} parent=15 // pred_region
          %s155 = smul.u32 98, %s23
          %p156 = scmp.lt.s32.totalorder %s155, 195
          %s157 = scalar_select %p156, %s155, 195
          %s158 = smul.addr %s157, 2
          %s159 = scalar_lea.vmem %s0, %s158
          %s160 = smul.u32 98, %s23
        $region20: #{model_forward.2} parent=15 // pred_fallthru
          _
        // Predicated region
        $region21: #{model_forward.2} parent=15 // pred_check
          %p161 = pneg %p75
        $region22: #{model_forward.2} parent=15 // pred_check_branch
          %163 = sbr.rel (%p161) target = $region24
        $region23: #{model_forward.2} parent=15 // pred_region
          %s164 = sand.u32 %s65, 1
          %s165 = scalar_lea.sflag [#allocation4], %s164
          %s166 = sand.u32 %s65, 1
          %s167 = smul.addr %s166, 12544
          %s168 = scalar_lea.vmem [#allocation3], %s167
          %s169 = smul.u32 1568, %s23
          %s170 = smul.u32 2, %s22
          %172 = vsyncadd %s165, 0
          %s173 = smul.addr %s169, 4
          %s174 = sadd.s32 %s170, %s173
          %s175 = smul.addr %s174, 4
          %s176 = scalar_lea.hbm %s1, %s175
          %s177 = sshll.u32 %s176, 4
          %s178 = int_to_ptr.hbm [resolvable:$true] %s177
          %s179 = sshll.u32 %s168, 4
          %s180 = int_to_ptr.vmem [resolvable:$true] %s179
          %185 = dma.hbm_to_vmem [thread:$0]  %s178, 200704, %s180, %s165, 256, 128, 8
        $region24: #{model_forward.2} parent=15 // pred_fallthru
          _
        // Predicated region
        $region25: #{model_forward.2} parent=15 // pred_check
          %p186 = pneg %p101
        $region26: #{model_forward.2} parent=15 // pred_check_branch
          %188 = sbr.rel (%p186) target = $region28
        $region27: #{model_forward.2} parent=15 // pred_region
          %s189 = sand.u32 %s91, 1
          %s190 = scalar_lea.sflag [#allocation6], %s189
          %s191 = sand.u32 %s91, 1
          %s192 = smul.addr %s191, 2
          %s193 = scalar_lea.vmem [#allocation5], %s192
          %s194 = smul.u32 2, %s22
          %196 = vsyncadd %s190, 0
          %s197 = scalar_lea.hbm %s2, %s194
          %s199 = sshll.u32 %s197, 4
          %s200 = int_to_ptr.hbm [resolvable:$true] %s199
          %s201 = sshll.u32 %s193, 4
          %s202 = int_to_ptr.vmem [resolvable:$true] %s201
          %204 = dma.hbm_to_vmem [thread:$0]  %s200, 32, %s202, %s190
        $region28: #{model_forward.2} parent=15 // pred_fallthru
          _
      $region16: #{model_forward.2} parent=5 // pred_fallthru
        _
      %p205 = scmp.le.s32.totalorder 1, %s15
      %p206 = scmp.lt.s32.totalorder %s15, 5
      %p207 = pnand %p205, %p206
      %p208 = pneg %p207
      // Predicated region
      $region29: #{model_forward.2} parent=5 // pred_check
        _
      $region30: #{model_forward.2} parent=5 // pred_check_branch
        %210 = sbr.rel (%p207) target = $region32
      $region31: #{model_forward.2} parent=5 // pred_region
        %s211 = ssub.s32 %s15, 1
        %s212 = sand.u32 %s68, 1
        %s213 = scalar_lea.sflag [#allocation4], %s212
        %s214 = sand.u32 %s68, 1
        %s215 = smul.addr %s214, 12544
        %s216 = scalar_lea.vmem [#allocation3], %s215
        // Predicated region
        $region33: #{model_forward.2} parent=31 // pred_check
          %p217 = pneg %p81
        $region34: #{model_forward.2} parent=31 // pred_check_branch
          %219 = sbr.rel (%p217) target = $region36
        $region35: #{model_forward.2} parent=31 // pred_region
          %221 = dma.done %s213, 200704
        $region36: #{model_forward.2} parent=31 // pred_fallthru
          _
        %s222 = sand.u32 %s94, 1
        %s223 = scalar_lea.sflag [#allocation6], %s222
        %s224 = sand.u32 %s94, 1
        %s225 = smul.addr %s224, 2
        %s226 = scalar_lea.vmem [#allocation5], %s225
        // Predicated region
        $region37: #{model_forward.2} parent=31 // pred_check
          %p227 = pneg %p107
        $region38: #{model_forward.2} parent=31 // pred_check_branch
          %229 = sbr.rel (%p227) target = $region40
        $region39: #{model_forward.2} parent=31 // pred_region
          %231 = dma.done %s223, 32
        $region40: #{model_forward.2} parent=31 // pred_fallthru
          _
        %s232 = smul.u32 98, %s25
        %p233 = scmp.lt.s32.totalorder %s232, 195
        %s234 = scalar_select %p233, %s232, 195
        %s235 = smul.addr %s234, 2
        %s236 = scalar_lea.vmem %s0, %s235
        %p237 = pneg %p53
        %p238 = pneg %p50
        %s239 = sand.u32 %s68, 1
        %s240 = scalar_lea.sflag [#allocation4], %s239
        %s241 = sand.u32 %s68, 1
        %s242 = smul.addr %s241, 12544
        %s243 = scalar_lea.vmem [#allocation3], %s242
        %p244 = pneg %p81
        %p245 = pneg %p78
        %s246 = sand.u32 %s94, 1
        %s247 = scalar_lea.sflag [#allocation6], %s246
        %s248 = sand.u32 %s94, 1
        %s249 = smul.addr %s248, 2
        %s250 = scalar_lea.vmem [#allocation5], %s249
        %p251 = pneg %p107
        %p252 = pneg %p104
        %p253 = pneg %p133
        %p254 = pneg %p130
        %s255 = smul.u32 2, %s24
        %p256 = scmp.lt.s32.totalorder %s255, 3
        %s257 = scalar_select %p256, %s255, 3
        %s258 = smul.addr %s257, 2
        %s259 = scalar_lea.vmem %s3, %s258
        %s260 = smul.u32 98, %s25
        %p261 = scmp.lt.s32.totalorder %s260, 195
        %s262 = scalar_select %p261, %s260, 195
        %s263 = smul.addr %s262, 2
        %s264 = scalar_lea.vmem %s0, %s263
        %s265 = smul.u32 98, %s25
        %s266 = smul.u32 1568, %s25
        %s267 = smul.u32 2, %s24
        %s268 = smul.u32 2, %s24
        %s269 = smul.u32 2, %s24
        %p270 = scmp.lt.s32.totalorder %s269, 3
        %s271 = scalar_select %p270, %s269, 3
        %s272 = smul.addr %s271, 2
        %s273 = scalar_lea.vmem %s3, %s272
        %s274 = smul.u32 2, %s24
        %p275 = scmp.eq.s32.totalorder %s25, 0
        // Predicated region
        $region41: #{model_forward.2} parent=31 // pred_check
          %p276 = pneg %p275
        $region42: #{model_forward.2} parent=31 // pred_check_branch
          %278 = sbr.rel (%p276) target = $region44
        $region43: #{model_forward.2} parent=31 // pred_region
          %279 = vst [vmem:[#allocation2] sm:$0xf] 0.0
        $region44: #{model_forward.2} parent=31 // pred_fallthru
          _
        %v280 = vld [vmem:[#allocation2] sm:$0xf]
        %v281 = vld [vmem:[%s264] sm:$0xff]
        %v282 = vld [vmem:[%s264 + $0x8] sm:$0xff]
        %v283 = vld [vmem:[%s264 + $0x10] sm:$0xff]
        %v284 = vld [vmem:[%s264 + $0x18] sm:$0xff]
        %v285 = vld [vmem:[%s264 + $0x20] sm:$0xff]
        %v286 = vld [vmem:[%s264 + $0x28] sm:$0xff]
        %v287 = vld [vmem:[%s264 + $0x30] sm:$0xff]
        %v288 = vld [vmem:[%s264 + $0x38] sm:$0xff]
        %v289 = vld [vmem:[%s264 + $0x40] sm:$0xff]
        %v290 = vld [vmem:[%s264 + $0x48] sm:$0xff]
        %v291 = vld [vmem:[%s264 + $0x50] sm:$0xff]
        %v292 = vld [vmem:[%s264 + $0x58] sm:$0xff]
        %v293 = vld [vmem:[%s264 + $0x60] sm:$0xff]
        %v294 = vld [vmem:[%s264 + $0x68] sm:$0xff]
        %v295 = vld [vmem:[%s264 + $0x70] sm:$0xff]
        %v296 = vld [vmem:[%s264 + $0x78] sm:$0xff]
        %v297 = vld [vmem:[%s264 + $0x80] sm:$0xff]
        %v298 = vld [vmem:[%s264 + $0x88] sm:$0xff]
        %v299 = vld [vmem:[%s264 + $0x90] sm:$0xff]
        %v300 = vld [vmem:[%s264 + $0x98] sm:$0xff]
        %v301 = vld [vmem:[%s264 + $0xa0] sm:$0xff]
        %v302 = vld [vmem:[%s264 + $0xa8] sm:$0xff]
        %v303 = vld [vmem:[%s264 + $0xb0] sm:$0xff]
        %v304 = vld [vmem:[%s264 + $0xb8] sm:$0xff]
        %v305 = vld [vmem:[%s264 + $0xc0] sm:$0xf]
        %331 = vst [vmem:[#allocation1] ss:$4 sm:$0xff] %v281
        %s332 = scalar_lea.vmem [#allocation1], 32
        %333 = vst [vmem:[%s332] ss:$4 sm:$0xff] %v282
        %v334 = vld.sshfl [vmem:[#allocation1] sm:$0xff pattern:$0x73625140]
        %v335 = vld.sshfl [vmem:[#allocation1 + $0x8] sm:$0xff pattern:$0x73625140]
        %v336 = vld.sshfl [vmem:[#allocation1 + $0x10] sm:$0xff pattern:$0x73625140]
        %v337 = vld.sshfl [vmem:[#allocation1 + $0x18] sm:$0xff pattern:$0x73625140]
        %v338 = vld.sshfl [vmem:[#allocation1 + $0x20] sm:$0xff pattern:$0x73625140]
        %v339 = vld.sshfl [vmem:[#allocation1 + $0x28] sm:$0xff pattern:$0x73625140]
        %v340 = vld.sshfl [vmem:[#allocation1 + $0x30] sm:$0xff pattern:$0x73625140]
        %v341 = vld.sshfl [vmem:[#allocation1 + $0x38] sm:$0xff pattern:$0x73625140]
        %342 = vst [vmem:[#allocation1] ss:$4 sm:$0xff] %v283
        %343 = vst [vmem:[%s332] ss:$4 sm:$0xff] %v284
        %v344 = vld.sshfl [vmem:[#allocation1] sm:$0xff pattern:$0x73625140]
        %v345 = vld.sshfl [vmem:[#allocation1 + $0x8] sm:$0xff pattern:$0x73625140]
        %v346 = vld.sshfl [vmem:[#allocation1 + $0x10] sm:$0xff pattern:$0x73625140]
        %v347 = vld.sshfl [vmem:[#allocation1 + $0x18] sm:$0xff pattern:$0x73625140]
        %v348 = vld.sshfl [vmem:[#allocation1 + $0x20] sm:$0xff pattern:$0x73625140]
        %v349 = vld.sshfl [vmem:[#allocation1 + $0x28] sm:$0xff pattern:$0x73625140]
        %v350 = vld.sshfl [vmem:[#allocation1 + $0x30] sm:$0xff pattern:$0x73625140]
        %v351 = vld.sshfl [vmem:[#allocation1 + $0x38] sm:$0xff pattern:$0x73625140]
        %352 = vst [vmem:[#allocation1] ss:$4 sm:$0xff] %v285
        %353 = vst [vmem:[%s332] ss:$4 sm:$0xff] %v286
        %v354 = vld.sshfl [vmem:[#allocation1] sm:$0xff pattern:$0x73625140]
        %v355 = vld.sshfl [vmem:[#allocation1 + $0x8] sm:$0xff pattern:$0x73625140]
        %v356 = vld.sshfl [vmem:[#allocation1 + $0x10] sm:$0xff pattern:$0x73625140]
        %v357 = vld.sshfl [vmem:[#allocation1 + $0x18] sm:$0xff pattern:$0x73625140]
        %v358 = vld.sshfl [vmem:[#allocation1 + $0x20] sm:$0xff pattern:$0x73625140]
        %v359 = vld.sshfl [vmem:[#allocation1 + $0x28] sm:$0xff pattern:$0x73625140]
        %v360 = vld.sshfl [vmem:[#allocation1 + $0x30] sm:$0xff pattern:$0x73625140]
        %v361 = vld.sshfl [vmem:[#allocation1 + $0x38] sm:$0xff pattern:$0x73625140]
        %362 = vst [vmem:[#allocation1] ss:$4 sm:$0xff] %v287
        %363 = vst [vmem:[%s332] ss:$4 sm:$0xff] %v288
        %v364 = vld.sshfl [vmem:[#allocation1] sm:$0xff pattern:$0x73625140]
        %v365 = vld.sshfl [vmem:[#allocation1 + $0x8] sm:$0xff pattern:$0x73625140]
        %v366 = vld.sshfl [vmem:[#allocation1 + $0x10] sm:$0xff pattern:$0x73625140]
        %v367 = vld.sshfl [vmem:[#allocation1 + $0x18] sm:$0xff pattern:$0x73625140]
        %v368 = vld.sshfl [vmem:[#allocation1 + $0x20] sm:$0xff pattern:$0x73625140]
        %v369 = vld.sshfl [vmem:[#allocation1 + $0x28] sm:$0xff pattern:$0x73625140]
        %v370 = vld.sshfl [vmem:[#allocation1 + $0x30] sm:$0xff pattern:$0x73625140]
        %v371 = vld.sshfl [vmem:[#allocation1 + $0x38] sm:$0xff pattern:$0x73625140]
        %372 = vst [vmem:[#allocation1] ss:$4 sm:$0xff] %v289
        %373 = vst [vmem:[%s332] ss:$4 sm:$0xff] %v290
        %v374 = vld.sshfl [vmem:[#allocation1] sm:$0xff pattern:$0x73625140]
        %v375 = vld.sshfl [vmem:[#allocation1 + $0x8] sm:$0xff pattern:$0x73625140]
        %v376 = vld.sshfl [vmem:[#allocation1 + $0x10] sm:$0xff pattern:$0x73625140]
        %v377 = vld.sshfl [vmem:[#allocation1 + $0x18] sm:$0xff pattern:$0x73625140]
        %v378 = vld.sshfl [vmem:[#allocation1 + $0x20] sm:$0xff pattern:$0x73625140]
        %v379 = vld.sshfl [vmem:[#allocation1 + $0x28] sm:$0xff pattern:$0x73625140]
        %v380 = vld.sshfl [vmem:[#allocation1 + $0x30] sm:$0xff pattern:$0x73625140]
        %v381 = vld.sshfl [vmem:[#allocation1 + $0x38] sm:$0xff pattern:$0x73625140]
        %382 = vst [vmem:[#allocation1] ss:$4 sm:$0xff] %v291
        %383 = vst [vmem:[%s332] ss:$4 sm:$0xff] %v292
        %v384 = vld.sshfl [vmem:[#allocation1] sm:$0xff pattern:$0x73625140]
        %v385 = vld.sshfl [vmem:[#allocation1 + $0x8] sm:$0xff pattern:$0x73625140]
        %v386 = vld.sshfl [vmem:[#allocation1 + $0x10] sm:$0xff pattern:$0x73625140]
        %v387 = vld.sshfl [vmem:[#allocation1 + $0x18] sm:$0xff pattern:$0x73625140]
        %v388 = vld.sshfl [vmem:[#allocation1 + $0x20] sm:$0xff pattern:$0x73625140]
        %v389 = vld.sshfl [vmem:[#allocation1 + $0x28] sm:$0xff pattern:$0x73625140]
        %v390 = vld.sshfl [vmem:[#allocation1 + $0x30] sm:$0xff pattern:$0x73625140]
        %v391 = vld.sshfl [vmem:[#allocation1 + $0x38] sm:$0xff pattern:$0x73625140]
        %392 = vst [vmem:[#allocation1] ss:$4 sm:$0xff] %v293
        %393 = vst [vmem:[%s332] ss:$4 sm:$0xff] %v294
        %v394 = vld.sshfl [vmem:[#allocation1] sm:$0xff pattern:$0x73625140]
        %v395 = vld.sshfl [vmem:[#allocation1 + $0x8] sm:$0xff pattern:$0x73625140]
        %v396 = vld.sshfl [vmem:[#allocation1 + $0x10] sm:$0xff pattern:$0x73625140]
        %v397 = vld.sshfl [vmem:[#allocation1 + $0x18] sm:$0xff pattern:$0x73625140]
        %v398 = vld.sshfl [vmem:[#allocation1 + $0x20] sm:$0xff pattern:$0x73625140]
        %v399 = vld.sshfl [vmem:[#allocation1 + $0x28] sm:$0xff pattern:$0x73625140]
        %v400 = vld.sshfl [vmem:[#allocation1 + $0x30] sm:$0xff pattern:$0x73625140]
        %v401 = vld.sshfl [vmem:[#allocation1 + $0x38] sm:$0xff pattern:$0x73625140]
        %402 = vst [vmem:[#allocation1] ss:$4 sm:$0xff] %v295
        %403 = vst [vmem:[%s332] ss:$4 sm:$0xff] %v296
        %v404 = vld.sshfl [vmem:[#allocation1] sm:$0xff pattern:$0x73625140]
        %v405 = vld.sshfl [vmem:[#allocation1 + $0x8] sm:$0xff pattern:$0x73625140]
        %v406 = vld.sshfl [vmem:[#allocation1 + $0x10] sm:$0xff pattern:$0x73625140]
        %v407 = vld.sshfl [vmem:[#allocation1 + $0x18] sm:$0xff pattern:$0x73625140]
        %v408 = vld.sshfl [vmem:[#allocation1 + $0x20] sm:$0xff pattern:$0x73625140]
        %v409 = vld.sshfl [vmem:[#allocation1 + $0x28] sm:$0xff pattern:$0x73625140]
        %v410 = vld.sshfl [vmem:[#allocation1 + $0x30] sm:$0xff pattern:$0x73625140]
        %v411 = vld.sshfl [vmem:[#allocation1 + $0x38] sm:$0xff pattern:$0x73625140]
        %412 = vst [vmem:[#allocation1] ss:$4 sm:$0xff] %v297
        %413 = vst [vmem:[%s332] ss:$4 sm:$0xff] %v298
        %v414 = vld.sshfl [vmem:[#allocation1] sm:$0xff pattern:$0x73625140]
        %v415 = vld.sshfl [vmem:[#allocation1 + $0x8] sm:$0xff pattern:$0x73625140]
        %v416 = vld.sshfl [vmem:[#allocation1 + $0x10] sm:$0xff pattern:$0x73625140]
        %v417 = vld.sshfl [vmem:[#allocation1 + $0x18] sm:$0xff pattern:$0x73625140]
        %v418 = vld.sshfl [vmem:[#allocation1 + $0x20] sm:$0xff pattern:$0x73625140]
        %v419 = vld.sshfl [vmem:[#allocation1 + $0x28] sm:$0xff pattern:$0x73625140]
        %v420 = vld.sshfl [vmem:[#allocation1 + $0x30] sm:$0xff pattern:$0x73625140]
        %v421 = vld.sshfl [vmem:[#allocation1 + $0x38] sm:$0xff pattern:$0x73625140]
        %422 = vst [vmem:[#allocation1] ss:$4 sm:$0xff] %v299
        %423 = vst [vmem:[%s332] ss:$4 sm:$0xff] %v300
        %v424 = vld.sshfl [vmem:[#allocation1] sm:$0xff pattern:$0x73625140]
        %v425 = vld.sshfl [vmem:[#allocation1 + $0x8] sm:$0xff pattern:$0x73625140]
        %v426 = vld.sshfl [vmem:[#allocation1 + $0x10] sm:$0xff pattern:$0x73625140]
        %v427 = vld.sshfl [vmem:[#allocation1 + $0x18] sm:$0xff pattern:$0x73625140]
        %v428 = vld.sshfl [vmem:[#allocation1 + $0x20] sm:$0xff pattern:$0x73625140]
        %v429 = vld.sshfl [vmem:[#allocation1 + $0x28] sm:$0xff pattern:$0x73625140]
        %v430 = vld.sshfl [vmem:[#allocation1 + $0x30] sm:$0xff pattern:$0x73625140]
        %v431 = vld.sshfl [vmem:[#allocation1 + $0x38] sm:$0xff pattern:$0x73625140]
        %432 = vst [vmem:[#allocation1] ss:$4 sm:$0xff] %v301
        %433 = vst [vmem:[%s332] ss:$4 sm:$0xff] %v302
        %v434 = vld.sshfl [vmem:[#allocation1] sm:$0xff pattern:$0x73625140]
        %v435 = vld.sshfl [vmem:[#allocation1 + $0x8] sm:$0xff pattern:$0x73625140]
        %v436 = vld.sshfl [vmem:[#allocation1 + $0x10] sm:$0xff pattern:$0x73625140]
        %v437 = vld.sshfl [vmem:[#allocation1 + $0x18] sm:$0xff pattern:$0x73625140]
        %v438 = vld.sshfl [vmem:[#allocation1 + $0x20] sm:$0xff pattern:$0x73625140]
        %v439 = vld.sshfl [vmem:[#allocation1 + $0x28] sm:$0xff pattern:$0x73625140]
        %v440 = vld.sshfl [vmem:[#allocation1 + $0x30] sm:$0xff pattern:$0x73625140]
        %v441 = vld.sshfl [vmem:[#allocation1 + $0x38] sm:$0xff pattern:$0x73625140]
        %442 = vst [vmem:[#allocation1] ss:$4 sm:$0xff] %v303
        %443 = vst [vmem:[%s332] ss:$4 sm:$0xff] %v304
        %v444 = vld.sshfl [vmem:[#allocation1] sm:$0xff pattern:$0x73625140]
        %v445 = vld.sshfl [vmem:[#allocation1 + $0x8] sm:$0xff pattern:$0x73625140]
        %v446 = vld.sshfl [vmem:[#allocation1 + $0x10] sm:$0xff pattern:$0x73625140]
        %v447 = vld.sshfl [vmem:[#allocation1 + $0x18] sm:$0xff pattern:$0x73625140]
        %v448 = vld.sshfl [vmem:[#allocation1 + $0x20] sm:$0xff pattern:$0x73625140]
        %v449 = vld.sshfl [vmem:[#allocation1 + $0x28] sm:$0xff pattern:$0x73625140]
        %v450 = vld.sshfl [vmem:[#allocation1 + $0x30] sm:$0xff pattern:$0x73625140]
        %v451 = vld.sshfl [vmem:[#allocation1 + $0x38] sm:$0xff pattern:$0x73625140]
        %452 = vst [vmem:[#allocation1] ss:$4 sm:$0xff] %v305
        %v453 = vld.sshfl [vmem:[#allocation1] sm:$0xff pattern:$0x73625140]
        %v454 = vld.sshfl [vmem:[#allocation1 + $0x8] sm:$0xff pattern:$0x73625140]
        %v553 = vpack.c.bf16 %v334, %v334
        %v554 = vpack.c.bf16 %v335, %v335
        %v555 = vpack.c.bf16 %v336, %v336
        %v556 = vpack.c.bf16 %v337, %v337
        %v557 = vpack.c.bf16 %v338, %v338
        %v558 = vpack.c.bf16 %v339, %v339
        %v559 = vpack.c.bf16 %v340, %v340
        %v560 = vpack.c.bf16 %v341, %v341
        %v561 = vpack.c.bf16 %v344, %v344
        %v562 = vpack.c.bf16 %v345, %v345
        %v563 = vpack.c.bf16 %v346, %v346
        %v564 = vpack.c.bf16 %v347, %v347
        %v565 = vpack.c.bf16 %v348, %v348
        %v566 = vpack.c.bf16 %v349, %v349
        %v567 = vpack.c.bf16 %v350, %v350
        %v568 = vpack.c.bf16 %v351, %v351
        %v569 = vpack.c.bf16 %v354, %v354
        %v570 = vpack.c.bf16 %v355, %v355
        %v571 = vpack.c.bf16 %v356, %v356
        %v572 = vpack.c.bf16 %v357, %v357
        %v573 = vpack.c.bf16 %v358, %v358
        %v574 = vpack.c.bf16 %v359, %v359
        %v575 = vpack.c.bf16 %v360, %v360
        %v576 = vpack.c.bf16 %v361, %v361
        %v577 = vpack.c.bf16 %v364, %v364
        %v578 = vpack.c.bf16 %v365, %v365
        %v579 = vpack.c.bf16 %v366, %v366
        %v580 = vpack.c.bf16 %v367, %v367
        %v581 = vpack.c.bf16 %v368, %v368
        %v582 = vpack.c.bf16 %v369, %v369
        %v583 = vpack.c.bf16 %v370, %v370
        %v584 = vpack.c.bf16 %v371, %v371
        %v585 = vpack.c.bf16 %v374, %v374
        %v586 = vpack.c.bf16 %v375, %v375
        %v587 = vpack.c.bf16 %v376, %v376
        %v588 = vpack.c.bf16 %v377, %v377
        %v589 = vpack.c.bf16 %v378, %v378
        %v590 = vpack.c.bf16 %v379, %v379
        %v591 = vpack.c.bf16 %v380, %v380
        %v592 = vpack.c.bf16 %v381, %v381
        %v593 = vpack.c.bf16 %v384, %v384
        %v594 = vpack.c.bf16 %v385, %v385
        %v595 = vpack.c.bf16 %v386, %v386
        %v596 = vpack.c.bf16 %v387, %v387
        %v597 = vpack.c.bf16 %v388, %v388
        %v598 = vpack.c.bf16 %v389, %v389
        %v599 = vpack.c.bf16 %v390, %v390
        %v600 = vpack.c.bf16 %v391, %v391
        %v601 = vpack.c.bf16 %v394, %v394
        %v602 = vpack.c.bf16 %v395, %v395
        %v603 = vpack.c.bf16 %v396, %v396
        %v604 = vpack.c.bf16 %v397, %v397
        %v605 = vpack.c.bf16 %v398, %v398
        %v606 = vpack.c.bf16 %v399, %v399
        %v607 = vpack.c.bf16 %v400, %v400
        %v608 = vpack.c.bf16 %v401, %v401
        %v609 = vpack.c.bf16 %v404, %v404
        %v610 = vpack.c.bf16 %v405, %v405
        %v611 = vpack.c.bf16 %v406, %v406
        %v612 = vpack.c.bf16 %v407, %v407
        %v613 = vpack.c.bf16 %v408, %v408
        %v614 = vpack.c.bf16 %v409, %v409
        %v615 = vpack.c.bf16 %v410, %v410
        %v616 = vpack.c.bf16 %v411, %v411
        %v617 = vpack.c.bf16 %v414, %v414
        %v618 = vpack.c.bf16 %v415, %v415
        %v619 = vpack.c.bf16 %v416, %v416
        %v620 = vpack.c.bf16 %v417, %v417
        %v621 = vpack.c.bf16 %v418, %v418
        %v622 = vpack.c.bf16 %v419, %v419
        %v623 = vpack.c.bf16 %v420, %v420
        %v624 = vpack.c.bf16 %v421, %v421
        %v625 = vpack.c.bf16 %v424, %v424
        %v626 = vpack.c.bf16 %v425, %v425
        %v627 = vpack.c.bf16 %v426, %v426
        %v628 = vpack.c.bf16 %v427, %v427
        %v629 = vpack.c.bf16 %v428, %v428
        %v630 = vpack.c.bf16 %v429, %v429
        %v631 = vpack.c.bf16 %v430, %v430
        %v632 = vpack.c.bf16 %v431, %v431
        %v633 = vpack.c.bf16 %v434, %v434
        %v634 = vpack.c.bf16 %v435, %v435
        %v635 = vpack.c.bf16 %v436, %v436
        %v636 = vpack.c.bf16 %v437, %v437
        %v637 = vpack.c.bf16 %v438, %v438
        %v638 = vpack.c.bf16 %v439, %v439
        %v639 = vpack.c.bf16 %v440, %v440
        %v640 = vpack.c.bf16 %v441, %v441
        %v641 = vpack.c.bf16 %v444, %v444
        %v642 = vpack.c.bf16 %v445, %v445
        %v643 = vpack.c.bf16 %v446, %v446
        %v644 = vpack.c.bf16 %v447, %v447
        %v645 = vpack.c.bf16 %v448, %v448
        %v646 = vpack.c.bf16 %v449, %v449
        %v647 = vpack.c.bf16 %v450, %v450
        %v648 = vpack.c.bf16 %v451, %v451
        %v649 = vpack.c.bf16 %v453, %v453
        %v650 = vpack.c.bf16 %v454, %v454
        %v651 = vld [vmem:[%s216] sm:$0xff]
        %v652 = vld [vmem:[%s216 + $0x8] sm:$0xff]
        %v653 = vld [vmem:[%s216 + $0x10] sm:$0xff]
        %v654 = vld [vmem:[%s216 + $0x18] sm:$0xff]
        %v655 = vld [vmem:[%s216 + $0x20] sm:$0xff]
        %v656 = vld [vmem:[%s216 + $0x28] sm:$0xff]
        %v657 = vld [vmem:[%s216 + $0x30] sm:$0xff]
        %v658 = vld [vmem:[%s216 + $0x38] sm:$0xff]
        %v659 = vld [vmem:[%s216 + $0x40] sm:$0xff]
        %v660 = vld [vmem:[%s216 + $0x48] sm:$0xff]
        %v661 = vld [vmem:[%s216 + $0x50] sm:$0xff]
        %v662 = vld [vmem:[%s216 + $0x58] sm:$0xff]
        %v663 = vld [vmem:[%s216 + $0x60] sm:$0xff]
        %v664 = vld [vmem:[%s216 + $0x68] sm:$0xff]
        %v665 = vld [vmem:[%s216 + $0x70] sm:$0xff]
        %v666 = vld [vmem:[%s216 + $0x78] sm:$0xff]
        %v667 = vld [vmem:[%s216 + $0x80] sm:$0xff]
        %v668 = vld [vmem:[%s216 + $0x88] sm:$0xff]
        %v669 = vld [vmem:[%s216 + $0x90] sm:$0xff]
        %v670 = vld [vmem:[%s216 + $0x98] sm:$0xff]
        %v671 = vld [vmem:[%s216 + $0xa0] sm:$0xff]
        %v672 = vld [vmem:[%s216 + $0xa8] sm:$0xff]
        %v673 = vld [vmem:[%s216 + $0xb0] sm:$0xff]
        %v674 = vld [vmem:[%s216 + $0xb8] sm:$0xff]
        %v675 = vld [vmem:[%s216 + $0xc0] sm:$0xff]
        %v676 = vld [vmem:[%s216 + $0xc8] sm:$0xff]
        %v677 = vld [vmem:[%s216 + $0xd0] sm:$0xff]
        %v678 = vld [vmem:[%s216 + $0xd8] sm:$0xff]
        %v679 = vld [vmem:[%s216 + $0xe0] sm:$0xff]
        %v680 = vld [vmem:[%s216 + $0xe8] sm:$0xff]
        %v681 = vld [vmem:[%s216 + $0xf0] sm:$0xff]
        %v682 = vld [vmem:[%s216 + $0xf8] sm:$0xff]
        %v683 = vld [vmem:[%s216 + $0x100] sm:$0xff]
        %v684 = vld [vmem:[%s216 + $0x108] sm:$0xff]
        %v685 = vld [vmem:[%s216 + $0x110] sm:$0xff]
        %v686 = vld [vmem:[%s216 + $0x118] sm:$0xff]
        %v687 = vld [vmem:[%s216 + $0x120] sm:$0xff]
        %v688 = vld [vmem:[%s216 + $0x128] sm:$0xff]
        %v689 = vld [vmem:[%s216 + $0x130] sm:$0xff]
        %v690 = vld [vmem:[%s216 + $0x138] sm:$0xff]
        %v691 = vld [vmem:[%s216 + $0x140] sm:$0xff]
        %v692 = vld [vmem:[%s216 + $0x148] sm:$0xff]
        %v693 = vld [vmem:[%s216 + $0x150] sm:$0xff]
        %v694 = vld [vmem:[%s216 + $0x158] sm:$0xff]
        %v695 = vld [vmem:[%s216 + $0x160] sm:$0xff]
        %v696 = vld [vmem:[%s216 + $0x168] sm:$0xff]
        %v697 = vld [vmem:[%s216 + $0x170] sm:$0xff]
        %v698 = vld [vmem:[%s216 + $0x178] sm:$0xff]
        %v699 = vld [vmem:[%s216 + $0x180] sm:$0xff]
        %v700 = vld [vmem:[%s216 + $0x188] sm:$0xff]
        %v701 = vld [vmem:[%s216 + $0x190] sm:$0xff]
        %v702 = vld [vmem:[%s216 + $0x198] sm:$0xff]
        %v703 = vld [vmem:[%s216 + $0x1a0] sm:$0xff]
        %v704 = vld [vmem:[%s216 + $0x1a8] sm:$0xff]
        %v705 = vld [vmem:[%s216 + $0x1b0] sm:$0xff]
        %v706 = vld [vmem:[%s216 + $0x1b8] sm:$0xff]
        %v707 = vld [vmem:[%s216 + $0x1c0] sm:$0xff]
        %v708 = vld [vmem:[%s216 + $0x1c8] sm:$0xff]
        %v709 = vld [vmem:[%s216 + $0x1d0] sm:$0xff]
        %v710 = vld [vmem:[%s216 + $0x1d8] sm:$0xff]
        %v711 = vld [vmem:[%s216 + $0x1e0] sm:$0xff]
        %v712 = vld [vmem:[%s216 + $0x1e8] sm:$0xff]
        %v713 = vld [vmem:[%s216 + $0x1f0] sm:$0xff]
        %v714 = vld [vmem:[%s216 + $0x1f8] sm:$0xff]
        %v715 = vld [vmem:[%s216 + $0x200] sm:$0xff]
        %v716 = vld [vmem:[%s216 + $0x208] sm:$0xff]
        %v717 = vld [vmem:[%s216 + $0x210] sm:$0xff]
        %v718 = vld [vmem:[%s216 + $0x218] sm:$0xff]
        %v719 = vld [vmem:[%s216 + $0x220] sm:$0xff]
        %v720 = vld [vmem:[%s216 + $0x228] sm:$0xff]
        %v721 = vld [vmem:[%s216 + $0x230] sm:$0xff]
        %v722 = vld [vmem:[%s216 + $0x238] sm:$0xff]
        %v723 = vld [vmem:[%s216 + $0x240] sm:$0xff]
        %v724 = vld [vmem:[%s216 + $0x248] sm:$0xff]
        %v725 = vld [vmem:[%s216 + $0x250] sm:$0xff]
        %v726 = vld [vmem:[%s216 + $0x258] sm:$0xff]
        %v727 = vld [vmem:[%s216 + $0x260] sm:$0xff]
        %v728 = vld [vmem:[%s216 + $0x268] sm:$0xff]
        %v729 = vld [vmem:[%s216 + $0x270] sm:$0xff]
        %v730 = vld [vmem:[%s216 + $0x278] sm:$0xff]
        %v731 = vld [vmem:[%s216 + $0x280] sm:$0xff]
        %v732 = vld [vmem:[%s216 + $0x288] sm:$0xff]
        %v733 = vld [vmem:[%s216 + $0x290] sm:$0xff]
        %v734 = vld [vmem:[%s216 + $0x298] sm:$0xff]
        %v735 = vld [vmem:[%s216 + $0x2a0] sm:$0xff]
        %v736 = vld [vmem:[%s216 + $0x2a8] sm:$0xff]
        %v737 = vld [vmem:[%s216 + $0x2b0] sm:$0xff]
        %v738 = vld [vmem:[%s216 + $0x2b8] sm:$0xff]
        %v739 = vld [vmem:[%s216 + $0x2c0] sm:$0xff]
        %v740 = vld [vmem:[%s216 + $0x2c8] sm:$0xff]
        %v741 = vld [vmem:[%s216 + $0x2d0] sm:$0xff]
        %v742 = vld [vmem:[%s216 + $0x2d8] sm:$0xff]
        %v743 = vld [vmem:[%s216 + $0x2e0] sm:$0xff]
        %v744 = vld [vmem:[%s216 + $0x2e8] sm:$0xff]
        %v745 = vld [vmem:[%s216 + $0x2f0] sm:$0xff]
        %v746 = vld [vmem:[%s216 + $0x2f8] sm:$0xff]
        %v747 = vld [vmem:[%s216 + $0x300] sm:$0xff]
        %v748 = vld [vmem:[%s216 + $0x308] sm:$0xff]
        %v749 = vld [vmem:[%s216 + $0x310] sm:$0xff]
        %v750 = vld [vmem:[%s216 + $0x318] sm:$0xff]
        %v751 = vld [vmem:[%s216 + $0x320] sm:$0xff]
        %v752 = vld [vmem:[%s216 + $0x328] sm:$0xff]
        %v753 = vld [vmem:[%s216 + $0x330] sm:$0xff]
        %v754 = vld [vmem:[%s216 + $0x338] sm:$0xff]
        %v755 = vld [vmem:[%s216 + $0x340] sm:$0xff]
        %v756 = vld [vmem:[%s216 + $0x348] sm:$0xff]
        %v757 = vld [vmem:[%s216 + $0x350] sm:$0xff]
        %v758 = vld [vmem:[%s216 + $0x358] sm:$0xff]
        %v759 = vld [vmem:[%s216 + $0x360] sm:$0xff]
        %v760 = vld [vmem:[%s216 + $0x368] sm:$0xff]
        %v761 = vld [vmem:[%s216 + $0x370] sm:$0xff]
        %v762 = vld [vmem:[%s216 + $0x378] sm:$0xff]
        %v763 = vld [vmem:[%s216 + $0x380] sm:$0xff]
        %v764 = vld [vmem:[%s216 + $0x388] sm:$0xff]
        %v765 = vld [vmem:[%s216 + $0x390] sm:$0xff]
        %v766 = vld [vmem:[%s216 + $0x398] sm:$0xff]
        %v767 = vld [vmem:[%s216 + $0x3a0] sm:$0xff]
        %v768 = vld [vmem:[%s216 + $0x3a8] sm:$0xff]
        %v769 = vld [vmem:[%s216 + $0x3b0] sm:$0xff]
        %v770 = vld [vmem:[%s216 + $0x3b8] sm:$0xff]
        %v771 = vld [vmem:[%s216 + $0x3c0] sm:$0xff]
        %v772 = vld [vmem:[%s216 + $0x3c8] sm:$0xff]
        %v773 = vld [vmem:[%s216 + $0x3d0] sm:$0xff]
        %v774 = vld [vmem:[%s216 + $0x3d8] sm:$0xff]
        %v775 = vld [vmem:[%s216 + $0x3e0] sm:$0xff]
        %v776 = vld [vmem:[%s216 + $0x3e8] sm:$0xff]
        %v777 = vld [vmem:[%s216 + $0x3f0] sm:$0xff]
        %v778 = vld [vmem:[%s216 + $0x3f8] sm:$0xff]
        %v779 = vld [vmem:[%s216 + $0x400] sm:$0xff]
        %v780 = vld [vmem:[%s216 + $0x408] sm:$0xff]
        %v781 = vld [vmem:[%s216 + $0x410] sm:$0xff]
        %v782 = vld [vmem:[%s216 + $0x418] sm:$0xff]
        %v783 = vld [vmem:[%s216 + $0x420] sm:$0xff]
        %v784 = vld [vmem:[%s216 + $0x428] sm:$0xff]
        %v785 = vld [vmem:[%s216 + $0x430] sm:$0xff]
        %v786 = vld [vmem:[%s216 + $0x438] sm:$0xff]
        %v787 = vld [vmem:[%s216 + $0x440] sm:$0xff]
        %v788 = vld [vmem:[%s216 + $0x448] sm:$0xff]
        %v789 = vld [vmem:[%s216 + $0x450] sm:$0xff]
        %v790 = vld [vmem:[%s216 + $0x458] sm:$0xff]
        %v791 = vld [vmem:[%s216 + $0x460] sm:$0xff]
        %v792 = vld [vmem:[%s216 + $0x468] sm:$0xff]
        %v793 = vld [vmem:[%s216 + $0x470] sm:$0xff]
        %v794 = vld [vmem:[%s216 + $0x478] sm:$0xff]
        %v795 = vld [vmem:[%s216 + $0x480] sm:$0xff]
        %v796 = vld [vmem:[%s216 + $0x488] sm:$0xff]
        %v797 = vld [vmem:[%s216 + $0x490] sm:$0xff]
        %v798 = vld [vmem:[%s216 + $0x498] sm:$0xff]
        %v799 = vld [vmem:[%s216 + $0x4a0] sm:$0xff]
        %v800 = vld [vmem:[%s216 + $0x4a8] sm:$0xff]
        %v801 = vld [vmem:[%s216 + $0x4b0] sm:$0xff]
        %v802 = vld [vmem:[%s216 + $0x4b8] sm:$0xff]
        %v803 = vld [vmem:[%s216 + $0x4c0] sm:$0xff]
        %v804 = vld [vmem:[%s216 + $0x4c8] sm:$0xff]
        %v805 = vld [vmem:[%s216 + $0x4d0] sm:$0xff]
        %v806 = vld [vmem:[%s216 + $0x4d8] sm:$0xff]
        %v807 = vld [vmem:[%s216 + $0x4e0] sm:$0xff]
        %v808 = vld [vmem:[%s216 + $0x4e8] sm:$0xff]
        %v809 = vld [vmem:[%s216 + $0x4f0] sm:$0xff]
        %v810 = vld [vmem:[%s216 + $0x4f8] sm:$0xff]
        %v811 = vld [vmem:[%s216 + $0x500] sm:$0xff]
        %v812 = vld [vmem:[%s216 + $0x508] sm:$0xff]
        %v813 = vld [vmem:[%s216 + $0x510] sm:$0xff]
        %v814 = vld [vmem:[%s216 + $0x518] sm:$0xff]
        %v815 = vld [vmem:[%s216 + $0x520] sm:$0xff]
        %v816 = vld [vmem:[%s216 + $0x528] sm:$0xff]
        %v817 = vld [vmem:[%s216 + $0x530] sm:$0xff]
        %v818 = vld [vmem:[%s216 + $0x538] sm:$0xff]
        %v819 = vld [vmem:[%s216 + $0x540] sm:$0xff]
        %v820 = vld [vmem:[%s216 + $0x548] sm:$0xff]
        %v821 = vld [vmem:[%s216 + $0x550] sm:$0xff]
        %v822 = vld [vmem:[%s216 + $0x558] sm:$0xff]
        %v823 = vld [vmem:[%s216 + $0x560] sm:$0xff]
        %v824 = vld [vmem:[%s216 + $0x568] sm:$0xff]
        %v825 = vld [vmem:[%s216 + $0x570] sm:$0xff]
        %v826 = vld [vmem:[%s216 + $0x578] sm:$0xff]
        %v827 = vld [vmem:[%s216 + $0x580] sm:$0xff]
        %v828 = vld [vmem:[%s216 + $0x588] sm:$0xff]
        %v829 = vld [vmem:[%s216 + $0x590] sm:$0xff]
        %v830 = vld [vmem:[%s216 + $0x598] sm:$0xff]
        %v831 = vld [vmem:[%s216 + $0x5a0] sm:$0xff]
        %v832 = vld [vmem:[%s216 + $0x5a8] sm:$0xff]
        %v833 = vld [vmem:[%s216 + $0x5b0] sm:$0xff]
        %v834 = vld [vmem:[%s216 + $0x5b8] sm:$0xff]
        %v835 = vld [vmem:[%s216 + $0x5c0] sm:$0xff]
        %v836 = vld [vmem:[%s216 + $0x5c8] sm:$0xff]
        %v837 = vld [vmem:[%s216 + $0x5d0] sm:$0xff]
        %v838 = vld [vmem:[%s216 + $0x5d8] sm:$0xff]
        %v839 = vld [vmem:[%s216 + $0x5e0] sm:$0xff]
        %v840 = vld [vmem:[%s216 + $0x5e8] sm:$0xff]
        %v841 = vld [vmem:[%s216 + $0x5f0] sm:$0xff]
        %v842 = vld [vmem:[%s216 + $0x5f8] sm:$0xff]
        %v843 = vld [vmem:[%s216 + $0x600] sm:$0xff]
        %v844 = vld [vmem:[%s216 + $0x608] sm:$0xff]
        %v845 = vld [vmem:[%s216 + $0x610] sm:$0xff]
        %v846 = vld [vmem:[%s216 + $0x618] sm:$0xff]
        %v847 = vld [vmem:[%s216 + $0x620] sm:$0xff]
        %v848 = vld [vmem:[%s216 + $0x628] sm:$0xff]
        %v849 = vld [vmem:[%s216 + $0x630] sm:$0xff]
        %v850 = vld [vmem:[%s216 + $0x638] sm:$0xff]
        %v851 = vld [vmem:[%s216 + $0x640] sm:$0xff]
        %v852 = vld [vmem:[%s216 + $0x648] sm:$0xff]
        %v853 = vld [vmem:[%s216 + $0x650] sm:$0xff]
        %v854 = vld [vmem:[%s216 + $0x658] sm:$0xff]
        %v855 = vld [vmem:[%s216 + $0x660] sm:$0xff]
        %v856 = vld [vmem:[%s216 + $0x668] sm:$0xff]
        %v857 = vld [vmem:[%s216 + $0x670] sm:$0xff]
        %v858 = vld [vmem:[%s216 + $0x678] sm:$0xff]
        %v859 = vld [vmem:[%s216 + $0x680] sm:$0xff]
        %v860 = vld [vmem:[%s216 + $0x688] sm:$0xff]
        %v861 = vld [vmem:[%s216 + $0x690] sm:$0xff]
        %v862 = vld [vmem:[%s216 + $0x698] sm:$0xff]
        %v863 = vld [vmem:[%s216 + $0x6a0] sm:$0xff]
        %v864 = vld [vmem:[%s216 + $0x6a8] sm:$0xff]
        %v865 = vld [vmem:[%s216 + $0x6b0] sm:$0xff]
        %v866 = vld [vmem:[%s216 + $0x6b8] sm:$0xff]
        %v867 = vld [vmem:[%s216 + $0x6c0] sm:$0xff]
        %v868 = vld [vmem:[%s216 + $0x6c8] sm:$0xff]
        %v869 = vld [vmem:[%s216 + $0x6d0] sm:$0xff]
        %v870 = vld [vmem:[%s216 + $0x6d8] sm:$0xff]
        %v871 = vld [vmem:[%s216 + $0x6e0] sm:$0xff]
        %v872 = vld [vmem:[%s216 + $0x6e8] sm:$0xff]
        %v873 = vld [vmem:[%s216 + $0x6f0] sm:$0xff]
        %v874 = vld [vmem:[%s216 + $0x6f8] sm:$0xff]
        %v875 = vld [vmem:[%s216 + $0x700] sm:$0xff]
        %v876 = vld [vmem:[%s216 + $0x708] sm:$0xff]
        %v877 = vld [vmem:[%s216 + $0x710] sm:$0xff]
        %v878 = vld [vmem:[%s216 + $0x718] sm:$0xff]
        %v879 = vld [vmem:[%s216 + $0x720] sm:$0xff]
        %v880 = vld [vmem:[%s216 + $0x728] sm:$0xff]
        %v881 = vld [vmem:[%s216 + $0x730] sm:$0xff]
        %v882 = vld [vmem:[%s216 + $0x738] sm:$0xff]
        %v883 = vld [vmem:[%s216 + $0x740] sm:$0xff]
        %v884 = vld [vmem:[%s216 + $0x748] sm:$0xff]
        %v885 = vld [vmem:[%s216 + $0x750] sm:$0xff]
        %v886 = vld [vmem:[%s216 + $0x758] sm:$0xff]
        %v887 = vld [vmem:[%s216 + $0x760] sm:$0xff]
        %v888 = vld [vmem:[%s216 + $0x768] sm:$0xff]
        %v889 = vld [vmem:[%s216 + $0x770] sm:$0xff]
        %v890 = vld [vmem:[%s216 + $0x778] sm:$0xff]
        %v891 = vld [vmem:[%s216 + $0x780] sm:$0xff]
        %v892 = vld [vmem:[%s216 + $0x788] sm:$0xff]
        %v893 = vld [vmem:[%s216 + $0x790] sm:$0xff]
        %v894 = vld [vmem:[%s216 + $0x798] sm:$0xff]
        %v895 = vld [vmem:[%s216 + $0x7a0] sm:$0xff]
        %v896 = vld [vmem:[%s216 + $0x7a8] sm:$0xff]
        %v897 = vld [vmem:[%s216 + $0x7b0] sm:$0xff]
        %v898 = vld [vmem:[%s216 + $0x7b8] sm:$0xff]
        %v899 = vld [vmem:[%s216 + $0x7c0] sm:$0xff]
        %v900 = vld [vmem:[%s216 + $0x7c8] sm:$0xff]
        %v901 = vld [vmem:[%s216 + $0x7d0] sm:$0xff]
        %v902 = vld [vmem:[%s216 + $0x7d8] sm:$0xff]
        %v903 = vld [vmem:[%s216 + $0x7e0] sm:$0xff]
        %v904 = vld [vmem:[%s216 + $0x7e8] sm:$0xff]
        %v905 = vld [vmem:[%s216 + $0x7f0] sm:$0xff]
        %v906 = vld [vmem:[%s216 + $0x7f8] sm:$0xff]
        %v907 = vld [vmem:[%s216 + $0x800] sm:$0xff]
        %v908 = vld [vmem:[%s216 + $0x808] sm:$0xff]
        %v909 = vld [vmem:[%s216 + $0x810] sm:$0xff]
        %v910 = vld [vmem:[%s216 + $0x818] sm:$0xff]
        %v911 = vld [vmem:[%s216 + $0x820] sm:$0xff]
        %v912 = vld [vmem:[%s216 + $0x828] sm:$0xff]
        %v913 = vld [vmem:[%s216 + $0x830] sm:$0xff]
        %v914 = vld [vmem:[%s216 + $0x838] sm:$0xff]
        %v915 = vld [vmem:[%s216 + $0x840] sm:$0xff]
        %v916 = vld [vmem:[%s216 + $0x848] sm:$0xff]
        %v917 = vld [vmem:[%s216 + $0x850] sm:$0xff]
        %v918 = vld [vmem:[%s216 + $0x858] sm:$0xff]
        %v919 = vld [vmem:[%s216 + $0x860] sm:$0xff]
        %v920 = vld [vmem:[%s216 + $0x868] sm:$0xff]
        %v921 = vld [vmem:[%s216 + $0x870] sm:$0xff]
        %v922 = vld [vmem:[%s216 + $0x878] sm:$0xff]
        %v923 = vld [vmem:[%s216 + $0x880] sm:$0xff]
        %v924 = vld [vmem:[%s216 + $0x888] sm:$0xff]
        %v925 = vld [vmem:[%s216 + $0x890] sm:$0xff]
        %v926 = vld [vmem:[%s216 + $0x898] sm:$0xff]
        %v927 = vld [vmem:[%s216 + $0x8a0] sm:$0xff]
        %v928 = vld [vmem:[%s216 + $0x8a8] sm:$0xff]
        %v929 = vld [vmem:[%s216 + $0x8b0] sm:$0xff]
        %v930 = vld [vmem:[%s216 + $0x8b8] sm:$0xff]
        %v931 = vld [vmem:[%s216 + $0x8c0] sm:$0xff]
        %v932 = vld [vmem:[%s216 + $0x8c8] sm:$0xff]
        %v933 = vld [vmem:[%s216 + $0x8d0] sm:$0xff]
        %v934 = vld [vmem:[%s216 + $0x8d8] sm:$0xff]
        %v935 = vld [vmem:[%s216 + $0x8e0] sm:$0xff]
        %v936 = vld [vmem:[%s216 + $0x8e8] sm:$0xff]
        %v937 = vld [vmem:[%s216 + $0x8f0] sm:$0xff]
        %v938 = vld [vmem:[%s216 + $0x8f8] sm:$0xff]
        %v939 = vld [vmem:[%s216 + $0x900] sm:$0xff]
        %v940 = vld [vmem:[%s216 + $0x908] sm:$0xff]
        %v941 = vld [vmem:[%s216 + $0x910] sm:$0xff]
        %v942 = vld [vmem:[%s216 + $0x918] sm:$0xff]
        %v943 = vld [vmem:[%s216 + $0x920] sm:$0xff]
        %v944 = vld [vmem:[%s216 + $0x928] sm:$0xff]
        %v945 = vld [vmem:[%s216 + $0x930] sm:$0xff]
        %v946 = vld [vmem:[%s216 + $0x938] sm:$0xff]
        %v947 = vld [vmem:[%s216 + $0x940] sm:$0xff]
        %v948 = vld [vmem:[%s216 + $0x948] sm:$0xff]
        %v949 = vld [vmem:[%s216 + $0x950] sm:$0xff]
        %v950 = vld [vmem:[%s216 + $0x958] sm:$0xff]
        %v951 = vld [vmem:[%s216 + $0x960] sm:$0xff]
        %v952 = vld [vmem:[%s216 + $0x968] sm:$0xff]
        %v953 = vld [vmem:[%s216 + $0x970] sm:$0xff]
        %v954 = vld [vmem:[%s216 + $0x978] sm:$0xff]
        %v955 = vld [vmem:[%s216 + $0x980] sm:$0xff]
        %v956 = vld [vmem:[%s216 + $0x988] sm:$0xff]
        %v957 = vld [vmem:[%s216 + $0x990] sm:$0xff]
        %v958 = vld [vmem:[%s216 + $0x998] sm:$0xff]
        %v959 = vld [vmem:[%s216 + $0x9a0] sm:$0xff]
        %v960 = vld [vmem:[%s216 + $0x9a8] sm:$0xff]
        %v961 = vld [vmem:[%s216 + $0x9b0] sm:$0xff]
        %v962 = vld [vmem:[%s216 + $0x9b8] sm:$0xff]
        %v963 = vld [vmem:[%s216 + $0x9c0] sm:$0xff]
        %v964 = vld [vmem:[%s216 + $0x9c8] sm:$0xff]
        %v965 = vld [vmem:[%s216 + $0x9d0] sm:$0xff]
        %v966 = vld [vmem:[%s216 + $0x9d8] sm:$0xff]
        %v967 = vld [vmem:[%s216 + $0x9e0] sm:$0xff]
        %v968 = vld [vmem:[%s216 + $0x9e8] sm:$0xff]
        %v969 = vld [vmem:[%s216 + $0x9f0] sm:$0xff]
        %v970 = vld [vmem:[%s216 + $0x9f8] sm:$0xff]
        %v971 = vld [vmem:[%s216 + $0xa00] sm:$0xff]
        %v972 = vld [vmem:[%s216 + $0xa08] sm:$0xff]
        %v973 = vld [vmem:[%s216 + $0xa10] sm:$0xff]
        %v974 = vld [vmem:[%s216 + $0xa18] sm:$0xff]
        %v975 = vld [vmem:[%s216 + $0xa20] sm:$0xff]
        %v976 = vld [vmem:[%s216 + $0xa28] sm:$0xff]
        %v977 = vld [vmem:[%s216 + $0xa30] sm:$0xff]
        %v978 = vld [vmem:[%s216 + $0xa38] sm:$0xff]
        %v979 = vld [vmem:[%s216 + $0xa40] sm:$0xff]
        %v980 = vld [vmem:[%s216 + $0xa48] sm:$0xff]
        %v981 = vld [vmem:[%s216 + $0xa50] sm:$0xff]
        %v982 = vld [vmem:[%s216 + $0xa58] sm:$0xff]
        %v983 = vld [vmem:[%s216 + $0xa60] sm:$0xff]
        %v984 = vld [vmem:[%s216 + $0xa68] sm:$0xff]
        %v985 = vld [vmem:[%s216 + $0xa70] sm:$0xff]
        %v986 = vld [vmem:[%s216 + $0xa78] sm:$0xff]
        %v987 = vld [vmem:[%s216 + $0xa80] sm:$0xff]
        %v988 = vld [vmem:[%s216 + $0xa88] sm:$0xff]
        %v989 = vld [vmem:[%s216 + $0xa90] sm:$0xff]
        %v990 = vld [vmem:[%s216 + $0xa98] sm:$0xff]
        %v991 = vld [vmem:[%s216 + $0xaa0] sm:$0xff]
        %v992 = vld [vmem:[%s216 + $0xaa8] sm:$0xff]
        %v993 = vld [vmem:[%s216 + $0xab0] sm:$0xff]
        %v994 = vld [vmem:[%s216 + $0xab8] sm:$0xff]
        %v995 = vld [vmem:[%s216 + $0xac0] sm:$0xff]
        %v996 = vld [vmem:[%s216 + $0xac8] sm:$0xff]
        %v997 = vld [vmem:[%s216 + $0xad0] sm:$0xff]
        %v998 = vld [vmem:[%s216 + $0xad8] sm:$0xff]
        %v999 = vld [vmem:[%s216 + $0xae0] sm:$0xff]
        %v1000 = vld [vmem:[%s216 + $0xae8] sm:$0xff]
        %v1001 = vld [vmem:[%s216 + $0xaf0] sm:$0xff]
        %v1002 = vld [vmem:[%s216 + $0xaf8] sm:$0xff]
        %v1003 = vld [vmem:[%s216 + $0xb00] sm:$0xff]
        %v1004 = vld [vmem:[%s216 + $0xb08] sm:$0xff]
        %v1005 = vld [vmem:[%s216 + $0xb10] sm:$0xff]
        %v1006 = vld [vmem:[%s216 + $0xb18] sm:$0xff]
        %v1007 = vld [vmem:[%s216 + $0xb20] sm:$0xff]
        %v1008 = vld [vmem:[%s216 + $0xb28] sm:$0xff]
        %v1009 = vld [vmem:[%s216 + $0xb30] sm:$0xff]
        %v1010 = vld [vmem:[%s216 + $0xb38] sm:$0xff]
        %v1011 = vld [vmem:[%s216 + $0xb40] sm:$0xff]
        %v1012 = vld [vmem:[%s216 + $0xb48] sm:$0xff]
        %v1013 = vld [vmem:[%s216 + $0xb50] sm:$0xff]
        %v1014 = vld [vmem:[%s216 + $0xb58] sm:$0xff]
        %v1015 = vld [vmem:[%s216 + $0xb60] sm:$0xff]
        %v1016 = vld [vmem:[%s216 + $0xb68] sm:$0xff]
        %v1017 = vld [vmem:[%s216 + $0xb70] sm:$0xff]
        %v1018 = vld [vmem:[%s216 + $0xb78] sm:$0xff]
        %v1019 = vld [vmem:[%s216 + $0xb80] sm:$0xff]
        %v1020 = vld [vmem:[%s216 + $0xb88] sm:$0xff]
        %v1021 = vld [vmem:[%s216 + $0xb90] sm:$0xff]
        %v1022 = vld [vmem:[%s216 + $0xb98] sm:$0xff]
        %v1023 = vld [vmem:[%s216 + $0xba0] sm:$0xff]
        %v1024 = vld [vmem:[%s216 + $0xba8] sm:$0xff]
        %v1025 = vld [vmem:[%s216 + $0xbb0] sm:$0xff]
        %v1026 = vld [vmem:[%s216 + $0xbb8] sm:$0xff]
        %v1027 = vld [vmem:[%s216 + $0xbc0] sm:$0xff]
        %v1028 = vld [vmem:[%s216 + $0xbc8] sm:$0xff]
        %v1029 = vld [vmem:[%s216 + $0xbd0] sm:$0xff]
        %v1030 = vld [vmem:[%s216 + $0xbd8] sm:$0xff]
        %v1031 = vld [vmem:[%s216 + $0xbe0] sm:$0xff]
        %v1032 = vld [vmem:[%s216 + $0xbe8] sm:$0xff]
        %v1033 = vld [vmem:[%s216 + $0xbf0] sm:$0xff]
        %v1034 = vld [vmem:[%s216 + $0xbf8] sm:$0xff]
        %v1035 = vld [vmem:[%s216 + $0xc00] sm:$0xff]
        %v1036 = vld [vmem:[%s216 + $0xc08] sm:$0xff]
        %v1037 = vld [vmem:[%s216 + $0xc10] sm:$0xff]
        %v1038 = vld [vmem:[%s216 + $0xc18] sm:$0xff]
        %v1039 = vld [vmem:[%s216 + $0xc20] sm:$0xff]
        %v1040 = vld [vmem:[%s216 + $0xc28] sm:$0xff]
        %v1041 = vld [vmem:[%s216 + $0xc30] sm:$0xff]
        %v1042 = vld [vmem:[%s216 + $0xc38] sm:$0xff]
        %v1043 = vld [vmem:[%s216 + $0xc40] sm:$0xff]
        %v1044 = vld [vmem:[%s216 + $0xc48] sm:$0xff]
        %v1045 = vld [vmem:[%s216 + $0xc50] sm:$0xff]
        %v1046 = vld [vmem:[%s216 + $0xc58] sm:$0xff]
        %v1047 = vld [vmem:[%s216 + $0xc60] sm:$0xff]
        %v1048 = vld [vmem:[%s216 + $0xc68] sm:$0xff]
        %v1049 = vld [vmem:[%s216 + $0xc70] sm:$0xff]
        %v1050 = vld [vmem:[%s216 + $0xc78] sm:$0xff]
        %v1051 = vld [vmem:[%s216 + $0xc80] sm:$0xff]
        %v1052 = vld [vmem:[%s216 + $0xc88] sm:$0xff]
        %v1053 = vld [vmem:[%s216 + $0xc90] sm:$0xff]
        %v1054 = vld [vmem:[%s216 + $0xc98] sm:$0xff]
        %v1055 = vld [vmem:[%s216 + $0xca0] sm:$0xff]
        %v1056 = vld [vmem:[%s216 + $0xca8] sm:$0xff]
        %v1057 = vld [vmem:[%s216 + $0xcb0] sm:$0xff]
        %v1058 = vld [vmem:[%s216 + $0xcb8] sm:$0xff]
        %v1059 = vld [vmem:[%s216 + $0xcc0] sm:$0xff]
        %v1060 = vld [vmem:[%s216 + $0xcc8] sm:$0xff]
        %v1061 = vld [vmem:[%s216 + $0xcd0] sm:$0xff]
        %v1062 = vld [vmem:[%s216 + $0xcd8] sm:$0xff]
        %v1063 = vld [vmem:[%s216 + $0xce0] sm:$0xff]
        %v1064 = vld [vmem:[%s216 + $0xce8] sm:$0xff]
        %v1065 = vld [vmem:[%s216 + $0xcf0] sm:$0xff]
        %v1066 = vld [vmem:[%s216 + $0xcf8] sm:$0xff]
        %v1067 = vld [vmem:[%s216 + $0xd00] sm:$0xff]
        %v1068 = vld [vmem:[%s216 + $0xd08] sm:$0xff]
        %v1069 = vld [vmem:[%s216 + $0xd10] sm:$0xff]
        %v1070 = vld [vmem:[%s216 + $0xd18] sm:$0xff]
        %v1071 = vld [vmem:[%s216 + $0xd20] sm:$0xff]
        %v1072 = vld [vmem:[%s216 + $0xd28] sm:$0xff]
        %v1073 = vld [vmem:[%s216 + $0xd30] sm:$0xff]
        %v1074 = vld [vmem:[%s216 + $0xd38] sm:$0xff]
        %v1075 = vld [vmem:[%s216 + $0xd40] sm:$0xff]
        %v1076 = vld [vmem:[%s216 + $0xd48] sm:$0xff]
        %v1077 = vld [vmem:[%s216 + $0xd50] sm:$0xff]
        %v1078 = vld [vmem:[%s216 + $0xd58] sm:$0xff]
        %v1079 = vld [vmem:[%s216 + $0xd60] sm:$0xff]
        %v1080 = vld [vmem:[%s216 + $0xd68] sm:$0xff]
        %v1081 = vld [vmem:[%s216 + $0xd70] sm:$0xff]
        %v1082 = vld [vmem:[%s216 + $0xd78] sm:$0xff]
        %v1083 = vld [vmem:[%s216 + $0xd80] sm:$0xff]
        %v1084 = vld [vmem:[%s216 + $0xd88] sm:$0xff]
        %v1085 = vld [vmem:[%s216 + $0xd90] sm:$0xff]
        %v1086 = vld [vmem:[%s216 + $0xd98] sm:$0xff]
        %v1087 = vld [vmem:[%s216 + $0xda0] sm:$0xff]
        %v1088 = vld [vmem:[%s216 + $0xda8] sm:$0xff]
        %v1089 = vld [vmem:[%s216 + $0xdb0] sm:$0xff]
        %v1090 = vld [vmem:[%s216 + $0xdb8] sm:$0xff]
        %v1091 = vld [vmem:[%s216 + $0xdc0] sm:$0xff]
        %v1092 = vld [vmem:[%s216 + $0xdc8] sm:$0xff]
        %v1093 = vld [vmem:[%s216 + $0xdd0] sm:$0xff]
        %v1094 = vld [vmem:[%s216 + $0xdd8] sm:$0xff]
        %v1095 = vld [vmem:[%s216 + $0xde0] sm:$0xff]
        %v1096 = vld [vmem:[%s216 + $0xde8] sm:$0xff]
        %v1097 = vld [vmem:[%s216 + $0xdf0] sm:$0xff]
        %v1098 = vld [vmem:[%s216 + $0xdf8] sm:$0xff]
        %v1099 = vld [vmem:[%s216 + $0xe00] sm:$0xff]
        %v1100 = vld [vmem:[%s216 + $0xe08] sm:$0xff]
        %v1101 = vld [vmem:[%s216 + $0xe10] sm:$0xff]
        %v1102 = vld [vmem:[%s216 + $0xe18] sm:$0xff]
        %v1103 = vld [vmem:[%s216 + $0xe20] sm:$0xff]
        %v1104 = vld [vmem:[%s216 + $0xe28] sm:$0xff]
        %v1105 = vld [vmem:[%s216 + $0xe30] sm:$0xff]
        %v1106 = vld [vmem:[%s216 + $0xe38] sm:$0xff]
        %v1107 = vld [vmem:[%s216 + $0xe40] sm:$0xff]
        %v1108 = vld [vmem:[%s216 + $0xe48] sm:$0xff]
        %v1109 = vld [vmem:[%s216 + $0xe50] sm:$0xff]
        %v1110 = vld [vmem:[%s216 + $0xe58] sm:$0xff]
        %v1111 = vld [vmem:[%s216 + $0xe60] sm:$0xff]
        %v1112 = vld [vmem:[%s216 + $0xe68] sm:$0xff]
        %v1113 = vld [vmem:[%s216 + $0xe70] sm:$0xff]
        %v1114 = vld [vmem:[%s216 + $0xe78] sm:$0xff]
        %v1115 = vld [vmem:[%s216 + $0xe80] sm:$0xff]
        %v1116 = vld [vmem:[%s216 + $0xe88] sm:$0xff]
        %v1117 = vld [vmem:[%s216 + $0xe90] sm:$0xff]
        %v1118 = vld [vmem:[%s216 + $0xe98] sm:$0xff]
        %v1119 = vld [vmem:[%s216 + $0xea0] sm:$0xff]
        %v1120 = vld [vmem:[%s216 + $0xea8] sm:$0xff]
        %v1121 = vld [vmem:[%s216 + $0xeb0] sm:$0xff]
        %v1122 = vld [vmem:[%s216 + $0xeb8] sm:$0xff]
        %v1123 = vld [vmem:[%s216 + $0xec0] sm:$0xff]
        %v1124 = vld [vmem:[%s216 + $0xec8] sm:$0xff]
        %v1125 = vld [vmem:[%s216 + $0xed0] sm:$0xff]
        %v1126 = vld [vmem:[%s216 + $0xed8] sm:$0xff]
        %v1127 = vld [vmem:[%s216 + $0xee0] sm:$0xff]
        %v1128 = vld [vmem:[%s216 + $0xee8] sm:$0xff]
        %v1129 = vld [vmem:[%s216 + $0xef0] sm:$0xff]
        %v1130 = vld [vmem:[%s216 + $0xef8] sm:$0xff]
        %v1131 = vld [vmem:[%s216 + $0xf00] sm:$0xff]
        %v1132 = vld [vmem:[%s216 + $0xf08] sm:$0xff]
        %v1133 = vld [vmem:[%s216 + $0xf10] sm:$0xff]
        %v1134 = vld [vmem:[%s216 + $0xf18] sm:$0xff]
        %v1135 = vld [vmem:[%s216 + $0xf20] sm:$0xff]
        %v1136 = vld [vmem:[%s216 + $0xf28] sm:$0xff]
        %v1137 = vld [vmem:[%s216 + $0xf30] sm:$0xff]
        %v1138 = vld [vmem:[%s216 + $0xf38] sm:$0xff]
        %v1139 = vld [vmem:[%s216 + $0xf40] sm:$0xff]
        %v1140 = vld [vmem:[%s216 + $0xf48] sm:$0xff]
        %v1141 = vld [vmem:[%s216 + $0xf50] sm:$0xff]
        %v1142 = vld [vmem:[%s216 + $0xf58] sm:$0xff]
        %v1143 = vld [vmem:[%s216 + $0xf60] sm:$0xff]
        %v1144 = vld [vmem:[%s216 + $0xf68] sm:$0xff]
        %v1145 = vld [vmem:[%s216 + $0xf70] sm:$0xff]
        %v1146 = vld [vmem:[%s216 + $0xf78] sm:$0xff]
        %v1147 = vld [vmem:[%s216 + $0xf80] sm:$0xff]
        %v1148 = vld [vmem:[%s216 + $0xf88] sm:$0xff]
        %v1149 = vld [vmem:[%s216 + $0xf90] sm:$0xff]
        %v1150 = vld [vmem:[%s216 + $0xf98] sm:$0xff]
        %v1151 = vld [vmem:[%s216 + $0xfa0] sm:$0xff]
        %v1152 = vld [vmem:[%s216 + $0xfa8] sm:$0xff]
        %v1153 = vld [vmem:[%s216 + $0xfb0] sm:$0xff]
        %v1154 = vld [vmem:[%s216 + $0xfb8] sm:$0xff]
        %v1155 = vld [vmem:[%s216 + $0xfc0] sm:$0xff]
        %v1156 = vld [vmem:[%s216 + $0xfc8] sm:$0xff]
        %v1157 = vld [vmem:[%s216 + $0xfd0] sm:$0xff]
        %v1158 = vld [vmem:[%s216 + $0xfd8] sm:$0xff]
        %v1159 = vld [vmem:[%s216 + $0xfe0] sm:$0xff]
        %v1160 = vld [vmem:[%s216 + $0xfe8] sm:$0xff]
        %v1161 = vld [vmem:[%s216 + $0xff0] sm:$0xff]
        %v1162 = vld [vmem:[%s216 + $0xff8] sm:$0xff]
        %v1163 = vld [vmem:[%s216 + $0x1000] sm:$0xff]
        %v1164 = vld [vmem:[%s216 + $0x1008] sm:$0xff]
        %v1165 = vld [vmem:[%s216 + $0x1010] sm:$0xff]
        %v1166 = vld [vmem:[%s216 + $0x1018] sm:$0xff]
        %v1167 = vld [vmem:[%s216 + $0x1020] sm:$0xff]
        %v1168 = vld [vmem:[%s216 + $0x1028] sm:$0xff]
        %v1169 = vld [vmem:[%s216 + $0x1030] sm:$0xff]
        %v1170 = vld [vmem:[%s216 + $0x1038] sm:$0xff]
        %v1171 = vld [vmem:[%s216 + $0x1040] sm:$0xff]
        %v1172 = vld [vmem:[%s216 + $0x1048] sm:$0xff]
        %v1173 = vld [vmem:[%s216 + $0x1050] sm:$0xff]
        %v1174 = vld [vmem:[%s216 + $0x1058] sm:$0xff]
        %v1175 = vld [vmem:[%s216 + $0x1060] sm:$0xff]
        %v1176 = vld [vmem:[%s216 + $0x1068] sm:$0xff]
        %v1177 = vld [vmem:[%s216 + $0x1070] sm:$0xff]
        %v1178 = vld [vmem:[%s216 + $0x1078] sm:$0xff]
        %v1179 = vld [vmem:[%s216 + $0x1080] sm:$0xff]
        %v1180 = vld [vmem:[%s216 + $0x1088] sm:$0xff]
        %v1181 = vld [vmem:[%s216 + $0x1090] sm:$0xff]
        %v1182 = vld [vmem:[%s216 + $0x1098] sm:$0xff]
        %v1183 = vld [vmem:[%s216 + $0x10a0] sm:$0xff]
        %v1184 = vld [vmem:[%s216 + $0x10a8] sm:$0xff]
        %v1185 = vld [vmem:[%s216 + $0x10b0] sm:$0xff]
        %v1186 = vld [vmem:[%s216 + $0x10b8] sm:$0xff]
        %v1187 = vld [vmem:[%s216 + $0x10c0] sm:$0xff]
        %v1188 = vld [vmem:[%s216 + $0x10c8] sm:$0xff]
        %v1189 = vld [vmem:[%s216 + $0x10d0] sm:$0xff]
        %v1190 = vld [vmem:[%s216 + $0x10d8] sm:$0xff]
        %v1191 = vld [vmem:[%s216 + $0x10e0] sm:$0xff]
        %v1192 = vld [vmem:[%s216 + $0x10e8] sm:$0xff]
        %v1193 = vld [vmem:[%s216 + $0x10f0] sm:$0xff]
        %v1194 = vld [vmem:[%s216 + $0x10f8] sm:$0xff]
        %v1195 = vld [vmem:[%s216 + $0x1100] sm:$0xff]
        %v1196 = vld [vmem:[%s216 + $0x1108] sm:$0xff]
        %v1197 = vld [vmem:[%s216 + $0x1110] sm:$0xff]
        %v1198 = vld [vmem:[%s216 + $0x1118] sm:$0xff]
        %v1199 = vld [vmem:[%s216 + $0x1120] sm:$0xff]
        %v1200 = vld [vmem:[%s216 + $0x1128] sm:$0xff]
        %v1201 = vld [vmem:[%s216 + $0x1130] sm:$0xff]
        %v1202 = vld [vmem:[%s216 + $0x1138] sm:$0xff]
        %v1203 = vld [vmem:[%s216 + $0x1140] sm:$0xff]
        %v1204 = vld [vmem:[%s216 + $0x1148] sm:$0xff]
        %v1205 = vld [vmem:[%s216 + $0x1150] sm:$0xff]
        %v1206 = vld [vmem:[%s216 + $0x1158] sm:$0xff]
        %v1207 = vld [vmem:[%s216 + $0x1160] sm:$0xff]
        %v1208 = vld [vmem:[%s216 + $0x1168] sm:$0xff]
        %v1209 = vld [vmem:[%s216 + $0x1170] sm:$0xff]
        %v1210 = vld [vmem:[%s216 + $0x1178] sm:$0xff]
        %v1211 = vld [vmem:[%s216 + $0x1180] sm:$0xff]
        %v1212 = vld [vmem:[%s216 + $0x1188] sm:$0xff]
        %v1213 = vld [vmem:[%s216 + $0x1190] sm:$0xff]
        %v1214 = vld [vmem:[%s216 + $0x1198] sm:$0xff]
        %v1215 = vld [vmem:[%s216 + $0x11a0] sm:$0xff]
        %v1216 = vld [vmem:[%s216 + $0x11a8] sm:$0xff]
        %v1217 = vld [vmem:[%s216 + $0x11b0] sm:$0xff]
        %v1218 = vld [vmem:[%s216 + $0x11b8] sm:$0xff]
        %v1219 = vld [vmem:[%s216 + $0x11c0] sm:$0xff]
        %v1220 = vld [vmem:[%s216 + $0x11c8] sm:$0xff]
        %v1221 = vld [vmem:[%s216 + $0x11d0] sm:$0xff]
        %v1222 = vld [vmem:[%s216 + $0x11d8] sm:$0xff]
        %v1223 = vld [vmem:[%s216 + $0x11e0] sm:$0xff]
        %v1224 = vld [vmem:[%s216 + $0x11e8] sm:$0xff]
        %v1225 = vld [vmem:[%s216 + $0x11f0] sm:$0xff]
        %v1226 = vld [vmem:[%s216 + $0x11f8] sm:$0xff]
        %v1227 = vld [vmem:[%s216 + $0x1200] sm:$0xff]
        %v1228 = vld [vmem:[%s216 + $0x1208] sm:$0xff]
        %v1229 = vld [vmem:[%s216 + $0x1210] sm:$0xff]
        %v1230 = vld [vmem:[%s216 + $0x1218] sm:$0xff]
        %v1231 = vld [vmem:[%s216 + $0x1220] sm:$0xff]
        %v1232 = vld [vmem:[%s216 + $0x1228] sm:$0xff]
        %v1233 = vld [vmem:[%s216 + $0x1230] sm:$0xff]
        %v1234 = vld [vmem:[%s216 + $0x1238] sm:$0xff]
        %v1235 = vld [vmem:[%s216 + $0x1240] sm:$0xff]
        %v1236 = vld [vmem:[%s216 + $0x1248] sm:$0xff]
        %v1237 = vld [vmem:[%s216 + $0x1250] sm:$0xff]
        %v1238 = vld [vmem:[%s216 + $0x1258] sm:$0xff]
        %v1239 = vld [vmem:[%s216 + $0x1260] sm:$0xff]
        %v1240 = vld [vmem:[%s216 + $0x1268] sm:$0xff]
        %v1241 = vld [vmem:[%s216 + $0x1270] sm:$0xff]
        %v1242 = vld [vmem:[%s216 + $0x1278] sm:$0xff]
        %v1243 = vld [vmem:[%s216 + $0x1280] sm:$0xff]
        %v1244 = vld [vmem:[%s216 + $0x1288] sm:$0xff]
        %v1245 = vld [vmem:[%s216 + $0x1290] sm:$0xff]
        %v1246 = vld [vmem:[%s216 + $0x1298] sm:$0xff]
        %v1247 = vld [vmem:[%s216 + $0x12a0] sm:$0xff]
        %v1248 = vld [vmem:[%s216 + $0x12a8] sm:$0xff]
        %v1249 = vld [vmem:[%s216 + $0x12b0] sm:$0xff]
        %v1250 = vld [vmem:[%s216 + $0x12b8] sm:$0xff]
        %v1251 = vld [vmem:[%s216 + $0x12c0] sm:$0xff]
        %v1252 = vld [vmem:[%s216 + $0x12c8] sm:$0xff]
        %v1253 = vld [vmem:[%s216 + $0x12d0] sm:$0xff]
        %v1254 = vld [vmem:[%s216 + $0x12d8] sm:$0xff]
        %v1255 = vld [vmem:[%s216 + $0x12e0] sm:$0xff]
        %v1256 = vld [vmem:[%s216 + $0x12e8] sm:$0xff]
        %v1257 = vld [vmem:[%s216 + $0x12f0] sm:$0xff]
        %v1258 = vld [vmem:[%s216 + $0x12f8] sm:$0xff]
        %v1259 = vld [vmem:[%s216 + $0x1300] sm:$0xff]
        %v1260 = vld [vmem:[%s216 + $0x1308] sm:$0xff]
        %v1261 = vld [vmem:[%s216 + $0x1310] sm:$0xff]
        %v1262 = vld [vmem:[%s216 + $0x1318] sm:$0xff]
        %v1263 = vld [vmem:[%s216 + $0x1320] sm:$0xff]
        %v1264 = vld [vmem:[%s216 + $0x1328] sm:$0xff]
        %v1265 = vld [vmem:[%s216 + $0x1330] sm:$0xff]
        %v1266 = vld [vmem:[%s216 + $0x1338] sm:$0xff]
        %v1267 = vld [vmem:[%s216 + $0x1340] sm:$0xff]
        %v1268 = vld [vmem:[%s216 + $0x1348] sm:$0xff]
        %v1269 = vld [vmem:[%s216 + $0x1350] sm:$0xff]
        %v1270 = vld [vmem:[%s216 + $0x1358] sm:$0xff]
        %v1271 = vld [vmem:[%s216 + $0x1360] sm:$0xff]
        %v1272 = vld [vmem:[%s216 + $0x1368] sm:$0xff]
        %v1273 = vld [vmem:[%s216 + $0x1370] sm:$0xff]
        %v1274 = vld [vmem:[%s216 + $0x1378] sm:$0xff]
        %v1275 = vld [vmem:[%s216 + $0x1380] sm:$0xff]
        %v1276 = vld [vmem:[%s216 + $0x1388] sm:$0xff]
        %v1277 = vld [vmem:[%s216 + $0x1390] sm:$0xff]
        %v1278 = vld [vmem:[%s216 + $0x1398] sm:$0xff]
        %v1279 = vld [vmem:[%s216 + $0x13a0] sm:$0xff]
        %v1280 = vld [vmem:[%s216 + $0x13a8] sm:$0xff]
        %v1281 = vld [vmem:[%s216 + $0x13b0] sm:$0xff]
        %v1282 = vld [vmem:[%s216 + $0x13b8] sm:$0xff]
        %v1283 = vld [vmem:[%s216 + $0x13c0] sm:$0xff]
        %v1284 = vld [vmem:[%s216 + $0x13c8] sm:$0xff]
        %v1285 = vld [vmem:[%s216 + $0x13d0] sm:$0xff]
        %v1286 = vld [vmem:[%s216 + $0x13d8] sm:$0xff]
        %v1287 = vld [vmem:[%s216 + $0x13e0] sm:$0xff]
        %v1288 = vld [vmem:[%s216 + $0x13e8] sm:$0xff]
        %v1289 = vld [vmem:[%s216 + $0x13f0] sm:$0xff]
        %v1290 = vld [vmem:[%s216 + $0x13f8] sm:$0xff]
        %v1291 = vld [vmem:[%s216 + $0x1400] sm:$0xff]
        %v1292 = vld [vmem:[%s216 + $0x1408] sm:$0xff]
        %v1293 = vld [vmem:[%s216 + $0x1410] sm:$0xff]
        %v1294 = vld [vmem:[%s216 + $0x1418] sm:$0xff]
        %v1295 = vld [vmem:[%s216 + $0x1420] sm:$0xff]
        %v1296 = vld [vmem:[%s216 + $0x1428] sm:$0xff]
        %v1297 = vld [vmem:[%s216 + $0x1430] sm:$0xff]
        %v1298 = vld [vmem:[%s216 + $0x1438] sm:$0xff]
        %v1299 = vld [vmem:[%s216 + $0x1440] sm:$0xff]
        %v1300 = vld [vmem:[%s216 + $0x1448] sm:$0xff]
        %v1301 = vld [vmem:[%s216 + $0x1450] sm:$0xff]
        %v1302 = vld [vmem:[%s216 + $0x1458] sm:$0xff]
        %v1303 = vld [vmem:[%s216 + $0x1460] sm:$0xff]
        %v1304 = vld [vmem:[%s216 + $0x1468] sm:$0xff]
        %v1305 = vld [vmem:[%s216 + $0x1470] sm:$0xff]
        %v1306 = vld [vmem:[%s216 + $0x1478] sm:$0xff]
        %v1307 = vld [vmem:[%s216 + $0x1480] sm:$0xff]
        %v1308 = vld [vmem:[%s216 + $0x1488] sm:$0xff]
        %v1309 = vld [vmem:[%s216 + $0x1490] sm:$0xff]
        %v1310 = vld [vmem:[%s216 + $0x1498] sm:$0xff]
        %v1311 = vld [vmem:[%s216 + $0x14a0] sm:$0xff]
        %v1312 = vld [vmem:[%s216 + $0x14a8] sm:$0xff]
        %v1313 = vld [vmem:[%s216 + $0x14b0] sm:$0xff]
        %v1314 = vld [vmem:[%s216 + $0x14b8] sm:$0xff]
        %v1315 = vld [vmem:[%s216 + $0x14c0] sm:$0xff]
        %v1316 = vld [vmem:[%s216 + $0x14c8] sm:$0xff]
        %v1317 = vld [vmem:[%s216 + $0x14d0] sm:$0xff]
        %v1318 = vld [vmem:[%s216 + $0x14d8] sm:$0xff]
        %v1319 = vld [vmem:[%s216 + $0x14e0] sm:$0xff]
        %v1320 = vld [vmem:[%s216 + $0x14e8] sm:$0xff]
        %v1321 = vld [vmem:[%s216 + $0x14f0] sm:$0xff]
        %v1322 = vld [vmem:[%s216 + $0x14f8] sm:$0xff]
        %v1323 = vld [vmem:[%s216 + $0x1500] sm:$0xff]
        %v1324 = vld [vmem:[%s216 + $0x1508] sm:$0xff]
        %v1325 = vld [vmem:[%s216 + $0x1510] sm:$0xff]
        %v1326 = vld [vmem:[%s216 + $0x1518] sm:$0xff]
        %v1327 = vld [vmem:[%s216 + $0x1520] sm:$0xff]
        %v1328 = vld [vmem:[%s216 + $0x1528] sm:$0xff]
        %v1329 = vld [vmem:[%s216 + $0x1530] sm:$0xff]
        %v1330 = vld [vmem:[%s216 + $0x1538] sm:$0xff]
        %v1331 = vld [vmem:[%s216 + $0x1540] sm:$0xff]
        %v1332 = vld [vmem:[%s216 + $0x1548] sm:$0xff]
        %v1333 = vld [vmem:[%s216 + $0x1550] sm:$0xff]
        %v1334 = vld [vmem:[%s216 + $0x1558] sm:$0xff]
        %v1335 = vld [vmem:[%s216 + $0x1560] sm:$0xff]
        %v1336 = vld [vmem:[%s216 + $0x1568] sm:$0xff]
        %v1337 = vld [vmem:[%s216 + $0x1570] sm:$0xff]
        %v1338 = vld [vmem:[%s216 + $0x1578] sm:$0xff]
        %v1339 = vld [vmem:[%s216 + $0x1580] sm:$0xff]
        %v1340 = vld [vmem:[%s216 + $0x1588] sm:$0xff]
        %v1341 = vld [vmem:[%s216 + $0x1590] sm:$0xff]
        %v1342 = vld [vmem:[%s216 + $0x1598] sm:$0xff]
        %v1343 = vld [vmem:[%s216 + $0x15a0] sm:$0xff]
        %v1344 = vld [vmem:[%s216 + $0x15a8] sm:$0xff]
        %v1345 = vld [vmem:[%s216 + $0x15b0] sm:$0xff]
        %v1346 = vld [vmem:[%s216 + $0x15b8] sm:$0xff]
        %v1347 = vld [vmem:[%s216 + $0x15c0] sm:$0xff]
        %v1348 = vld [vmem:[%s216 + $0x15c8] sm:$0xff]
        %v1349 = vld [vmem:[%s216 + $0x15d0] sm:$0xff]
        %v1350 = vld [vmem:[%s216 + $0x15d8] sm:$0xff]
        %v1351 = vld [vmem:[%s216 + $0x15e0] sm:$0xff]
        %v1352 = vld [vmem:[%s216 + $0x15e8] sm:$0xff]
        %v1353 = vld [vmem:[%s216 + $0x15f0] sm:$0xff]
        %v1354 = vld [vmem:[%s216 + $0x15f8] sm:$0xff]
        %v1355 = vld [vmem:[%s216 + $0x1600] sm:$0xff]
        %v1356 = vld [vmem:[%s216 + $0x1608] sm:$0xff]
        %v1357 = vld [vmem:[%s216 + $0x1610] sm:$0xff]
        %v1358 = vld [vmem:[%s216 + $0x1618] sm:$0xff]
        %v1359 = vld [vmem:[%s216 + $0x1620] sm:$0xff]
        %v1360 = vld [vmem:[%s216 + $0x1628] sm:$0xff]
        %v1361 = vld [vmem:[%s216 + $0x1630] sm:$0xff]
        %v1362 = vld [vmem:[%s216 + $0x1638] sm:$0xff]
        %v1363 = vld [vmem:[%s216 + $0x1640] sm:$0xff]
        %v1364 = vld [vmem:[%s216 + $0x1648] sm:$0xff]
        %v1365 = vld [vmem:[%s216 + $0x1650] sm:$0xff]
        %v1366 = vld [vmem:[%s216 + $0x1658] sm:$0xff]
        %v1367 = vld [vmem:[%s216 + $0x1660] sm:$0xff]
        %v1368 = vld [vmem:[%s216 + $0x1668] sm:$0xff]
        %v1369 = vld [vmem:[%s216 + $0x1670] sm:$0xff]
        %v1370 = vld [vmem:[%s216 + $0x1678] sm:$0xff]
        %v1371 = vld [vmem:[%s216 + $0x1680] sm:$0xff]
        %v1372 = vld [vmem:[%s216 + $0x1688] sm:$0xff]
        %v1373 = vld [vmem:[%s216 + $0x1690] sm:$0xff]
        %v1374 = vld [vmem:[%s216 + $0x1698] sm:$0xff]
        %v1375 = vld [vmem:[%s216 + $0x16a0] sm:$0xff]
        %v1376 = vld [vmem:[%s216 + $0x16a8] sm:$0xff]
        %v1377 = vld [vmem:[%s216 + $0x16b0] sm:$0xff]
        %v1378 = vld [vmem:[%s216 + $0x16b8] sm:$0xff]
        %v1379 = vld [vmem:[%s216 + $0x16c0] sm:$0xff]
        %v1380 = vld [vmem:[%s216 + $0x16c8] sm:$0xff]
        %v1381 = vld [vmem:[%s216 + $0x16d0] sm:$0xff]
        %v1382 = vld [vmem:[%s216 + $0x16d8] sm:$0xff]
        %v1383 = vld [vmem:[%s216 + $0x16e0] sm:$0xff]
        %v1384 = vld [vmem:[%s216 + $0x16e8] sm:$0xff]
        %v1385 = vld [vmem:[%s216 + $0x16f0] sm:$0xff]
        %v1386 = vld [vmem:[%s216 + $0x16f8] sm:$0xff]
        %v1387 = vld [vmem:[%s216 + $0x1700] sm:$0xff]
        %v1388 = vld [vmem:[%s216 + $0x1708] sm:$0xff]
        %v1389 = vld [vmem:[%s216 + $0x1710] sm:$0xff]
        %v1390 = vld [vmem:[%s216 + $0x1718] sm:$0xff]
        %v1391 = vld [vmem:[%s216 + $0x1720] sm:$0xff]
        %v1392 = vld [vmem:[%s216 + $0x1728] sm:$0xff]
        %v1393 = vld [vmem:[%s216 + $0x1730] sm:$0xff]
        %v1394 = vld [vmem:[%s216 + $0x1738] sm:$0xff]
        %v1395 = vld [vmem:[%s216 + $0x1740] sm:$0xff]
        %v1396 = vld [vmem:[%s216 + $0x1748] sm:$0xff]
        %v1397 = vld [vmem:[%s216 + $0x1750] sm:$0xff]
        %v1398 = vld [vmem:[%s216 + $0x1758] sm:$0xff]
        %v1399 = vld [vmem:[%s216 + $0x1760] sm:$0xff]
        %v1400 = vld [vmem:[%s216 + $0x1768] sm:$0xff]
        %v1401 = vld [vmem:[%s216 + $0x1770] sm:$0xff]
        %v1402 = vld [vmem:[%s216 + $0x1778] sm:$0xff]
        %v1403 = vld [vmem:[%s216 + $0x1780] sm:$0xff]
        %v1404 = vld [vmem:[%s216 + $0x1788] sm:$0xff]
        %v1405 = vld [vmem:[%s216 + $0x1790] sm:$0xff]
        %v1406 = vld [vmem:[%s216 + $0x1798] sm:$0xff]
        %v1407 = vld [vmem:[%s216 + $0x17a0] sm:$0xff]
        %v1408 = vld [vmem:[%s216 + $0x17a8] sm:$0xff]
        %v1409 = vld [vmem:[%s216 + $0x17b0] sm:$0xff]
        %v1410 = vld [vmem:[%s216 + $0x17b8] sm:$0xff]
        %v1411 = vld [vmem:[%s216 + $0x17c0] sm:$0xff]
        %v1412 = vld [vmem:[%s216 + $0x17c8] sm:$0xff]
        %v1413 = vld [vmem:[%s216 + $0x17d0] sm:$0xff]
        %v1414 = vld [vmem:[%s216 + $0x17d8] sm:$0xff]
        %v1415 = vld [vmem:[%s216 + $0x17e0] sm:$0xff]
        %v1416 = vld [vmem:[%s216 + $0x17e8] sm:$0xff]
        %v1417 = vld [vmem:[%s216 + $0x17f0] sm:$0xff]
        %v1418 = vld [vmem:[%s216 + $0x17f8] sm:$0xff]
        %v1419 = vld [vmem:[%s216 + $0x1800] sm:$0xff]
        %v1420 = vld [vmem:[%s216 + $0x1808] sm:$0xff]
        %v1421 = vld [vmem:[%s216 + $0x1810] sm:$0xff]
        %v1422 = vld [vmem:[%s216 + $0x1818] sm:$0xff]
        %v1423 = vld [vmem:[%s216 + $0x1820] sm:$0xff]
        %v1424 = vld [vmem:[%s216 + $0x1828] sm:$0xff]
        %v1425 = vld [vmem:[%s216 + $0x1830] sm:$0xff]
        %v1426 = vld [vmem:[%s216 + $0x1838] sm:$0xff]
        %v1427 = vld [vmem:[%s216 + $0x1840] sm:$0xff]
        %v1428 = vld [vmem:[%s216 + $0x1848] sm:$0xff]
        %v1429 = vld [vmem:[%s216 + $0x1850] sm:$0xff]
        %v1430 = vld [vmem:[%s216 + $0x1858] sm:$0xff]
        %v1431 = vld [vmem:[%s216 + $0x1860] sm:$0xff]
        %v1432 = vld [vmem:[%s216 + $0x1868] sm:$0xff]
        %v1433 = vld [vmem:[%s216 + $0x1870] sm:$0xff]
        %v1434 = vld [vmem:[%s216 + $0x1878] sm:$0xff]
        %v1435 = vld [vmem:[%s216 + $0x1880] sm:$0xff]
        %v1436 = vld [vmem:[%s216 + $0x1888] sm:$0xff]
        %v1437 = vld [vmem:[%s216 + $0x1890] sm:$0xff]
        %v1438 = vld [vmem:[%s216 + $0x1898] sm:$0xff]
        %v1439 = vld [vmem:[%s216 + $0x18a0] sm:$0xff]
        %v1440 = vld [vmem:[%s216 + $0x18a8] sm:$0xff]
        %v1441 = vld [vmem:[%s216 + $0x18b0] sm:$0xff]
        %v1442 = vld [vmem:[%s216 + $0x18b8] sm:$0xff]
        %v1443 = vld [vmem:[%s216 + $0x18c0] sm:$0xff]
        %v1444 = vld [vmem:[%s216 + $0x18c8] sm:$0xff]
        %v1445 = vld [vmem:[%s216 + $0x18d0] sm:$0xff]
        %v1446 = vld [vmem:[%s216 + $0x18d8] sm:$0xff]
        %v1447 = vld [vmem:[%s216 + $0x18e0] sm:$0xff]
        %v1448 = vld [vmem:[%s216 + $0x18e8] sm:$0xff]
        %v1449 = vld [vmem:[%s216 + $0x18f0] sm:$0xff]
        %v1450 = vld [vmem:[%s216 + $0x18f8] sm:$0xff]
        %v1451 = vld [vmem:[%s216 + $0x1900] sm:$0xff]
        %v1452 = vld [vmem:[%s216 + $0x1908] sm:$0xff]
        %v1453 = vld [vmem:[%s216 + $0x1910] sm:$0xff]
        %v1454 = vld [vmem:[%s216 + $0x1918] sm:$0xff]
        %v1455 = vld [vmem:[%s216 + $0x1920] sm:$0xff]
        %v1456 = vld [vmem:[%s216 + $0x1928] sm:$0xff]
        %v1457 = vld [vmem:[%s216 + $0x1930] sm:$0xff]
        %v1458 = vld [vmem:[%s216 + $0x1938] sm:$0xff]
        %v1459 = vld [vmem:[%s216 + $0x1940] sm:$0xff]
        %v1460 = vld [vmem:[%s216 + $0x1948] sm:$0xff]
        %v1461 = vld [vmem:[%s216 + $0x1950] sm:$0xff]
        %v1462 = vld [vmem:[%s216 + $0x1958] sm:$0xff]
        %v1463 = vld [vmem:[%s216 + $0x1960] sm:$0xff]
        %v1464 = vld [vmem:[%s216 + $0x1968] sm:$0xff]
        %v1465 = vld [vmem:[%s216 + $0x1970] sm:$0xff]
        %v1466 = vld [vmem:[%s216 + $0x1978] sm:$0xff]
        %v1467 = vld [vmem:[%s216 + $0x1980] sm:$0xff]
        %v1468 = vld [vmem:[%s216 + $0x1988] sm:$0xff]
        %v1469 = vld [vmem:[%s216 + $0x1990] sm:$0xff]
        %v1470 = vld [vmem:[%s216 + $0x1998] sm:$0xff]
        %v1471 = vld [vmem:[%s216 + $0x19a0] sm:$0xff]
        %v1472 = vld [vmem:[%s216 + $0x19a8] sm:$0xff]
        %v1473 = vld [vmem:[%s216 + $0x19b0] sm:$0xff]
        %v1474 = vld [vmem:[%s216 + $0x19b8] sm:$0xff]
        %v1475 = vld [vmem:[%s216 + $0x19c0] sm:$0xff]
        %v1476 = vld [vmem:[%s216 + $0x19c8] sm:$0xff]
        %v1477 = vld [vmem:[%s216 + $0x19d0] sm:$0xff]
        %v1478 = vld [vmem:[%s216 + $0x19d8] sm:$0xff]
        %v1479 = vld [vmem:[%s216 + $0x19e0] sm:$0xff]
        %v1480 = vld [vmem:[%s216 + $0x19e8] sm:$0xff]
        %v1481 = vld [vmem:[%s216 + $0x19f0] sm:$0xff]
        %v1482 = vld [vmem:[%s216 + $0x19f8] sm:$0xff]
        %v1483 = vld [vmem:[%s216 + $0x1a00] sm:$0xff]
        %v1484 = vld [vmem:[%s216 + $0x1a08] sm:$0xff]
        %v1485 = vld [vmem:[%s216 + $0x1a10] sm:$0xff]
        %v1486 = vld [vmem:[%s216 + $0x1a18] sm:$0xff]
        %v1487 = vld [vmem:[%s216 + $0x1a20] sm:$0xff]
        %v1488 = vld [vmem:[%s216 + $0x1a28] sm:$0xff]
        %v1489 = vld [vmem:[%s216 + $0x1a30] sm:$0xff]
        %v1490 = vld [vmem:[%s216 + $0x1a38] sm:$0xff]
        %v1491 = vld [vmem:[%s216 + $0x1a40] sm:$0xff]
        %v1492 = vld [vmem:[%s216 + $0x1a48] sm:$0xff]
        %v1493 = vld [vmem:[%s216 + $0x1a50] sm:$0xff]
        %v1494 = vld [vmem:[%s216 + $0x1a58] sm:$0xff]
        %v1495 = vld [vmem:[%s216 + $0x1a60] sm:$0xff]
        %v1496 = vld [vmem:[%s216 + $0x1a68] sm:$0xff]
        %v1497 = vld [vmem:[%s216 + $0x1a70] sm:$0xff]
        %v1498 = vld [vmem:[%s216 + $0x1a78] sm:$0xff]
        %v1499 = vld [vmem:[%s216 + $0x1a80] sm:$0xff]
        %v1500 = vld [vmem:[%s216 + $0x1a88] sm:$0xff]
        %v1501 = vld [vmem:[%s216 + $0x1a90] sm:$0xff]
        %v1502 = vld [vmem:[%s216 + $0x1a98] sm:$0xff]
        %v1503 = vld [vmem:[%s216 + $0x1aa0] sm:$0xff]
        %v1504 = vld [vmem:[%s216 + $0x1aa8] sm:$0xff]
        %v1505 = vld [vmem:[%s216 + $0x1ab0] sm:$0xff]
        %v1506 = vld [vmem:[%s216 + $0x1ab8] sm:$0xff]
        %v1507 = vld [vmem:[%s216 + $0x1ac0] sm:$0xff]
        %v1508 = vld [vmem:[%s216 + $0x1ac8] sm:$0xff]
        %v1509 = vld [vmem:[%s216 + $0x1ad0] sm:$0xff]
        %v1510 = vld [vmem:[%s216 + $0x1ad8] sm:$0xff]
        %v1511 = vld [vmem:[%s216 + $0x1ae0] sm:$0xff]
        %v1512 = vld [vmem:[%s216 + $0x1ae8] sm:$0xff]
        %v1513 = vld [vmem:[%s216 + $0x1af0] sm:$0xff]
        %v1514 = vld [vmem:[%s216 + $0x1af8] sm:$0xff]
        %v1515 = vld [vmem:[%s216 + $0x1b00] sm:$0xff]
        %v1516 = vld [vmem:[%s216 + $0x1b08] sm:$0xff]
        %v1517 = vld [vmem:[%s216 + $0x1b10] sm:$0xff]
        %v1518 = vld [vmem:[%s216 + $0x1b18] sm:$0xff]
        %v1519 = vld [vmem:[%s216 + $0x1b20] sm:$0xff]
        %v1520 = vld [vmem:[%s216 + $0x1b28] sm:$0xff]
        %v1521 = vld [vmem:[%s216 + $0x1b30] sm:$0xff]
        %v1522 = vld [vmem:[%s216 + $0x1b38] sm:$0xff]
        %v1523 = vld [vmem:[%s216 + $0x1b40] sm:$0xff]
        %v1524 = vld [vmem:[%s216 + $0x1b48] sm:$0xff]
        %v1525 = vld [vmem:[%s216 + $0x1b50] sm:$0xff]
        %v1526 = vld [vmem:[%s216 + $0x1b58] sm:$0xff]
        %v1527 = vld [vmem:[%s216 + $0x1b60] sm:$0xff]
        %v1528 = vld [vmem:[%s216 + $0x1b68] sm:$0xff]
        %v1529 = vld [vmem:[%s216 + $0x1b70] sm:$0xff]
        %v1530 = vld [vmem:[%s216 + $0x1b78] sm:$0xff]
        %v1531 = vld [vmem:[%s216 + $0x1b80] sm:$0xff]
        %v1532 = vld [vmem:[%s216 + $0x1b88] sm:$0xff]
        %v1533 = vld [vmem:[%s216 + $0x1b90] sm:$0xff]
        %v1534 = vld [vmem:[%s216 + $0x1b98] sm:$0xff]
        %v1535 = vld [vmem:[%s216 + $0x1ba0] sm:$0xff]
        %v1536 = vld [vmem:[%s216 + $0x1ba8] sm:$0xff]
        %v1537 = vld [vmem:[%s216 + $0x1bb0] sm:$0xff]
        %v1538 = vld [vmem:[%s216 + $0x1bb8] sm:$0xff]
        %v1539 = vld [vmem:[%s216 + $0x1bc0] sm:$0xff]
        %v1540 = vld [vmem:[%s216 + $0x1bc8] sm:$0xff]
        %v1541 = vld [vmem:[%s216 + $0x1bd0] sm:$0xff]
        %v1542 = vld [vmem:[%s216 + $0x1bd8] sm:$0xff]
        %v1543 = vld [vmem:[%s216 + $0x1be0] sm:$0xff]
        %v1544 = vld [vmem:[%s216 + $0x1be8] sm:$0xff]
        %v1545 = vld [vmem:[%s216 + $0x1bf0] sm:$0xff]
        %v1546 = vld [vmem:[%s216 + $0x1bf8] sm:$0xff]
        %v1547 = vld [vmem:[%s216 + $0x1c00] sm:$0xff]
        %v1548 = vld [vmem:[%s216 + $0x1c08] sm:$0xff]
        %v1549 = vld [vmem:[%s216 + $0x1c10] sm:$0xff]
        %v1550 = vld [vmem:[%s216 + $0x1c18] sm:$0xff]
        %v1551 = vld [vmem:[%s216 + $0x1c20] sm:$0xff]
        %v1552 = vld [vmem:[%s216 + $0x1c28] sm:$0xff]
        %v1553 = vld [vmem:[%s216 + $0x1c30] sm:$0xff]
        %v1554 = vld [vmem:[%s216 + $0x1c38] sm:$0xff]
        %v1555 = vld [vmem:[%s216 + $0x1c40] sm:$0xff]
        %v1556 = vld [vmem:[%s216 + $0x1c48] sm:$0xff]
        %v1557 = vld [vmem:[%s216 + $0x1c50] sm:$0xff]
        %v1558 = vld [vmem:[%s216 + $0x1c58] sm:$0xff]
        %v1559 = vld [vmem:[%s216 + $0x1c60] sm:$0xff]
        %v1560 = vld [vmem:[%s216 + $0x1c68] sm:$0xff]
        %v1561 = vld [vmem:[%s216 + $0x1c70] sm:$0xff]
        %v1562 = vld [vmem:[%s216 + $0x1c78] sm:$0xff]
        %v1563 = vld [vmem:[%s216 + $0x1c80] sm:$0xff]
        %v1564 = vld [vmem:[%s216 + $0x1c88] sm:$0xff]
        %v1565 = vld [vmem:[%s216 + $0x1c90] sm:$0xff]
        %v1566 = vld [vmem:[%s216 + $0x1c98] sm:$0xff]
        %v1567 = vld [vmem:[%s216 + $0x1ca0] sm:$0xff]
        %v1568 = vld [vmem:[%s216 + $0x1ca8] sm:$0xff]
        %v1569 = vld [vmem:[%s216 + $0x1cb0] sm:$0xff]
        %v1570 = vld [vmem:[%s216 + $0x1cb8] sm:$0xff]
        %v1571 = vld [vmem:[%s216 + $0x1cc0] sm:$0xff]
        %v1572 = vld [vmem:[%s216 + $0x1cc8] sm:$0xff]
        %v1573 = vld [vmem:[%s216 + $0x1cd0] sm:$0xff]
        %v1574 = vld [vmem:[%s216 + $0x1cd8] sm:$0xff]
        %v1575 = vld [vmem:[%s216 + $0x1ce0] sm:$0xff]
        %v1576 = vld [vmem:[%s216 + $0x1ce8] sm:$0xff]
        %v1577 = vld [vmem:[%s216 + $0x1cf0] sm:$0xff]
        %v1578 = vld [vmem:[%s216 + $0x1cf8] sm:$0xff]
        %v1579 = vld [vmem:[%s216 + $0x1d00] sm:$0xff]
        %v1580 = vld [vmem:[%s216 + $0x1d08] sm:$0xff]
        %v1581 = vld [vmem:[%s216 + $0x1d10] sm:$0xff]
        %v1582 = vld [vmem:[%s216 + $0x1d18] sm:$0xff]
        %v1583 = vld [vmem:[%s216 + $0x1d20] sm:$0xff]
        %v1584 = vld [vmem:[%s216 + $0x1d28] sm:$0xff]
        %v1585 = vld [vmem:[%s216 + $0x1d30] sm:$0xff]
        %v1586 = vld [vmem:[%s216 + $0x1d38] sm:$0xff]
        %v1587 = vld [vmem:[%s216 + $0x1d40] sm:$0xff]
        %v1588 = vld [vmem:[%s216 + $0x1d48] sm:$0xff]
        %v1589 = vld [vmem:[%s216 + $0x1d50] sm:$0xff]
        %v1590 = vld [vmem:[%s216 + $0x1d58] sm:$0xff]
        %v1591 = vld [vmem:[%s216 + $0x1d60] sm:$0xff]
        %v1592 = vld [vmem:[%s216 + $0x1d68] sm:$0xff]
        %v1593 = vld [vmem:[%s216 + $0x1d70] sm:$0xff]
        %v1594 = vld [vmem:[%s216 + $0x1d78] sm:$0xff]
        %v1595 = vld [vmem:[%s216 + $0x1d80] sm:$0xff]
        %v1596 = vld [vmem:[%s216 + $0x1d88] sm:$0xff]
        %v1597 = vld [vmem:[%s216 + $0x1d90] sm:$0xff]
        %v1598 = vld [vmem:[%s216 + $0x1d98] sm:$0xff]
        %v1599 = vld [vmem:[%s216 + $0x1da0] sm:$0xff]
        %v1600 = vld [vmem:[%s216 + $0x1da8] sm:$0xff]
        %v1601 = vld [vmem:[%s216 + $0x1db0] sm:$0xff]
        %v1602 = vld [vmem:[%s216 + $0x1db8] sm:$0xff]
        %v1603 = vld [vmem:[%s216 + $0x1dc0] sm:$0xff]
        %v1604 = vld [vmem:[%s216 + $0x1dc8] sm:$0xff]
        %v1605 = vld [vmem:[%s216 + $0x1dd0] sm:$0xff]
        %v1606 = vld [vmem:[%s216 + $0x1dd8] sm:$0xff]
        %v1607 = vld [vmem:[%s216 + $0x1de0] sm:$0xff]
        %v1608 = vld [vmem:[%s216 + $0x1de8] sm:$0xff]
        %v1609 = vld [vmem:[%s216 + $0x1df0] sm:$0xff]
        %v1610 = vld [vmem:[%s216 + $0x1df8] sm:$0xff]
        %v1611 = vld [vmem:[%s216 + $0x1e00] sm:$0xff]
        %v1612 = vld [vmem:[%s216 + $0x1e08] sm:$0xff]
        %v1613 = vld [vmem:[%s216 + $0x1e10] sm:$0xff]
        %v1614 = vld [vmem:[%s216 + $0x1e18] sm:$0xff]
        %v1615 = vld [vmem:[%s216 + $0x1e20] sm:$0xff]
        %v1616 = vld [vmem:[%s216 + $0x1e28] sm:$0xff]
        %v1617 = vld [vmem:[%s216 + $0x1e30] sm:$0xff]
        %v1618 = vld [vmem:[%s216 + $0x1e38] sm:$0xff]
        %v1619 = vld [vmem:[%s216 + $0x1e40] sm:$0xff]
        %v1620 = vld [vmem:[%s216 + $0x1e48] sm:$0xff]
        %v1621 = vld [vmem:[%s216 + $0x1e50] sm:$0xff]
        %v1622 = vld [vmem:[%s216 + $0x1e58] sm:$0xff]
        %v1623 = vld [vmem:[%s216 + $0x1e60] sm:$0xff]
        %v1624 = vld [vmem:[%s216 + $0x1e68] sm:$0xff]
        %v1625 = vld [vmem:[%s216 + $0x1e70] sm:$0xff]
        %v1626 = vld [vmem:[%s216 + $0x1e78] sm:$0xff]
        %v1627 = vld [vmem:[%s216 + $0x1e80] sm:$0xff]
        %v1628 = vld [vmem:[%s216 + $0x1e88] sm:$0xff]
        %v1629 = vld [vmem:[%s216 + $0x1e90] sm:$0xff]
        %v1630 = vld [vmem:[%s216 + $0x1e98] sm:$0xff]
        %v1631 = vld [vmem:[%s216 + $0x1ea0] sm:$0xff]
        %v1632 = vld [vmem:[%s216 + $0x1ea8] sm:$0xff]
        %v1633 = vld [vmem:[%s216 + $0x1eb0] sm:$0xff]
        %v1634 = vld [vmem:[%s216 + $0x1eb8] sm:$0xff]
        %v1635 = vld [vmem:[%s216 + $0x1ec0] sm:$0xff]
        %v1636 = vld [vmem:[%s216 + $0x1ec8] sm:$0xff]
        %v1637 = vld [vmem:[%s216 + $0x1ed0] sm:$0xff]
        %v1638 = vld [vmem:[%s216 + $0x1ed8] sm:$0xff]
        %v1639 = vld [vmem:[%s216 + $0x1ee0] sm:$0xff]
        %v1640 = vld [vmem:[%s216 + $0x1ee8] sm:$0xff]
        %v1641 = vld [vmem:[%s216 + $0x1ef0] sm:$0xff]
        %v1642 = vld [vmem:[%s216 + $0x1ef8] sm:$0xff]
        %v1643 = vld [vmem:[%s216 + $0x1f00] sm:$0xff]
        %v1644 = vld [vmem:[%s216 + $0x1f08] sm:$0xff]
        %v1645 = vld [vmem:[%s216 + $0x1f10] sm:$0xff]
        %v1646 = vld [vmem:[%s216 + $0x1f18] sm:$0xff]
        %v1647 = vld [vmem:[%s216 + $0x1f20] sm:$0xff]
        %v1648 = vld [vmem:[%s216 + $0x1f28] sm:$0xff]
        %v1649 = vld [vmem:[%s216 + $0x1f30] sm:$0xff]
        %v1650 = vld [vmem:[%s216 + $0x1f38] sm:$0xff]
        %v1651 = vld [vmem:[%s216 + $0x1f40] sm:$0xff]
        %v1652 = vld [vmem:[%s216 + $0x1f48] sm:$0xff]
        %v1653 = vld [vmem:[%s216 + $0x1f50] sm:$0xff]
        %v1654 = vld [vmem:[%s216 + $0x1f58] sm:$0xff]
        %v1655 = vld [vmem:[%s216 + $0x1f60] sm:$0xff]
        %v1656 = vld [vmem:[%s216 + $0x1f68] sm:$0xff]
        %v1657 = vld [vmem:[%s216 + $0x1f70] sm:$0xff]
        %v1658 = vld [vmem:[%s216 + $0x1f78] sm:$0xff]
        %v1659 = vld [vmem:[%s216 + $0x1f80] sm:$0xff]
        %v1660 = vld [vmem:[%s216 + $0x1f88] sm:$0xff]
        %v1661 = vld [vmem:[%s216 + $0x1f90] sm:$0xff]
        %v1662 = vld [vmem:[%s216 + $0x1f98] sm:$0xff]
        %v1663 = vld [vmem:[%s216 + $0x1fa0] sm:$0xff]
        %v1664 = vld [vmem:[%s216 + $0x1fa8] sm:$0xff]
        %v1665 = vld [vmem:[%s216 + $0x1fb0] sm:$0xff]
        %v1666 = vld [vmem:[%s216 + $0x1fb8] sm:$0xff]
        %v1667 = vld [vmem:[%s216 + $0x1fc0] sm:$0xff]
        %v1668 = vld [vmem:[%s216 + $0x1fc8] sm:$0xff]
        %v1669 = vld [vmem:[%s216 + $0x1fd0] sm:$0xff]
        %v1670 = vld [vmem:[%s216 + $0x1fd8] sm:$0xff]
        %v1671 = vld [vmem:[%s216 + $0x1fe0] sm:$0xff]
        %v1672 = vld [vmem:[%s216 + $0x1fe8] sm:$0xff]
        %v1673 = vld [vmem:[%s216 + $0x1ff0] sm:$0xff]
        %v1674 = vld [vmem:[%s216 + $0x1ff8] sm:$0xff]
        %v1675 = vld [vmem:[%s216 + $0x2000] sm:$0xff]
        %v1676 = vld [vmem:[%s216 + $0x2008] sm:$0xff]
        %v1677 = vld [vmem:[%s216 + $0x2010] sm:$0xff]
        %v1678 = vld [vmem:[%s216 + $0x2018] sm:$0xff]
        %v1679 = vld [vmem:[%s216 + $0x2020] sm:$0xff]
        %v1680 = vld [vmem:[%s216 + $0x2028] sm:$0xff]
        %v1681 = vld [vmem:[%s216 + $0x2030] sm:$0xff]
        %v1682 = vld [vmem:[%s216 + $0x2038] sm:$0xff]
        %v1683 = vld [vmem:[%s216 + $0x2040] sm:$0xff]
        %v1684 = vld [vmem:[%s216 + $0x2048] sm:$0xff]
        %v1685 = vld [vmem:[%s216 + $0x2050] sm:$0xff]
        %v1686 = vld [vmem:[%s216 + $0x2058] sm:$0xff]
        %v1687 = vld [vmem:[%s216 + $0x2060] sm:$0xff]
        %v1688 = vld [vmem:[%s216 + $0x2068] sm:$0xff]
        %v1689 = vld [vmem:[%s216 + $0x2070] sm:$0xff]
        %v1690 = vld [vmem:[%s216 + $0x2078] sm:$0xff]
        %v1691 = vld [vmem:[%s216 + $0x2080] sm:$0xff]
        %v1692 = vld [vmem:[%s216 + $0x2088] sm:$0xff]
        %v1693 = vld [vmem:[%s216 + $0x2090] sm:$0xff]
        %v1694 = vld [vmem:[%s216 + $0x2098] sm:$0xff]
        %v1695 = vld [vmem:[%s216 + $0x20a0] sm:$0xff]
        %v1696 = vld [vmem:[%s216 + $0x20a8] sm:$0xff]
        %v1697 = vld [vmem:[%s216 + $0x20b0] sm:$0xff]
        %v1698 = vld [vmem:[%s216 + $0x20b8] sm:$0xff]
        %v1699 = vld [vmem:[%s216 + $0x20c0] sm:$0xff]
        %v1700 = vld [vmem:[%s216 + $0x20c8] sm:$0xff]
        %v1701 = vld [vmem:[%s216 + $0x20d0] sm:$0xff]
        %v1702 = vld [vmem:[%s216 + $0x20d8] sm:$0xff]
        %v1703 = vld [vmem:[%s216 + $0x20e0] sm:$0xff]
        %v1704 = vld [vmem:[%s216 + $0x20e8] sm:$0xff]
        %v1705 = vld [vmem:[%s216 + $0x20f0] sm:$0xff]
        %v1706 = vld [vmem:[%s216 + $0x20f8] sm:$0xff]
        %v1707 = vld [vmem:[%s216 + $0x2100] sm:$0xff]
        %v1708 = vld [vmem:[%s216 + $0x2108] sm:$0xff]
        %v1709 = vld [vmem:[%s216 + $0x2110] sm:$0xff]
        %v1710 = vld [vmem:[%s216 + $0x2118] sm:$0xff]
        %v1711 = vld [vmem:[%s216 + $0x2120] sm:$0xff]
        %v1712 = vld [vmem:[%s216 + $0x2128] sm:$0xff]
        %v1713 = vld [vmem:[%s216 + $0x2130] sm:$0xff]
        %v1714 = vld [vmem:[%s216 + $0x2138] sm:$0xff]
        %v1715 = vld [vmem:[%s216 + $0x2140] sm:$0xff]
        %v1716 = vld [vmem:[%s216 + $0x2148] sm:$0xff]
        %v1717 = vld [vmem:[%s216 + $0x2150] sm:$0xff]
        %v1718 = vld [vmem:[%s216 + $0x2158] sm:$0xff]
        %v1719 = vld [vmem:[%s216 + $0x2160] sm:$0xff]
        %v1720 = vld [vmem:[%s216 + $0x2168] sm:$0xff]
        %v1721 = vld [vmem:[%s216 + $0x2170] sm:$0xff]
        %v1722 = vld [vmem:[%s216 + $0x2178] sm:$0xff]
        %v1723 = vld [vmem:[%s216 + $0x2180] sm:$0xff]
        %v1724 = vld [vmem:[%s216 + $0x2188] sm:$0xff]
        %v1725 = vld [vmem:[%s216 + $0x2190] sm:$0xff]
        %v1726 = vld [vmem:[%s216 + $0x2198] sm:$0xff]
        %v1727 = vld [vmem:[%s216 + $0x21a0] sm:$0xff]
        %v1728 = vld [vmem:[%s216 + $0x21a8] sm:$0xff]
        %v1729 = vld [vmem:[%s216 + $0x21b0] sm:$0xff]
        %v1730 = vld [vmem:[%s216 + $0x21b8] sm:$0xff]
        %v1731 = vld [vmem:[%s216 + $0x21c0] sm:$0xff]
        %v1732 = vld [vmem:[%s216 + $0x21c8] sm:$0xff]
        %v1733 = vld [vmem:[%s216 + $0x21d0] sm:$0xff]
        %v1734 = vld [vmem:[%s216 + $0x21d8] sm:$0xff]
        %v1735 = vld [vmem:[%s216 + $0x21e0] sm:$0xff]
        %v1736 = vld [vmem:[%s216 + $0x21e8] sm:$0xff]
        %v1737 = vld [vmem:[%s216 + $0x21f0] sm:$0xff]
        %v1738 = vld [vmem:[%s216 + $0x21f8] sm:$0xff]
        %v1739 = vld [vmem:[%s216 + $0x2200] sm:$0xff]
        %v1740 = vld [vmem:[%s216 + $0x2208] sm:$0xff]
        %v1741 = vld [vmem:[%s216 + $0x2210] sm:$0xff]
        %v1742 = vld [vmem:[%s216 + $0x2218] sm:$0xff]
        %v1743 = vld [vmem:[%s216 + $0x2220] sm:$0xff]
        %v1744 = vld [vmem:[%s216 + $0x2228] sm:$0xff]
        %v1745 = vld [vmem:[%s216 + $0x2230] sm:$0xff]
        %v1746 = vld [vmem:[%s216 + $0x2238] sm:$0xff]
        %v1747 = vld [vmem:[%s216 + $0x2240] sm:$0xff]
        %v1748 = vld [vmem:[%s216 + $0x2248] sm:$0xff]
        %v1749 = vld [vmem:[%s216 + $0x2250] sm:$0xff]
        %v1750 = vld [vmem:[%s216 + $0x2258] sm:$0xff]
        %v1751 = vld [vmem:[%s216 + $0x2260] sm:$0xff]
        %v1752 = vld [vmem:[%s216 + $0x2268] sm:$0xff]
        %v1753 = vld [vmem:[%s216 + $0x2270] sm:$0xff]
        %v1754 = vld [vmem:[%s216 + $0x2278] sm:$0xff]
        %v1755 = vld [vmem:[%s216 + $0x2280] sm:$0xff]
        %v1756 = vld [vmem:[%s216 + $0x2288] sm:$0xff]
        %v1757 = vld [vmem:[%s216 + $0x2290] sm:$0xff]
        %v1758 = vld [vmem:[%s216 + $0x2298] sm:$0xff]
        %v1759 = vld [vmem:[%s216 + $0x22a0] sm:$0xff]
        %v1760 = vld [vmem:[%s216 + $0x22a8] sm:$0xff]
        %v1761 = vld [vmem:[%s216 + $0x22b0] sm:$0xff]
        %v1762 = vld [vmem:[%s216 + $0x22b8] sm:$0xff]
        %v1763 = vld [vmem:[%s216 + $0x22c0] sm:$0xff]
        %v1764 = vld [vmem:[%s216 + $0x22c8] sm:$0xff]
        %v1765 = vld [vmem:[%s216 + $0x22d0] sm:$0xff]
        %v1766 = vld [vmem:[%s216 + $0x22d8] sm:$0xff]
        %v1767 = vld [vmem:[%s216 + $0x22e0] sm:$0xff]
        %v1768 = vld [vmem:[%s216 + $0x22e8] sm:$0xff]
        %v1769 = vld [vmem:[%s216 + $0x22f0] sm:$0xff]
        %v1770 = vld [vmem:[%s216 + $0x22f8] sm:$0xff]
        %v1771 = vld [vmem:[%s216 + $0x2300] sm:$0xff]
        %v1772 = vld [vmem:[%s216 + $0x2308] sm:$0xff]
        %v1773 = vld [vmem:[%s216 + $0x2310] sm:$0xff]
        %v1774 = vld [vmem:[%s216 + $0x2318] sm:$0xff]
        %v1775 = vld [vmem:[%s216 + $0x2320] sm:$0xff]
        %v1776 = vld [vmem:[%s216 + $0x2328] sm:$0xff]
        %v1777 = vld [vmem:[%s216 + $0x2330] sm:$0xff]
        %v1778 = vld [vmem:[%s216 + $0x2338] sm:$0xff]
        %v1779 = vld [vmem:[%s216 + $0x2340] sm:$0xff]
        %v1780 = vld [vmem:[%s216 + $0x2348] sm:$0xff]
        %v1781 = vld [vmem:[%s216 + $0x2350] sm:$0xff]
        %v1782 = vld [vmem:[%s216 + $0x2358] sm:$0xff]
        %v1783 = vld [vmem:[%s216 + $0x2360] sm:$0xff]
        %v1784 = vld [vmem:[%s216 + $0x2368] sm:$0xff]
        %v1785 = vld [vmem:[%s216 + $0x2370] sm:$0xff]
        %v1786 = vld [vmem:[%s216 + $0x2378] sm:$0xff]
        %v1787 = vld [vmem:[%s216 + $0x2380] sm:$0xff]
        %v1788 = vld [vmem:[%s216 + $0x2388] sm:$0xff]
        %v1789 = vld [vmem:[%s216 + $0x2390] sm:$0xff]
        %v1790 = vld [vmem:[%s216 + $0x2398] sm:$0xff]
        %v1791 = vld [vmem:[%s216 + $0x23a0] sm:$0xff]
        %v1792 = vld [vmem:[%s216 + $0x23a8] sm:$0xff]
        %v1793 = vld [vmem:[%s216 + $0x23b0] sm:$0xff]
        %v1794 = vld [vmem:[%s216 + $0x23b8] sm:$0xff]
        %v1795 = vld [vmem:[%s216 + $0x23c0] sm:$0xff]
        %v1796 = vld [vmem:[%s216 + $0x23c8] sm:$0xff]
        %v1797 = vld [vmem:[%s216 + $0x23d0] sm:$0xff]
        %v1798 = vld [vmem:[%s216 + $0x23d8] sm:$0xff]
        %v1799 = vld [vmem:[%s216 + $0x23e0] sm:$0xff]
        %v1800 = vld [vmem:[%s216 + $0x23e8] sm:$0xff]
        %v1801 = vld [vmem:[%s216 + $0x23f0] sm:$0xff]
        %v1802 = vld [vmem:[%s216 + $0x23f8] sm:$0xff]
        %v1803 = vld [vmem:[%s216 + $0x2400] sm:$0xff]
        %v1804 = vld [vmem:[%s216 + $0x2408] sm:$0xff]
        %v1805 = vld [vmem:[%s216 + $0x2410] sm:$0xff]
        %v1806 = vld [vmem:[%s216 + $0x2418] sm:$0xff]
        %v1807 = vld [vmem:[%s216 + $0x2420] sm:$0xff]
        %v1808 = vld [vmem:[%s216 + $0x2428] sm:$0xff]
        %v1809 = vld [vmem:[%s216 + $0x2430] sm:$0xff]
        %v1810 = vld [vmem:[%s216 + $0x2438] sm:$0xff]
        %v1811 = vld [vmem:[%s216 + $0x2440] sm:$0xff]
        %v1812 = vld [vmem:[%s216 + $0x2448] sm:$0xff]
        %v1813 = vld [vmem:[%s216 + $0x2450] sm:$0xff]
        %v1814 = vld [vmem:[%s216 + $0x2458] sm:$0xff]
        %v1815 = vld [vmem:[%s216 + $0x2460] sm:$0xff]
        %v1816 = vld [vmem:[%s216 + $0x2468] sm:$0xff]
        %v1817 = vld [vmem:[%s216 + $0x2470] sm:$0xff]
        %v1818 = vld [vmem:[%s216 + $0x2478] sm:$0xff]
        %v1819 = vld [vmem:[%s216 + $0x2480] sm:$0xff]
        %v1820 = vld [vmem:[%s216 + $0x2488] sm:$0xff]
        %v1821 = vld [vmem:[%s216 + $0x2490] sm:$0xff]
        %v1822 = vld [vmem:[%s216 + $0x2498] sm:$0xff]
        %v1823 = vld [vmem:[%s216 + $0x24a0] sm:$0xff]
        %v1824 = vld [vmem:[%s216 + $0x24a8] sm:$0xff]
        %v1825 = vld [vmem:[%s216 + $0x24b0] sm:$0xff]
        %v1826 = vld [vmem:[%s216 + $0x24b8] sm:$0xff]
        %v1827 = vld [vmem:[%s216 + $0x24c0] sm:$0xff]
        %v1828 = vld [vmem:[%s216 + $0x24c8] sm:$0xff]
        %v1829 = vld [vmem:[%s216 + $0x24d0] sm:$0xff]
        %v1830 = vld [vmem:[%s216 + $0x24d8] sm:$0xff]
        %v1831 = vld [vmem:[%s216 + $0x24e0] sm:$0xff]
        %v1832 = vld [vmem:[%s216 + $0x24e8] sm:$0xff]
        %v1833 = vld [vmem:[%s216 + $0x24f0] sm:$0xff]
        %v1834 = vld [vmem:[%s216 + $0x24f8] sm:$0xff]
        %v1835 = vld [vmem:[%s216 + $0x2500] sm:$0xff]
        %v1836 = vld [vmem:[%s216 + $0x2508] sm:$0xff]
        %v1837 = vld [vmem:[%s216 + $0x2510] sm:$0xff]
        %v1838 = vld [vmem:[%s216 + $0x2518] sm:$0xff]
        %v1839 = vld [vmem:[%s216 + $0x2520] sm:$0xff]
        %v1840 = vld [vmem:[%s216 + $0x2528] sm:$0xff]
        %v1841 = vld [vmem:[%s216 + $0x2530] sm:$0xff]
        %v1842 = vld [vmem:[%s216 + $0x2538] sm:$0xff]
        %v1843 = vld [vmem:[%s216 + $0x2540] sm:$0xff]
        %v1844 = vld [vmem:[%s216 + $0x2548] sm:$0xff]
        %v1845 = vld [vmem:[%s216 + $0x2550] sm:$0xff]
        %v1846 = vld [vmem:[%s216 + $0x2558] sm:$0xff]
        %v1847 = vld [vmem:[%s216 + $0x2560] sm:$0xff]
        %v1848 = vld [vmem:[%s216 + $0x2568] sm:$0xff]
        %v1849 = vld [vmem:[%s216 + $0x2570] sm:$0xff]
        %v1850 = vld [vmem:[%s216 + $0x2578] sm:$0xff]
        %v1851 = vld [vmem:[%s216 + $0x2580] sm:$0xff]
        %v1852 = vld [vmem:[%s216 + $0x2588] sm:$0xff]
        %v1853 = vld [vmem:[%s216 + $0x2590] sm:$0xff]
        %v1854 = vld [vmem:[%s216 + $0x2598] sm:$0xff]
        %v1855 = vld [vmem:[%s216 + $0x25a0] sm:$0xff]
        %v1856 = vld [vmem:[%s216 + $0x25a8] sm:$0xff]
        %v1857 = vld [vmem:[%s216 + $0x25b0] sm:$0xff]
        %v1858 = vld [vmem:[%s216 + $0x25b8] sm:$0xff]
        %v1859 = vld [vmem:[%s216 + $0x25c0] sm:$0xff]
        %v1860 = vld [vmem:[%s216 + $0x25c8] sm:$0xff]
        %v1861 = vld [vmem:[%s216 + $0x25d0] sm:$0xff]
        %v1862 = vld [vmem:[%s216 + $0x25d8] sm:$0xff]
        %v1863 = vld [vmem:[%s216 + $0x25e0] sm:$0xff]
        %v1864 = vld [vmem:[%s216 + $0x25e8] sm:$0xff]
        %v1865 = vld [vmem:[%s216 + $0x25f0] sm:$0xff]
        %v1866 = vld [vmem:[%s216 + $0x25f8] sm:$0xff]
        %v1867 = vld [vmem:[%s216 + $0x2600] sm:$0xff]
        %v1868 = vld [vmem:[%s216 + $0x2608] sm:$0xff]
        %v1869 = vld [vmem:[%s216 + $0x2610] sm:$0xff]
        %v1870 = vld [vmem:[%s216 + $0x2618] sm:$0xff]
        %v1871 = vld [vmem:[%s216 + $0x2620] sm:$0xff]
        %v1872 = vld [vmem:[%s216 + $0x2628] sm:$0xff]
        %v1873 = vld [vmem:[%s216 + $0x2630] sm:$0xff]
        %v1874 = vld [vmem:[%s216 + $0x2638] sm:$0xff]
        %v1875 = vld [vmem:[%s216 + $0x2640] sm:$0xff]
        %v1876 = vld [vmem:[%s216 + $0x2648] sm:$0xff]
        %v1877 = vld [vmem:[%s216 + $0x2650] sm:$0xff]
        %v1878 = vld [vmem:[%s216 + $0x2658] sm:$0xff]
        %v1879 = vld [vmem:[%s216 + $0x2660] sm:$0xff]
        %v1880 = vld [vmem:[%s216 + $0x2668] sm:$0xff]
        %v1881 = vld [vmem:[%s216 + $0x2670] sm:$0xff]
        %v1882 = vld [vmem:[%s216 + $0x2678] sm:$0xff]
        %v1883 = vld [vmem:[%s216 + $0x2680] sm:$0xff]
        %v1884 = vld [vmem:[%s216 + $0x2688] sm:$0xff]
        %v1885 = vld [vmem:[%s216 + $0x2690] sm:$0xff]
        %v1886 = vld [vmem:[%s216 + $0x2698] sm:$0xff]
        %v1887 = vld [vmem:[%s216 + $0x26a0] sm:$0xff]
        %v1888 = vld [vmem:[%s216 + $0x26a8] sm:$0xff]
        %v1889 = vld [vmem:[%s216 + $0x26b0] sm:$0xff]
        %v1890 = vld [vmem:[%s216 + $0x26b8] sm:$0xff]
        %v1891 = vld [vmem:[%s216 + $0x26c0] sm:$0xff]
        %v1892 = vld [vmem:[%s216 + $0x26c8] sm:$0xff]
        %v1893 = vld [vmem:[%s216 + $0x26d0] sm:$0xff]
        %v1894 = vld [vmem:[%s216 + $0x26d8] sm:$0xff]
        %v1895 = vld [vmem:[%s216 + $0x26e0] sm:$0xff]
        %v1896 = vld [vmem:[%s216 + $0x26e8] sm:$0xff]
        %v1897 = vld [vmem:[%s216 + $0x26f0] sm:$0xff]
        %v1898 = vld [vmem:[%s216 + $0x26f8] sm:$0xff]
        %v1899 = vld [vmem:[%s216 + $0x2700] sm:$0xff]
        %v1900 = vld [vmem:[%s216 + $0x2708] sm:$0xff]
        %v1901 = vld [vmem:[%s216 + $0x2710] sm:$0xff]
        %v1902 = vld [vmem:[%s216 + $0x2718] sm:$0xff]
        %v1903 = vld [vmem:[%s216 + $0x2720] sm:$0xff]
        %v1904 = vld [vmem:[%s216 + $0x2728] sm:$0xff]
        %v1905 = vld [vmem:[%s216 + $0x2730] sm:$0xff]
        %v1906 = vld [vmem:[%s216 + $0x2738] sm:$0xff]
        %v1907 = vld [vmem:[%s216 + $0x2740] sm:$0xff]
        %v1908 = vld [vmem:[%s216 + $0x2748] sm:$0xff]
        %v1909 = vld [vmem:[%s216 + $0x2750] sm:$0xff]
        %v1910 = vld [vmem:[%s216 + $0x2758] sm:$0xff]
        %v1911 = vld [vmem:[%s216 + $0x2760] sm:$0xff]
        %v1912 = vld [vmem:[%s216 + $0x2768] sm:$0xff]
        %v1913 = vld [vmem:[%s216 + $0x2770] sm:$0xff]
        %v1914 = vld [vmem:[%s216 + $0x2778] sm:$0xff]
        %v1915 = vld [vmem:[%s216 + $0x2780] sm:$0xff]
        %v1916 = vld [vmem:[%s216 + $0x2788] sm:$0xff]
        %v1917 = vld [vmem:[%s216 + $0x2790] sm:$0xff]
        %v1918 = vld [vmem:[%s216 + $0x2798] sm:$0xff]
        %v1919 = vld [vmem:[%s216 + $0x27a0] sm:$0xff]
        %v1920 = vld [vmem:[%s216 + $0x27a8] sm:$0xff]
        %v1921 = vld [vmem:[%s216 + $0x27b0] sm:$0xff]
        %v1922 = vld [vmem:[%s216 + $0x27b8] sm:$0xff]
        %v1923 = vld [vmem:[%s216 + $0x27c0] sm:$0xff]
        %v1924 = vld [vmem:[%s216 + $0x27c8] sm:$0xff]
        %v1925 = vld [vmem:[%s216 + $0x27d0] sm:$0xff]
        %v1926 = vld [vmem:[%s216 + $0x27d8] sm:$0xff]
        %v1927 = vld [vmem:[%s216 + $0x27e0] sm:$0xff]
        %v1928 = vld [vmem:[%s216 + $0x27e8] sm:$0xff]
        %v1929 = vld [vmem:[%s216 + $0x27f0] sm:$0xff]
        %v1930 = vld [vmem:[%s216 + $0x27f8] sm:$0xff]
        %v1931 = vld [vmem:[%s216 + $0x2800] sm:$0xff]
        %v1932 = vld [vmem:[%s216 + $0x2808] sm:$0xff]
        %v1933 = vld [vmem:[%s216 + $0x2810] sm:$0xff]
        %v1934 = vld [vmem:[%s216 + $0x2818] sm:$0xff]
        %v1935 = vld [vmem:[%s216 + $0x2820] sm:$0xff]
        %v1936 = vld [vmem:[%s216 + $0x2828] sm:$0xff]
        %v1937 = vld [vmem:[%s216 + $0x2830] sm:$0xff]
        %v1938 = vld [vmem:[%s216 + $0x2838] sm:$0xff]
        %v1939 = vld [vmem:[%s216 + $0x2840] sm:$0xff]
        %v1940 = vld [vmem:[%s216 + $0x2848] sm:$0xff]
        %v1941 = vld [vmem:[%s216 + $0x2850] sm:$0xff]
        %v1942 = vld [vmem:[%s216 + $0x2858] sm:$0xff]
        %v1943 = vld [vmem:[%s216 + $0x2860] sm:$0xff]
        %v1944 = vld [vmem:[%s216 + $0x2868] sm:$0xff]
        %v1945 = vld [vmem:[%s216 + $0x2870] sm:$0xff]
        %v1946 = vld [vmem:[%s216 + $0x2878] sm:$0xff]
        %v1947 = vld [vmem:[%s216 + $0x2880] sm:$0xff]
        %v1948 = vld [vmem:[%s216 + $0x2888] sm:$0xff]
        %v1949 = vld [vmem:[%s216 + $0x2890] sm:$0xff]
        %v1950 = vld [vmem:[%s216 + $0x2898] sm:$0xff]
        %v1951 = vld [vmem:[%s216 + $0x28a0] sm:$0xff]
        %v1952 = vld [vmem:[%s216 + $0x28a8] sm:$0xff]
        %v1953 = vld [vmem:[%s216 + $0x28b0] sm:$0xff]
        %v1954 = vld [vmem:[%s216 + $0x28b8] sm:$0xff]
        %v1955 = vld [vmem:[%s216 + $0x28c0] sm:$0xff]
        %v1956 = vld [vmem:[%s216 + $0x28c8] sm:$0xff]
        %v1957 = vld [vmem:[%s216 + $0x28d0] sm:$0xff]
        %v1958 = vld [vmem:[%s216 + $0x28d8] sm:$0xff]
        %v1959 = vld [vmem:[%s216 + $0x28e0] sm:$0xff]
        %v1960 = vld [vmem:[%s216 + $0x28e8] sm:$0xff]
        %v1961 = vld [vmem:[%s216 + $0x28f0] sm:$0xff]
        %v1962 = vld [vmem:[%s216 + $0x28f8] sm:$0xff]
        %v1963 = vld [vmem:[%s216 + $0x2900] sm:$0xff]
        %v1964 = vld [vmem:[%s216 + $0x2908] sm:$0xff]
        %v1965 = vld [vmem:[%s216 + $0x2910] sm:$0xff]
        %v1966 = vld [vmem:[%s216 + $0x2918] sm:$0xff]
        %v1967 = vld [vmem:[%s216 + $0x2920] sm:$0xff]
        %v1968 = vld [vmem:[%s216 + $0x2928] sm:$0xff]
        %v1969 = vld [vmem:[%s216 + $0x2930] sm:$0xff]
        %v1970 = vld [vmem:[%s216 + $0x2938] sm:$0xff]
        %v1971 = vld [vmem:[%s216 + $0x2940] sm:$0xff]
        %v1972 = vld [vmem:[%s216 + $0x2948] sm:$0xff]
        %v1973 = vld [vmem:[%s216 + $0x2950] sm:$0xff]
        %v1974 = vld [vmem:[%s216 + $0x2958] sm:$0xff]
        %v1975 = vld [vmem:[%s216 + $0x2960] sm:$0xff]
        %v1976 = vld [vmem:[%s216 + $0x2968] sm:$0xff]
        %v1977 = vld [vmem:[%s216 + $0x2970] sm:$0xff]
        %v1978 = vld [vmem:[%s216 + $0x2978] sm:$0xff]
        %v1979 = vld [vmem:[%s216 + $0x2980] sm:$0xff]
        %v1980 = vld [vmem:[%s216 + $0x2988] sm:$0xff]
        %v1981 = vld [vmem:[%s216 + $0x2990] sm:$0xff]
        %v1982 = vld [vmem:[%s216 + $0x2998] sm:$0xff]
        %v1983 = vld [vmem:[%s216 + $0x29a0] sm:$0xff]
        %v1984 = vld [vmem:[%s216 + $0x29a8] sm:$0xff]
        %v1985 = vld [vmem:[%s216 + $0x29b0] sm:$0xff]
        %v1986 = vld [vmem:[%s216 + $0x29b8] sm:$0xff]
        %v1987 = vld [vmem:[%s216 + $0x29c0] sm:$0xff]
        %v1988 = vld [vmem:[%s216 + $0x29c8] sm:$0xff]
        %v1989 = vld [vmem:[%s216 + $0x29d0] sm:$0xff]
        %v1990 = vld [vmem:[%s216 + $0x29d8] sm:$0xff]
        %v1991 = vld [vmem:[%s216 + $0x29e0] sm:$0xff]
        %v1992 = vld [vmem:[%s216 + $0x29e8] sm:$0xff]
        %v1993 = vld [vmem:[%s216 + $0x29f0] sm:$0xff]
        %v1994 = vld [vmem:[%s216 + $0x29f8] sm:$0xff]
        %v1995 = vld [vmem:[%s216 + $0x2a00] sm:$0xff]
        %v1996 = vld [vmem:[%s216 + $0x2a08] sm:$0xff]
        %v1997 = vld [vmem:[%s216 + $0x2a10] sm:$0xff]
        %v1998 = vld [vmem:[%s216 + $0x2a18] sm:$0xff]
        %v1999 = vld [vmem:[%s216 + $0x2a20] sm:$0xff]
        %v2000 = vld [vmem:[%s216 + $0x2a28] sm:$0xff]
        %v2001 = vld [vmem:[%s216 + $0x2a30] sm:$0xff]
        %v2002 = vld [vmem:[%s216 + $0x2a38] sm:$0xff]
        %v2003 = vld [vmem:[%s216 + $0x2a40] sm:$0xff]
        %v2004 = vld [vmem:[%s216 + $0x2a48] sm:$0xff]
        %v2005 = vld [vmem:[%s216 + $0x2a50] sm:$0xff]
        %v2006 = vld [vmem:[%s216 + $0x2a58] sm:$0xff]
        %v2007 = vld [vmem:[%s216 + $0x2a60] sm:$0xff]
        %v2008 = vld [vmem:[%s216 + $0x2a68] sm:$0xff]
        %v2009 = vld [vmem:[%s216 + $0x2a70] sm:$0xff]
        %v2010 = vld [vmem:[%s216 + $0x2a78] sm:$0xff]
        %v2011 = vld [vmem:[%s216 + $0x2a80] sm:$0xff]
        %v2012 = vld [vmem:[%s216 + $0x2a88] sm:$0xff]
        %v2013 = vld [vmem:[%s216 + $0x2a90] sm:$0xff]
        %v2014 = vld [vmem:[%s216 + $0x2a98] sm:$0xff]
        %v2015 = vld [vmem:[%s216 + $0x2aa0] sm:$0xff]
        %v2016 = vld [vmem:[%s216 + $0x2aa8] sm:$0xff]
        %v2017 = vld [vmem:[%s216 + $0x2ab0] sm:$0xff]
        %v2018 = vld [vmem:[%s216 + $0x2ab8] sm:$0xff]
        %v2019 = vld [vmem:[%s216 + $0x2ac0] sm:$0xff]
        %v2020 = vld [vmem:[%s216 + $0x2ac8] sm:$0xff]
        %v2021 = vld [vmem:[%s216 + $0x2ad0] sm:$0xff]
        %v2022 = vld [vmem:[%s216 + $0x2ad8] sm:$0xff]
        %v2023 = vld [vmem:[%s216 + $0x2ae0] sm:$0xff]
        %v2024 = vld [vmem:[%s216 + $0x2ae8] sm:$0xff]
        %v2025 = vld [vmem:[%s216 + $0x2af0] sm:$0xff]
        %v2026 = vld [vmem:[%s216 + $0x2af8] sm:$0xff]
        %v2027 = vld [vmem:[%s216 + $0x2b00] sm:$0xff]
        %v2028 = vld [vmem:[%s216 + $0x2b08] sm:$0xff]
        %v2029 = vld [vmem:[%s216 + $0x2b10] sm:$0xff]
        %v2030 = vld [vmem:[%s216 + $0x2b18] sm:$0xff]
        %v2031 = vld [vmem:[%s216 + $0x2b20] sm:$0xff]
        %v2032 = vld [vmem:[%s216 + $0x2b28] sm:$0xff]
        %v2033 = vld [vmem:[%s216 + $0x2b30] sm:$0xff]
        %v2034 = vld [vmem:[%s216 + $0x2b38] sm:$0xff]
        %v2035 = vld [vmem:[%s216 + $0x2b40] sm:$0xff]
        %v2036 = vld [vmem:[%s216 + $0x2b48] sm:$0xff]
        %v2037 = vld [vmem:[%s216 + $0x2b50] sm:$0xff]
        %v2038 = vld [vmem:[%s216 + $0x2b58] sm:$0xff]
        %v2039 = vld [vmem:[%s216 + $0x2b60] sm:$0xff]
        %v2040 = vld [vmem:[%s216 + $0x2b68] sm:$0xff]
        %v2041 = vld [vmem:[%s216 + $0x2b70] sm:$0xff]
        %v2042 = vld [vmem:[%s216 + $0x2b78] sm:$0xff]
        %v2043 = vld [vmem:[%s216 + $0x2b80] sm:$0xff]
        %v2044 = vld [vmem:[%s216 + $0x2b88] sm:$0xff]
        %v2045 = vld [vmem:[%s216 + $0x2b90] sm:$0xff]
        %v2046 = vld [vmem:[%s216 + $0x2b98] sm:$0xff]
        %v2047 = vld [vmem:[%s216 + $0x2ba0] sm:$0xff]
        %v2048 = vld [vmem:[%s216 + $0x2ba8] sm:$0xff]
        %v2049 = vld [vmem:[%s216 + $0x2bb0] sm:$0xff]
        %v2050 = vld [vmem:[%s216 + $0x2bb8] sm:$0xff]
        %v2051 = vld [vmem:[%s216 + $0x2bc0] sm:$0xff]
        %v2052 = vld [vmem:[%s216 + $0x2bc8] sm:$0xff]
        %v2053 = vld [vmem:[%s216 + $0x2bd0] sm:$0xff]
        %v2054 = vld [vmem:[%s216 + $0x2bd8] sm:$0xff]
        %v2055 = vld [vmem:[%s216 + $0x2be0] sm:$0xff]
        %v2056 = vld [vmem:[%s216 + $0x2be8] sm:$0xff]
        %v2057 = vld [vmem:[%s216 + $0x2bf0] sm:$0xff]
        %v2058 = vld [vmem:[%s216 + $0x2bf8] sm:$0xff]
        %v2059 = vld [vmem:[%s216 + $0x2c00] sm:$0xff]
        %v2060 = vld [vmem:[%s216 + $0x2c08] sm:$0xff]
        %v2061 = vld [vmem:[%s216 + $0x2c10] sm:$0xff]
        %v2062 = vld [vmem:[%s216 + $0x2c18] sm:$0xff]
        %v2063 = vld [vmem:[%s216 + $0x2c20] sm:$0xff]
        %v2064 = vld [vmem:[%s216 + $0x2c28] sm:$0xff]
        %v2065 = vld [vmem:[%s216 + $0x2c30] sm:$0xff]
        %v2066 = vld [vmem:[%s216 + $0x2c38] sm:$0xff]
        %v2067 = vld [vmem:[%s216 + $0x2c40] sm:$0xff]
        %v2068 = vld [vmem:[%s216 + $0x2c48] sm:$0xff]
        %v2069 = vld [vmem:[%s216 + $0x2c50] sm:$0xff]
        %v2070 = vld [vmem:[%s216 + $0x2c58] sm:$0xff]
        %v2071 = vld [vmem:[%s216 + $0x2c60] sm:$0xff]
        %v2072 = vld [vmem:[%s216 + $0x2c68] sm:$0xff]
        %v2073 = vld [vmem:[%s216 + $0x2c70] sm:$0xff]
        %v2074 = vld [vmem:[%s216 + $0x2c78] sm:$0xff]
        %v2075 = vld [vmem:[%s216 + $0x2c80] sm:$0xff]
        %v2076 = vld [vmem:[%s216 + $0x2c88] sm:$0xff]
        %v2077 = vld [vmem:[%s216 + $0x2c90] sm:$0xff]
        %v2078 = vld [vmem:[%s216 + $0x2c98] sm:$0xff]
        %v2079 = vld [vmem:[%s216 + $0x2ca0] sm:$0xff]
        %v2080 = vld [vmem:[%s216 + $0x2ca8] sm:$0xff]
        %v2081 = vld [vmem:[%s216 + $0x2cb0] sm:$0xff]
        %v2082 = vld [vmem:[%s216 + $0x2cb8] sm:$0xff]
        %v2083 = vld [vmem:[%s216 + $0x2cc0] sm:$0xff]
        %v2084 = vld [vmem:[%s216 + $0x2cc8] sm:$0xff]
        %v2085 = vld [vmem:[%s216 + $0x2cd0] sm:$0xff]
        %v2086 = vld [vmem:[%s216 + $0x2cd8] sm:$0xff]
        %v2087 = vld [vmem:[%s216 + $0x2ce0] sm:$0xff]
        %v2088 = vld [vmem:[%s216 + $0x2ce8] sm:$0xff]
        %v2089 = vld [vmem:[%s216 + $0x2cf0] sm:$0xff]
        %v2090 = vld [vmem:[%s216 + $0x2cf8] sm:$0xff]
        %v2091 = vld [vmem:[%s216 + $0x2d00] sm:$0xff]
        %v2092 = vld [vmem:[%s216 + $0x2d08] sm:$0xff]
        %v2093 = vld [vmem:[%s216 + $0x2d10] sm:$0xff]
        %v2094 = vld [vmem:[%s216 + $0x2d18] sm:$0xff]
        %v2095 = vld [vmem:[%s216 + $0x2d20] sm:$0xff]
        %v2096 = vld [vmem:[%s216 + $0x2d28] sm:$0xff]
        %v2097 = vld [vmem:[%s216 + $0x2d30] sm:$0xff]
        %v2098 = vld [vmem:[%s216 + $0x2d38] sm:$0xff]
        %v2099 = vld [vmem:[%s216 + $0x2d40] sm:$0xff]
        %v2100 = vld [vmem:[%s216 + $0x2d48] sm:$0xff]
        %v2101 = vld [vmem:[%s216 + $0x2d50] sm:$0xff]
        %v2102 = vld [vmem:[%s216 + $0x2d58] sm:$0xff]
        %v2103 = vld [vmem:[%s216 + $0x2d60] sm:$0xff]
        %v2104 = vld [vmem:[%s216 + $0x2d68] sm:$0xff]
        %v2105 = vld [vmem:[%s216 + $0x2d70] sm:$0xff]
        %v2106 = vld [vmem:[%s216 + $0x2d78] sm:$0xff]
        %v2107 = vld [vmem:[%s216 + $0x2d80] sm:$0xff]
        %v2108 = vld [vmem:[%s216 + $0x2d88] sm:$0xff]
        %v2109 = vld [vmem:[%s216 + $0x2d90] sm:$0xff]
        %v2110 = vld [vmem:[%s216 + $0x2d98] sm:$0xff]
        %v2111 = vld [vmem:[%s216 + $0x2da0] sm:$0xff]
        %v2112 = vld [vmem:[%s216 + $0x2da8] sm:$0xff]
        %v2113 = vld [vmem:[%s216 + $0x2db0] sm:$0xff]
        %v2114 = vld [vmem:[%s216 + $0x2db8] sm:$0xff]
        %v2115 = vld [vmem:[%s216 + $0x2dc0] sm:$0xff]
        %v2116 = vld [vmem:[%s216 + $0x2dc8] sm:$0xff]
        %v2117 = vld [vmem:[%s216 + $0x2dd0] sm:$0xff]
        %v2118 = vld [vmem:[%s216 + $0x2dd8] sm:$0xff]
        %v2119 = vld [vmem:[%s216 + $0x2de0] sm:$0xff]
        %v2120 = vld [vmem:[%s216 + $0x2de8] sm:$0xff]
        %v2121 = vld [vmem:[%s216 + $0x2df0] sm:$0xff]
        %v2122 = vld [vmem:[%s216 + $0x2df8] sm:$0xff]
        %v2123 = vld [vmem:[%s216 + $0x2e00] sm:$0xff]
        %v2124 = vld [vmem:[%s216 + $0x2e08] sm:$0xff]
        %v2125 = vld [vmem:[%s216 + $0x2e10] sm:$0xff]
        %v2126 = vld [vmem:[%s216 + $0x2e18] sm:$0xff]
        %v2127 = vld [vmem:[%s216 + $0x2e20] sm:$0xff]
        %v2128 = vld [vmem:[%s216 + $0x2e28] sm:$0xff]
        %v2129 = vld [vmem:[%s216 + $0x2e30] sm:$0xff]
        %v2130 = vld [vmem:[%s216 + $0x2e38] sm:$0xff]
        %v2131 = vld [vmem:[%s216 + $0x2e40] sm:$0xff]
        %v2132 = vld [vmem:[%s216 + $0x2e48] sm:$0xff]
        %v2133 = vld [vmem:[%s216 + $0x2e50] sm:$0xff]
        %v2134 = vld [vmem:[%s216 + $0x2e58] sm:$0xff]
        %v2135 = vld [vmem:[%s216 + $0x2e60] sm:$0xff]
        %v2136 = vld [vmem:[%s216 + $0x2e68] sm:$0xff]
        %v2137 = vld [vmem:[%s216 + $0x2e70] sm:$0xff]
        %v2138 = vld [vmem:[%s216 + $0x2e78] sm:$0xff]
        %v2139 = vld [vmem:[%s216 + $0x2e80] sm:$0xff]
        %v2140 = vld [vmem:[%s216 + $0x2e88] sm:$0xff]
        %v2141 = vld [vmem:[%s216 + $0x2e90] sm:$0xff]
        %v2142 = vld [vmem:[%s216 + $0x2e98] sm:$0xff]
        %v2143 = vld [vmem:[%s216 + $0x2ea0] sm:$0xff]
        %v2144 = vld [vmem:[%s216 + $0x2ea8] sm:$0xff]
        %v2145 = vld [vmem:[%s216 + $0x2eb0] sm:$0xff]
        %v2146 = vld [vmem:[%s216 + $0x2eb8] sm:$0xff]
        %v2147 = vld [vmem:[%s216 + $0x2ec0] sm:$0xff]
        %v2148 = vld [vmem:[%s216 + $0x2ec8] sm:$0xff]
        %v2149 = vld [vmem:[%s216 + $0x2ed0] sm:$0xff]
        %v2150 = vld [vmem:[%s216 + $0x2ed8] sm:$0xff]
        %v2151 = vld [vmem:[%s216 + $0x2ee0] sm:$0xff]
        %v2152 = vld [vmem:[%s216 + $0x2ee8] sm:$0xff]
        %v2153 = vld [vmem:[%s216 + $0x2ef0] sm:$0xff]
        %v2154 = vld [vmem:[%s216 + $0x2ef8] sm:$0xff]
        %v2155 = vld [vmem:[%s216 + $0x2f00] sm:$0xff]
        %v2156 = vld [vmem:[%s216 + $0x2f08] sm:$0xff]
        %v2157 = vld [vmem:[%s216 + $0x2f10] sm:$0xff]
        %v2158 = vld [vmem:[%s216 + $0x2f18] sm:$0xff]
        %v2159 = vld [vmem:[%s216 + $0x2f20] sm:$0xff]
        %v2160 = vld [vmem:[%s216 + $0x2f28] sm:$0xff]
        %v2161 = vld [vmem:[%s216 + $0x2f30] sm:$0xff]
        %v2162 = vld [vmem:[%s216 + $0x2f38] sm:$0xff]
        %v2163 = vld [vmem:[%s216 + $0x2f40] sm:$0xff]
        %v2164 = vld [vmem:[%s216 + $0x2f48] sm:$0xff]
        %v2165 = vld [vmem:[%s216 + $0x2f50] sm:$0xff]
        %v2166 = vld [vmem:[%s216 + $0x2f58] sm:$0xff]
        %v2167 = vld [vmem:[%s216 + $0x2f60] sm:$0xff]
        %v2168 = vld [vmem:[%s216 + $0x2f68] sm:$0xff]
        %v2169 = vld [vmem:[%s216 + $0x2f70] sm:$0xff]
        %v2170 = vld [vmem:[%s216 + $0x2f78] sm:$0xff]
        %v2171 = vld [vmem:[%s216 + $0x2f80] sm:$0xff]
        %v2172 = vld [vmem:[%s216 + $0x2f88] sm:$0xff]
        %v2173 = vld [vmem:[%s216 + $0x2f90] sm:$0xff]
        %v2174 = vld [vmem:[%s216 + $0x2f98] sm:$0xff]
        %v2175 = vld [vmem:[%s216 + $0x2fa0] sm:$0xff]
        %v2176 = vld [vmem:[%s216 + $0x2fa8] sm:$0xff]
        %v2177 = vld [vmem:[%s216 + $0x2fb0] sm:$0xff]
        %v2178 = vld [vmem:[%s216 + $0x2fb8] sm:$0xff]
        %v2179 = vld [vmem:[%s216 + $0x2fc0] sm:$0xff]
        %v2180 = vld [vmem:[%s216 + $0x2fc8] sm:$0xff]
        %v2181 = vld [vmem:[%s216 + $0x2fd0] sm:$0xff]
        %v2182 = vld [vmem:[%s216 + $0x2fd8] sm:$0xff]
        %v2183 = vld [vmem:[%s216 + $0x2fe0] sm:$0xff]
        %v2184 = vld [vmem:[%s216 + $0x2fe8] sm:$0xff]
        %v2185 = vld [vmem:[%s216 + $0x2ff0] sm:$0xff]
        %v2186 = vld [vmem:[%s216 + $0x2ff8] sm:$0xff]
        %v2187 = vld [vmem:[%s216 + $0x3000] sm:$0xff]
        %v2188 = vld [vmem:[%s216 + $0x3008] sm:$0xff]
        %v2189 = vld [vmem:[%s216 + $0x3010] sm:$0xff]
        %v2190 = vld [vmem:[%s216 + $0x3018] sm:$0xff]
        %v2191 = vld [vmem:[%s216 + $0x3020] sm:$0xff]
        %v2192 = vld [vmem:[%s216 + $0x3028] sm:$0xff]
        %v2193 = vld [vmem:[%s216 + $0x3030] sm:$0xff]
        %v2194 = vld [vmem:[%s216 + $0x3038] sm:$0xff]
        %v2195 = vld [vmem:[%s216 + $0x3040] sm:$0xff]
        %v2196 = vld [vmem:[%s216 + $0x3048] sm:$0xff]
        %v2197 = vld [vmem:[%s216 + $0x3050] sm:$0xff]
        %v2198 = vld [vmem:[%s216 + $0x3058] sm:$0xff]
        %v2199 = vld [vmem:[%s216 + $0x3060] sm:$0xff]
        %v2200 = vld [vmem:[%s216 + $0x3068] sm:$0xff]
        %v2201 = vld [vmem:[%s216 + $0x3070] sm:$0xff]
        %v2202 = vld [vmem:[%s216 + $0x3078] sm:$0xff]
        %v2203 = vld [vmem:[%s216 + $0x3080] sm:$0xff]
        %v2204 = vld [vmem:[%s216 + $0x3088] sm:$0xff]
        %v2205 = vld [vmem:[%s216 + $0x3090] sm:$0xff]
        %v2206 = vld [vmem:[%s216 + $0x3098] sm:$0xff]
        %v2207 = vld [vmem:[%s216 + $0x30a0] sm:$0xff]
        %v2208 = vld [vmem:[%s216 + $0x30a8] sm:$0xff]
        %v2209 = vld [vmem:[%s216 + $0x30b0] sm:$0xff]
        %v2210 = vld [vmem:[%s216 + $0x30b8] sm:$0xff]
        %v2211 = vld [vmem:[%s216 + $0x30c0] sm:$0xff]
        %v2212 = vld [vmem:[%s216 + $0x30c8] sm:$0xff]
        %v2213 = vld [vmem:[%s216 + $0x30d0] sm:$0xff]
        %v2214 = vld [vmem:[%s216 + $0x30d8] sm:$0xff]
        %v2215 = vld [vmem:[%s216 + $0x30e0] sm:$0xff]
        %v2216 = vld [vmem:[%s216 + $0x30e8] sm:$0xff]
        %v2217 = vld [vmem:[%s216 + $0x30f0] sm:$0xff]
        %v2218 = vld [vmem:[%s216 + $0x30f8] sm:$0xff]
        %v3787 = vunpack.c.l.b16 %v651
        %v3788 = vunpack.c.h.b16 %v651
        %v3789 = vunpack.c.l.b16 %v652
        %v3790 = vunpack.c.h.b16 %v652
        %v3791 = vunpack.c.l.b16 %v653
        %v3792 = vunpack.c.h.b16 %v653
        %v3793 = vunpack.c.l.b16 %v654
        %v3794 = vunpack.c.h.b16 %v654
        %v3795 = vunpack.c.l.b16 %v655
        %v3796 = vunpack.c.h.b16 %v655
        %v3797 = vunpack.c.l.b16 %v656
        %v3798 = vunpack.c.h.b16 %v656
        %v3799 = vunpack.c.l.b16 %v657
        %v3800 = vunpack.c.h.b16 %v657
        %v3801 = vunpack.c.l.b16 %v658
        %v3802 = vunpack.c.h.b16 %v658
        %v3803 = vunpack.c.l.b16 %v659
        %v3804 = vunpack.c.h.b16 %v659
        %v3805 = vunpack.c.l.b16 %v660
        %v3806 = vunpack.c.h.b16 %v660
        %v3807 = vunpack.c.l.b16 %v661
        %v3808 = vunpack.c.h.b16 %v661
        %v3809 = vunpack.c.l.b16 %v662
        %v3810 = vunpack.c.h.b16 %v662
        %v3811 = vunpack.c.l.b16 %v663
        %v3812 = vunpack.c.h.b16 %v663
        %v3813 = vunpack.c.l.b16 %v664
        %v3814 = vunpack.c.h.b16 %v664
        %v3815 = vunpack.c.l.b16 %v665
        %v3816 = vunpack.c.h.b16 %v665
        %v3817 = vunpack.c.l.b16 %v666
        %v3818 = vunpack.c.h.b16 %v666
        %v3819 = vunpack.c.l.b16 %v667
        %v3820 = vunpack.c.h.b16 %v667
        %v3821 = vunpack.c.l.b16 %v668
        %v3822 = vunpack.c.h.b16 %v668
        %v3823 = vunpack.c.l.b16 %v669
        %v3824 = vunpack.c.h.b16 %v669
        %v3825 = vunpack.c.l.b16 %v670
        %v3826 = vunpack.c.h.b16 %v670
        %v3827 = vunpack.c.l.b16 %v671
        %v3828 = vunpack.c.h.b16 %v671
        %v3829 = vunpack.c.l.b16 %v672
        %v3830 = vunpack.c.h.b16 %v672
        %v3831 = vunpack.c.l.b16 %v673
        %v3832 = vunpack.c.h.b16 %v673
        %v3833 = vunpack.c.l.b16 %v674
        %v3834 = vunpack.c.h.b16 %v674
        %v3835 = vunpack.c.l.b16 %v675
        %v3836 = vunpack.c.h.b16 %v675
        %v3837 = vunpack.c.l.b16 %v676
        %v3838 = vunpack.c.h.b16 %v676
        %v3839 = vunpack.c.l.b16 %v677
        %v3840 = vunpack.c.h.b16 %v677
        %v3841 = vunpack.c.l.b16 %v678
        %v3842 = vunpack.c.h.b16 %v678
        %v3843 = vunpack.c.l.b16 %v679
        %v3844 = vunpack.c.h.b16 %v679
        %v3845 = vunpack.c.l.b16 %v680
        %v3846 = vunpack.c.h.b16 %v680
        %v3847 = vunpack.c.l.b16 %v681
        %v3848 = vunpack.c.h.b16 %v681
        %v3849 = vunpack.c.l.b16 %v682
        %v3850 = vunpack.c.h.b16 %v682
        %v3851 = vunpack.c.l.b16 %v683
        %v3852 = vunpack.c.h.b16 %v683
        %v3853 = vunpack.c.l.b16 %v684
        %v3854 = vunpack.c.h.b16 %v684
        %v3855 = vunpack.c.l.b16 %v685
        %v3856 = vunpack.c.h.b16 %v685
        %v3857 = vunpack.c.l.b16 %v686
        %v3858 = vunpack.c.h.b16 %v686
        %v3859 = vunpack.c.l.b16 %v687
        %v3860 = vunpack.c.h.b16 %v687
        %v3861 = vunpack.c.l.b16 %v688
        %v3862 = vunpack.c.h.b16 %v688
        %v3863 = vunpack.c.l.b16 %v689
        %v3864 = vunpack.c.h.b16 %v689
        %v3865 = vunpack.c.l.b16 %v690
        %v3866 = vunpack.c.h.b16 %v690
        %v3867 = vunpack.c.l.b16 %v691
        %v3868 = vunpack.c.h.b16 %v691
        %v3869 = vunpack.c.l.b16 %v692
        %v3870 = vunpack.c.h.b16 %v692
        %v3871 = vunpack.c.l.b16 %v693
        %v3872 = vunpack.c.h.b16 %v693
        %v3873 = vunpack.c.l.b16 %v694
        %v3874 = vunpack.c.h.b16 %v694
        %v3875 = vunpack.c.l.b16 %v695
        %v3876 = vunpack.c.h.b16 %v695
        %v3877 = vunpack.c.l.b16 %v696
        %v3878 = vunpack.c.h.b16 %v696
        %v3879 = vunpack.c.l.b16 %v697
        %v3880 = vunpack.c.h.b16 %v697
        %v3881 = vunpack.c.l.b16 %v698
        %v3882 = vunpack.c.h.b16 %v698
        %v3883 = vunpack.c.l.b16 %v699
        %v3884 = vunpack.c.h.b16 %v699
        %v3885 = vunpack.c.l.b16 %v700
        %v3886 = vunpack.c.h.b16 %v700
        %v3887 = vunpack.c.l.b16 %v701
        %v3888 = vunpack.c.h.b16 %v701
        %v3889 = vunpack.c.l.b16 %v702
        %v3890 = vunpack.c.h.b16 %v702
        %v3891 = vunpack.c.l.b16 %v703
        %v3892 = vunpack.c.h.b16 %v703
        %v3893 = vunpack.c.l.b16 %v704
        %v3894 = vunpack.c.h.b16 %v704
        %v3895 = vunpack.c.l.b16 %v705
        %v3896 = vunpack.c.h.b16 %v705
        %v3897 = vunpack.c.l.b16 %v706
        %v3898 = vunpack.c.h.b16 %v706
        %v3899 = vunpack.c.l.b16 %v707
        %v3900 = vunpack.c.h.b16 %v707
        %v3901 = vunpack.c.l.b16 %v708
        %v3902 = vunpack.c.h.b16 %v708
        %v3903 = vunpack.c.l.b16 %v709
        %v3904 = vunpack.c.h.b16 %v709
        %v3905 = vunpack.c.l.b16 %v710
        %v3906 = vunpack.c.h.b16 %v710
        %v3907 = vunpack.c.l.b16 %v711
        %v3908 = vunpack.c.h.b16 %v711
        %v3909 = vunpack.c.l.b16 %v712
        %v3910 = vunpack.c.h.b16 %v712
        %v3911 = vunpack.c.l.b16 %v713
        %v3912 = vunpack.c.h.b16 %v713
        %v3913 = vunpack.c.l.b16 %v714
        %v3914 = vunpack.c.h.b16 %v714
        %v3915 = vunpack.c.l.b16 %v715
        %v3916 = vunpack.c.h.b16 %v715
        %v3917 = vunpack.c.l.b16 %v716
        %v3918 = vunpack.c.h.b16 %v716
        %v3919 = vunpack.c.l.b16 %v717
        %v3920 = vunpack.c.h.b16 %v717
        %v3921 = vunpack.c.l.b16 %v718
        %v3922 = vunpack.c.h.b16 %v718
        %v3923 = vunpack.c.l.b16 %v719
        %v3924 = vunpack.c.h.b16 %v719
        %v3925 = vunpack.c.l.b16 %v720
        %v3926 = vunpack.c.h.b16 %v720
        %v3927 = vunpack.c.l.b16 %v721
        %v3928 = vunpack.c.h.b16 %v721
        %v3929 = vunpack.c.l.b16 %v722
        %v3930 = vunpack.c.h.b16 %v722
        %v3931 = vunpack.c.l.b16 %v723
        %v3932 = vunpack.c.h.b16 %v723
        %v3933 = vunpack.c.l.b16 %v724
        %v3934 = vunpack.c.h.b16 %v724
        %v3935 = vunpack.c.l.b16 %v725
        %v3936 = vunpack.c.h.b16 %v725
        %v3937 = vunpack.c.l.b16 %v726
        %v3938 = vunpack.c.h.b16 %v726
        %v3939 = vunpack.c.l.b16 %v727
        %v3940 = vunpack.c.h.b16 %v727
        %v3941 = vunpack.c.l.b16 %v728
        %v3942 = vunpack.c.h.b16 %v728
        %v3943 = vunpack.c.l.b16 %v729
        %v3944 = vunpack.c.h.b16 %v729
        %v3945 = vunpack.c.l.b16 %v730
        %v3946 = vunpack.c.h.b16 %v730
        %v3947 = vunpack.c.l.b16 %v731
        %v3948 = vunpack.c.h.b16 %v731
        %v3949 = vunpack.c.l.b16 %v732
        %v3950 = vunpack.c.h.b16 %v732
        %v3951 = vunpack.c.l.b16 %v733
        %v3952 = vunpack.c.h.b16 %v733
        %v3953 = vunpack.c.l.b16 %v734
        %v3954 = vunpack.c.h.b16 %v734
        %v3955 = vunpack.c.l.b16 %v735
        %v3956 = vunpack.c.h.b16 %v735
        %v3957 = vunpack.c.l.b16 %v736
        %v3958 = vunpack.c.h.b16 %v736
        %v3959 = vunpack.c.l.b16 %v737
        %v3960 = vunpack.c.h.b16 %v737
        %v3961 = vunpack.c.l.b16 %v738
        %v3962 = vunpack.c.h.b16 %v738
        %v3963 = vunpack.c.l.b16 %v739
        %v3964 = vunpack.c.h.b16 %v739
        %v3965 = vunpack.c.l.b16 %v740
        %v3966 = vunpack.c.h.b16 %v740
        %v3967 = vunpack.c.l.b16 %v741
        %v3968 = vunpack.c.h.b16 %v741
        %v3969 = vunpack.c.l.b16 %v742
        %v3970 = vunpack.c.h.b16 %v742
        %v3971 = vunpack.c.l.b16 %v743
        %v3972 = vunpack.c.h.b16 %v743
        %v3973 = vunpack.c.l.b16 %v744
        %v3974 = vunpack.c.h.b16 %v744
        %v3975 = vunpack.c.l.b16 %v745
        %v3976 = vunpack.c.h.b16 %v745
        %v3977 = vunpack.c.l.b16 %v746
        %v3978 = vunpack.c.h.b16 %v746
        %v3979 = vunpack.c.l.b16 %v747
        %v3980 = vunpack.c.h.b16 %v747
        %v3981 = vunpack.c.l.b16 %v748
        %v3982 = vunpack.c.h.b16 %v748
        %v3983 = vunpack.c.l.b16 %v749
        %v3984 = vunpack.c.h.b16 %v749
        %v3985 = vunpack.c.l.b16 %v750
        %v3986 = vunpack.c.h.b16 %v750
        %v3987 = vunpack.c.l.b16 %v751
        %v3988 = vunpack.c.h.b16 %v751
        %v3989 = vunpack.c.l.b16 %v752
        %v3990 = vunpack.c.h.b16 %v752
        %v3991 = vunpack.c.l.b16 %v753
        %v3992 = vunpack.c.h.b16 %v753
        %v3993 = vunpack.c.l.b16 %v754
        %v3994 = vunpack.c.h.b16 %v754
        %v3995 = vunpack.c.l.b16 %v755
        %v3996 = vunpack.c.h.b16 %v755
        %v3997 = vunpack.c.l.b16 %v756
        %v3998 = vunpack.c.h.b16 %v756
        %v3999 = vunpack.c.l.b16 %v757
        %v4000 = vunpack.c.h.b16 %v757
        %v4001 = vunpack.c.l.b16 %v758
        %v4002 = vunpack.c.h.b16 %v758
        %v4003 = vunpack.c.l.b16 %v759
        %v4004 = vunpack.c.h.b16 %v759
        %v4005 = vunpack.c.l.b16 %v760
        %v4006 = vunpack.c.h.b16 %v760
        %v4007 = vunpack.c.l.b16 %v761
        %v4008 = vunpack.c.h.b16 %v761
        %v4009 = vunpack.c.l.b16 %v762
        %v4010 = vunpack.c.h.b16 %v762
        %v4011 = vunpack.c.l.b16 %v763
        %v4012 = vunpack.c.h.b16 %v763
        %v4013 = vunpack.c.l.b16 %v764
        %v4014 = vunpack.c.h.b16 %v764
        %v4015 = vunpack.c.l.b16 %v765
        %v4016 = vunpack.c.h.b16 %v765
        %v4017 = vunpack.c.l.b16 %v766
        %v4018 = vunpack.c.h.b16 %v766
        %v4019 = vunpack.c.l.b16 %v767
        %v4020 = vunpack.c.h.b16 %v767
        %v4021 = vunpack.c.l.b16 %v768
        %v4022 = vunpack.c.h.b16 %v768
        %v4023 = vunpack.c.l.b16 %v769
        %v4024 = vunpack.c.h.b16 %v769
        %v4025 = vunpack.c.l.b16 %v770
        %v4026 = vunpack.c.h.b16 %v770
        %v4027 = vunpack.c.l.b16 %v771
        %v4028 = vunpack.c.h.b16 %v771
        %v4029 = vunpack.c.l.b16 %v772
        %v4030 = vunpack.c.h.b16 %v772
        %v4031 = vunpack.c.l.b16 %v773
        %v4032 = vunpack.c.h.b16 %v773
        %v4033 = vunpack.c.l.b16 %v774
        %v4034 = vunpack.c.h.b16 %v774
        %v4035 = vunpack.c.l.b16 %v775
        %v4036 = vunpack.c.h.b16 %v775
        %v4037 = vunpack.c.l.b16 %v776
        %v4038 = vunpack.c.h.b16 %v776
        %v4039 = vunpack.c.l.b16 %v777
        %v4040 = vunpack.c.h.b16 %v777
        %v4041 = vunpack.c.l.b16 %v778
        %v4042 = vunpack.c.h.b16 %v778
        %v4043 = vunpack.c.l.b16 %v779
        %v4044 = vunpack.c.h.b16 %v779
        %v4045 = vunpack.c.l.b16 %v780
        %v4046 = vunpack.c.h.b16 %v780
        %v4047 = vunpack.c.l.b16 %v781
        %v4048 = vunpack.c.h.b16 %v781
        %v4049 = vunpack.c.l.b16 %v782
        %v4050 = vunpack.c.h.b16 %v782
        %v4051 = vunpack.c.l.b16 %v783
        %v4052 = vunpack.c.h.b16 %v783
        %v4053 = vunpack.c.l.b16 %v784
        %v4054 = vunpack.c.h.b16 %v784
        %v4055 = vunpack.c.l.b16 %v785
        %v4056 = vunpack.c.h.b16 %v785
        %v4057 = vunpack.c.l.b16 %v786
        %v4058 = vunpack.c.h.b16 %v786
        %v4059 = vunpack.c.l.b16 %v787
        %v4060 = vunpack.c.h.b16 %v787
        %v4061 = vunpack.c.l.b16 %v788
        %v4062 = vunpack.c.h.b16 %v788
        %v4063 = vunpack.c.l.b16 %v789
        %v4064 = vunpack.c.h.b16 %v789
        %v4065 = vunpack.c.l.b16 %v790
        %v4066 = vunpack.c.h.b16 %v790
        %v4067 = vunpack.c.l.b16 %v791
        %v4068 = vunpack.c.h.b16 %v791
        %v4069 = vunpack.c.l.b16 %v792
        %v4070 = vunpack.c.h.b16 %v792
        %v4071 = vunpack.c.l.b16 %v793
        %v4072 = vunpack.c.h.b16 %v793
        %v4073 = vunpack.c.l.b16 %v794
        %v4074 = vunpack.c.h.b16 %v794
        %v4075 = vunpack.c.l.b16 %v795
        %v4076 = vunpack.c.h.b16 %v795
        %v4077 = vunpack.c.l.b16 %v796
        %v4078 = vunpack.c.h.b16 %v796
        %v4079 = vunpack.c.l.b16 %v797
        %v4080 = vunpack.c.h.b16 %v797
        %v4081 = vunpack.c.l.b16 %v798
        %v4082 = vunpack.c.h.b16 %v798
        %v4083 = vunpack.c.l.b16 %v799
        %v4084 = vunpack.c.h.b16 %v799
        %v4085 = vunpack.c.l.b16 %v800
        %v4086 = vunpack.c.h.b16 %v800
        %v4087 = vunpack.c.l.b16 %v801
        %v4088 = vunpack.c.h.b16 %v801
        %v4089 = vunpack.c.l.b16 %v802
        %v4090 = vunpack.c.h.b16 %v802
        %v4091 = vunpack.c.l.b16 %v803
        %v4092 = vunpack.c.h.b16 %v803
        %v4093 = vunpack.c.l.b16 %v804
        %v4094 = vunpack.c.h.b16 %v804
        %v4095 = vunpack.c.l.b16 %v805
        %v4096 = vunpack.c.h.b16 %v805
        %v4097 = vunpack.c.l.b16 %v806
        %v4098 = vunpack.c.h.b16 %v806
        %v4099 = vunpack.c.l.b16 %v807
        %v4100 = vunpack.c.h.b16 %v807
        %v4101 = vunpack.c.l.b16 %v808
        %v4102 = vunpack.c.h.b16 %v808
        %v4103 = vunpack.c.l.b16 %v809
        %v4104 = vunpack.c.h.b16 %v809
        %v4105 = vunpack.c.l.b16 %v810
        %v4106 = vunpack.c.h.b16 %v810
        %v4107 = vunpack.c.l.b16 %v811
        %v4108 = vunpack.c.h.b16 %v811
        %v4109 = vunpack.c.l.b16 %v812
        %v4110 = vunpack.c.h.b16 %v812
        %v4111 = vunpack.c.l.b16 %v813
        %v4112 = vunpack.c.h.b16 %v813
        %v4113 = vunpack.c.l.b16 %v814
        %v4114 = vunpack.c.h.b16 %v814
        %v4115 = vunpack.c.l.b16 %v815
        %v4116 = vunpack.c.h.b16 %v815
        %v4117 = vunpack.c.l.b16 %v816
        %v4118 = vunpack.c.h.b16 %v816
        %v4119 = vunpack.c.l.b16 %v817
        %v4120 = vunpack.c.h.b16 %v817
        %v4121 = vunpack.c.l.b16 %v818
        %v4122 = vunpack.c.h.b16 %v818
        %v4123 = vunpack.c.l.b16 %v819
        %v4124 = vunpack.c.h.b16 %v819
        %v4125 = vunpack.c.l.b16 %v820
        %v4126 = vunpack.c.h.b16 %v820
        %v4127 = vunpack.c.l.b16 %v821
        %v4128 = vunpack.c.h.b16 %v821
        %v4129 = vunpack.c.l.b16 %v822
        %v4130 = vunpack.c.h.b16 %v822
        %v4131 = vunpack.c.l.b16 %v823
        %v4132 = vunpack.c.h.b16 %v823
        %v4133 = vunpack.c.l.b16 %v824
        %v4134 = vunpack.c.h.b16 %v824
        %v4135 = vunpack.c.l.b16 %v825
        %v4136 = vunpack.c.h.b16 %v825
        %v4137 = vunpack.c.l.b16 %v826
        %v4138 = vunpack.c.h.b16 %v826
        %v4139 = vunpack.c.l.b16 %v827
        %v4140 = vunpack.c.h.b16 %v827
        %v4141 = vunpack.c.l.b16 %v828
        %v4142 = vunpack.c.h.b16 %v828
        %v4143 = vunpack.c.l.b16 %v829
        %v4144 = vunpack.c.h.b16 %v829
        %v4145 = vunpack.c.l.b16 %v830
        %v4146 = vunpack.c.h.b16 %v830
        %v4147 = vunpack.c.l.b16 %v831
        %v4148 = vunpack.c.h.b16 %v831
        %v4149 = vunpack.c.l.b16 %v832
        %v4150 = vunpack.c.h.b16 %v832
        %v4151 = vunpack.c.l.b16 %v833
        %v4152 = vunpack.c.h.b16 %v833
        %v4153 = vunpack.c.l.b16 %v834
        %v4154 = vunpack.c.h.b16 %v834
        %v4155 = vunpack.c.l.b16 %v835
        %v4156 = vunpack.c.h.b16 %v835
        %v4157 = vunpack.c.l.b16 %v836
        %v4158 = vunpack.c.h.b16 %v836
        %v4159 = vunpack.c.l.b16 %v837
        %v4160 = vunpack.c.h.b16 %v837
        %v4161 = vunpack.c.l.b16 %v838
        %v4162 = vunpack.c.h.b16 %v838
        %v4163 = vunpack.c.l.b16 %v839
        %v4164 = vunpack.c.h.b16 %v839
        %v4165 = vunpack.c.l.b16 %v840
        %v4166 = vunpack.c.h.b16 %v840
        %v4167 = vunpack.c.l.b16 %v841
        %v4168 = vunpack.c.h.b16 %v841
        %v4169 = vunpack.c.l.b16 %v842
        %v4170 = vunpack.c.h.b16 %v842
        %v4171 = vunpack.c.l.b16 %v843
        %v4172 = vunpack.c.h.b16 %v843
        %v4173 = vunpack.c.l.b16 %v844
        %v4174 = vunpack.c.h.b16 %v844
        %v4175 = vunpack.c.l.b16 %v845
        %v4176 = vunpack.c.h.b16 %v845
        %v4177 = vunpack.c.l.b16 %v846
        %v4178 = vunpack.c.h.b16 %v846
        %v4179 = vunpack.c.l.b16 %v847
        %v4180 = vunpack.c.h.b16 %v847
        %v4181 = vunpack.c.l.b16 %v848
        %v4182 = vunpack.c.h.b16 %v848
        %v4183 = vunpack.c.l.b16 %v849
        %v4184 = vunpack.c.h.b16 %v849
        %v4185 = vunpack.c.l.b16 %v850
        %v4186 = vunpack.c.h.b16 %v850
        %v4187 = vunpack.c.l.b16 %v851
        %v4188 = vunpack.c.h.b16 %v851
        %v4189 = vunpack.c.l.b16 %v852
        %v4190 = vunpack.c.h.b16 %v852
        %v4191 = vunpack.c.l.b16 %v853
        %v4192 = vunpack.c.h.b16 %v853
        %v4193 = vunpack.c.l.b16 %v854
        %v4194 = vunpack.c.h.b16 %v854
        %v4195 = vunpack.c.l.b16 %v855
        %v4196 = vunpack.c.h.b16 %v855
        %v4197 = vunpack.c.l.b16 %v856
        %v4198 = vunpack.c.h.b16 %v856
        %v4199 = vunpack.c.l.b16 %v857
        %v4200 = vunpack.c.h.b16 %v857
        %v4201 = vunpack.c.l.b16 %v858
        %v4202 = vunpack.c.h.b16 %v858
        %v4203 = vunpack.c.l.b16 %v859
        %v4204 = vunpack.c.h.b16 %v859
        %v4205 = vunpack.c.l.b16 %v860
        %v4206 = vunpack.c.h.b16 %v860
        %v4207 = vunpack.c.l.b16 %v861
        %v4208 = vunpack.c.h.b16 %v861
        %v4209 = vunpack.c.l.b16 %v862
        %v4210 = vunpack.c.h.b16 %v862
        %v4211 = vunpack.c.l.b16 %v863
        %v4212 = vunpack.c.h.b16 %v863
        %v4213 = vunpack.c.l.b16 %v864
        %v4214 = vunpack.c.h.b16 %v864
        %v4215 = vunpack.c.l.b16 %v865
        %v4216 = vunpack.c.h.b16 %v865
        %v4217 = vunpack.c.l.b16 %v866
        %v4218 = vunpack.c.h.b16 %v866
        %v4219 = vunpack.c.l.b16 %v867
        %v4220 = vunpack.c.h.b16 %v867
        %v4221 = vunpack.c.l.b16 %v868
        %v4222 = vunpack.c.h.b16 %v868
        %v4223 = vunpack.c.l.b16 %v869
        %v4224 = vunpack.c.h.b16 %v869
        %v4225 = vunpack.c.l.b16 %v870
        %v4226 = vunpack.c.h.b16 %v870
        %v4227 = vunpack.c.l.b16 %v871
        %v4228 = vunpack.c.h.b16 %v871
        %v4229 = vunpack.c.l.b16 %v872
        %v4230 = vunpack.c.h.b16 %v872
        %v4231 = vunpack.c.l.b16 %v873
        %v4232 = vunpack.c.h.b16 %v873
        %v4233 = vunpack.c.l.b16 %v874
        %v4234 = vunpack.c.h.b16 %v874
        %v4235 = vunpack.c.l.b16 %v875
        %v4236 = vunpack.c.h.b16 %v875
        %v4237 = vunpack.c.l.b16 %v876
        %v4238 = vunpack.c.h.b16 %v876
        %v4239 = vunpack.c.l.b16 %v877
        %v4240 = vunpack.c.h.b16 %v877
        %v4241 = vunpack.c.l.b16 %v878
        %v4242 = vunpack.c.h.b16 %v878
        %v4243 = vunpack.c.l.b16 %v879
        %v4244 = vunpack.c.h.b16 %v879
        %v4245 = vunpack.c.l.b16 %v880
        %v4246 = vunpack.c.h.b16 %v880
        %v4247 = vunpack.c.l.b16 %v881
        %v4248 = vunpack.c.h.b16 %v881
        %v4249 = vunpack.c.l.b16 %v882
        %v4250 = vunpack.c.h.b16 %v882
        %v4251 = vunpack.c.l.b16 %v883
        %v4252 = vunpack.c.h.b16 %v883
        %v4253 = vunpack.c.l.b16 %v884
        %v4254 = vunpack.c.h.b16 %v884
        %v4255 = vunpack.c.l.b16 %v885
        %v4256 = vunpack.c.h.b16 %v885
        %v4257 = vunpack.c.l.b16 %v886
        %v4258 = vunpack.c.h.b16 %v886
        %v4259 = vunpack.c.l.b16 %v887
        %v4260 = vunpack.c.h.b16 %v887
        %v4261 = vunpack.c.l.b16 %v888
        %v4262 = vunpack.c.h.b16 %v888
        %v4263 = vunpack.c.l.b16 %v889
        %v4264 = vunpack.c.h.b16 %v889
        %v4265 = vunpack.c.l.b16 %v890
        %v4266 = vunpack.c.h.b16 %v890
        %v4267 = vunpack.c.l.b16 %v891
        %v4268 = vunpack.c.h.b16 %v891
        %v4269 = vunpack.c.l.b16 %v892
        %v4270 = vunpack.c.h.b16 %v892
        %v4271 = vunpack.c.l.b16 %v893
        %v4272 = vunpack.c.h.b16 %v893
        %v4273 = vunpack.c.l.b16 %v894
        %v4274 = vunpack.c.h.b16 %v894
        %v4275 = vunpack.c.l.b16 %v895
        %v4276 = vunpack.c.h.b16 %v895
        %v4277 = vunpack.c.l.b16 %v896
        %v4278 = vunpack.c.h.b16 %v896
        %v4279 = vunpack.c.l.b16 %v897
        %v4280 = vunpack.c.h.b16 %v897
        %v4281 = vunpack.c.l.b16 %v898
        %v4282 = vunpack.c.h.b16 %v898
        %v4283 = vunpack.c.l.b16 %v899
        %v4284 = vunpack.c.h.b16 %v899
        %v4285 = vunpack.c.l.b16 %v900
        %v4286 = vunpack.c.h.b16 %v900
        %v4287 = vunpack.c.l.b16 %v901
        %v4288 = vunpack.c.h.b16 %v901
        %v4289 = vunpack.c.l.b16 %v902
        %v4290 = vunpack.c.h.b16 %v902
        %v4291 = vunpack.c.l.b16 %v903
        %v4292 = vunpack.c.h.b16 %v903
        %v4293 = vunpack.c.l.b16 %v904
        %v4294 = vunpack.c.h.b16 %v904
        %v4295 = vunpack.c.l.b16 %v905
        %v4296 = vunpack.c.h.b16 %v905
        %v4297 = vunpack.c.l.b16 %v906
        %v4298 = vunpack.c.h.b16 %v906
        %v4299 = vunpack.c.l.b16 %v907
        %v4300 = vunpack.c.h.b16 %v907
        %v4301 = vunpack.c.l.b16 %v908
        %v4302 = vunpack.c.h.b16 %v908
        %v4303 = vunpack.c.l.b16 %v909
        %v4304 = vunpack.c.h.b16 %v909
        %v4305 = vunpack.c.l.b16 %v910
        %v4306 = vunpack.c.h.b16 %v910
        %v4307 = vunpack.c.l.b16 %v911
        %v4308 = vunpack.c.h.b16 %v911
        %v4309 = vunpack.c.l.b16 %v912
        %v4310 = vunpack.c.h.b16 %v912
        %v4311 = vunpack.c.l.b16 %v913
        %v4312 = vunpack.c.h.b16 %v913
        %v4313 = vunpack.c.l.b16 %v914
        %v4314 = vunpack.c.h.b16 %v914
        %v4315 = vunpack.c.l.b16 %v915
        %v4316 = vunpack.c.h.b16 %v915
        %v4317 = vunpack.c.l.b16 %v916
        %v4318 = vunpack.c.h.b16 %v916
        %v4319 = vunpack.c.l.b16 %v917
        %v4320 = vunpack.c.h.b16 %v917
        %v4321 = vunpack.c.l.b16 %v918
        %v4322 = vunpack.c.h.b16 %v918
        %v4323 = vunpack.c.l.b16 %v919
        %v4324 = vunpack.c.h.b16 %v919
        %v4325 = vunpack.c.l.b16 %v920
        %v4326 = vunpack.c.h.b16 %v920
        %v4327 = vunpack.c.l.b16 %v921
        %v4328 = vunpack.c.h.b16 %v921
        %v4329 = vunpack.c.l.b16 %v922
        %v4330 = vunpack.c.h.b16 %v922
        %v4331 = vunpack.c.l.b16 %v923
        %v4332 = vunpack.c.h.b16 %v923
        %v4333 = vunpack.c.l.b16 %v924
        %v4334 = vunpack.c.h.b16 %v924
        %v4335 = vunpack.c.l.b16 %v925
        %v4336 = vunpack.c.h.b16 %v925
        %v4337 = vunpack.c.l.b16 %v926
        %v4338 = vunpack.c.h.b16 %v926
        %v4339 = vunpack.c.l.b16 %v927
        %v4340 = vunpack.c.h.b16 %v927
        %v4341 = vunpack.c.l.b16 %v928
        %v4342 = vunpack.c.h.b16 %v928
        %v4343 = vunpack.c.l.b16 %v929
        %v4344 = vunpack.c.h.b16 %v929
        %v4345 = vunpack.c.l.b16 %v930
        %v4346 = vunpack.c.h.b16 %v930
        %v4347 = vunpack.c.l.b16 %v931
        %v4348 = vunpack.c.h.b16 %v931
        %v4349 = vunpack.c.l.b16 %v932
        %v4350 = vunpack.c.h.b16 %v932
        %v4351 = vunpack.c.l.b16 %v933
        %v4352 = vunpack.c.h.b16 %v933
        %v4353 = vunpack.c.l.b16 %v934
        %v4354 = vunpack.c.h.b16 %v934
        %v4355 = vunpack.c.l.b16 %v935
        %v4356 = vunpack.c.h.b16 %v935
        %v4357 = vunpack.c.l.b16 %v936
        %v4358 = vunpack.c.h.b16 %v936
        %v4359 = vunpack.c.l.b16 %v937
        %v4360 = vunpack.c.h.b16 %v937
        %v4361 = vunpack.c.l.b16 %v938
        %v4362 = vunpack.c.h.b16 %v938
        %v4363 = vunpack.c.l.b16 %v939
        %v4364 = vunpack.c.h.b16 %v939
        %v4365 = vunpack.c.l.b16 %v940
        %v4366 = vunpack.c.h.b16 %v940
        %v4367 = vunpack.c.l.b16 %v941
        %v4368 = vunpack.c.h.b16 %v941
        %v4369 = vunpack.c.l.b16 %v942
        %v4370 = vunpack.c.h.b16 %v942
        %v4371 = vunpack.c.l.b16 %v943
        %v4372 = vunpack.c.h.b16 %v943
        %v4373 = vunpack.c.l.b16 %v944
        %v4374 = vunpack.c.h.b16 %v944
        %v4375 = vunpack.c.l.b16 %v945
        %v4376 = vunpack.c.h.b16 %v945
        %v4377 = vunpack.c.l.b16 %v946
        %v4378 = vunpack.c.h.b16 %v946
        %v4379 = vunpack.c.l.b16 %v947
        %v4380 = vunpack.c.h.b16 %v947
        %v4381 = vunpack.c.l.b16 %v948
        %v4382 = vunpack.c.h.b16 %v948
        %v4383 = vunpack.c.l.b16 %v949
        %v4384 = vunpack.c.h.b16 %v949
        %v4385 = vunpack.c.l.b16 %v950
        %v4386 = vunpack.c.h.b16 %v950
        %v4387 = vunpack.c.l.b16 %v951
        %v4388 = vunpack.c.h.b16 %v951
        %v4389 = vunpack.c.l.b16 %v952
        %v4390 = vunpack.c.h.b16 %v952
        %v4391 = vunpack.c.l.b16 %v953
        %v4392 = vunpack.c.h.b16 %v953
        %v4393 = vunpack.c.l.b16 %v954
        %v4394 = vunpack.c.h.b16 %v954
        %v4395 = vunpack.c.l.b16 %v955
        %v4396 = vunpack.c.h.b16 %v955
        %v4397 = vunpack.c.l.b16 %v956
        %v4398 = vunpack.c.h.b16 %v956
        %v4399 = vunpack.c.l.b16 %v957
        %v4400 = vunpack.c.h.b16 %v957
        %v4401 = vunpack.c.l.b16 %v958
        %v4402 = vunpack.c.h.b16 %v958
        %v4403 = vunpack.c.l.b16 %v959
        %v4404 = vunpack.c.h.b16 %v959
        %v4405 = vunpack.c.l.b16 %v960
        %v4406 = vunpack.c.h.b16 %v960
        %v4407 = vunpack.c.l.b16 %v961
        %v4408 = vunpack.c.h.b16 %v961
        %v4409 = vunpack.c.l.b16 %v962
        %v4410 = vunpack.c.h.b16 %v962
        %v4411 = vunpack.c.l.b16 %v963
        %v4412 = vunpack.c.h.b16 %v963
        %v4413 = vunpack.c.l.b16 %v964
        %v4414 = vunpack.c.h.b16 %v964
        %v4415 = vunpack.c.l.b16 %v965
        %v4416 = vunpack.c.h.b16 %v965
        %v4417 = vunpack.c.l.b16 %v966
        %v4418 = vunpack.c.h.b16 %v966
        %v4419 = vunpack.c.l.b16 %v967
        %v4420 = vunpack.c.h.b16 %v967
        %v4421 = vunpack.c.l.b16 %v968
        %v4422 = vunpack.c.h.b16 %v968
        %v4423 = vunpack.c.l.b16 %v969
        %v4424 = vunpack.c.h.b16 %v969
        %v4425 = vunpack.c.l.b16 %v970
        %v4426 = vunpack.c.h.b16 %v970
        %v4427 = vunpack.c.l.b16 %v971
        %v4428 = vunpack.c.h.b16 %v971
        %v4429 = vunpack.c.l.b16 %v972
        %v4430 = vunpack.c.h.b16 %v972
        %v4431 = vunpack.c.l.b16 %v973
        %v4432 = vunpack.c.h.b16 %v973
        %v4433 = vunpack.c.l.b16 %v974
        %v4434 = vunpack.c.h.b16 %v974
        %v4435 = vunpack.c.l.b16 %v975
        %v4436 = vunpack.c.h.b16 %v975
        %v4437 = vunpack.c.l.b16 %v976
        %v4438 = vunpack.c.h.b16 %v976
        %v4439 = vunpack.c.l.b16 %v977
        %v4440 = vunpack.c.h.b16 %v977
        %v4441 = vunpack.c.l.b16 %v978
        %v4442 = vunpack.c.h.b16 %v978
        %v4443 = vunpack.c.l.b16 %v979
        %v4444 = vunpack.c.h.b16 %v979
        %v4445 = vunpack.c.l.b16 %v980
        %v4446 = vunpack.c.h.b16 %v980
        %v4447 = vunpack.c.l.b16 %v981
        %v4448 = vunpack.c.h.b16 %v981
        %v4449 = vunpack.c.l.b16 %v982
        %v4450 = vunpack.c.h.b16 %v982
        %v4451 = vunpack.c.l.b16 %v983
        %v4452 = vunpack.c.h.b16 %v983
        %v4453 = vunpack.c.l.b16 %v984
        %v4454 = vunpack.c.h.b16 %v984
        %v4455 = vunpack.c.l.b16 %v985
        %v4456 = vunpack.c.h.b16 %v985
        %v4457 = vunpack.c.l.b16 %v986
        %v4458 = vunpack.c.h.b16 %v986
        %v4459 = vunpack.c.l.b16 %v987
        %v4460 = vunpack.c.h.b16 %v987
        %v4461 = vunpack.c.l.b16 %v988
        %v4462 = vunpack.c.h.b16 %v988
        %v4463 = vunpack.c.l.b16 %v989
        %v4464 = vunpack.c.h.b16 %v989
        %v4465 = vunpack.c.l.b16 %v990
        %v4466 = vunpack.c.h.b16 %v990
        %v4467 = vunpack.c.l.b16 %v991
        %v4468 = vunpack.c.h.b16 %v991
        %v4469 = vunpack.c.l.b16 %v992
        %v4470 = vunpack.c.h.b16 %v992
        %v4471 = vunpack.c.l.b16 %v993
        %v4472 = vunpack.c.h.b16 %v993
        %v4473 = vunpack.c.l.b16 %v994
        %v4474 = vunpack.c.h.b16 %v994
        %v4475 = vunpack.c.l.b16 %v995
        %v4476 = vunpack.c.h.b16 %v995
        %v4477 = vunpack.c.l.b16 %v996
        %v4478 = vunpack.c.h.b16 %v996
        %v4479 = vunpack.c.l.b16 %v997
        %v4480 = vunpack.c.h.b16 %v997
        %v4481 = vunpack.c.l.b16 %v998
        %v4482 = vunpack.c.h.b16 %v998
        %v4483 = vunpack.c.l.b16 %v999
        %v4484 = vunpack.c.h.b16 %v999
        %v4485 = vunpack.c.l.b16 %v1000
        %v4486 = vunpack.c.h.b16 %v1000
        %v4487 = vunpack.c.l.b16 %v1001
        %v4488 = vunpack.c.h.b16 %v1001
        %v4489 = vunpack.c.l.b16 %v1002
        %v4490 = vunpack.c.h.b16 %v1002
        %v4491 = vunpack.c.l.b16 %v1003
        %v4492 = vunpack.c.h.b16 %v1003
        %v4493 = vunpack.c.l.b16 %v1004
        %v4494 = vunpack.c.h.b16 %v1004
        %v4495 = vunpack.c.l.b16 %v1005
        %v4496 = vunpack.c.h.b16 %v1005
        %v4497 = vunpack.c.l.b16 %v1006
        %v4498 = vunpack.c.h.b16 %v1006
        %v4499 = vunpack.c.l.b16 %v1007
        %v4500 = vunpack.c.h.b16 %v1007
        %v4501 = vunpack.c.l.b16 %v1008
        %v4502 = vunpack.c.h.b16 %v1008
        %v4503 = vunpack.c.l.b16 %v1009
        %v4504 = vunpack.c.h.b16 %v1009
        %v4505 = vunpack.c.l.b16 %v1010
        %v4506 = vunpack.c.h.b16 %v1010
        %v4507 = vunpack.c.l.b16 %v1011
        %v4508 = vunpack.c.h.b16 %v1011
        %v4509 = vunpack.c.l.b16 %v1012
        %v4510 = vunpack.c.h.b16 %v1012
        %v4511 = vunpack.c.l.b16 %v1013
        %v4512 = vunpack.c.h.b16 %v1013
        %v4513 = vunpack.c.l.b16 %v1014
        %v4514 = vunpack.c.h.b16 %v1014
        %v4515 = vunpack.c.l.b16 %v1015
        %v4516 = vunpack.c.h.b16 %v1015
        %v4517 = vunpack.c.l.b16 %v1016
        %v4518 = vunpack.c.h.b16 %v1016
        %v4519 = vunpack.c.l.b16 %v1017
        %v4520 = vunpack.c.h.b16 %v1017
        %v4521 = vunpack.c.l.b16 %v1018
        %v4522 = vunpack.c.h.b16 %v1018
        %v4523 = vunpack.c.l.b16 %v1019
        %v4524 = vunpack.c.h.b16 %v1019
        %v4525 = vunpack.c.l.b16 %v1020
        %v4526 = vunpack.c.h.b16 %v1020
        %v4527 = vunpack.c.l.b16 %v1021
        %v4528 = vunpack.c.h.b16 %v1021
        %v4529 = vunpack.c.l.b16 %v1022
        %v4530 = vunpack.c.h.b16 %v1022
        %v4531 = vunpack.c.l.b16 %v1023
        %v4532 = vunpack.c.h.b16 %v1023
        %v4533 = vunpack.c.l.b16 %v1024
        %v4534 = vunpack.c.h.b16 %v1024
        %v4535 = vunpack.c.l.b16 %v1025
        %v4536 = vunpack.c.h.b16 %v1025
        %v4537 = vunpack.c.l.b16 %v1026
        %v4538 = vunpack.c.h.b16 %v1026
        %v4539 = vunpack.c.l.b16 %v1027
        %v4540 = vunpack.c.h.b16 %v1027
        %v4541 = vunpack.c.l.b16 %v1028
        %v4542 = vunpack.c.h.b16 %v1028
        %v4543 = vunpack.c.l.b16 %v1029
        %v4544 = vunpack.c.h.b16 %v1029
        %v4545 = vunpack.c.l.b16 %v1030
        %v4546 = vunpack.c.h.b16 %v1030
        %v4547 = vunpack.c.l.b16 %v1031
        %v4548 = vunpack.c.h.b16 %v1031
        %v4549 = vunpack.c.l.b16 %v1032
        %v4550 = vunpack.c.h.b16 %v1032
        %v4551 = vunpack.c.l.b16 %v1033
        %v4552 = vunpack.c.h.b16 %v1033
        %v4553 = vunpack.c.l.b16 %v1034
        %v4554 = vunpack.c.h.b16 %v1034
        %v4555 = vunpack.c.l.b16 %v1035
        %v4556 = vunpack.c.h.b16 %v1035
        %v4557 = vunpack.c.l.b16 %v1036
        %v4558 = vunpack.c.h.b16 %v1036
        %v4559 = vunpack.c.l.b16 %v1037
        %v4560 = vunpack.c.h.b16 %v1037
        %v4561 = vunpack.c.l.b16 %v1038
        %v4562 = vunpack.c.h.b16 %v1038
        %v4563 = vunpack.c.l.b16 %v1039
        %v4564 = vunpack.c.h.b16 %v1039
        %v4565 = vunpack.c.l.b16 %v1040
        %v4566 = vunpack.c.h.b16 %v1040
        %v4567 = vunpack.c.l.b16 %v1041
        %v4568 = vunpack.c.h.b16 %v1041
        %v4569 = vunpack.c.l.b16 %v1042
        %v4570 = vunpack.c.h.b16 %v1042
        %v4571 = vunpack.c.l.b16 %v1043
        %v4572 = vunpack.c.h.b16 %v1043
        %v4573 = vunpack.c.l.b16 %v1044
        %v4574 = vunpack.c.h.b16 %v1044
        %v4575 = vunpack.c.l.b16 %v1045
        %v4576 = vunpack.c.h.b16 %v1045
        %v4577 = vunpack.c.l.b16 %v1046
        %v4578 = vunpack.c.h.b16 %v1046
        %v4579 = vunpack.c.l.b16 %v1047
        %v4580 = vunpack.c.h.b16 %v1047
        %v4581 = vunpack.c.l.b16 %v1048
        %v4582 = vunpack.c.h.b16 %v1048
        %v4583 = vunpack.c.l.b16 %v1049
        %v4584 = vunpack.c.h.b16 %v1049
        %v4585 = vunpack.c.l.b16 %v1050
        %v4586 = vunpack.c.h.b16 %v1050
        %v4587 = vunpack.c.l.b16 %v1051
        %v4588 = vunpack.c.h.b16 %v1051
        %v4589 = vunpack.c.l.b16 %v1052
        %v4590 = vunpack.c.h.b16 %v1052
        %v4591 = vunpack.c.l.b16 %v1053
        %v4592 = vunpack.c.h.b16 %v1053
        %v4593 = vunpack.c.l.b16 %v1054
        %v4594 = vunpack.c.h.b16 %v1054
        %v4595 = vunpack.c.l.b16 %v1055
        %v4596 = vunpack.c.h.b16 %v1055
        %v4597 = vunpack.c.l.b16 %v1056
        %v4598 = vunpack.c.h.b16 %v1056
        %v4599 = vunpack.c.l.b16 %v1057
        %v4600 = vunpack.c.h.b16 %v1057
        %v4601 = vunpack.c.l.b16 %v1058
        %v4602 = vunpack.c.h.b16 %v1058
        %v4603 = vunpack.c.l.b16 %v1059
        %v4604 = vunpack.c.h.b16 %v1059
        %v4605 = vunpack.c.l.b16 %v1060
        %v4606 = vunpack.c.h.b16 %v1060
        %v4607 = vunpack.c.l.b16 %v1061
        %v4608 = vunpack.c.h.b16 %v1061
        %v4609 = vunpack.c.l.b16 %v1062
        %v4610 = vunpack.c.h.b16 %v1062
        %v4611 = vunpack.c.l.b16 %v1063
        %v4612 = vunpack.c.h.b16 %v1063
        %v4613 = vunpack.c.l.b16 %v1064
        %v4614 = vunpack.c.h.b16 %v1064
        %v4615 = vunpack.c.l.b16 %v1065
        %v4616 = vunpack.c.h.b16 %v1065
        %v4617 = vunpack.c.l.b16 %v1066
        %v4618 = vunpack.c.h.b16 %v1066
        %v4619 = vunpack.c.l.b16 %v1067
        %v4620 = vunpack.c.h.b16 %v1067
        %v4621 = vunpack.c.l.b16 %v1068
        %v4622 = vunpack.c.h.b16 %v1068
        %v4623 = vunpack.c.l.b16 %v1069
        %v4624 = vunpack.c.h.b16 %v1069
        %v4625 = vunpack.c.l.b16 %v1070
        %v4626 = vunpack.c.h.b16 %v1070
        %v4627 = vunpack.c.l.b16 %v1071
        %v4628 = vunpack.c.h.b16 %v1071
        %v4629 = vunpack.c.l.b16 %v1072
        %v4630 = vunpack.c.h.b16 %v1072
        %v4631 = vunpack.c.l.b16 %v1073
        %v4632 = vunpack.c.h.b16 %v1073
        %v4633 = vunpack.c.l.b16 %v1074
        %v4634 = vunpack.c.h.b16 %v1074
        %v4635 = vunpack.c.l.b16 %v1075
        %v4636 = vunpack.c.h.b16 %v1075
        %v4637 = vunpack.c.l.b16 %v1076
        %v4638 = vunpack.c.h.b16 %v1076
        %v4639 = vunpack.c.l.b16 %v1077
        %v4640 = vunpack.c.h.b16 %v1077
        %v4641 = vunpack.c.l.b16 %v1078
        %v4642 = vunpack.c.h.b16 %v1078
        %v4643 = vunpack.c.l.b16 %v1079
        %v4644 = vunpack.c.h.b16 %v1079
        %v4645 = vunpack.c.l.b16 %v1080
        %v4646 = vunpack.c.h.b16 %v1080
        %v4647 = vunpack.c.l.b16 %v1081
        %v4648 = vunpack.c.h.b16 %v1081
        %v4649 = vunpack.c.l.b16 %v1082
        %v4650 = vunpack.c.h.b16 %v1082
        %v4651 = vunpack.c.l.b16 %v1083
        %v4652 = vunpack.c.h.b16 %v1083
        %v4653 = vunpack.c.l.b16 %v1084
        %v4654 = vunpack.c.h.b16 %v1084
        %v4655 = vunpack.c.l.b16 %v1085
        %v4656 = vunpack.c.h.b16 %v1085
        %v4657 = vunpack.c.l.b16 %v1086
        %v4658 = vunpack.c.h.b16 %v1086
        %v4659 = vunpack.c.l.b16 %v1087
        %v4660 = vunpack.c.h.b16 %v1087
        %v4661 = vunpack.c.l.b16 %v1088
        %v4662 = vunpack.c.h.b16 %v1088
        %v4663 = vunpack.c.l.b16 %v1089
        %v4664 = vunpack.c.h.b16 %v1089
        %v4665 = vunpack.c.l.b16 %v1090
        %v4666 = vunpack.c.h.b16 %v1090
        %v4667 = vunpack.c.l.b16 %v1091
        %v4668 = vunpack.c.h.b16 %v1091
        %v4669 = vunpack.c.l.b16 %v1092
        %v4670 = vunpack.c.h.b16 %v1092
        %v4671 = vunpack.c.l.b16 %v1093
        %v4672 = vunpack.c.h.b16 %v1093
        %v4673 = vunpack.c.l.b16 %v1094
        %v4674 = vunpack.c.h.b16 %v1094
        %v4675 = vunpack.c.l.b16 %v1095
        %v4676 = vunpack.c.h.b16 %v1095
        %v4677 = vunpack.c.l.b16 %v1096
        %v4678 = vunpack.c.h.b16 %v1096
        %v4679 = vunpack.c.l.b16 %v1097
        %v4680 = vunpack.c.h.b16 %v1097
        %v4681 = vunpack.c.l.b16 %v1098
        %v4682 = vunpack.c.h.b16 %v1098
        %v4683 = vunpack.c.l.b16 %v1099
        %v4684 = vunpack.c.h.b16 %v1099
        %v4685 = vunpack.c.l.b16 %v1100
        %v4686 = vunpack.c.h.b16 %v1100
        %v4687 = vunpack.c.l.b16 %v1101
        %v4688 = vunpack.c.h.b16 %v1101
        %v4689 = vunpack.c.l.b16 %v1102
        %v4690 = vunpack.c.h.b16 %v1102
        %v4691 = vunpack.c.l.b16 %v1103
        %v4692 = vunpack.c.h.b16 %v1103
        %v4693 = vunpack.c.l.b16 %v1104
        %v4694 = vunpack.c.h.b16 %v1104
        %v4695 = vunpack.c.l.b16 %v1105
        %v4696 = vunpack.c.h.b16 %v1105
        %v4697 = vunpack.c.l.b16 %v1106
        %v4698 = vunpack.c.h.b16 %v1106
        %v4699 = vunpack.c.l.b16 %v1107
        %v4700 = vunpack.c.h.b16 %v1107
        %v4701 = vunpack.c.l.b16 %v1108
        %v4702 = vunpack.c.h.b16 %v1108
        %v4703 = vunpack.c.l.b16 %v1109
        %v4704 = vunpack.c.h.b16 %v1109
        %v4705 = vunpack.c.l.b16 %v1110
        %v4706 = vunpack.c.h.b16 %v1110
        %v4707 = vunpack.c.l.b16 %v1111
        %v4708 = vunpack.c.h.b16 %v1111
        %v4709 = vunpack.c.l.b16 %v1112
        %v4710 = vunpack.c.h.b16 %v1112
        %v4711 = vunpack.c.l.b16 %v1113
        %v4712 = vunpack.c.h.b16 %v1113
        %v4713 = vunpack.c.l.b16 %v1114
        %v4714 = vunpack.c.h.b16 %v1114
        %v4715 = vunpack.c.l.b16 %v1115
        %v4716 = vunpack.c.h.b16 %v1115
        %v4717 = vunpack.c.l.b16 %v1116
        %v4718 = vunpack.c.h.b16 %v1116
        %v4719 = vunpack.c.l.b16 %v1117
        %v4720 = vunpack.c.h.b16 %v1117
        %v4721 = vunpack.c.l.b16 %v1118
        %v4722 = vunpack.c.h.b16 %v1118
        %v4723 = vunpack.c.l.b16 %v1119
        %v4724 = vunpack.c.h.b16 %v1119
        %v4725 = vunpack.c.l.b16 %v1120
        %v4726 = vunpack.c.h.b16 %v1120
        %v4727 = vunpack.c.l.b16 %v1121
        %v4728 = vunpack.c.h.b16 %v1121
        %v4729 = vunpack.c.l.b16 %v1122
        %v4730 = vunpack.c.h.b16 %v1122
        %v4731 = vunpack.c.l.b16 %v1123
        %v4732 = vunpack.c.h.b16 %v1123
        %v4733 = vunpack.c.l.b16 %v1124
        %v4734 = vunpack.c.h.b16 %v1124
        %v4735 = vunpack.c.l.b16 %v1125
        %v4736 = vunpack.c.h.b16 %v1125
        %v4737 = vunpack.c.l.b16 %v1126
        %v4738 = vunpack.c.h.b16 %v1126
        %v4739 = vunpack.c.l.b16 %v1127
        %v4740 = vunpack.c.h.b16 %v1127
        %v4741 = vunpack.c.l.b16 %v1128
        %v4742 = vunpack.c.h.b16 %v1128
        %v4743 = vunpack.c.l.b16 %v1129
        %v4744 = vunpack.c.h.b16 %v1129
        %v4745 = vunpack.c.l.b16 %v1130
        %v4746 = vunpack.c.h.b16 %v1130
        %v4747 = vunpack.c.l.b16 %v1131
        %v4748 = vunpack.c.h.b16 %v1131
        %v4749 = vunpack.c.l.b16 %v1132
        %v4750 = vunpack.c.h.b16 %v1132
        %v4751 = vunpack.c.l.b16 %v1133
        %v4752 = vunpack.c.h.b16 %v1133
        %v4753 = vunpack.c.l.b16 %v1134
        %v4754 = vunpack.c.h.b16 %v1134
        %v4755 = vunpack.c.l.b16 %v1135
        %v4756 = vunpack.c.h.b16 %v1135
        %v4757 = vunpack.c.l.b16 %v1136
        %v4758 = vunpack.c.h.b16 %v1136
        %v4759 = vunpack.c.l.b16 %v1137
        %v4760 = vunpack.c.h.b16 %v1137
        %v4761 = vunpack.c.l.b16 %v1138
        %v4762 = vunpack.c.h.b16 %v1138
        %v4763 = vunpack.c.l.b16 %v1139
        %v4764 = vunpack.c.h.b16 %v1139
        %v4765 = vunpack.c.l.b16 %v1140
        %v4766 = vunpack.c.h.b16 %v1140
        %v4767 = vunpack.c.l.b16 %v1141
        %v4768 = vunpack.c.h.b16 %v1141
        %v4769 = vunpack.c.l.b16 %v1142
        %v4770 = vunpack.c.h.b16 %v1142
        %v4771 = vunpack.c.l.b16 %v1143
        %v4772 = vunpack.c.h.b16 %v1143
        %v4773 = vunpack.c.l.b16 %v1144
        %v4774 = vunpack.c.h.b16 %v1144
        %v4775 = vunpack.c.l.b16 %v1145
        %v4776 = vunpack.c.h.b16 %v1145
        %v4777 = vunpack.c.l.b16 %v1146
        %v4778 = vunpack.c.h.b16 %v1146
        %v4779 = vunpack.c.l.b16 %v1147
        %v4780 = vunpack.c.h.b16 %v1147
        %v4781 = vunpack.c.l.b16 %v1148
        %v4782 = vunpack.c.h.b16 %v1148
        %v4783 = vunpack.c.l.b16 %v1149
        %v4784 = vunpack.c.h.b16 %v1149
        %v4785 = vunpack.c.l.b16 %v1150
        %v4786 = vunpack.c.h.b16 %v1150
        %v4787 = vunpack.c.l.b16 %v1151
        %v4788 = vunpack.c.h.b16 %v1151
        %v4789 = vunpack.c.l.b16 %v1152
        %v4790 = vunpack.c.h.b16 %v1152
        %v4791 = vunpack.c.l.b16 %v1153
        %v4792 = vunpack.c.h.b16 %v1153
        %v4793 = vunpack.c.l.b16 %v1154
        %v4794 = vunpack.c.h.b16 %v1154
        %v4795 = vunpack.c.l.b16 %v1155
        %v4796 = vunpack.c.h.b16 %v1155
        %v4797 = vunpack.c.l.b16 %v1156
        %v4798 = vunpack.c.h.b16 %v1156
        %v4799 = vunpack.c.l.b16 %v1157
        %v4800 = vunpack.c.h.b16 %v1157
        %v4801 = vunpack.c.l.b16 %v1158
        %v4802 = vunpack.c.h.b16 %v1158
        %v4803 = vunpack.c.l.b16 %v1159
        %v4804 = vunpack.c.h.b16 %v1159
        %v4805 = vunpack.c.l.b16 %v1160
        %v4806 = vunpack.c.h.b16 %v1160
        %v4807 = vunpack.c.l.b16 %v1161
        %v4808 = vunpack.c.h.b16 %v1161
        %v4809 = vunpack.c.l.b16 %v1162
        %v4810 = vunpack.c.h.b16 %v1162
        %v4811 = vunpack.c.l.b16 %v1163
        %v4812 = vunpack.c.h.b16 %v1163
        %v4813 = vunpack.c.l.b16 %v1164
        %v4814 = vunpack.c.h.b16 %v1164
        %v4815 = vunpack.c.l.b16 %v1165
        %v4816 = vunpack.c.h.b16 %v1165
        %v4817 = vunpack.c.l.b16 %v1166
        %v4818 = vunpack.c.h.b16 %v1166
        %v4819 = vunpack.c.l.b16 %v1167
        %v4820 = vunpack.c.h.b16 %v1167
        %v4821 = vunpack.c.l.b16 %v1168
        %v4822 = vunpack.c.h.b16 %v1168
        %v4823 = vunpack.c.l.b16 %v1169
        %v4824 = vunpack.c.h.b16 %v1169
        %v4825 = vunpack.c.l.b16 %v1170
        %v4826 = vunpack.c.h.b16 %v1170
        %v4827 = vunpack.c.l.b16 %v1171
        %v4828 = vunpack.c.h.b16 %v1171
        %v4829 = vunpack.c.l.b16 %v1172
        %v4830 = vunpack.c.h.b16 %v1172
        %v4831 = vunpack.c.l.b16 %v1173
        %v4832 = vunpack.c.h.b16 %v1173
        %v4833 = vunpack.c.l.b16 %v1174
        %v4834 = vunpack.c.h.b16 %v1174
        %v4835 = vunpack.c.l.b16 %v1175
        %v4836 = vunpack.c.h.b16 %v1175
        %v4837 = vunpack.c.l.b16 %v1176
        %v4838 = vunpack.c.h.b16 %v1176
        %v4839 = vunpack.c.l.b16 %v1177
        %v4840 = vunpack.c.h.b16 %v1177
        %v4841 = vunpack.c.l.b16 %v1178
        %v4842 = vunpack.c.h.b16 %v1178
        %v4843 = vunpack.c.l.b16 %v1179
        %v4844 = vunpack.c.h.b16 %v1179
        %v4845 = vunpack.c.l.b16 %v1180
        %v4846 = vunpack.c.h.b16 %v1180
        %v4847 = vunpack.c.l.b16 %v1181
        %v4848 = vunpack.c.h.b16 %v1181
        %v4849 = vunpack.c.l.b16 %v1182
        %v4850 = vunpack.c.h.b16 %v1182
        %v4851 = vunpack.c.l.b16 %v1183
        %v4852 = vunpack.c.h.b16 %v1183
        %v4853 = vunpack.c.l.b16 %v1184
        %v4854 = vunpack.c.h.b16 %v1184
        %v4855 = vunpack.c.l.b16 %v1185
        %v4856 = vunpack.c.h.b16 %v1185
        %v4857 = vunpack.c.l.b16 %v1186
        %v4858 = vunpack.c.h.b16 %v1186
        %v4859 = vunpack.c.l.b16 %v1187
        %v4860 = vunpack.c.h.b16 %v1187
        %v4861 = vunpack.c.l.b16 %v1188
        %v4862 = vunpack.c.h.b16 %v1188
        %v4863 = vunpack.c.l.b16 %v1189
        %v4864 = vunpack.c.h.b16 %v1189
        %v4865 = vunpack.c.l.b16 %v1190
        %v4866 = vunpack.c.h.b16 %v1190
        %v4867 = vunpack.c.l.b16 %v1191
        %v4868 = vunpack.c.h.b16 %v1191
        %v4869 = vunpack.c.l.b16 %v1192
        %v4870 = vunpack.c.h.b16 %v1192
        %v4871 = vunpack.c.l.b16 %v1193
        %v4872 = vunpack.c.h.b16 %v1193
        %v4873 = vunpack.c.l.b16 %v1194
        %v4874 = vunpack.c.h.b16 %v1194
        %v4875 = vunpack.c.l.b16 %v1195
        %v4876 = vunpack.c.h.b16 %v1195
        %v4877 = vunpack.c.l.b16 %v1196
        %v4878 = vunpack.c.h.b16 %v1196
        %v4879 = vunpack.c.l.b16 %v1197
        %v4880 = vunpack.c.h.b16 %v1197
        %v4881 = vunpack.c.l.b16 %v1198
        %v4882 = vunpack.c.h.b16 %v1198
        %v4883 = vunpack.c.l.b16 %v1199
        %v4884 = vunpack.c.h.b16 %v1199
        %v4885 = vunpack.c.l.b16 %v1200
        %v4886 = vunpack.c.h.b16 %v1200
        %v4887 = vunpack.c.l.b16 %v1201
        %v4888 = vunpack.c.h.b16 %v1201
        %v4889 = vunpack.c.l.b16 %v1202
        %v4890 = vunpack.c.h.b16 %v1202
        %v4891 = vunpack.c.l.b16 %v1203
        %v4892 = vunpack.c.h.b16 %v1203
        %v4893 = vunpack.c.l.b16 %v1204
        %v4894 = vunpack.c.h.b16 %v1204
        %v4895 = vunpack.c.l.b16 %v1205
        %v4896 = vunpack.c.h.b16 %v1205
        %v4897 = vunpack.c.l.b16 %v1206
        %v4898 = vunpack.c.h.b16 %v1206
        %v4899 = vunpack.c.l.b16 %v1207
        %v4900 = vunpack.c.h.b16 %v1207
        %v4901 = vunpack.c.l.b16 %v1208
        %v4902 = vunpack.c.h.b16 %v1208
        %v4903 = vunpack.c.l.b16 %v1209
        %v4904 = vunpack.c.h.b16 %v1209
        %v4905 = vunpack.c.l.b16 %v1210
        %v4906 = vunpack.c.h.b16 %v1210
        %v4907 = vunpack.c.l.b16 %v1211
        %v4908 = vunpack.c.h.b16 %v1211
        %v4909 = vunpack.c.l.b16 %v1212
        %v4910 = vunpack.c.h.b16 %v1212
        %v4911 = vunpack.c.l.b16 %v1213
        %v4912 = vunpack.c.h.b16 %v1213
        %v4913 = vunpack.c.l.b16 %v1214
        %v4914 = vunpack.c.h.b16 %v1214
        %v4915 = vunpack.c.l.b16 %v1215
        %v4916 = vunpack.c.h.b16 %v1215
        %v4917 = vunpack.c.l.b16 %v1216
        %v4918 = vunpack.c.h.b16 %v1216
        %v4919 = vunpack.c.l.b16 %v1217
        %v4920 = vunpack.c.h.b16 %v1217
        %v4921 = vunpack.c.l.b16 %v1218
        %v4922 = vunpack.c.h.b16 %v1218
        %v4923 = vunpack.c.l.b16 %v1219
        %v4924 = vunpack.c.h.b16 %v1219
        %v4925 = vunpack.c.l.b16 %v1220
        %v4926 = vunpack.c.h.b16 %v1220
        %v4927 = vunpack.c.l.b16 %v1221
        %v4928 = vunpack.c.h.b16 %v1221
        %v4929 = vunpack.c.l.b16 %v1222
        %v4930 = vunpack.c.h.b16 %v1222
        %v4931 = vunpack.c.l.b16 %v1223
        %v4932 = vunpack.c.h.b16 %v1223
        %v4933 = vunpack.c.l.b16 %v1224
        %v4934 = vunpack.c.h.b16 %v1224
        %v4935 = vunpack.c.l.b16 %v1225
        %v4936 = vunpack.c.h.b16 %v1225
        %v4937 = vunpack.c.l.b16 %v1226
        %v4938 = vunpack.c.h.b16 %v1226
        %v4939 = vunpack.c.l.b16 %v1227
        %v4940 = vunpack.c.h.b16 %v1227
        %v4941 = vunpack.c.l.b16 %v1228
        %v4942 = vunpack.c.h.b16 %v1228
        %v4943 = vunpack.c.l.b16 %v1229
        %v4944 = vunpack.c.h.b16 %v1229
        %v4945 = vunpack.c.l.b16 %v1230
        %v4946 = vunpack.c.h.b16 %v1230
        %v4947 = vunpack.c.l.b16 %v1231
        %v4948 = vunpack.c.h.b16 %v1231
        %v4949 = vunpack.c.l.b16 %v1232
        %v4950 = vunpack.c.h.b16 %v1232
        %v4951 = vunpack.c.l.b16 %v1233
        %v4952 = vunpack.c.h.b16 %v1233
        %v4953 = vunpack.c.l.b16 %v1234
        %v4954 = vunpack.c.h.b16 %v1234
        %v4955 = vunpack.c.l.b16 %v1235
        %v4956 = vunpack.c.h.b16 %v1235
        %v4957 = vunpack.c.l.b16 %v1236
        %v4958 = vunpack.c.h.b16 %v1236
        %v4959 = vunpack.c.l.b16 %v1237
        %v4960 = vunpack.c.h.b16 %v1237
        %v4961 = vunpack.c.l.b16 %v1238
        %v4962 = vunpack.c.h.b16 %v1238
        %v4963 = vunpack.c.l.b16 %v1239
        %v4964 = vunpack.c.h.b16 %v1239
        %v4965 = vunpack.c.l.b16 %v1240
        %v4966 = vunpack.c.h.b16 %v1240
        %v4967 = vunpack.c.l.b16 %v1241
        %v4968 = vunpack.c.h.b16 %v1241
        %v4969 = vunpack.c.l.b16 %v1242
        %v4970 = vunpack.c.h.b16 %v1242
        %v4971 = vunpack.c.l.b16 %v1243
        %v4972 = vunpack.c.h.b16 %v1243
        %v4973 = vunpack.c.l.b16 %v1244
        %v4974 = vunpack.c.h.b16 %v1244
        %v4975 = vunpack.c.l.b16 %v1245
        %v4976 = vunpack.c.h.b16 %v1245
        %v4977 = vunpack.c.l.b16 %v1246
        %v4978 = vunpack.c.h.b16 %v1246
        %v4979 = vunpack.c.l.b16 %v1247
        %v4980 = vunpack.c.h.b16 %v1247
        %v4981 = vunpack.c.l.b16 %v1248
        %v4982 = vunpack.c.h.b16 %v1248
        %v4983 = vunpack.c.l.b16 %v1249
        %v4984 = vunpack.c.h.b16 %v1249
        %v4985 = vunpack.c.l.b16 %v1250
        %v4986 = vunpack.c.h.b16 %v1250
        %v4987 = vunpack.c.l.b16 %v1251
        %v4988 = vunpack.c.h.b16 %v1251
        %v4989 = vunpack.c.l.b16 %v1252
        %v4990 = vunpack.c.h.b16 %v1252
        %v4991 = vunpack.c.l.b16 %v1253
        %v4992 = vunpack.c.h.b16 %v1253
        %v4993 = vunpack.c.l.b16 %v1254
        %v4994 = vunpack.c.h.b16 %v1254
        %v4995 = vunpack.c.l.b16 %v1255
        %v4996 = vunpack.c.h.b16 %v1255
        %v4997 = vunpack.c.l.b16 %v1256
        %v4998 = vunpack.c.h.b16 %v1256
        %v4999 = vunpack.c.l.b16 %v1257
        %v5000 = vunpack.c.h.b16 %v1257
        %v5001 = vunpack.c.l.b16 %v1258
        %v5002 = vunpack.c.h.b16 %v1258
        %v5003 = vunpack.c.l.b16 %v1259
        %v5004 = vunpack.c.h.b16 %v1259
        %v5005 = vunpack.c.l.b16 %v1260
        %v5006 = vunpack.c.h.b16 %v1260
        %v5007 = vunpack.c.l.b16 %v1261
        %v5008 = vunpack.c.h.b16 %v1261
        %v5009 = vunpack.c.l.b16 %v1262
        %v5010 = vunpack.c.h.b16 %v1262
        %v5011 = vunpack.c.l.b16 %v1263
        %v5012 = vunpack.c.h.b16 %v1263
        %v5013 = vunpack.c.l.b16 %v1264
        %v5014 = vunpack.c.h.b16 %v1264
        %v5015 = vunpack.c.l.b16 %v1265
        %v5016 = vunpack.c.h.b16 %v1265
        %v5017 = vunpack.c.l.b16 %v1266
        %v5018 = vunpack.c.h.b16 %v1266
        %v5019 = vunpack.c.l.b16 %v1267
        %v5020 = vunpack.c.h.b16 %v1267
        %v5021 = vunpack.c.l.b16 %v1268
        %v5022 = vunpack.c.h.b16 %v1268
        %v5023 = vunpack.c.l.b16 %v1269
        %v5024 = vunpack.c.h.b16 %v1269
        %v5025 = vunpack.c.l.b16 %v1270
        %v5026 = vunpack.c.h.b16 %v1270
        %v5027 = vunpack.c.l.b16 %v1271
        %v5028 = vunpack.c.h.b16 %v1271
        %v5029 = vunpack.c.l.b16 %v1272
        %v5030 = vunpack.c.h.b16 %v1272
        %v5031 = vunpack.c.l.b16 %v1273
        %v5032 = vunpack.c.h.b16 %v1273
        %v5033 = vunpack.c.l.b16 %v1274
        %v5034 = vunpack.c.h.b16 %v1274
        %v5035 = vunpack.c.l.b16 %v1275
        %v5036 = vunpack.c.h.b16 %v1275
        %v5037 = vunpack.c.l.b16 %v1276
        %v5038 = vunpack.c.h.b16 %v1276
        %v5039 = vunpack.c.l.b16 %v1277
        %v5040 = vunpack.c.h.b16 %v1277
        %v5041 = vunpack.c.l.b16 %v1278
        %v5042 = vunpack.c.h.b16 %v1278
        %v5043 = vunpack.c.l.b16 %v1279
        %v5044 = vunpack.c.h.b16 %v1279
        %v5045 = vunpack.c.l.b16 %v1280
        %v5046 = vunpack.c.h.b16 %v1280
        %v5047 = vunpack.c.l.b16 %v1281
        %v5048 = vunpack.c.h.b16 %v1281
        %v5049 = vunpack.c.l.b16 %v1282
        %v5050 = vunpack.c.h.b16 %v1282
        %v5051 = vunpack.c.l.b16 %v1283
        %v5052 = vunpack.c.h.b16 %v1283
        %v5053 = vunpack.c.l.b16 %v1284
        %v5054 = vunpack.c.h.b16 %v1284
        %v5055 = vunpack.c.l.b16 %v1285
        %v5056 = vunpack.c.h.b16 %v1285
        %v5057 = vunpack.c.l.b16 %v1286
        %v5058 = vunpack.c.h.b16 %v1286
        %v5059 = vunpack.c.l.b16 %v1287
        %v5060 = vunpack.c.h.b16 %v1287
        %v5061 = vunpack.c.l.b16 %v1288
        %v5062 = vunpack.c.h.b16 %v1288
        %v5063 = vunpack.c.l.b16 %v1289
        %v5064 = vunpack.c.h.b16 %v1289
        %v5065 = vunpack.c.l.b16 %v1290
        %v5066 = vunpack.c.h.b16 %v1290
        %v5067 = vunpack.c.l.b16 %v1291
        %v5068 = vunpack.c.h.b16 %v1291
        %v5069 = vunpack.c.l.b16 %v1292
        %v5070 = vunpack.c.h.b16 %v1292
        %v5071 = vunpack.c.l.b16 %v1293
        %v5072 = vunpack.c.h.b16 %v1293
        %v5073 = vunpack.c.l.b16 %v1294
        %v5074 = vunpack.c.h.b16 %v1294
        %v5075 = vunpack.c.l.b16 %v1295
        %v5076 = vunpack.c.h.b16 %v1295
        %v5077 = vunpack.c.l.b16 %v1296
        %v5078 = vunpack.c.h.b16 %v1296
        %v5079 = vunpack.c.l.b16 %v1297
        %v5080 = vunpack.c.h.b16 %v1297
        %v5081 = vunpack.c.l.b16 %v1298
        %v5082 = vunpack.c.h.b16 %v1298
        %v5083 = vunpack.c.l.b16 %v1299
        %v5084 = vunpack.c.h.b16 %v1299
        %v5085 = vunpack.c.l.b16 %v1300
        %v5086 = vunpack.c.h.b16 %v1300
        %v5087 = vunpack.c.l.b16 %v1301
        %v5088 = vunpack.c.h.b16 %v1301
        %v5089 = vunpack.c.l.b16 %v1302
        %v5090 = vunpack.c.h.b16 %v1302
        %v5091 = vunpack.c.l.b16 %v1303
        %v5092 = vunpack.c.h.b16 %v1303
        %v5093 = vunpack.c.l.b16 %v1304
        %v5094 = vunpack.c.h.b16 %v1304
        %v5095 = vunpack.c.l.b16 %v1305
        %v5096 = vunpack.c.h.b16 %v1305
        %v5097 = vunpack.c.l.b16 %v1306
        %v5098 = vunpack.c.h.b16 %v1306
        %v5099 = vunpack.c.l.b16 %v1307
        %v5100 = vunpack.c.h.b16 %v1307
        %v5101 = vunpack.c.l.b16 %v1308
        %v5102 = vunpack.c.h.b16 %v1308
        %v5103 = vunpack.c.l.b16 %v1309
        %v5104 = vunpack.c.h.b16 %v1309
        %v5105 = vunpack.c.l.b16 %v1310
        %v5106 = vunpack.c.h.b16 %v1310
        %v5107 = vunpack.c.l.b16 %v1311
        %v5108 = vunpack.c.h.b16 %v1311
        %v5109 = vunpack.c.l.b16 %v1312
        %v5110 = vunpack.c.h.b16 %v1312
        %v5111 = vunpack.c.l.b16 %v1313
        %v5112 = vunpack.c.h.b16 %v1313
        %v5113 = vunpack.c.l.b16 %v1314
        %v5114 = vunpack.c.h.b16 %v1314
        %v5115 = vunpack.c.l.b16 %v1315
        %v5116 = vunpack.c.h.b16 %v1315
        %v5117 = vunpack.c.l.b16 %v1316
        %v5118 = vunpack.c.h.b16 %v1316
        %v5119 = vunpack.c.l.b16 %v1317
        %v5120 = vunpack.c.h.b16 %v1317
        %v5121 = vunpack.c.l.b16 %v1318
        %v5122 = vunpack.c.h.b16 %v1318
        %v5123 = vunpack.c.l.b16 %v1319
        %v5124 = vunpack.c.h.b16 %v1319
        %v5125 = vunpack.c.l.b16 %v1320
        %v5126 = vunpack.c.h.b16 %v1320
        %v5127 = vunpack.c.l.b16 %v1321
        %v5128 = vunpack.c.h.b16 %v1321
        %v5129 = vunpack.c.l.b16 %v1322
        %v5130 = vunpack.c.h.b16 %v1322
        %v5131 = vunpack.c.l.b16 %v1323
        %v5132 = vunpack.c.h.b16 %v1323
        %v5133 = vunpack.c.l.b16 %v1324
        %v5134 = vunpack.c.h.b16 %v1324
        %v5135 = vunpack.c.l.b16 %v1325
        %v5136 = vunpack.c.h.b16 %v1325
        %v5137 = vunpack.c.l.b16 %v1326
        %v5138 = vunpack.c.h.b16 %v1326
        %v5139 = vunpack.c.l.b16 %v1327
        %v5140 = vunpack.c.h.b16 %v1327
        %v5141 = vunpack.c.l.b16 %v1328
        %v5142 = vunpack.c.h.b16 %v1328
        %v5143 = vunpack.c.l.b16 %v1329
        %v5144 = vunpack.c.h.b16 %v1329
        %v5145 = vunpack.c.l.b16 %v1330
        %v5146 = vunpack.c.h.b16 %v1330
        %v5147 = vunpack.c.l.b16 %v1331
        %v5148 = vunpack.c.h.b16 %v1331
        %v5149 = vunpack.c.l.b16 %v1332
        %v5150 = vunpack.c.h.b16 %v1332
        %v5151 = vunpack.c.l.b16 %v1333
        %v5152 = vunpack.c.h.b16 %v1333
        %v5153 = vunpack.c.l.b16 %v1334
        %v5154 = vunpack.c.h.b16 %v1334
        %v5155 = vunpack.c.l.b16 %v1335
        %v5156 = vunpack.c.h.b16 %v1335
        %v5157 = vunpack.c.l.b16 %v1336
        %v5158 = vunpack.c.h.b16 %v1336
        %v5159 = vunpack.c.l.b16 %v1337
        %v5160 = vunpack.c.h.b16 %v1337
        %v5161 = vunpack.c.l.b16 %v1338
        %v5162 = vunpack.c.h.b16 %v1338
        %v5163 = vunpack.c.l.b16 %v1339
        %v5164 = vunpack.c.h.b16 %v1339
        %v5165 = vunpack.c.l.b16 %v1340
        %v5166 = vunpack.c.h.b16 %v1340
        %v5167 = vunpack.c.l.b16 %v1341
        %v5168 = vunpack.c.h.b16 %v1341
        %v5169 = vunpack.c.l.b16 %v1342
        %v5170 = vunpack.c.h.b16 %v1342
        %v5171 = vunpack.c.l.b16 %v1343
        %v5172 = vunpack.c.h.b16 %v1343
        %v5173 = vunpack.c.l.b16 %v1344
        %v5174 = vunpack.c.h.b16 %v1344
        %v5175 = vunpack.c.l.b16 %v1345
        %v5176 = vunpack.c.h.b16 %v1345
        %v5177 = vunpack.c.l.b16 %v1346
        %v5178 = vunpack.c.h.b16 %v1346
        %v5179 = vunpack.c.l.b16 %v1347
        %v5180 = vunpack.c.h.b16 %v1347
        %v5181 = vunpack.c.l.b16 %v1348
        %v5182 = vunpack.c.h.b16 %v1348
        %v5183 = vunpack.c.l.b16 %v1349
        %v5184 = vunpack.c.h.b16 %v1349
        %v5185 = vunpack.c.l.b16 %v1350
        %v5186 = vunpack.c.h.b16 %v1350
        %v5187 = vunpack.c.l.b16 %v1351
        %v5188 = vunpack.c.h.b16 %v1351
        %v5189 = vunpack.c.l.b16 %v1352
        %v5190 = vunpack.c.h.b16 %v1352
        %v5191 = vunpack.c.l.b16 %v1353
        %v5192 = vunpack.c.h.b16 %v1353
        %v5193 = vunpack.c.l.b16 %v1354
        %v5194 = vunpack.c.h.b16 %v1354
        %v5195 = vunpack.c.l.b16 %v1355
        %v5196 = vunpack.c.h.b16 %v1355
        %v5197 = vunpack.c.l.b16 %v1356
        %v5198 = vunpack.c.h.b16 %v1356
        %v5199 = vunpack.c.l.b16 %v1357
        %v5200 = vunpack.c.h.b16 %v1357
        %v5201 = vunpack.c.l.b16 %v1358
        %v5202 = vunpack.c.h.b16 %v1358
        %v5203 = vunpack.c.l.b16 %v1359
        %v5204 = vunpack.c.h.b16 %v1359
        %v5205 = vunpack.c.l.b16 %v1360
        %v5206 = vunpack.c.h.b16 %v1360
        %v5207 = vunpack.c.l.b16 %v1361
        %v5208 = vunpack.c.h.b16 %v1361
        %v5209 = vunpack.c.l.b16 %v1362
        %v5210 = vunpack.c.h.b16 %v1362
        %v5211 = vunpack.c.l.b16 %v1363
        %v5212 = vunpack.c.h.b16 %v1363
        %v5213 = vunpack.c.l.b16 %v1364
        %v5214 = vunpack.c.h.b16 %v1364
        %v5215 = vunpack.c.l.b16 %v1365
        %v5216 = vunpack.c.h.b16 %v1365
        %v5217 = vunpack.c.l.b16 %v1366
        %v5218 = vunpack.c.h.b16 %v1366
        %v5219 = vunpack.c.l.b16 %v1367
        %v5220 = vunpack.c.h.b16 %v1367
        %v5221 = vunpack.c.l.b16 %v1368
        %v5222 = vunpack.c.h.b16 %v1368
        %v5223 = vunpack.c.l.b16 %v1369
        %v5224 = vunpack.c.h.b16 %v1369
        %v5225 = vunpack.c.l.b16 %v1370
        %v5226 = vunpack.c.h.b16 %v1370
        %v5227 = vunpack.c.l.b16 %v1371
        %v5228 = vunpack.c.h.b16 %v1371
        %v5229 = vunpack.c.l.b16 %v1372
        %v5230 = vunpack.c.h.b16 %v1372
        %v5231 = vunpack.c.l.b16 %v1373
        %v5232 = vunpack.c.h.b16 %v1373
        %v5233 = vunpack.c.l.b16 %v1374
        %v5234 = vunpack.c.h.b16 %v1374
        %v5235 = vunpack.c.l.b16 %v1375
        %v5236 = vunpack.c.h.b16 %v1375
        %v5237 = vunpack.c.l.b16 %v1376
        %v5238 = vunpack.c.h.b16 %v1376
        %v5239 = vunpack.c.l.b16 %v1377
        %v5240 = vunpack.c.h.b16 %v1377
        %v5241 = vunpack.c.l.b16 %v1378
        %v5242 = vunpack.c.h.b16 %v1378
        %v5243 = vunpack.c.l.b16 %v1379
        %v5244 = vunpack.c.h.b16 %v1379
        %v5245 = vunpack.c.l.b16 %v1380
        %v5246 = vunpack.c.h.b16 %v1380
        %v5247 = vunpack.c.l.b16 %v1381
        %v5248 = vunpack.c.h.b16 %v1381
        %v5249 = vunpack.c.l.b16 %v1382
        %v5250 = vunpack.c.h.b16 %v1382
        %v5251 = vunpack.c.l.b16 %v1383
        %v5252 = vunpack.c.h.b16 %v1383
        %v5253 = vunpack.c.l.b16 %v1384
        %v5254 = vunpack.c.h.b16 %v1384
        %v5255 = vunpack.c.l.b16 %v1385
        %v5256 = vunpack.c.h.b16 %v1385
        %v5257 = vunpack.c.l.b16 %v1386
        %v5258 = vunpack.c.h.b16 %v1386
        %v5259 = vunpack.c.l.b16 %v1387
        %v5260 = vunpack.c.h.b16 %v1387
        %v5261 = vunpack.c.l.b16 %v1388
        %v5262 = vunpack.c.h.b16 %v1388
        %v5263 = vunpack.c.l.b16 %v1389
        %v5264 = vunpack.c.h.b16 %v1389
        %v5265 = vunpack.c.l.b16 %v1390
        %v5266 = vunpack.c.h.b16 %v1390
        %v5267 = vunpack.c.l.b16 %v1391
        %v5268 = vunpack.c.h.b16 %v1391
        %v5269 = vunpack.c.l.b16 %v1392
        %v5270 = vunpack.c.h.b16 %v1392
        %v5271 = vunpack.c.l.b16 %v1393
        %v5272 = vunpack.c.h.b16 %v1393
        %v5273 = vunpack.c.l.b16 %v1394
        %v5274 = vunpack.c.h.b16 %v1394
        %v5275 = vunpack.c.l.b16 %v1395
        %v5276 = vunpack.c.h.b16 %v1395
        %v5277 = vunpack.c.l.b16 %v1396
        %v5278 = vunpack.c.h.b16 %v1396
        %v5279 = vunpack.c.l.b16 %v1397
        %v5280 = vunpack.c.h.b16 %v1397
        %v5281 = vunpack.c.l.b16 %v1398
        %v5282 = vunpack.c.h.b16 %v1398
        %v5283 = vunpack.c.l.b16 %v1399
        %v5284 = vunpack.c.h.b16 %v1399
        %v5285 = vunpack.c.l.b16 %v1400
        %v5286 = vunpack.c.h.b16 %v1400
        %v5287 = vunpack.c.l.b16 %v1401
        %v5288 = vunpack.c.h.b16 %v1401
        %v5289 = vunpack.c.l.b16 %v1402
        %v5290 = vunpack.c.h.b16 %v1402
        %v5291 = vunpack.c.l.b16 %v1403
        %v5292 = vunpack.c.h.b16 %v1403
        %v5293 = vunpack.c.l.b16 %v1404
        %v5294 = vunpack.c.h.b16 %v1404
        %v5295 = vunpack.c.l.b16 %v1405
        %v5296 = vunpack.c.h.b16 %v1405
        %v5297 = vunpack.c.l.b16 %v1406
        %v5298 = vunpack.c.h.b16 %v1406
        %v5299 = vunpack.c.l.b16 %v1407
        %v5300 = vunpack.c.h.b16 %v1407
        %v5301 = vunpack.c.l.b16 %v1408
        %v5302 = vunpack.c.h.b16 %v1408
        %v5303 = vunpack.c.l.b16 %v1409
        %v5304 = vunpack.c.h.b16 %v1409
        %v5305 = vunpack.c.l.b16 %v1410
        %v5306 = vunpack.c.h.b16 %v1410
        %v5307 = vunpack.c.l.b16 %v1411
        %v5308 = vunpack.c.h.b16 %v1411
        %v5309 = vunpack.c.l.b16 %v1412
        %v5310 = vunpack.c.h.b16 %v1412
        %v5311 = vunpack.c.l.b16 %v1413
        %v5312 = vunpack.c.h.b16 %v1413
        %v5313 = vunpack.c.l.b16 %v1414
        %v5314 = vunpack.c.h.b16 %v1414
        %v5315 = vunpack.c.l.b16 %v1415
        %v5316 = vunpack.c.h.b16 %v1415
        %v5317 = vunpack.c.l.b16 %v1416
        %v5318 = vunpack.c.h.b16 %v1416
        %v5319 = vunpack.c.l.b16 %v1417
        %v5320 = vunpack.c.h.b16 %v1417
        %v5321 = vunpack.c.l.b16 %v1418
        %v5322 = vunpack.c.h.b16 %v1418
        %v5323 = vunpack.c.l.b16 %v1419
        %v5324 = vunpack.c.h.b16 %v1419
        %v5325 = vunpack.c.l.b16 %v1420
        %v5326 = vunpack.c.h.b16 %v1420
        %v5327 = vunpack.c.l.b16 %v1421
        %v5328 = vunpack.c.h.b16 %v1421
        %v5329 = vunpack.c.l.b16 %v1422
        %v5330 = vunpack.c.h.b16 %v1422
        %v5331 = vunpack.c.l.b16 %v1423
        %v5332 = vunpack.c.h.b16 %v1423
        %v5333 = vunpack.c.l.b16 %v1424
        %v5334 = vunpack.c.h.b16 %v1424
        %v5335 = vunpack.c.l.b16 %v1425
        %v5336 = vunpack.c.h.b16 %v1425
        %v5337 = vunpack.c.l.b16 %v1426
        %v5338 = vunpack.c.h.b16 %v1426
        %v5339 = vunpack.c.l.b16 %v1427
        %v5340 = vunpack.c.h.b16 %v1427
        %v5341 = vunpack.c.l.b16 %v1428
        %v5342 = vunpack.c.h.b16 %v1428
        %v5343 = vunpack.c.l.b16 %v1429
        %v5344 = vunpack.c.h.b16 %v1429
        %v5345 = vunpack.c.l.b16 %v1430
        %v5346 = vunpack.c.h.b16 %v1430
        %v5347 = vunpack.c.l.b16 %v1431
        %v5348 = vunpack.c.h.b16 %v1431
        %v5349 = vunpack.c.l.b16 %v1432
        %v5350 = vunpack.c.h.b16 %v1432
        %v5351 = vunpack.c.l.b16 %v1433
        %v5352 = vunpack.c.h.b16 %v1433
        %v5353 = vunpack.c.l.b16 %v1434
        %v5354 = vunpack.c.h.b16 %v1434
        %v5355 = vunpack.c.l.b16 %v1435
        %v5356 = vunpack.c.h.b16 %v1435
        %v5357 = vunpack.c.l.b16 %v1436
        %v5358 = vunpack.c.h.b16 %v1436
        %v5359 = vunpack.c.l.b16 %v1437
        %v5360 = vunpack.c.h.b16 %v1437
        %v5361 = vunpack.c.l.b16 %v1438
        %v5362 = vunpack.c.h.b16 %v1438
        %v5363 = vunpack.c.l.b16 %v1439
        %v5364 = vunpack.c.h.b16 %v1439
        %v5365 = vunpack.c.l.b16 %v1440
        %v5366 = vunpack.c.h.b16 %v1440
        %v5367 = vunpack.c.l.b16 %v1441
        %v5368 = vunpack.c.h.b16 %v1441
        %v5369 = vunpack.c.l.b16 %v1442
        %v5370 = vunpack.c.h.b16 %v1442
        %v5371 = vunpack.c.l.b16 %v1443
        %v5372 = vunpack.c.h.b16 %v1443
        %v5373 = vunpack.c.l.b16 %v1444
        %v5374 = vunpack.c.h.b16 %v1444
        %v5375 = vunpack.c.l.b16 %v1445
        %v5376 = vunpack.c.h.b16 %v1445
        %v5377 = vunpack.c.l.b16 %v1446
        %v5378 = vunpack.c.h.b16 %v1446
        %v5379 = vunpack.c.l.b16 %v1447
        %v5380 = vunpack.c.h.b16 %v1447
        %v5381 = vunpack.c.l.b16 %v1448
        %v5382 = vunpack.c.h.b16 %v1448
        %v5383 = vunpack.c.l.b16 %v1449
        %v5384 = vunpack.c.h.b16 %v1449
        %v5385 = vunpack.c.l.b16 %v1450
        %v5386 = vunpack.c.h.b16 %v1450
        %v5387 = vunpack.c.l.b16 %v1451
        %v5388 = vunpack.c.h.b16 %v1451
        %v5389 = vunpack.c.l.b16 %v1452
        %v5390 = vunpack.c.h.b16 %v1452
        %v5391 = vunpack.c.l.b16 %v1453
        %v5392 = vunpack.c.h.b16 %v1453
        %v5393 = vunpack.c.l.b16 %v1454
        %v5394 = vunpack.c.h.b16 %v1454
        %v5395 = vunpack.c.l.b16 %v1455
        %v5396 = vunpack.c.h.b16 %v1455
        %v5397 = vunpack.c.l.b16 %v1456
        %v5398 = vunpack.c.h.b16 %v1456
        %v5399 = vunpack.c.l.b16 %v1457
        %v5400 = vunpack.c.h.b16 %v1457
        %v5401 = vunpack.c.l.b16 %v1458
        %v5402 = vunpack.c.h.b16 %v1458
        %v5403 = vunpack.c.l.b16 %v1459
        %v5404 = vunpack.c.h.b16 %v1459
        %v5405 = vunpack.c.l.b16 %v1460
        %v5406 = vunpack.c.h.b16 %v1460
        %v5407 = vunpack.c.l.b16 %v1461
        %v5408 = vunpack.c.h.b16 %v1461
        %v5409 = vunpack.c.l.b16 %v1462
        %v5410 = vunpack.c.h.b16 %v1462
        %v5411 = vunpack.c.l.b16 %v1463
        %v5412 = vunpack.c.h.b16 %v1463
        %v5413 = vunpack.c.l.b16 %v1464
        %v5414 = vunpack.c.h.b16 %v1464
        %v5415 = vunpack.c.l.b16 %v1465
        %v5416 = vunpack.c.h.b16 %v1465
        %v5417 = vunpack.c.l.b16 %v1466
        %v5418 = vunpack.c.h.b16 %v1466
        %v5419 = vunpack.c.l.b16 %v1467
        %v5420 = vunpack.c.h.b16 %v1467
        %v5421 = vunpack.c.l.b16 %v1468
        %v5422 = vunpack.c.h.b16 %v1468
        %v5423 = vunpack.c.l.b16 %v1469
        %v5424 = vunpack.c.h.b16 %v1469
        %v5425 = vunpack.c.l.b16 %v1470
        %v5426 = vunpack.c.h.b16 %v1470
        %v5427 = vunpack.c.l.b16 %v1471
        %v5428 = vunpack.c.h.b16 %v1471
        %v5429 = vunpack.c.l.b16 %v1472
        %v5430 = vunpack.c.h.b16 %v1472
        %v5431 = vunpack.c.l.b16 %v1473
        %v5432 = vunpack.c.h.b16 %v1473
        %v5433 = vunpack.c.l.b16 %v1474
        %v5434 = vunpack.c.h.b16 %v1474
        %v5435 = vunpack.c.l.b16 %v1475
        %v5436 = vunpack.c.h.b16 %v1475
        %v5437 = vunpack.c.l.b16 %v1476
        %v5438 = vunpack.c.h.b16 %v1476
        %v5439 = vunpack.c.l.b16 %v1477
        %v5440 = vunpack.c.h.b16 %v1477
        %v5441 = vunpack.c.l.b16 %v1478
        %v5442 = vunpack.c.h.b16 %v1478
        %v5443 = vunpack.c.l.b16 %v1479
        %v5444 = vunpack.c.h.b16 %v1479
        %v5445 = vunpack.c.l.b16 %v1480
        %v5446 = vunpack.c.h.b16 %v1480
        %v5447 = vunpack.c.l.b16 %v1481
        %v5448 = vunpack.c.h.b16 %v1481
        %v5449 = vunpack.c.l.b16 %v1482
        %v5450 = vunpack.c.h.b16 %v1482
        %v5451 = vunpack.c.l.b16 %v1483
        %v5452 = vunpack.c.h.b16 %v1483
        %v5453 = vunpack.c.l.b16 %v1484
        %v5454 = vunpack.c.h.b16 %v1484
        %v5455 = vunpack.c.l.b16 %v1485
        %v5456 = vunpack.c.h.b16 %v1485
        %v5457 = vunpack.c.l.b16 %v1486
        %v5458 = vunpack.c.h.b16 %v1486
        %v5459 = vunpack.c.l.b16 %v1487
        %v5460 = vunpack.c.h.b16 %v1487
        %v5461 = vunpack.c.l.b16 %v1488
        %v5462 = vunpack.c.h.b16 %v1488
        %v5463 = vunpack.c.l.b16 %v1489
        %v5464 = vunpack.c.h.b16 %v1489
        %v5465 = vunpack.c.l.b16 %v1490
        %v5466 = vunpack.c.h.b16 %v1490
        %v5467 = vunpack.c.l.b16 %v1491
        %v5468 = vunpack.c.h.b16 %v1491
        %v5469 = vunpack.c.l.b16 %v1492
        %v5470 = vunpack.c.h.b16 %v1492
        %v5471 = vunpack.c.l.b16 %v1493
        %v5472 = vunpack.c.h.b16 %v1493
        %v5473 = vunpack.c.l.b16 %v1494
        %v5474 = vunpack.c.h.b16 %v1494
        %v5475 = vunpack.c.l.b16 %v1495
        %v5476 = vunpack.c.h.b16 %v1495
        %v5477 = vunpack.c.l.b16 %v1496
        %v5478 = vunpack.c.h.b16 %v1496
        %v5479 = vunpack.c.l.b16 %v1497
        %v5480 = vunpack.c.h.b16 %v1497
        %v5481 = vunpack.c.l.b16 %v1498
        %v5482 = vunpack.c.h.b16 %v1498
        %v5483 = vunpack.c.l.b16 %v1499
        %v5484 = vunpack.c.h.b16 %v1499
        %v5485 = vunpack.c.l.b16 %v1500
        %v5486 = vunpack.c.h.b16 %v1500
        %v5487 = vunpack.c.l.b16 %v1501
        %v5488 = vunpack.c.h.b16 %v1501
        %v5489 = vunpack.c.l.b16 %v1502
        %v5490 = vunpack.c.h.b16 %v1502
        %v5491 = vunpack.c.l.b16 %v1503
        %v5492 = vunpack.c.h.b16 %v1503
        %v5493 = vunpack.c.l.b16 %v1504
        %v5494 = vunpack.c.h.b16 %v1504
        %v5495 = vunpack.c.l.b16 %v1505
        %v5496 = vunpack.c.h.b16 %v1505
        %v5497 = vunpack.c.l.b16 %v1506
        %v5498 = vunpack.c.h.b16 %v1506
        %v5499 = vunpack.c.l.b16 %v1507
        %v5500 = vunpack.c.h.b16 %v1507
        %v5501 = vunpack.c.l.b16 %v1508
        %v5502 = vunpack.c.h.b16 %v1508
        %v5503 = vunpack.c.l.b16 %v1509
        %v5504 = vunpack.c.h.b16 %v1509
        %v5505 = vunpack.c.l.b16 %v1510
        %v5506 = vunpack.c.h.b16 %v1510
        %v5507 = vunpack.c.l.b16 %v1511
        %v5508 = vunpack.c.h.b16 %v1511
        %v5509 = vunpack.c.l.b16 %v1512
        %v5510 = vunpack.c.h.b16 %v1512
        %v5511 = vunpack.c.l.b16 %v1513
        %v5512 = vunpack.c.h.b16 %v1513
        %v5513 = vunpack.c.l.b16 %v1514
        %v5514 = vunpack.c.h.b16 %v1514
        %v5515 = vunpack.c.l.b16 %v1515
        %v5516 = vunpack.c.h.b16 %v1515
        %v5517 = vunpack.c.l.b16 %v1516
        %v5518 = vunpack.c.h.b16 %v1516
        %v5519 = vunpack.c.l.b16 %v1517
        %v5520 = vunpack.c.h.b16 %v1517
        %v5521 = vunpack.c.l.b16 %v1518
        %v5522 = vunpack.c.h.b16 %v1518
        %v5523 = vunpack.c.l.b16 %v1519
        %v5524 = vunpack.c.h.b16 %v1519
        %v5525 = vunpack.c.l.b16 %v1520
        %v5526 = vunpack.c.h.b16 %v1520
        %v5527 = vunpack.c.l.b16 %v1521
        %v5528 = vunpack.c.h.b16 %v1521
        %v5529 = vunpack.c.l.b16 %v1522
        %v5530 = vunpack.c.h.b16 %v1522
        %v5531 = vunpack.c.l.b16 %v1523
        %v5532 = vunpack.c.h.b16 %v1523
        %v5533 = vunpack.c.l.b16 %v1524
        %v5534 = vunpack.c.h.b16 %v1524
        %v5535 = vunpack.c.l.b16 %v1525
        %v5536 = vunpack.c.h.b16 %v1525
        %v5537 = vunpack.c.l.b16 %v1526
        %v5538 = vunpack.c.h.b16 %v1526
        %v5539 = vunpack.c.l.b16 %v1527
        %v5540 = vunpack.c.h.b16 %v1527
        %v5541 = vunpack.c.l.b16 %v1528
        %v5542 = vunpack.c.h.b16 %v1528
        %v5543 = vunpack.c.l.b16 %v1529
        %v5544 = vunpack.c.h.b16 %v1529
        %v5545 = vunpack.c.l.b16 %v1530
        %v5546 = vunpack.c.h.b16 %v1530
        %v5547 = vunpack.c.l.b16 %v1531
        %v5548 = vunpack.c.h.b16 %v1531
        %v5549 = vunpack.c.l.b16 %v1532
        %v5550 = vunpack.c.h.b16 %v1532
        %v5551 = vunpack.c.l.b16 %v1533
        %v5552 = vunpack.c.h.b16 %v1533
        %v5553 = vunpack.c.l.b16 %v1534
        %v5554 = vunpack.c.h.b16 %v1534
        %v5555 = vunpack.c.l.b16 %v1535
        %v5556 = vunpack.c.h.b16 %v1535
        %v5557 = vunpack.c.l.b16 %v1536
        %v5558 = vunpack.c.h.b16 %v1536
        %v5559 = vunpack.c.l.b16 %v1537
        %v5560 = vunpack.c.h.b16 %v1537
        %v5561 = vunpack.c.l.b16 %v1538
        %v5562 = vunpack.c.h.b16 %v1538
        %v5563 = vunpack.c.l.b16 %v1539
        %v5564 = vunpack.c.h.b16 %v1539
        %v5565 = vunpack.c.l.b16 %v1540
        %v5566 = vunpack.c.h.b16 %v1540
        %v5567 = vunpack.c.l.b16 %v1541
        %v5568 = vunpack.c.h.b16 %v1541
        %v5569 = vunpack.c.l.b16 %v1542
        %v5570 = vunpack.c.h.b16 %v1542
        %v5571 = vunpack.c.l.b16 %v1543
        %v5572 = vunpack.c.h.b16 %v1543
        %v5573 = vunpack.c.l.b16 %v1544
        %v5574 = vunpack.c.h.b16 %v1544
        %v5575 = vunpack.c.l.b16 %v1545
        %v5576 = vunpack.c.h.b16 %v1545
        %v5577 = vunpack.c.l.b16 %v1546
        %v5578 = vunpack.c.h.b16 %v1546
        %v5579 = vunpack.c.l.b16 %v1547
        %v5580 = vunpack.c.h.b16 %v1547
        %v5581 = vunpack.c.l.b16 %v1548
        %v5582 = vunpack.c.h.b16 %v1548
        %v5583 = vunpack.c.l.b16 %v1549
        %v5584 = vunpack.c.h.b16 %v1549
        %v5585 = vunpack.c.l.b16 %v1550
        %v5586 = vunpack.c.h.b16 %v1550
        %v5587 = vunpack.c.l.b16 %v1551
        %v5588 = vunpack.c.h.b16 %v1551
        %v5589 = vunpack.c.l.b16 %v1552
        %v5590 = vunpack.c.h.b16 %v1552
        %v5591 = vunpack.c.l.b16 %v1553
        %v5592 = vunpack.c.h.b16 %v1553
        %v5593 = vunpack.c.l.b16 %v1554
        %v5594 = vunpack.c.h.b16 %v1554
        %v5595 = vunpack.c.l.b16 %v1555
        %v5596 = vunpack.c.h.b16 %v1555
        %v5597 = vunpack.c.l.b16 %v1556
        %v5598 = vunpack.c.h.b16 %v1556
        %v5599 = vunpack.c.l.b16 %v1557
        %v5600 = vunpack.c.h.b16 %v1557
        %v5601 = vunpack.c.l.b16 %v1558
        %v5602 = vunpack.c.h.b16 %v1558
        %v5603 = vunpack.c.l.b16 %v1559
        %v5604 = vunpack.c.h.b16 %v1559
        %v5605 = vunpack.c.l.b16 %v1560
        %v5606 = vunpack.c.h.b16 %v1560
        %v5607 = vunpack.c.l.b16 %v1561
        %v5608 = vunpack.c.h.b16 %v1561
        %v5609 = vunpack.c.l.b16 %v1562
        %v5610 = vunpack.c.h.b16 %v1562
        %v5611 = vunpack.c.l.b16 %v1563
        %v5612 = vunpack.c.h.b16 %v1563
        %v5613 = vunpack.c.l.b16 %v1564
        %v5614 = vunpack.c.h.b16 %v1564
        %v5615 = vunpack.c.l.b16 %v1565
        %v5616 = vunpack.c.h.b16 %v1565
        %v5617 = vunpack.c.l.b16 %v1566
        %v5618 = vunpack.c.h.b16 %v1566
        %v5619 = vunpack.c.l.b16 %v1567
        %v5620 = vunpack.c.h.b16 %v1567
        %v5621 = vunpack.c.l.b16 %v1568
        %v5622 = vunpack.c.h.b16 %v1568
        %v5623 = vunpack.c.l.b16 %v1569
        %v5624 = vunpack.c.h.b16 %v1569
        %v5625 = vunpack.c.l.b16 %v1570
        %v5626 = vunpack.c.h.b16 %v1570
        %v5627 = vunpack.c.l.b16 %v1571
        %v5628 = vunpack.c.h.b16 %v1571
        %v5629 = vunpack.c.l.b16 %v1572
        %v5630 = vunpack.c.h.b16 %v1572
        %v5631 = vunpack.c.l.b16 %v1573
        %v5632 = vunpack.c.h.b16 %v1573
        %v5633 = vunpack.c.l.b16 %v1574
        %v5634 = vunpack.c.h.b16 %v1574
        %v5635 = vunpack.c.l.b16 %v1575
        %v5636 = vunpack.c.h.b16 %v1575
        %v5637 = vunpack.c.l.b16 %v1576
        %v5638 = vunpack.c.h.b16 %v1576
        %v5639 = vunpack.c.l.b16 %v1577
        %v5640 = vunpack.c.h.b16 %v1577
        %v5641 = vunpack.c.l.b16 %v1578
        %v5642 = vunpack.c.h.b16 %v1578
        %v5643 = vunpack.c.l.b16 %v1579
        %v5644 = vunpack.c.h.b16 %v1579
        %v5645 = vunpack.c.l.b16 %v1580
        %v5646 = vunpack.c.h.b16 %v1580
        %v5647 = vunpack.c.l.b16 %v1581
        %v5648 = vunpack.c.h.b16 %v1581
        %v5649 = vunpack.c.l.b16 %v1582
        %v5650 = vunpack.c.h.b16 %v1582
        %v5651 = vunpack.c.l.b16 %v1583
        %v5652 = vunpack.c.h.b16 %v1583
        %v5653 = vunpack.c.l.b16 %v1584
        %v5654 = vunpack.c.h.b16 %v1584
        %v5655 = vunpack.c.l.b16 %v1585
        %v5656 = vunpack.c.h.b16 %v1585
        %v5657 = vunpack.c.l.b16 %v1586
        %v5658 = vunpack.c.h.b16 %v1586
        %v5659 = vunpack.c.l.b16 %v1587
        %v5660 = vunpack.c.h.b16 %v1587
        %v5661 = vunpack.c.l.b16 %v1588
        %v5662 = vunpack.c.h.b16 %v1588
        %v5663 = vunpack.c.l.b16 %v1589
        %v5664 = vunpack.c.h.b16 %v1589
        %v5665 = vunpack.c.l.b16 %v1590
        %v5666 = vunpack.c.h.b16 %v1590
        %v5667 = vunpack.c.l.b16 %v1591
        %v5668 = vunpack.c.h.b16 %v1591
        %v5669 = vunpack.c.l.b16 %v1592
        %v5670 = vunpack.c.h.b16 %v1592
        %v5671 = vunpack.c.l.b16 %v1593
        %v5672 = vunpack.c.h.b16 %v1593
        %v5673 = vunpack.c.l.b16 %v1594
        %v5674 = vunpack.c.h.b16 %v1594
        %v5675 = vunpack.c.l.b16 %v1595
        %v5676 = vunpack.c.h.b16 %v1595
        %v5677 = vunpack.c.l.b16 %v1596
        %v5678 = vunpack.c.h.b16 %v1596
        %v5679 = vunpack.c.l.b16 %v1597
        %v5680 = vunpack.c.h.b16 %v1597
        %v5681 = vunpack.c.l.b16 %v1598
        %v5682 = vunpack.c.h.b16 %v1598
        %v5683 = vunpack.c.l.b16 %v1599
        %v5684 = vunpack.c.h.b16 %v1599
        %v5685 = vunpack.c.l.b16 %v1600
        %v5686 = vunpack.c.h.b16 %v1600
        %v5687 = vunpack.c.l.b16 %v1601
        %v5688 = vunpack.c.h.b16 %v1601
        %v5689 = vunpack.c.l.b16 %v1602
        %v5690 = vunpack.c.h.b16 %v1602
        %v5691 = vunpack.c.l.b16 %v1603
        %v5692 = vunpack.c.h.b16 %v1603
        %v5693 = vunpack.c.l.b16 %v1604
        %v5694 = vunpack.c.h.b16 %v1604
        %v5695 = vunpack.c.l.b16 %v1605
        %v5696 = vunpack.c.h.b16 %v1605
        %v5697 = vunpack.c.l.b16 %v1606
        %v5698 = vunpack.c.h.b16 %v1606
        %v5699 = vunpack.c.l.b16 %v1607
        %v5700 = vunpack.c.h.b16 %v1607
        %v5701 = vunpack.c.l.b16 %v1608
        %v5702 = vunpack.c.h.b16 %v1608
        %v5703 = vunpack.c.l.b16 %v1609
        %v5704 = vunpack.c.h.b16 %v1609
        %v5705 = vunpack.c.l.b16 %v1610
        %v5706 = vunpack.c.h.b16 %v1610
        %v5707 = vunpack.c.l.b16 %v1611
        %v5708 = vunpack.c.h.b16 %v1611
        %v5709 = vunpack.c.l.b16 %v1612
        %v5710 = vunpack.c.h.b16 %v1612
        %v5711 = vunpack.c.l.b16 %v1613
        %v5712 = vunpack.c.h.b16 %v1613
        %v5713 = vunpack.c.l.b16 %v1614
        %v5714 = vunpack.c.h.b16 %v1614
        %v5715 = vunpack.c.l.b16 %v1615
        %v5716 = vunpack.c.h.b16 %v1615
        %v5717 = vunpack.c.l.b16 %v1616
        %v5718 = vunpack.c.h.b16 %v1616
        %v5719 = vunpack.c.l.b16 %v1617
        %v5720 = vunpack.c.h.b16 %v1617
        %v5721 = vunpack.c.l.b16 %v1618
        %v5722 = vunpack.c.h.b16 %v1618
        %v5723 = vunpack.c.l.b16 %v1619
        %v5724 = vunpack.c.h.b16 %v1619
        %v5725 = vunpack.c.l.b16 %v1620
        %v5726 = vunpack.c.h.b16 %v1620
        %v5727 = vunpack.c.l.b16 %v1621
        %v5728 = vunpack.c.h.b16 %v1621
        %v5729 = vunpack.c.l.b16 %v1622
        %v5730 = vunpack.c.h.b16 %v1622
        %v5731 = vunpack.c.l.b16 %v1623
        %v5732 = vunpack.c.h.b16 %v1623
        %v5733 = vunpack.c.l.b16 %v1624
        %v5734 = vunpack.c.h.b16 %v1624
        %v5735 = vunpack.c.l.b16 %v1625
        %v5736 = vunpack.c.h.b16 %v1625
        %v5737 = vunpack.c.l.b16 %v1626
        %v5738 = vunpack.c.h.b16 %v1626
        %v5739 = vunpack.c.l.b16 %v1627
        %v5740 = vunpack.c.h.b16 %v1627
        %v5741 = vunpack.c.l.b16 %v1628
        %v5742 = vunpack.c.h.b16 %v1628
        %v5743 = vunpack.c.l.b16 %v1629
        %v5744 = vunpack.c.h.b16 %v1629
        %v5745 = vunpack.c.l.b16 %v1630
        %v5746 = vunpack.c.h.b16 %v1630
        %v5747 = vunpack.c.l.b16 %v1631
        %v5748 = vunpack.c.h.b16 %v1631
        %v5749 = vunpack.c.l.b16 %v1632
        %v5750 = vunpack.c.h.b16 %v1632
        %v5751 = vunpack.c.l.b16 %v1633
        %v5752 = vunpack.c.h.b16 %v1633
        %v5753 = vunpack.c.l.b16 %v1634
        %v5754 = vunpack.c.h.b16 %v1634
        %v5755 = vunpack.c.l.b16 %v1635
        %v5756 = vunpack.c.h.b16 %v1635
        %v5757 = vunpack.c.l.b16 %v1636
        %v5758 = vunpack.c.h.b16 %v1636
        %v5759 = vunpack.c.l.b16 %v1637
        %v5760 = vunpack.c.h.b16 %v1637
        %v5761 = vunpack.c.l.b16 %v1638
        %v5762 = vunpack.c.h.b16 %v1638
        %v5763 = vunpack.c.l.b16 %v1639
        %v5764 = vunpack.c.h.b16 %v1639
        %v5765 = vunpack.c.l.b16 %v1640
        %v5766 = vunpack.c.h.b16 %v1640
        %v5767 = vunpack.c.l.b16 %v1641
        %v5768 = vunpack.c.h.b16 %v1641
        %v5769 = vunpack.c.l.b16 %v1642
        %v5770 = vunpack.c.h.b16 %v1642
        %v5771 = vunpack.c.l.b16 %v1643
        %v5772 = vunpack.c.h.b16 %v1643
        %v5773 = vunpack.c.l.b16 %v1644
        %v5774 = vunpack.c.h.b16 %v1644
        %v5775 = vunpack.c.l.b16 %v1645
        %v5776 = vunpack.c.h.b16 %v1645
        %v5777 = vunpack.c.l.b16 %v1646
        %v5778 = vunpack.c.h.b16 %v1646
        %v5779 = vunpack.c.l.b16 %v1647
        %v5780 = vunpack.c.h.b16 %v1647
        %v5781 = vunpack.c.l.b16 %v1648
        %v5782 = vunpack.c.h.b16 %v1648
        %v5783 = vunpack.c.l.b16 %v1649
        %v5784 = vunpack.c.h.b16 %v1649
        %v5785 = vunpack.c.l.b16 %v1650
        %v5786 = vunpack.c.h.b16 %v1650
        %v5787 = vunpack.c.l.b16 %v1651
        %v5788 = vunpack.c.h.b16 %v1651
        %v5789 = vunpack.c.l.b16 %v1652
        %v5790 = vunpack.c.h.b16 %v1652
        %v5791 = vunpack.c.l.b16 %v1653
        %v5792 = vunpack.c.h.b16 %v1653
        %v5793 = vunpack.c.l.b16 %v1654
        %v5794 = vunpack.c.h.b16 %v1654
        %v5795 = vunpack.c.l.b16 %v1655
        %v5796 = vunpack.c.h.b16 %v1655
        %v5797 = vunpack.c.l.b16 %v1656
        %v5798 = vunpack.c.h.b16 %v1656
        %v5799 = vunpack.c.l.b16 %v1657
        %v5800 = vunpack.c.h.b16 %v1657
        %v5801 = vunpack.c.l.b16 %v1658
        %v5802 = vunpack.c.h.b16 %v1658
        %v5803 = vunpack.c.l.b16 %v1659
        %v5804 = vunpack.c.h.b16 %v1659
        %v5805 = vunpack.c.l.b16 %v1660
        %v5806 = vunpack.c.h.b16 %v1660
        %v5807 = vunpack.c.l.b16 %v1661
        %v5808 = vunpack.c.h.b16 %v1661
        %v5809 = vunpack.c.l.b16 %v1662
        %v5810 = vunpack.c.h.b16 %v1662
        %v5811 = vunpack.c.l.b16 %v1663
        %v5812 = vunpack.c.h.b16 %v1663
        %v5813 = vunpack.c.l.b16 %v1664
        %v5814 = vunpack.c.h.b16 %v1664
        %v5815 = vunpack.c.l.b16 %v1665
        %v5816 = vunpack.c.h.b16 %v1665
        %v5817 = vunpack.c.l.b16 %v1666
        %v5818 = vunpack.c.h.b16 %v1666
        %v5819 = vunpack.c.l.b16 %v1667
        %v5820 = vunpack.c.h.b16 %v1667
        %v5821 = vunpack.c.l.b16 %v1668
        %v5822 = vunpack.c.h.b16 %v1668
        %v5823 = vunpack.c.l.b16 %v1669
        %v5824 = vunpack.c.h.b16 %v1669
        %v5825 = vunpack.c.l.b16 %v1670
        %v5826 = vunpack.c.h.b16 %v1670
        %v5827 = vunpack.c.l.b16 %v1671
        %v5828 = vunpack.c.h.b16 %v1671
        %v5829 = vunpack.c.l.b16 %v1672
        %v5830 = vunpack.c.h.b16 %v1672
        %v5831 = vunpack.c.l.b16 %v1673
        %v5832 = vunpack.c.h.b16 %v1673
        %v5833 = vunpack.c.l.b16 %v1674
        %v5834 = vunpack.c.h.b16 %v1674
        %v5835 = vunpack.c.l.b16 %v1675
        %v5836 = vunpack.c.h.b16 %v1675
        %v5837 = vunpack.c.l.b16 %v1676
        %v5838 = vunpack.c.h.b16 %v1676
        %v5839 = vunpack.c.l.b16 %v1677
        %v5840 = vunpack.c.h.b16 %v1677
        %v5841 = vunpack.c.l.b16 %v1678
        %v5842 = vunpack.c.h.b16 %v1678
        %v5843 = vunpack.c.l.b16 %v1679
        %v5844 = vunpack.c.h.b16 %v1679
        %v5845 = vunpack.c.l.b16 %v1680
        %v5846 = vunpack.c.h.b16 %v1680
        %v5847 = vunpack.c.l.b16 %v1681
        %v5848 = vunpack.c.h.b16 %v1681
        %v5849 = vunpack.c.l.b16 %v1682
        %v5850 = vunpack.c.h.b16 %v1682
        %v5851 = vunpack.c.l.b16 %v1683
        %v5852 = vunpack.c.h.b16 %v1683
        %v5853 = vunpack.c.l.b16 %v1684
        %v5854 = vunpack.c.h.b16 %v1684
        %v5855 = vunpack.c.l.b16 %v1685
        %v5856 = vunpack.c.h.b16 %v1685
        %v5857 = vunpack.c.l.b16 %v1686
        %v5858 = vunpack.c.h.b16 %v1686
        %v5859 = vunpack.c.l.b16 %v1687
        %v5860 = vunpack.c.h.b16 %v1687
        %v5861 = vunpack.c.l.b16 %v1688
        %v5862 = vunpack.c.h.b16 %v1688
        %v5863 = vunpack.c.l.b16 %v1689
        %v5864 = vunpack.c.h.b16 %v1689
        %v5865 = vunpack.c.l.b16 %v1690
        %v5866 = vunpack.c.h.b16 %v1690
        %v5867 = vunpack.c.l.b16 %v1691
        %v5868 = vunpack.c.h.b16 %v1691
        %v5869 = vunpack.c.l.b16 %v1692
        %v5870 = vunpack.c.h.b16 %v1692
        %v5871 = vunpack.c.l.b16 %v1693
        %v5872 = vunpack.c.h.b16 %v1693
        %v5873 = vunpack.c.l.b16 %v1694
        %v5874 = vunpack.c.h.b16 %v1694
        %v5875 = vunpack.c.l.b16 %v1695
        %v5876 = vunpack.c.h.b16 %v1695
        %v5877 = vunpack.c.l.b16 %v1696
        %v5878 = vunpack.c.h.b16 %v1696
        %v5879 = vunpack.c.l.b16 %v1697
        %v5880 = vunpack.c.h.b16 %v1697
        %v5881 = vunpack.c.l.b16 %v1698
        %v5882 = vunpack.c.h.b16 %v1698
        %v5883 = vunpack.c.l.b16 %v1699
        %v5884 = vunpack.c.h.b16 %v1699
        %v5885 = vunpack.c.l.b16 %v1700
        %v5886 = vunpack.c.h.b16 %v1700
        %v5887 = vunpack.c.l.b16 %v1701
        %v5888 = vunpack.c.h.b16 %v1701
        %v5889 = vunpack.c.l.b16 %v1702
        %v5890 = vunpack.c.h.b16 %v1702
        %v5891 = vunpack.c.l.b16 %v1703
        %v5892 = vunpack.c.h.b16 %v1703
        %v5893 = vunpack.c.l.b16 %v1704
        %v5894 = vunpack.c.h.b16 %v1704
        %v5895 = vunpack.c.l.b16 %v1705
        %v5896 = vunpack.c.h.b16 %v1705
        %v5897 = vunpack.c.l.b16 %v1706
        %v5898 = vunpack.c.h.b16 %v1706
        %v5899 = vunpack.c.l.b16 %v1707
        %v5900 = vunpack.c.h.b16 %v1707
        %v5901 = vunpack.c.l.b16 %v1708
        %v5902 = vunpack.c.h.b16 %v1708
        %v5903 = vunpack.c.l.b16 %v1709
        %v5904 = vunpack.c.h.b16 %v1709
        %v5905 = vunpack.c.l.b16 %v1710
        %v5906 = vunpack.c.h.b16 %v1710
        %v5907 = vunpack.c.l.b16 %v1711
        %v5908 = vunpack.c.h.b16 %v1711
        %v5909 = vunpack.c.l.b16 %v1712
        %v5910 = vunpack.c.h.b16 %v1712
        %v5911 = vunpack.c.l.b16 %v1713
        %v5912 = vunpack.c.h.b16 %v1713
        %v5913 = vunpack.c.l.b16 %v1714
        %v5914 = vunpack.c.h.b16 %v1714
        %v5915 = vunpack.c.l.b16 %v1715
        %v5916 = vunpack.c.h.b16 %v1715
        %v5917 = vunpack.c.l.b16 %v1716
        %v5918 = vunpack.c.h.b16 %v1716
        %v5919 = vunpack.c.l.b16 %v1717
        %v5920 = vunpack.c.h.b16 %v1717
        %v5921 = vunpack.c.l.b16 %v1718
        %v5922 = vunpack.c.h.b16 %v1718
        %v5923 = vunpack.c.l.b16 %v1719
        %v5924 = vunpack.c.h.b16 %v1719
        %v5925 = vunpack.c.l.b16 %v1720
        %v5926 = vunpack.c.h.b16 %v1720
        %v5927 = vunpack.c.l.b16 %v1721
        %v5928 = vunpack.c.h.b16 %v1721
        %v5929 = vunpack.c.l.b16 %v1722
        %v5930 = vunpack.c.h.b16 %v1722
        %v5931 = vunpack.c.l.b16 %v1723
        %v5932 = vunpack.c.h.b16 %v1723
        %v5933 = vunpack.c.l.b16 %v1724
        %v5934 = vunpack.c.h.b16 %v1724
        %v5935 = vunpack.c.l.b16 %v1725
        %v5936 = vunpack.c.h.b16 %v1725
        %v5937 = vunpack.c.l.b16 %v1726
        %v5938 = vunpack.c.h.b16 %v1726
        %v5939 = vunpack.c.l.b16 %v1727
        %v5940 = vunpack.c.h.b16 %v1727
        %v5941 = vunpack.c.l.b16 %v1728
        %v5942 = vunpack.c.h.b16 %v1728
        %v5943 = vunpack.c.l.b16 %v1729
        %v5944 = vunpack.c.h.b16 %v1729
        %v5945 = vunpack.c.l.b16 %v1730
        %v5946 = vunpack.c.h.b16 %v1730
        %v5947 = vunpack.c.l.b16 %v1731
        %v5948 = vunpack.c.h.b16 %v1731
        %v5949 = vunpack.c.l.b16 %v1732
        %v5950 = vunpack.c.h.b16 %v1732
        %v5951 = vunpack.c.l.b16 %v1733
        %v5952 = vunpack.c.h.b16 %v1733
        %v5953 = vunpack.c.l.b16 %v1734
        %v5954 = vunpack.c.h.b16 %v1734
        %v5955 = vunpack.c.l.b16 %v1735
        %v5956 = vunpack.c.h.b16 %v1735
        %v5957 = vunpack.c.l.b16 %v1736
        %v5958 = vunpack.c.h.b16 %v1736
        %v5959 = vunpack.c.l.b16 %v1737
        %v5960 = vunpack.c.h.b16 %v1737
        %v5961 = vunpack.c.l.b16 %v1738
        %v5962 = vunpack.c.h.b16 %v1738
        %v5963 = vunpack.c.l.b16 %v1739
        %v5964 = vunpack.c.h.b16 %v1739
        %v5965 = vunpack.c.l.b16 %v1740
        %v5966 = vunpack.c.h.b16 %v1740
        %v5967 = vunpack.c.l.b16 %v1741
        %v5968 = vunpack.c.h.b16 %v1741
        %v5969 = vunpack.c.l.b16 %v1742
        %v5970 = vunpack.c.h.b16 %v1742
        %v5971 = vunpack.c.l.b16 %v1743
        %v5972 = vunpack.c.h.b16 %v1743
        %v5973 = vunpack.c.l.b16 %v1744
        %v5974 = vunpack.c.h.b16 %v1744
        %v5975 = vunpack.c.l.b16 %v1745
        %v5976 = vunpack.c.h.b16 %v1745
        %v5977 = vunpack.c.l.b16 %v1746
        %v5978 = vunpack.c.h.b16 %v1746
        %v5979 = vunpack.c.l.b16 %v1747
        %v5980 = vunpack.c.h.b16 %v1747
        %v5981 = vunpack.c.l.b16 %v1748
        %v5982 = vunpack.c.h.b16 %v1748
        %v5983 = vunpack.c.l.b16 %v1749
        %v5984 = vunpack.c.h.b16 %v1749
        %v5985 = vunpack.c.l.b16 %v1750
        %v5986 = vunpack.c.h.b16 %v1750
        %v5987 = vunpack.c.l.b16 %v1751
        %v5988 = vunpack.c.h.b16 %v1751
        %v5989 = vunpack.c.l.b16 %v1752
        %v5990 = vunpack.c.h.b16 %v1752
        %v5991 = vunpack.c.l.b16 %v1753
        %v5992 = vunpack.c.h.b16 %v1753
        %v5993 = vunpack.c.l.b16 %v1754
        %v5994 = vunpack.c.h.b16 %v1754
        %v5995 = vunpack.c.l.b16 %v1755
        %v5996 = vunpack.c.h.b16 %v1755
        %v5997 = vunpack.c.l.b16 %v1756
        %v5998 = vunpack.c.h.b16 %v1756
        %v5999 = vunpack.c.l.b16 %v1757
        %v6000 = vunpack.c.h.b16 %v1757
        %v6001 = vunpack.c.l.b16 %v1758
        %v6002 = vunpack.c.h.b16 %v1758
        %v6003 = vunpack.c.l.b16 %v1759
        %v6004 = vunpack.c.h.b16 %v1759
        %v6005 = vunpack.c.l.b16 %v1760
        %v6006 = vunpack.c.h.b16 %v1760
        %v6007 = vunpack.c.l.b16 %v1761
        %v6008 = vunpack.c.h.b16 %v1761
        %v6009 = vunpack.c.l.b16 %v1762
        %v6010 = vunpack.c.h.b16 %v1762
        %v6011 = vunpack.c.l.b16 %v1763
        %v6012 = vunpack.c.h.b16 %v1763
        %v6013 = vunpack.c.l.b16 %v1764
        %v6014 = vunpack.c.h.b16 %v1764
        %v6015 = vunpack.c.l.b16 %v1765
        %v6016 = vunpack.c.h.b16 %v1765
        %v6017 = vunpack.c.l.b16 %v1766
        %v6018 = vunpack.c.h.b16 %v1766
        %v6019 = vunpack.c.l.b16 %v1767
        %v6020 = vunpack.c.h.b16 %v1767
        %v6021 = vunpack.c.l.b16 %v1768
        %v6022 = vunpack.c.h.b16 %v1768
        %v6023 = vunpack.c.l.b16 %v1769
        %v6024 = vunpack.c.h.b16 %v1769
        %v6025 = vunpack.c.l.b16 %v1770
        %v6026 = vunpack.c.h.b16 %v1770
        %v6027 = vunpack.c.l.b16 %v1771
        %v6028 = vunpack.c.h.b16 %v1771
        %v6029 = vunpack.c.l.b16 %v1772
        %v6030 = vunpack.c.h.b16 %v1772
        %v6031 = vunpack.c.l.b16 %v1773
        %v6032 = vunpack.c.h.b16 %v1773
        %v6033 = vunpack.c.l.b16 %v1774
        %v6034 = vunpack.c.h.b16 %v1774
        %v6035 = vunpack.c.l.b16 %v1775
        %v6036 = vunpack.c.h.b16 %v1775
        %v6037 = vunpack.c.l.b16 %v1776
        %v6038 = vunpack.c.h.b16 %v1776
        %v6039 = vunpack.c.l.b16 %v1777
        %v6040 = vunpack.c.h.b16 %v1777
        %v6041 = vunpack.c.l.b16 %v1778
        %v6042 = vunpack.c.h.b16 %v1778
        %v6043 = vunpack.c.l.b16 %v1779
        %v6044 = vunpack.c.h.b16 %v1779
        %v6045 = vunpack.c.l.b16 %v1780
        %v6046 = vunpack.c.h.b16 %v1780
        %v6047 = vunpack.c.l.b16 %v1781
        %v6048 = vunpack.c.h.b16 %v1781
        %v6049 = vunpack.c.l.b16 %v1782
        %v6050 = vunpack.c.h.b16 %v1782
        %v6051 = vunpack.c.l.b16 %v1783
        %v6052 = vunpack.c.h.b16 %v1783
        %v6053 = vunpack.c.l.b16 %v1784
        %v6054 = vunpack.c.h.b16 %v1784
        %v6055 = vunpack.c.l.b16 %v1785
        %v6056 = vunpack.c.h.b16 %v1785
        %v6057 = vunpack.c.l.b16 %v1786
        %v6058 = vunpack.c.h.b16 %v1786
        %v6059 = vunpack.c.l.b16 %v1787
        %v6060 = vunpack.c.h.b16 %v1787
        %v6061 = vunpack.c.l.b16 %v1788
        %v6062 = vunpack.c.h.b16 %v1788
        %v6063 = vunpack.c.l.b16 %v1789
        %v6064 = vunpack.c.h.b16 %v1789
        %v6065 = vunpack.c.l.b16 %v1790
        %v6066 = vunpack.c.h.b16 %v1790
        %v6067 = vunpack.c.l.b16 %v1791
        %v6068 = vunpack.c.h.b16 %v1791
        %v6069 = vunpack.c.l.b16 %v1792
        %v6070 = vunpack.c.h.b16 %v1792
        %v6071 = vunpack.c.l.b16 %v1793
        %v6072 = vunpack.c.h.b16 %v1793
        %v6073 = vunpack.c.l.b16 %v1794
        %v6074 = vunpack.c.h.b16 %v1794
        %v6075 = vunpack.c.l.b16 %v1795
        %v6076 = vunpack.c.h.b16 %v1795
        %v6077 = vunpack.c.l.b16 %v1796
        %v6078 = vunpack.c.h.b16 %v1796
        %v6079 = vunpack.c.l.b16 %v1797
        %v6080 = vunpack.c.h.b16 %v1797
        %v6081 = vunpack.c.l.b16 %v1798
        %v6082 = vunpack.c.h.b16 %v1798
        %v6083 = vunpack.c.l.b16 %v1799
        %v6084 = vunpack.c.h.b16 %v1799
        %v6085 = vunpack.c.l.b16 %v1800
        %v6086 = vunpack.c.h.b16 %v1800
        %v6087 = vunpack.c.l.b16 %v1801
        %v6088 = vunpack.c.h.b16 %v1801
        %v6089 = vunpack.c.l.b16 %v1802
        %v6090 = vunpack.c.h.b16 %v1802
        %v6091 = vunpack.c.l.b16 %v1803
        %v6092 = vunpack.c.h.b16 %v1803
        %v6093 = vunpack.c.l.b16 %v1804
        %v6094 = vunpack.c.h.b16 %v1804
        %v6095 = vunpack.c.l.b16 %v1805
        %v6096 = vunpack.c.h.b16 %v1805
        %v6097 = vunpack.c.l.b16 %v1806
        %v6098 = vunpack.c.h.b16 %v1806
        %v6099 = vunpack.c.l.b16 %v1807
        %v6100 = vunpack.c.h.b16 %v1807
        %v6101 = vunpack.c.l.b16 %v1808
        %v6102 = vunpack.c.h.b16 %v1808
        %v6103 = vunpack.c.l.b16 %v1809
        %v6104 = vunpack.c.h.b16 %v1809
        %v6105 = vunpack.c.l.b16 %v1810
        %v6106 = vunpack.c.h.b16 %v1810
        %v6107 = vunpack.c.l.b16 %v1811
        %v6108 = vunpack.c.h.b16 %v1811
        %v6109 = vunpack.c.l.b16 %v1812
        %v6110 = vunpack.c.h.b16 %v1812
        %v6111 = vunpack.c.l.b16 %v1813
        %v6112 = vunpack.c.h.b16 %v1813
        %v6113 = vunpack.c.l.b16 %v1814
        %v6114 = vunpack.c.h.b16 %v1814
        %v6115 = vunpack.c.l.b16 %v1815
        %v6116 = vunpack.c.h.b16 %v1815
        %v6117 = vunpack.c.l.b16 %v1816
        %v6118 = vunpack.c.h.b16 %v1816
        %v6119 = vunpack.c.l.b16 %v1817
        %v6120 = vunpack.c.h.b16 %v1817
        %v6121 = vunpack.c.l.b16 %v1818
        %v6122 = vunpack.c.h.b16 %v1818
        %v6123 = vunpack.c.l.b16 %v1819
        %v6124 = vunpack.c.h.b16 %v1819
        %v6125 = vunpack.c.l.b16 %v1820
        %v6126 = vunpack.c.h.b16 %v1820
        %v6127 = vunpack.c.l.b16 %v1821
        %v6128 = vunpack.c.h.b16 %v1821
        %v6129 = vunpack.c.l.b16 %v1822
        %v6130 = vunpack.c.h.b16 %v1822
        %v6131 = vunpack.c.l.b16 %v1823
        %v6132 = vunpack.c.h.b16 %v1823
        %v6133 = vunpack.c.l.b16 %v1824
        %v6134 = vunpack.c.h.b16 %v1824
        %v6135 = vunpack.c.l.b16 %v1825
        %v6136 = vunpack.c.h.b16 %v1825
        %v6137 = vunpack.c.l.b16 %v1826
        %v6138 = vunpack.c.h.b16 %v1826
        %v6139 = vunpack.c.l.b16 %v1827
        %v6140 = vunpack.c.h.b16 %v1827
        %v6141 = vunpack.c.l.b16 %v1828
        %v6142 = vunpack.c.h.b16 %v1828
        %v6143 = vunpack.c.l.b16 %v1829
        %v6144 = vunpack.c.h.b16 %v1829
        %v6145 = vunpack.c.l.b16 %v1830
        %v6146 = vunpack.c.h.b16 %v1830
        %v6147 = vunpack.c.l.b16 %v1831
        %v6148 = vunpack.c.h.b16 %v1831
        %v6149 = vunpack.c.l.b16 %v1832
        %v6150 = vunpack.c.h.b16 %v1832
        %v6151 = vunpack.c.l.b16 %v1833
        %v6152 = vunpack.c.h.b16 %v1833
        %v6153 = vunpack.c.l.b16 %v1834
        %v6154 = vunpack.c.h.b16 %v1834
        %v6155 = vunpack.c.l.b16 %v1835
        %v6156 = vunpack.c.h.b16 %v1835
        %v6157 = vunpack.c.l.b16 %v1836
        %v6158 = vunpack.c.h.b16 %v1836
        %v6159 = vunpack.c.l.b16 %v1837
        %v6160 = vunpack.c.h.b16 %v1837
        %v6161 = vunpack.c.l.b16 %v1838
        %v6162 = vunpack.c.h.b16 %v1838
        %v6163 = vunpack.c.l.b16 %v1839
        %v6164 = vunpack.c.h.b16 %v1839
        %v6165 = vunpack.c.l.b16 %v1840
        %v6166 = vunpack.c.h.b16 %v1840
        %v6167 = vunpack.c.l.b16 %v1841
        %v6168 = vunpack.c.h.b16 %v1841
        %v6169 = vunpack.c.l.b16 %v1842
        %v6170 = vunpack.c.h.b16 %v1842
        %v6171 = vunpack.c.l.b16 %v1843
        %v6172 = vunpack.c.h.b16 %v1843
        %v6173 = vunpack.c.l.b16 %v1844
        %v6174 = vunpack.c.h.b16 %v1844
        %v6175 = vunpack.c.l.b16 %v1845
        %v6176 = vunpack.c.h.b16 %v1845
        %v6177 = vunpack.c.l.b16 %v1846
        %v6178 = vunpack.c.h.b16 %v1846
        %v6179 = vunpack.c.l.b16 %v1847
        %v6180 = vunpack.c.h.b16 %v1847
        %v6181 = vunpack.c.l.b16 %v1848
        %v6182 = vunpack.c.h.b16 %v1848
        %v6183 = vunpack.c.l.b16 %v1849
        %v6184 = vunpack.c.h.b16 %v1849
        %v6185 = vunpack.c.l.b16 %v1850
        %v6186 = vunpack.c.h.b16 %v1850
        %v6187 = vunpack.c.l.b16 %v1851
        %v6188 = vunpack.c.h.b16 %v1851
        %v6189 = vunpack.c.l.b16 %v1852
        %v6190 = vunpack.c.h.b16 %v1852
        %v6191 = vunpack.c.l.b16 %v1853
        %v6192 = vunpack.c.h.b16 %v1853
        %v6193 = vunpack.c.l.b16 %v1854
        %v6194 = vunpack.c.h.b16 %v1854
        %v6195 = vunpack.c.l.b16 %v1855
        %v6196 = vunpack.c.h.b16 %v1855
        %v6197 = vunpack.c.l.b16 %v1856
        %v6198 = vunpack.c.h.b16 %v1856
        %v6199 = vunpack.c.l.b16 %v1857
        %v6200 = vunpack.c.h.b16 %v1857
        %v6201 = vunpack.c.l.b16 %v1858
        %v6202 = vunpack.c.h.b16 %v1858
        %v6203 = vunpack.c.l.b16 %v1859
        %v6204 = vunpack.c.h.b16 %v1859
        %v6205 = vunpack.c.l.b16 %v1860
        %v6206 = vunpack.c.h.b16 %v1860
        %v6207 = vunpack.c.l.b16 %v1861
        %v6208 = vunpack.c.h.b16 %v1861
        %v6209 = vunpack.c.l.b16 %v1862
        %v6210 = vunpack.c.h.b16 %v1862
        %v6211 = vunpack.c.l.b16 %v1863
        %v6212 = vunpack.c.h.b16 %v1863
        %v6213 = vunpack.c.l.b16 %v1864
        %v6214 = vunpack.c.h.b16 %v1864
        %v6215 = vunpack.c.l.b16 %v1865
        %v6216 = vunpack.c.h.b16 %v1865
        %v6217 = vunpack.c.l.b16 %v1866
        %v6218 = vunpack.c.h.b16 %v1866
        %v6219 = vunpack.c.l.b16 %v1867
        %v6220 = vunpack.c.h.b16 %v1867
        %v6221 = vunpack.c.l.b16 %v1868
        %v6222 = vunpack.c.h.b16 %v1868
        %v6223 = vunpack.c.l.b16 %v1869
        %v6224 = vunpack.c.h.b16 %v1869
        %v6225 = vunpack.c.l.b16 %v1870
        %v6226 = vunpack.c.h.b16 %v1870
        %v6227 = vunpack.c.l.b16 %v1871
        %v6228 = vunpack.c.h.b16 %v1871
        %v6229 = vunpack.c.l.b16 %v1872
        %v6230 = vunpack.c.h.b16 %v1872
        %v6231 = vunpack.c.l.b16 %v1873
        %v6232 = vunpack.c.h.b16 %v1873
        %v6233 = vunpack.c.l.b16 %v1874
        %v6234 = vunpack.c.h.b16 %v1874
        %v6235 = vunpack.c.l.b16 %v1875
        %v6236 = vunpack.c.h.b16 %v1875
        %v6237 = vunpack.c.l.b16 %v1876
        %v6238 = vunpack.c.h.b16 %v1876
        %v6239 = vunpack.c.l.b16 %v1877
        %v6240 = vunpack.c.h.b16 %v1877
        %v6241 = vunpack.c.l.b16 %v1878
        %v6242 = vunpack.c.h.b16 %v1878
        %v6243 = vunpack.c.l.b16 %v1879
        %v6244 = vunpack.c.h.b16 %v1879
        %v6245 = vunpack.c.l.b16 %v1880
        %v6246 = vunpack.c.h.b16 %v1880
        %v6247 = vunpack.c.l.b16 %v1881
        %v6248 = vunpack.c.h.b16 %v1881
        %v6249 = vunpack.c.l.b16 %v1882
        %v6250 = vunpack.c.h.b16 %v1882
        %v6251 = vunpack.c.l.b16 %v1883
        %v6252 = vunpack.c.h.b16 %v1883
        %v6253 = vunpack.c.l.b16 %v1884
        %v6254 = vunpack.c.h.b16 %v1884
        %v6255 = vunpack.c.l.b16 %v1885
        %v6256 = vunpack.c.h.b16 %v1885
        %v6257 = vunpack.c.l.b16 %v1886
        %v6258 = vunpack.c.h.b16 %v1886
        %v6259 = vunpack.c.l.b16 %v1887
        %v6260 = vunpack.c.h.b16 %v1887
        %v6261 = vunpack.c.l.b16 %v1888
        %v6262 = vunpack.c.h.b16 %v1888
        %v6263 = vunpack.c.l.b16 %v1889
        %v6264 = vunpack.c.h.b16 %v1889
        %v6265 = vunpack.c.l.b16 %v1890
        %v6266 = vunpack.c.h.b16 %v1890
        %v6267 = vunpack.c.l.b16 %v1891
        %v6268 = vunpack.c.h.b16 %v1891
        %v6269 = vunpack.c.l.b16 %v1892
        %v6270 = vunpack.c.h.b16 %v1892
        %v6271 = vunpack.c.l.b16 %v1893
        %v6272 = vunpack.c.h.b16 %v1893
        %v6273 = vunpack.c.l.b16 %v1894
        %v6274 = vunpack.c.h.b16 %v1894
        %v6275 = vunpack.c.l.b16 %v1895
        %v6276 = vunpack.c.h.b16 %v1895
        %v6277 = vunpack.c.l.b16 %v1896
        %v6278 = vunpack.c.h.b16 %v1896
        %v6279 = vunpack.c.l.b16 %v1897
        %v6280 = vunpack.c.h.b16 %v1897
        %v6281 = vunpack.c.l.b16 %v1898
        %v6282 = vunpack.c.h.b16 %v1898
        %v6283 = vunpack.c.l.b16 %v1899
        %v6284 = vunpack.c.h.b16 %v1899
        %v6285 = vunpack.c.l.b16 %v1900
        %v6286 = vunpack.c.h.b16 %v1900
        %v6287 = vunpack.c.l.b16 %v1901
        %v6288 = vunpack.c.h.b16 %v1901
        %v6289 = vunpack.c.l.b16 %v1902
        %v6290 = vunpack.c.h.b16 %v1902
        %v6291 = vunpack.c.l.b16 %v1903
        %v6292 = vunpack.c.h.b16 %v1903
        %v6293 = vunpack.c.l.b16 %v1904
        %v6294 = vunpack.c.h.b16 %v1904
        %v6295 = vunpack.c.l.b16 %v1905
        %v6296 = vunpack.c.h.b16 %v1905
        %v6297 = vunpack.c.l.b16 %v1906
        %v6298 = vunpack.c.h.b16 %v1906
        %v6299 = vunpack.c.l.b16 %v1907
        %v6300 = vunpack.c.h.b16 %v1907
        %v6301 = vunpack.c.l.b16 %v1908
        %v6302 = vunpack.c.h.b16 %v1908
        %v6303 = vunpack.c.l.b16 %v1909
        %v6304 = vunpack.c.h.b16 %v1909
        %v6305 = vunpack.c.l.b16 %v1910
        %v6306 = vunpack.c.h.b16 %v1910
        %v6307 = vunpack.c.l.b16 %v1911
        %v6308 = vunpack.c.h.b16 %v1911
        %v6309 = vunpack.c.l.b16 %v1912
        %v6310 = vunpack.c.h.b16 %v1912
        %v6311 = vunpack.c.l.b16 %v1913
        %v6312 = vunpack.c.h.b16 %v1913
        %v6313 = vunpack.c.l.b16 %v1914
        %v6314 = vunpack.c.h.b16 %v1914
        %v6315 = vunpack.c.l.b16 %v1915
        %v6316 = vunpack.c.h.b16 %v1915
        %v6317 = vunpack.c.l.b16 %v1916
        %v6318 = vunpack.c.h.b16 %v1916
        %v6319 = vunpack.c.l.b16 %v1917
        %v6320 = vunpack.c.h.b16 %v1917
        %v6321 = vunpack.c.l.b16 %v1918
        %v6322 = vunpack.c.h.b16 %v1918
        %v6323 = vunpack.c.l.b16 %v1919
        %v6324 = vunpack.c.h.b16 %v1919
        %v6325 = vunpack.c.l.b16 %v1920
        %v6326 = vunpack.c.h.b16 %v1920
        %v6327 = vunpack.c.l.b16 %v1921
        %v6328 = vunpack.c.h.b16 %v1921
        %v6329 = vunpack.c.l.b16 %v1922
        %v6330 = vunpack.c.h.b16 %v1922
        %v6331 = vunpack.c.l.b16 %v1923
        %v6332 = vunpack.c.h.b16 %v1923
        %v6333 = vunpack.c.l.b16 %v1924
        %v6334 = vunpack.c.h.b16 %v1924
        %v6335 = vunpack.c.l.b16 %v1925
        %v6336 = vunpack.c.h.b16 %v1925
        %v6337 = vunpack.c.l.b16 %v1926
        %v6338 = vunpack.c.h.b16 %v1926
        %v6339 = vunpack.c.l.b16 %v1927
        %v6340 = vunpack.c.h.b16 %v1927
        %v6341 = vunpack.c.l.b16 %v1928
        %v6342 = vunpack.c.h.b16 %v1928
        %v6343 = vunpack.c.l.b16 %v1929
        %v6344 = vunpack.c.h.b16 %v1929
        %v6345 = vunpack.c.l.b16 %v1930
        %v6346 = vunpack.c.h.b16 %v1930
        %v6347 = vunpack.c.l.b16 %v1931
        %v6348 = vunpack.c.h.b16 %v1931
        %v6349 = vunpack.c.l.b16 %v1932
        %v6350 = vunpack.c.h.b16 %v1932
        %v6351 = vunpack.c.l.b16 %v1933
        %v6352 = vunpack.c.h.b16 %v1933
        %v6353 = vunpack.c.l.b16 %v1934
        %v6354 = vunpack.c.h.b16 %v1934
        %v6355 = vunpack.c.l.b16 %v1935
        %v6356 = vunpack.c.h.b16 %v1935
        %v6357 = vunpack.c.l.b16 %v1936
        %v6358 = vunpack.c.h.b16 %v1936
        %v6359 = vunpack.c.l.b16 %v1937
        %v6360 = vunpack.c.h.b16 %v1937
        %v6361 = vunpack.c.l.b16 %v1938
        %v6362 = vunpack.c.h.b16 %v1938
        %v6363 = vunpack.c.l.b16 %v1939
        %v6364 = vunpack.c.h.b16 %v1939
        %v6365 = vunpack.c.l.b16 %v1940
        %v6366 = vunpack.c.h.b16 %v1940
        %v6367 = vunpack.c.l.b16 %v1941
        %v6368 = vunpack.c.h.b16 %v1941
        %v6369 = vunpack.c.l.b16 %v1942
        %v6370 = vunpack.c.h.b16 %v1942
        %v6371 = vunpack.c.l.b16 %v1943
        %v6372 = vunpack.c.h.b16 %v1943
        %v6373 = vunpack.c.l.b16 %v1944
        %v6374 = vunpack.c.h.b16 %v1944
        %v6375 = vunpack.c.l.b16 %v1945
        %v6376 = vunpack.c.h.b16 %v1945
        %v6377 = vunpack.c.l.b16 %v1946
        %v6378 = vunpack.c.h.b16 %v1946
        %v6379 = vunpack.c.l.b16 %v1947
        %v6380 = vunpack.c.h.b16 %v1947
        %v6381 = vunpack.c.l.b16 %v1948
        %v6382 = vunpack.c.h.b16 %v1948
        %v6383 = vunpack.c.l.b16 %v1949
        %v6384 = vunpack.c.h.b16 %v1949
        %v6385 = vunpack.c.l.b16 %v1950
        %v6386 = vunpack.c.h.b16 %v1950
        %v6387 = vunpack.c.l.b16 %v1951
        %v6388 = vunpack.c.h.b16 %v1951
        %v6389 = vunpack.c.l.b16 %v1952
        %v6390 = vunpack.c.h.b16 %v1952
        %v6391 = vunpack.c.l.b16 %v1953
        %v6392 = vunpack.c.h.b16 %v1953
        %v6393 = vunpack.c.l.b16 %v1954
        %v6394 = vunpack.c.h.b16 %v1954
        %v6395 = vunpack.c.l.b16 %v1955
        %v6396 = vunpack.c.h.b16 %v1955
        %v6397 = vunpack.c.l.b16 %v1956
        %v6398 = vunpack.c.h.b16 %v1956
        %v6399 = vunpack.c.l.b16 %v1957
        %v6400 = vunpack.c.h.b16 %v1957
        %v6401 = vunpack.c.l.b16 %v1958
        %v6402 = vunpack.c.h.b16 %v1958
        %v6403 = vunpack.c.l.b16 %v1959
        %v6404 = vunpack.c.h.b16 %v1959
        %v6405 = vunpack.c.l.b16 %v1960
        %v6406 = vunpack.c.h.b16 %v1960
        %v6407 = vunpack.c.l.b16 %v1961
        %v6408 = vunpack.c.h.b16 %v1961
        %v6409 = vunpack.c.l.b16 %v1962
        %v6410 = vunpack.c.h.b16 %v1962
        %v6411 = vunpack.c.l.b16 %v1963
        %v6412 = vunpack.c.h.b16 %v1963
        %v6413 = vunpack.c.l.b16 %v1964
        %v6414 = vunpack.c.h.b16 %v1964
        %v6415 = vunpack.c.l.b16 %v1965
        %v6416 = vunpack.c.h.b16 %v1965
        %v6417 = vunpack.c.l.b16 %v1966
        %v6418 = vunpack.c.h.b16 %v1966
        %v6419 = vunpack.c.l.b16 %v1967
        %v6420 = vunpack.c.h.b16 %v1967
        %v6421 = vunpack.c.l.b16 %v1968
        %v6422 = vunpack.c.h.b16 %v1968
        %v6423 = vunpack.c.l.b16 %v1969
        %v6424 = vunpack.c.h.b16 %v1969
        %v6425 = vunpack.c.l.b16 %v1970
        %v6426 = vunpack.c.h.b16 %v1970
        %v6427 = vunpack.c.l.b16 %v1971
        %v6428 = vunpack.c.h.b16 %v1971
        %v6429 = vunpack.c.l.b16 %v1972
        %v6430 = vunpack.c.h.b16 %v1972
        %v6431 = vunpack.c.l.b16 %v1973
        %v6432 = vunpack.c.h.b16 %v1973
        %v6433 = vunpack.c.l.b16 %v1974
        %v6434 = vunpack.c.h.b16 %v1974
        %v6435 = vunpack.c.l.b16 %v1975
        %v6436 = vunpack.c.h.b16 %v1975
        %v6437 = vunpack.c.l.b16 %v1976
        %v6438 = vunpack.c.h.b16 %v1976
        %v6439 = vunpack.c.l.b16 %v1977
        %v6440 = vunpack.c.h.b16 %v1977
        %v6441 = vunpack.c.l.b16 %v1978
        %v6442 = vunpack.c.h.b16 %v1978
        %v6443 = vunpack.c.l.b16 %v1979
        %v6444 = vunpack.c.h.b16 %v1979
        %v6445 = vunpack.c.l.b16 %v1980
        %v6446 = vunpack.c.h.b16 %v1980
        %v6447 = vunpack.c.l.b16 %v1981
        %v6448 = vunpack.c.h.b16 %v1981
        %v6449 = vunpack.c.l.b16 %v1982
        %v6450 = vunpack.c.h.b16 %v1982
        %v6451 = vunpack.c.l.b16 %v1983
        %v6452 = vunpack.c.h.b16 %v1983
        %v6453 = vunpack.c.l.b16 %v1984
        %v6454 = vunpack.c.h.b16 %v1984
        %v6455 = vunpack.c.l.b16 %v1985
        %v6456 = vunpack.c.h.b16 %v1985
        %v6457 = vunpack.c.l.b16 %v1986
        %v6458 = vunpack.c.h.b16 %v1986
        %v6459 = vunpack.c.l.b16 %v1987
        %v6460 = vunpack.c.h.b16 %v1987
        %v6461 = vunpack.c.l.b16 %v1988
        %v6462 = vunpack.c.h.b16 %v1988
        %v6463 = vunpack.c.l.b16 %v1989
        %v6464 = vunpack.c.h.b16 %v1989
        %v6465 = vunpack.c.l.b16 %v1990
        %v6466 = vunpack.c.h.b16 %v1990
        %v6467 = vunpack.c.l.b16 %v1991
        %v6468 = vunpack.c.h.b16 %v1991
        %v6469 = vunpack.c.l.b16 %v1992
        %v6470 = vunpack.c.h.b16 %v1992
        %v6471 = vunpack.c.l.b16 %v1993
        %v6472 = vunpack.c.h.b16 %v1993
        %v6473 = vunpack.c.l.b16 %v1994
        %v6474 = vunpack.c.h.b16 %v1994
        %v6475 = vunpack.c.l.b16 %v1995
        %v6476 = vunpack.c.h.b16 %v1995
        %v6477 = vunpack.c.l.b16 %v1996
        %v6478 = vunpack.c.h.b16 %v1996
        %v6479 = vunpack.c.l.b16 %v1997
        %v6480 = vunpack.c.h.b16 %v1997
        %v6481 = vunpack.c.l.b16 %v1998
        %v6482 = vunpack.c.h.b16 %v1998
        %v6483 = vunpack.c.l.b16 %v1999
        %v6484 = vunpack.c.h.b16 %v1999
        %v6485 = vunpack.c.l.b16 %v2000
        %v6486 = vunpack.c.h.b16 %v2000
        %v6487 = vunpack.c.l.b16 %v2001
        %v6488 = vunpack.c.h.b16 %v2001
        %v6489 = vunpack.c.l.b16 %v2002
        %v6490 = vunpack.c.h.b16 %v2002
        %v6491 = vunpack.c.l.b16 %v2003
        %v6492 = vunpack.c.h.b16 %v2003
        %v6493 = vunpack.c.l.b16 %v2004
        %v6494 = vunpack.c.h.b16 %v2004
        %v6495 = vunpack.c.l.b16 %v2005
        %v6496 = vunpack.c.h.b16 %v2005
        %v6497 = vunpack.c.l.b16 %v2006
        %v6498 = vunpack.c.h.b16 %v2006
        %v6499 = vunpack.c.l.b16 %v2007
        %v6500 = vunpack.c.h.b16 %v2007
        %v6501 = vunpack.c.l.b16 %v2008
        %v6502 = vunpack.c.h.b16 %v2008
        %v6503 = vunpack.c.l.b16 %v2009
        %v6504 = vunpack.c.h.b16 %v2009
        %v6505 = vunpack.c.l.b16 %v2010
        %v6506 = vunpack.c.h.b16 %v2010
        %v6507 = vunpack.c.l.b16 %v2011
        %v6508 = vunpack.c.h.b16 %v2011
        %v6509 = vunpack.c.l.b16 %v2012
        %v6510 = vunpack.c.h.b16 %v2012
        %v6511 = vunpack.c.l.b16 %v2013
        %v6512 = vunpack.c.h.b16 %v2013
        %v6513 = vunpack.c.l.b16 %v2014
        %v6514 = vunpack.c.h.b16 %v2014
        %v6515 = vunpack.c.l.b16 %v2015
        %v6516 = vunpack.c.h.b16 %v2015
        %v6517 = vunpack.c.l.b16 %v2016
        %v6518 = vunpack.c.h.b16 %v2016
        %v6519 = vunpack.c.l.b16 %v2017
        %v6520 = vunpack.c.h.b16 %v2017
        %v6521 = vunpack.c.l.b16 %v2018
        %v6522 = vunpack.c.h.b16 %v2018
        %v6523 = vunpack.c.l.b16 %v2019
        %v6524 = vunpack.c.h.b16 %v2019
        %v6525 = vunpack.c.l.b16 %v2020
        %v6526 = vunpack.c.h.b16 %v2020
        %v6527 = vunpack.c.l.b16 %v2021
        %v6528 = vunpack.c.h.b16 %v2021
        %v6529 = vunpack.c.l.b16 %v2022
        %v6530 = vunpack.c.h.b16 %v2022
        %v6531 = vunpack.c.l.b16 %v2023
        %v6532 = vunpack.c.h.b16 %v2023
        %v6533 = vunpack.c.l.b16 %v2024
        %v6534 = vunpack.c.h.b16 %v2024
        %v6535 = vunpack.c.l.b16 %v2025
        %v6536 = vunpack.c.h.b16 %v2025
        %v6537 = vunpack.c.l.b16 %v2026
        %v6538 = vunpack.c.h.b16 %v2026
        %v6539 = vunpack.c.l.b16 %v2027
        %v6540 = vunpack.c.h.b16 %v2027
        %v6541 = vunpack.c.l.b16 %v2028
        %v6542 = vunpack.c.h.b16 %v2028
        %v6543 = vunpack.c.l.b16 %v2029
        %v6544 = vunpack.c.h.b16 %v2029
        %v6545 = vunpack.c.l.b16 %v2030
        %v6546 = vunpack.c.h.b16 %v2030
        %v6547 = vunpack.c.l.b16 %v2031
        %v6548 = vunpack.c.h.b16 %v2031
        %v6549 = vunpack.c.l.b16 %v2032
        %v6550 = vunpack.c.h.b16 %v2032
        %v6551 = vunpack.c.l.b16 %v2033
        %v6552 = vunpack.c.h.b16 %v2033
        %v6553 = vunpack.c.l.b16 %v2034
        %v6554 = vunpack.c.h.b16 %v2034
        %v6555 = vunpack.c.l.b16 %v2035
        %v6556 = vunpack.c.h.b16 %v2035
        %v6557 = vunpack.c.l.b16 %v2036
        %v6558 = vunpack.c.h.b16 %v2036
        %v6559 = vunpack.c.l.b16 %v2037
        %v6560 = vunpack.c.h.b16 %v2037
        %v6561 = vunpack.c.l.b16 %v2038
        %v6562 = vunpack.c.h.b16 %v2038
        %v6563 = vunpack.c.l.b16 %v2039
        %v6564 = vunpack.c.h.b16 %v2039
        %v6565 = vunpack.c.l.b16 %v2040
        %v6566 = vunpack.c.h.b16 %v2040
        %v6567 = vunpack.c.l.b16 %v2041
        %v6568 = vunpack.c.h.b16 %v2041
        %v6569 = vunpack.c.l.b16 %v2042
        %v6570 = vunpack.c.h.b16 %v2042
        %v6571 = vunpack.c.l.b16 %v2043
        %v6572 = vunpack.c.h.b16 %v2043
        %v6573 = vunpack.c.l.b16 %v2044
        %v6574 = vunpack.c.h.b16 %v2044
        %v6575 = vunpack.c.l.b16 %v2045
        %v6576 = vunpack.c.h.b16 %v2045
        %v6577 = vunpack.c.l.b16 %v2046
        %v6578 = vunpack.c.h.b16 %v2046
        %v6579 = vunpack.c.l.b16 %v2047
        %v6580 = vunpack.c.h.b16 %v2047
        %v6581 = vunpack.c.l.b16 %v2048
        %v6582 = vunpack.c.h.b16 %v2048
        %v6583 = vunpack.c.l.b16 %v2049
        %v6584 = vunpack.c.h.b16 %v2049
        %v6585 = vunpack.c.l.b16 %v2050
        %v6586 = vunpack.c.h.b16 %v2050
        %v6587 = vunpack.c.l.b16 %v2051
        %v6588 = vunpack.c.h.b16 %v2051
        %v6589 = vunpack.c.l.b16 %v2052
        %v6590 = vunpack.c.h.b16 %v2052
        %v6591 = vunpack.c.l.b16 %v2053
        %v6592 = vunpack.c.h.b16 %v2053
        %v6593 = vunpack.c.l.b16 %v2054
        %v6594 = vunpack.c.h.b16 %v2054
        %v6595 = vunpack.c.l.b16 %v2055
        %v6596 = vunpack.c.h.b16 %v2055
        %v6597 = vunpack.c.l.b16 %v2056
        %v6598 = vunpack.c.h.b16 %v2056
        %v6599 = vunpack.c.l.b16 %v2057
        %v6600 = vunpack.c.h.b16 %v2057
        %v6601 = vunpack.c.l.b16 %v2058
        %v6602 = vunpack.c.h.b16 %v2058
        %v6603 = vunpack.c.l.b16 %v2059
        %v6604 = vunpack.c.h.b16 %v2059
        %v6605 = vunpack.c.l.b16 %v2060
        %v6606 = vunpack.c.h.b16 %v2060
        %v6607 = vunpack.c.l.b16 %v2061
        %v6608 = vunpack.c.h.b16 %v2061
        %v6609 = vunpack.c.l.b16 %v2062
        %v6610 = vunpack.c.h.b16 %v2062
        %v6611 = vunpack.c.l.b16 %v2063
        %v6612 = vunpack.c.h.b16 %v2063
        %v6613 = vunpack.c.l.b16 %v2064
        %v6614 = vunpack.c.h.b16 %v2064
        %v6615 = vunpack.c.l.b16 %v2065
        %v6616 = vunpack.c.h.b16 %v2065
        %v6617 = vunpack.c.l.b16 %v2066
        %v6618 = vunpack.c.h.b16 %v2066
        %v6619 = vunpack.c.l.b16 %v2067
        %v6620 = vunpack.c.h.b16 %v2067
        %v6621 = vunpack.c.l.b16 %v2068
        %v6622 = vunpack.c.h.b16 %v2068
        %v6623 = vunpack.c.l.b16 %v2069
        %v6624 = vunpack.c.h.b16 %v2069
        %v6625 = vunpack.c.l.b16 %v2070
        %v6626 = vunpack.c.h.b16 %v2070
        %v6627 = vunpack.c.l.b16 %v2071
        %v6628 = vunpack.c.h.b16 %v2071
        %v6629 = vunpack.c.l.b16 %v2072
        %v6630 = vunpack.c.h.b16 %v2072
        %v6631 = vunpack.c.l.b16 %v2073
        %v6632 = vunpack.c.h.b16 %v2073
        %v6633 = vunpack.c.l.b16 %v2074
        %v6634 = vunpack.c.h.b16 %v2074
        %v6635 = vunpack.c.l.b16 %v2075
        %v6636 = vunpack.c.h.b16 %v2075
        %v6637 = vunpack.c.l.b16 %v2076
        %v6638 = vunpack.c.h.b16 %v2076
        %v6639 = vunpack.c.l.b16 %v2077
        %v6640 = vunpack.c.h.b16 %v2077
        %v6641 = vunpack.c.l.b16 %v2078
        %v6642 = vunpack.c.h.b16 %v2078
        %v6643 = vunpack.c.l.b16 %v2079
        %v6644 = vunpack.c.h.b16 %v2079
        %v6645 = vunpack.c.l.b16 %v2080
        %v6646 = vunpack.c.h.b16 %v2080
        %v6647 = vunpack.c.l.b16 %v2081
        %v6648 = vunpack.c.h.b16 %v2081
        %v6649 = vunpack.c.l.b16 %v2082
        %v6650 = vunpack.c.h.b16 %v2082
        %v6651 = vunpack.c.l.b16 %v2083
        %v6652 = vunpack.c.h.b16 %v2083
        %v6653 = vunpack.c.l.b16 %v2084
        %v6654 = vunpack.c.h.b16 %v2084
        %v6655 = vunpack.c.l.b16 %v2085
        %v6656 = vunpack.c.h.b16 %v2085
        %v6657 = vunpack.c.l.b16 %v2086
        %v6658 = vunpack.c.h.b16 %v2086
        %v6659 = vunpack.c.l.b16 %v2087
        %v6660 = vunpack.c.h.b16 %v2087
        %v6661 = vunpack.c.l.b16 %v2088
        %v6662 = vunpack.c.h.b16 %v2088
        %v6663 = vunpack.c.l.b16 %v2089
        %v6664 = vunpack.c.h.b16 %v2089
        %v6665 = vunpack.c.l.b16 %v2090
        %v6666 = vunpack.c.h.b16 %v2090
        %v6667 = vunpack.c.l.b16 %v2091
        %v6668 = vunpack.c.h.b16 %v2091
        %v6669 = vunpack.c.l.b16 %v2092
        %v6670 = vunpack.c.h.b16 %v2092
        %v6671 = vunpack.c.l.b16 %v2093
        %v6672 = vunpack.c.h.b16 %v2093
        %v6673 = vunpack.c.l.b16 %v2094
        %v6674 = vunpack.c.h.b16 %v2094
        %v6675 = vunpack.c.l.b16 %v2095
        %v6676 = vunpack.c.h.b16 %v2095
        %v6677 = vunpack.c.l.b16 %v2096
        %v6678 = vunpack.c.h.b16 %v2096
        %v6679 = vunpack.c.l.b16 %v2097
        %v6680 = vunpack.c.h.b16 %v2097
        %v6681 = vunpack.c.l.b16 %v2098
        %v6682 = vunpack.c.h.b16 %v2098
        %v6683 = vunpack.c.l.b16 %v2099
        %v6684 = vunpack.c.h.b16 %v2099
        %v6685 = vunpack.c.l.b16 %v2100
        %v6686 = vunpack.c.h.b16 %v2100
        %v6687 = vunpack.c.l.b16 %v2101
        %v6688 = vunpack.c.h.b16 %v2101
        %v6689 = vunpack.c.l.b16 %v2102
        %v6690 = vunpack.c.h.b16 %v2102
        %v6691 = vunpack.c.l.b16 %v2103
        %v6692 = vunpack.c.h.b16 %v2103
        %v6693 = vunpack.c.l.b16 %v2104
        %v6694 = vunpack.c.h.b16 %v2104
        %v6695 = vunpack.c.l.b16 %v2105
        %v6696 = vunpack.c.h.b16 %v2105
        %v6697 = vunpack.c.l.b16 %v2106
        %v6698 = vunpack.c.h.b16 %v2106
        %v6699 = vunpack.c.l.b16 %v2107
        %v6700 = vunpack.c.h.b16 %v2107
        %v6701 = vunpack.c.l.b16 %v2108
        %v6702 = vunpack.c.h.b16 %v2108
        %v6703 = vunpack.c.l.b16 %v2109
        %v6704 = vunpack.c.h.b16 %v2109
        %v6705 = vunpack.c.l.b16 %v2110
        %v6706 = vunpack.c.h.b16 %v2110
        %v6707 = vunpack.c.l.b16 %v2111
        %v6708 = vunpack.c.h.b16 %v2111
        %v6709 = vunpack.c.l.b16 %v2112
        %v6710 = vunpack.c.h.b16 %v2112
        %v6711 = vunpack.c.l.b16 %v2113
        %v6712 = vunpack.c.h.b16 %v2113
        %v6713 = vunpack.c.l.b16 %v2114
        %v6714 = vunpack.c.h.b16 %v2114
        %v6715 = vunpack.c.l.b16 %v2115
        %v6716 = vunpack.c.h.b16 %v2115
        %v6717 = vunpack.c.l.b16 %v2116
        %v6718 = vunpack.c.h.b16 %v2116
        %v6719 = vunpack.c.l.b16 %v2117
        %v6720 = vunpack.c.h.b16 %v2117
        %v6721 = vunpack.c.l.b16 %v2118
        %v6722 = vunpack.c.h.b16 %v2118
        %v6723 = vunpack.c.l.b16 %v2119
        %v6724 = vunpack.c.h.b16 %v2119
        %v6725 = vunpack.c.l.b16 %v2120
        %v6726 = vunpack.c.h.b16 %v2120
        %v6727 = vunpack.c.l.b16 %v2121
        %v6728 = vunpack.c.h.b16 %v2121
        %v6729 = vunpack.c.l.b16 %v2122
        %v6730 = vunpack.c.h.b16 %v2122
        %v6731 = vunpack.c.l.b16 %v2123
        %v6732 = vunpack.c.h.b16 %v2123
        %v6733 = vunpack.c.l.b16 %v2124
        %v6734 = vunpack.c.h.b16 %v2124
        %v6735 = vunpack.c.l.b16 %v2125
        %v6736 = vunpack.c.h.b16 %v2125
        %v6737 = vunpack.c.l.b16 %v2126
        %v6738 = vunpack.c.h.b16 %v2126
        %v6739 = vunpack.c.l.b16 %v2127
        %v6740 = vunpack.c.h.b16 %v2127
        %v6741 = vunpack.c.l.b16 %v2128
        %v6742 = vunpack.c.h.b16 %v2128
        %v6743 = vunpack.c.l.b16 %v2129
        %v6744 = vunpack.c.h.b16 %v2129
        %v6745 = vunpack.c.l.b16 %v2130
        %v6746 = vunpack.c.h.b16 %v2130
        %v6747 = vunpack.c.l.b16 %v2131
        %v6748 = vunpack.c.h.b16 %v2131
        %v6749 = vunpack.c.l.b16 %v2132
        %v6750 = vunpack.c.h.b16 %v2132
        %v6751 = vunpack.c.l.b16 %v2133
        %v6752 = vunpack.c.h.b16 %v2133
        %v6753 = vunpack.c.l.b16 %v2134
        %v6754 = vunpack.c.h.b16 %v2134
        %v6755 = vunpack.c.l.b16 %v2135
        %v6756 = vunpack.c.h.b16 %v2135
        %v6757 = vunpack.c.l.b16 %v2136
        %v6758 = vunpack.c.h.b16 %v2136
        %v6759 = vunpack.c.l.b16 %v2137
        %v6760 = vunpack.c.h.b16 %v2137
        %v6761 = vunpack.c.l.b16 %v2138
        %v6762 = vunpack.c.h.b16 %v2138
        %v6763 = vunpack.c.l.b16 %v2139
        %v6764 = vunpack.c.h.b16 %v2139
        %v6765 = vunpack.c.l.b16 %v2140
        %v6766 = vunpack.c.h.b16 %v2140
        %v6767 = vunpack.c.l.b16 %v2141
        %v6768 = vunpack.c.h.b16 %v2141
        %v6769 = vunpack.c.l.b16 %v2142
        %v6770 = vunpack.c.h.b16 %v2142
        %v6771 = vunpack.c.l.b16 %v2143
        %v6772 = vunpack.c.h.b16 %v2143
        %v6773 = vunpack.c.l.b16 %v2144
        %v6774 = vunpack.c.h.b16 %v2144
        %v6775 = vunpack.c.l.b16 %v2145
        %v6776 = vunpack.c.h.b16 %v2145
        %v6777 = vunpack.c.l.b16 %v2146
        %v6778 = vunpack.c.h.b16 %v2146
        %v6779 = vunpack.c.l.b16 %v2147
        %v6780 = vunpack.c.h.b16 %v2147
        %v6781 = vunpack.c.l.b16 %v2148
        %v6782 = vunpack.c.h.b16 %v2148
        %v6783 = vunpack.c.l.b16 %v2149
        %v6784 = vunpack.c.h.b16 %v2149
        %v6785 = vunpack.c.l.b16 %v2150
        %v6786 = vunpack.c.h.b16 %v2150
        %v6787 = vunpack.c.l.b16 %v2151
        %v6788 = vunpack.c.h.b16 %v2151
        %v6789 = vunpack.c.l.b16 %v2152
        %v6790 = vunpack.c.h.b16 %v2152
        %v6791 = vunpack.c.l.b16 %v2153
        %v6792 = vunpack.c.h.b16 %v2153
        %v6793 = vunpack.c.l.b16 %v2154
        %v6794 = vunpack.c.h.b16 %v2154
        %v6795 = vunpack.c.l.b16 %v2155
        %v6796 = vunpack.c.h.b16 %v2155
        %v6797 = vunpack.c.l.b16 %v2156
        %v6798 = vunpack.c.h.b16 %v2156
        %v6799 = vunpack.c.l.b16 %v2157
        %v6800 = vunpack.c.h.b16 %v2157
        %v6801 = vunpack.c.l.b16 %v2158
        %v6802 = vunpack.c.h.b16 %v2158
        %v6803 = vunpack.c.l.b16 %v2159
        %v6804 = vunpack.c.h.b16 %v2159
        %v6805 = vunpack.c.l.b16 %v2160
        %v6806 = vunpack.c.h.b16 %v2160
        %v6807 = vunpack.c.l.b16 %v2161
        %v6808 = vunpack.c.h.b16 %v2161
        %v6809 = vunpack.c.l.b16 %v2162
        %v6810 = vunpack.c.h.b16 %v2162
        %v6811 = vunpack.c.l.b16 %v2163
        %v6812 = vunpack.c.h.b16 %v2163
        %v6813 = vunpack.c.l.b16 %v2164
        %v6814 = vunpack.c.h.b16 %v2164
        %v6815 = vunpack.c.l.b16 %v2165
        %v6816 = vunpack.c.h.b16 %v2165
        %v6817 = vunpack.c.l.b16 %v2166
        %v6818 = vunpack.c.h.b16 %v2166
        %v6819 = vunpack.c.l.b16 %v2167
        %v6820 = vunpack.c.h.b16 %v2167
        %v6821 = vunpack.c.l.b16 %v2168
        %v6822 = vunpack.c.h.b16 %v2168
        %v6823 = vunpack.c.l.b16 %v2169
        %v6824 = vunpack.c.h.b16 %v2169
        %v6825 = vunpack.c.l.b16 %v2170
        %v6826 = vunpack.c.h.b16 %v2170
        %v6827 = vunpack.c.l.b16 %v2171
        %v6828 = vunpack.c.h.b16 %v2171
        %v6829 = vunpack.c.l.b16 %v2172
        %v6830 = vunpack.c.h.b16 %v2172
        %v6831 = vunpack.c.l.b16 %v2173
        %v6832 = vunpack.c.h.b16 %v2173
        %v6833 = vunpack.c.l.b16 %v2174
        %v6834 = vunpack.c.h.b16 %v2174
        %v6835 = vunpack.c.l.b16 %v2175
        %v6836 = vunpack.c.h.b16 %v2175
        %v6837 = vunpack.c.l.b16 %v2176
        %v6838 = vunpack.c.h.b16 %v2176
        %v6839 = vunpack.c.l.b16 %v2177
        %v6840 = vunpack.c.h.b16 %v2177
        %v6841 = vunpack.c.l.b16 %v2178
        %v6842 = vunpack.c.h.b16 %v2178
        %v6843 = vunpack.c.l.b16 %v2179
        %v6844 = vunpack.c.h.b16 %v2179
        %v6845 = vunpack.c.l.b16 %v2180
        %v6846 = vunpack.c.h.b16 %v2180
        %v6847 = vunpack.c.l.b16 %v2181
        %v6848 = vunpack.c.h.b16 %v2181
        %v6849 = vunpack.c.l.b16 %v2182
        %v6850 = vunpack.c.h.b16 %v2182
        %v6851 = vunpack.c.l.b16 %v2183
        %v6852 = vunpack.c.h.b16 %v2183
        %v6853 = vunpack.c.l.b16 %v2184
        %v6854 = vunpack.c.h.b16 %v2184
        %v6855 = vunpack.c.l.b16 %v2185
        %v6856 = vunpack.c.h.b16 %v2185
        %v6857 = vunpack.c.l.b16 %v2186
        %v6858 = vunpack.c.h.b16 %v2186
        %v6859 = vunpack.c.l.b16 %v2187
        %v6860 = vunpack.c.h.b16 %v2187
        %v6861 = vunpack.c.l.b16 %v2188
        %v6862 = vunpack.c.h.b16 %v2188
        %v6863 = vunpack.c.l.b16 %v2189
        %v6864 = vunpack.c.h.b16 %v2189
        %v6865 = vunpack.c.l.b16 %v2190
        %v6866 = vunpack.c.h.b16 %v2190
        %v6867 = vunpack.c.l.b16 %v2191
        %v6868 = vunpack.c.h.b16 %v2191
        %v6869 = vunpack.c.l.b16 %v2192
        %v6870 = vunpack.c.h.b16 %v2192
        %v6871 = vunpack.c.l.b16 %v2193
        %v6872 = vunpack.c.h.b16 %v2193
        %v6873 = vunpack.c.l.b16 %v2194
        %v6874 = vunpack.c.h.b16 %v2194
        %v6875 = vunpack.c.l.b16 %v2195
        %v6876 = vunpack.c.h.b16 %v2195
        %v6877 = vunpack.c.l.b16 %v2196
        %v6878 = vunpack.c.h.b16 %v2196
        %v6879 = vunpack.c.l.b16 %v2197
        %v6880 = vunpack.c.h.b16 %v2197
        %v6881 = vunpack.c.l.b16 %v2198
        %v6882 = vunpack.c.h.b16 %v2198
        %v6883 = vunpack.c.l.b16 %v2199
        %v6884 = vunpack.c.h.b16 %v2199
        %v6885 = vunpack.c.l.b16 %v2200
        %v6886 = vunpack.c.h.b16 %v2200
        %v6887 = vunpack.c.l.b16 %v2201
        %v6888 = vunpack.c.h.b16 %v2201
        %v6889 = vunpack.c.l.b16 %v2202
        %v6890 = vunpack.c.h.b16 %v2202
        %v6891 = vunpack.c.l.b16 %v2203
        %v6892 = vunpack.c.h.b16 %v2203
        %v6893 = vunpack.c.l.b16 %v2204
        %v6894 = vunpack.c.h.b16 %v2204
        %v6895 = vunpack.c.l.b16 %v2205
        %v6896 = vunpack.c.h.b16 %v2205
        %v6897 = vunpack.c.l.b16 %v2206
        %v6898 = vunpack.c.h.b16 %v2206
        %v6899 = vunpack.c.l.b16 %v2207
        %v6900 = vunpack.c.h.b16 %v2207
        %v6901 = vunpack.c.l.b16 %v2208
        %v6902 = vunpack.c.h.b16 %v2208
        %v6903 = vunpack.c.l.b16 %v2209
        %v6904 = vunpack.c.h.b16 %v2209
        %v6905 = vunpack.c.l.b16 %v2210
        %v6906 = vunpack.c.h.b16 %v2210
        %v6907 = vunpack.c.l.b16 %v2211
        %v6908 = vunpack.c.h.b16 %v2211
        %v6909 = vunpack.c.l.b16 %v2212
        %v6910 = vunpack.c.h.b16 %v2212
        %v6911 = vunpack.c.l.b16 %v2213
        %v6912 = vunpack.c.h.b16 %v2213
        %v6913 = vunpack.c.l.b16 %v2214
        %v6914 = vunpack.c.h.b16 %v2214
        %v6915 = vunpack.c.l.b16 %v2215
        %v6916 = vunpack.c.h.b16 %v2215
        %v6917 = vunpack.c.l.b16 %v2216
        %v6918 = vunpack.c.h.b16 %v2216
        %v6919 = vunpack.c.l.b16 %v2217
        %v6920 = vunpack.c.h.b16 %v2217
        %v6921 = vunpack.c.l.b16 %v2218
        %v6922 = vunpack.c.h.b16 %v2218
        %v6923 = vpack.c.b16 %v3789, %v3787
        %v6924 = vpack.c.b16 %v3790, %v3788
        %v6925 = vpack.c.b16 %v3793, %v3791
        %v6926 = vpack.c.b16 %v3794, %v3792
        %v6927 = vpack.c.b16 %v3797, %v3795
        %v6928 = vpack.c.b16 %v3798, %v3796
        %v6929 = vpack.c.b16 %v3801, %v3799
        %v6930 = vpack.c.b16 %v3802, %v3800
        %v6931 = vpack.c.b16 %v3805, %v3803
        %v6932 = vpack.c.b16 %v3806, %v3804
        %v6933 = vpack.c.b16 %v3809, %v3807
        %v6934 = vpack.c.b16 %v3810, %v3808
        %v6935 = vpack.c.b16 %v3813, %v3811
        %v6936 = vpack.c.b16 %v3814, %v3812
        %v6937 = vpack.c.b16 %v3817, %v3815
        %v6938 = vpack.c.b16 %v3818, %v3816
        %v6939 = vpack.c.b16 %v3821, %v3819
        %v6940 = vpack.c.b16 %v3822, %v3820
        %v6941 = vpack.c.b16 %v3825, %v3823
        %v6942 = vpack.c.b16 %v3826, %v3824
        %v6943 = vpack.c.b16 %v3829, %v3827
        %v6944 = vpack.c.b16 %v3830, %v3828
        %v6945 = vpack.c.b16 %v3833, %v3831
        %v6946 = vpack.c.b16 %v3834, %v3832
        %v6947 = vpack.c.b16 %v3837, %v3835
        %v6948 = vpack.c.b16 %v3838, %v3836
        %v6949 = vpack.c.b16 %v3841, %v3839
        %v6950 = vpack.c.b16 %v3842, %v3840
        %v6951 = vpack.c.b16 %v3845, %v3843
        %v6952 = vpack.c.b16 %v3846, %v3844
        %v6953 = vpack.c.b16 %v3849, %v3847
        %v6954 = vpack.c.b16 %v3850, %v3848
        %v6955 = vpack.c.b16 %v3853, %v3851
        %v6956 = vpack.c.b16 %v3854, %v3852
        %v6957 = vpack.c.b16 %v3857, %v3855
        %v6958 = vpack.c.b16 %v3858, %v3856
        %v6959 = vpack.c.b16 %v3861, %v3859
        %v6960 = vpack.c.b16 %v3862, %v3860
        %v6961 = vpack.c.b16 %v3865, %v3863
        %v6962 = vpack.c.b16 %v3866, %v3864
        %v6963 = vpack.c.b16 %v3869, %v3867
        %v6964 = vpack.c.b16 %v3870, %v3868
        %v6965 = vpack.c.b16 %v3873, %v3871
        %v6966 = vpack.c.b16 %v3874, %v3872
        %v6967 = vpack.c.b16 %v3877, %v3875
        %v6968 = vpack.c.b16 %v3878, %v3876
        %v6969 = vpack.c.b16 %v3881, %v3879
        %v6970 = vpack.c.b16 %v3882, %v3880
        %v6971 = vpack.c.b16 %v3885, %v3883
        %v6972 = vpack.c.b16 %v3886, %v3884
        %v6973 = vpack.c.b16 %v3889, %v3887
        %v6974 = vpack.c.b16 %v3890, %v3888
        %v6975 = vpack.c.b16 %v3893, %v3891
        %v6976 = vpack.c.b16 %v3894, %v3892
        %v6977 = vpack.c.b16 %v3897, %v3895
        %v6978 = vpack.c.b16 %v3898, %v3896
        %v6979 = vpack.c.b16 %v3901, %v3899
        %v6980 = vpack.c.b16 %v3902, %v3900
        %v6981 = vpack.c.b16 %v3905, %v3903
        %v6982 = vpack.c.b16 %v3906, %v3904
        %v6983 = vpack.c.b16 %v3909, %v3907
        %v6984 = vpack.c.b16 %v3910, %v3908
        %v6985 = vpack.c.b16 %v3913, %v3911
        %v6986 = vpack.c.b16 %v3914, %v3912
        %v6987 = vpack.c.b16 %v3917, %v3915
        %v6988 = vpack.c.b16 %v3918, %v3916
        %v6989 = vpack.c.b16 %v3921, %v3919
        %v6990 = vpack.c.b16 %v3922, %v3920
        %v6991 = vpack.c.b16 %v3925, %v3923
        %v6992 = vpack.c.b16 %v3926, %v3924
        %v6993 = vpack.c.b16 %v3929, %v3927
        %v6994 = vpack.c.b16 %v3930, %v3928
        %v6995 = vpack.c.b16 %v3933, %v3931
        %v6996 = vpack.c.b16 %v3934, %v3932
        %v6997 = vpack.c.b16 %v3937, %v3935
        %v6998 = vpack.c.b16 %v3938, %v3936
        %v6999 = vpack.c.b16 %v3941, %v3939
        %v7000 = vpack.c.b16 %v3942, %v3940
        %v7001 = vpack.c.b16 %v3945, %v3943
        %v7002 = vpack.c.b16 %v3946, %v3944
        %v7003 = vpack.c.b16 %v3949, %v3947
        %v7004 = vpack.c.b16 %v3950, %v3948
        %v7005 = vpack.c.b16 %v3953, %v3951
        %v7006 = vpack.c.b16 %v3954, %v3952
        %v7007 = vpack.c.b16 %v3957, %v3955
        %v7008 = vpack.c.b16 %v3958, %v3956
        %v7009 = vpack.c.b16 %v3961, %v3959
        %v7010 = vpack.c.b16 %v3962, %v3960
        %v7011 = vpack.c.b16 %v3965, %v3963
        %v7012 = vpack.c.b16 %v3966, %v3964
        %v7013 = vpack.c.b16 %v3969, %v3967
        %v7014 = vpack.c.b16 %v3970, %v3968
        %v7015 = vpack.c.b16 %v3973, %v3971
        %v7016 = vpack.c.b16 %v3974, %v3972
        %v7017 = vpack.c.b16 %v3977, %v3975
        %v7018 = vpack.c.b16 %v3978, %v3976
        %v7019 = vpack.c.b16 %v3981, %v3979
        %v7020 = vpack.c.b16 %v3982, %v3980
        %v7021 = vpack.c.b16 %v3985, %v3983
        %v7022 = vpack.c.b16 %v3986, %v3984
        %v7023 = vpack.c.b16 %v3989, %v3987
        %v7024 = vpack.c.b16 %v3990, %v3988
        %v7025 = vpack.c.b16 %v3993, %v3991
        %v7026 = vpack.c.b16 %v3994, %v3992
        %v7027 = vpack.c.b16 %v3997, %v3995
        %v7028 = vpack.c.b16 %v3998, %v3996
        %v7029 = vpack.c.b16 %v4001, %v3999
        %v7030 = vpack.c.b16 %v4002, %v4000
        %v7031 = vpack.c.b16 %v4005, %v4003
        %v7032 = vpack.c.b16 %v4006, %v4004
        %v7033 = vpack.c.b16 %v4009, %v4007
        %v7034 = vpack.c.b16 %v4010, %v4008
        %v7035 = vpack.c.b16 %v4013, %v4011
        %v7036 = vpack.c.b16 %v4014, %v4012
        %v7037 = vpack.c.b16 %v4017, %v4015
        %v7038 = vpack.c.b16 %v4018, %v4016
        %v7039 = vpack.c.b16 %v4021, %v4019
        %v7040 = vpack.c.b16 %v4022, %v4020
        %v7041 = vpack.c.b16 %v4025, %v4023
        %v7042 = vpack.c.b16 %v4026, %v4024
        %v7043 = vpack.c.b16 %v4029, %v4027
        %v7044 = vpack.c.b16 %v4030, %v4028
        %v7045 = vpack.c.b16 %v4033, %v4031
        %v7046 = vpack.c.b16 %v4034, %v4032
        %v7047 = vpack.c.b16 %v4037, %v4035
        %v7048 = vpack.c.b16 %v4038, %v4036
        %v7049 = vpack.c.b16 %v4041, %v4039
        %v7050 = vpack.c.b16 %v4042, %v4040
        %v7051 = vpack.c.b16 %v4045, %v4043
        %v7052 = vpack.c.b16 %v4046, %v4044
        %v7053 = vpack.c.b16 %v4049, %v4047
        %v7054 = vpack.c.b16 %v4050, %v4048
        %v7055 = vpack.c.b16 %v4053, %v4051
        %v7056 = vpack.c.b16 %v4054, %v4052
        %v7057 = vpack.c.b16 %v4057, %v4055
        %v7058 = vpack.c.b16 %v4058, %v4056
        %v7059 = vpack.c.b16 %v4061, %v4059
        %v7060 = vpack.c.b16 %v4062, %v4060
        %v7061 = vpack.c.b16 %v4065, %v4063
        %v7062 = vpack.c.b16 %v4066, %v4064
        %v7063 = vpack.c.b16 %v4069, %v4067
        %v7064 = vpack.c.b16 %v4070, %v4068
        %v7065 = vpack.c.b16 %v4073, %v4071
        %v7066 = vpack.c.b16 %v4074, %v4072
        %v7067 = vpack.c.b16 %v4077, %v4075
        %v7068 = vpack.c.b16 %v4078, %v4076
        %v7069 = vpack.c.b16 %v4081, %v4079
        %v7070 = vpack.c.b16 %v4082, %v4080
        %v7071 = vpack.c.b16 %v4085, %v4083
        %v7072 = vpack.c.b16 %v4086, %v4084
        %v7073 = vpack.c.b16 %v4089, %v4087
        %v7074 = vpack.c.b16 %v4090, %v4088
        %v7075 = vpack.c.b16 %v4093, %v4091
        %v7076 = vpack.c.b16 %v4094, %v4092
        %v7077 = vpack.c.b16 %v4097, %v4095
        %v7078 = vpack.c.b16 %v4098, %v4096
        %v7079 = vpack.c.b16 %v4101, %v4099
        %v7080 = vpack.c.b16 %v4102, %v4100
        %v7081 = vpack.c.b16 %v4105, %v4103
        %v7082 = vpack.c.b16 %v4106, %v4104
        %v7083 = vpack.c.b16 %v4109, %v4107
        %v7084 = vpack.c.b16 %v4110, %v4108
        %v7085 = vpack.c.b16 %v4113, %v4111
        %v7086 = vpack.c.b16 %v4114, %v4112
        %v7087 = vpack.c.b16 %v4117, %v4115
        %v7088 = vpack.c.b16 %v4118, %v4116
        %v7089 = vpack.c.b16 %v4121, %v4119
        %v7090 = vpack.c.b16 %v4122, %v4120
        %v7091 = vpack.c.b16 %v4125, %v4123
        %v7092 = vpack.c.b16 %v4126, %v4124
        %v7093 = vpack.c.b16 %v4129, %v4127
        %v7094 = vpack.c.b16 %v4130, %v4128
        %v7095 = vpack.c.b16 %v4133, %v4131
        %v7096 = vpack.c.b16 %v4134, %v4132
        %v7097 = vpack.c.b16 %v4137, %v4135
        %v7098 = vpack.c.b16 %v4138, %v4136
        %v7099 = vpack.c.b16 %v4141, %v4139
        %v7100 = vpack.c.b16 %v4142, %v4140
        %v7101 = vpack.c.b16 %v4145, %v4143
        %v7102 = vpack.c.b16 %v4146, %v4144
        %v7103 = vpack.c.b16 %v4149, %v4147
        %v7104 = vpack.c.b16 %v4150, %v4148
        %v7105 = vpack.c.b16 %v4153, %v4151
        %v7106 = vpack.c.b16 %v4154, %v4152
        %v7107 = vpack.c.b16 %v4157, %v4155
        %v7108 = vpack.c.b16 %v4158, %v4156
        %v7109 = vpack.c.b16 %v4161, %v4159
        %v7110 = vpack.c.b16 %v4162, %v4160
        %v7111 = vpack.c.b16 %v4165, %v4163
        %v7112 = vpack.c.b16 %v4166, %v4164
        %v7113 = vpack.c.b16 %v4169, %v4167
        %v7114 = vpack.c.b16 %v4170, %v4168
        %v7115 = vpack.c.b16 %v4173, %v4171
        %v7116 = vpack.c.b16 %v4174, %v4172
        %v7117 = vpack.c.b16 %v4177, %v4175
        %v7118 = vpack.c.b16 %v4178, %v4176
        %v7119 = vpack.c.b16 %v4181, %v4179
        %v7120 = vpack.c.b16 %v4182, %v4180
        %v7121 = vpack.c.b16 %v4185, %v4183
        %v7122 = vpack.c.b16 %v4186, %v4184
        %v7123 = vpack.c.b16 %v4189, %v4187
        %v7124 = vpack.c.b16 %v4190, %v4188
        %v7125 = vpack.c.b16 %v4193, %v4191
        %v7126 = vpack.c.b16 %v4194, %v4192
        %v7127 = vpack.c.b16 %v4197, %v4195
        %v7128 = vpack.c.b16 %v4198, %v4196
        %v7129 = vpack.c.b16 %v4201, %v4199
        %v7130 = vpack.c.b16 %v4202, %v4200
        %v7131 = vpack.c.b16 %v4205, %v4203
        %v7132 = vpack.c.b16 %v4206, %v4204
        %v7133 = vpack.c.b16 %v4209, %v4207
        %v7134 = vpack.c.b16 %v4210, %v4208
        %v7135 = vpack.c.b16 %v4213, %v4211
        %v7136 = vpack.c.b16 %v4214, %v4212
        %v7137 = vpack.c.b16 %v4217, %v4215
        %v7138 = vpack.c.b16 %v4218, %v4216
        %v7139 = vpack.c.b16 %v4221, %v4219
        %v7140 = vpack.c.b16 %v4222, %v4220
        %v7141 = vpack.c.b16 %v4225, %v4223
        %v7142 = vpack.c.b16 %v4226, %v4224
        %v7143 = vpack.c.b16 %v4229, %v4227
        %v7144 = vpack.c.b16 %v4230, %v4228
        %v7145 = vpack.c.b16 %v4233, %v4231
        %v7146 = vpack.c.b16 %v4234, %v4232
        %v7147 = vpack.c.b16 %v4237, %v4235
        %v7148 = vpack.c.b16 %v4238, %v4236
        %v7149 = vpack.c.b16 %v4241, %v4239
        %v7150 = vpack.c.b16 %v4242, %v4240
        %v7151 = vpack.c.b16 %v4245, %v4243
        %v7152 = vpack.c.b16 %v4246, %v4244
        %v7153 = vpack.c.b16 %v4249, %v4247
        %v7154 = vpack.c.b16 %v4250, %v4248
        %v7155 = vpack.c.b16 %v4253, %v4251
        %v7156 = vpack.c.b16 %v4254, %v4252
        %v7157 = vpack.c.b16 %v4257, %v4255
        %v7158 = vpack.c.b16 %v4258, %v4256
        %v7159 = vpack.c.b16 %v4261, %v4259
        %v7160 = vpack.c.b16 %v4262, %v4260
        %v7161 = vpack.c.b16 %v4265, %v4263
        %v7162 = vpack.c.b16 %v4266, %v4264
        %v7163 = vpack.c.b16 %v4269, %v4267
        %v7164 = vpack.c.b16 %v4270, %v4268
        %v7165 = vpack.c.b16 %v4273, %v4271
        %v7166 = vpack.c.b16 %v4274, %v4272
        %v7167 = vpack.c.b16 %v4277, %v4275
        %v7168 = vpack.c.b16 %v4278, %v4276
        %v7169 = vpack.c.b16 %v4281, %v4279
        %v7170 = vpack.c.b16 %v4282, %v4280
        %v7171 = vpack.c.b16 %v4285, %v4283
        %v7172 = vpack.c.b16 %v4286, %v4284
        %v7173 = vpack.c.b16 %v4289, %v4287
        %v7174 = vpack.c.b16 %v4290, %v4288
        %v7175 = vpack.c.b16 %v4293, %v4291
        %v7176 = vpack.c.b16 %v4294, %v4292
        %v7177 = vpack.c.b16 %v4297, %v4295
        %v7178 = vpack.c.b16 %v4298, %v4296
        %v7179 = vpack.c.b16 %v4301, %v4299
        %v7180 = vpack.c.b16 %v4302, %v4300
        %v7181 = vpack.c.b16 %v4305, %v4303
        %v7182 = vpack.c.b16 %v4306, %v4304
        %v7183 = vpack.c.b16 %v4309, %v4307
        %v7184 = vpack.c.b16 %v4310, %v4308
        %v7185 = vpack.c.b16 %v4313, %v4311
        %v7186 = vpack.c.b16 %v4314, %v4312
        %v7187 = vpack.c.b16 %v4317, %v4315
        %v7188 = vpack.c.b16 %v4318, %v4316
        %v7189 = vpack.c.b16 %v4321, %v4319
        %v7190 = vpack.c.b16 %v4322, %v4320
        %v7191 = vpack.c.b16 %v4325, %v4323
        %v7192 = vpack.c.b16 %v4326, %v4324
        %v7193 = vpack.c.b16 %v4329, %v4327
        %v7194 = vpack.c.b16 %v4330, %v4328
        %v7195 = vpack.c.b16 %v4333, %v4331
        %v7196 = vpack.c.b16 %v4334, %v4332
        %v7197 = vpack.c.b16 %v4337, %v4335
        %v7198 = vpack.c.b16 %v4338, %v4336
        %v7199 = vpack.c.b16 %v4341, %v4339
        %v7200 = vpack.c.b16 %v4342, %v4340
        %v7201 = vpack.c.b16 %v4345, %v4343
        %v7202 = vpack.c.b16 %v4346, %v4344
        %v7203 = vpack.c.b16 %v4349, %v4347
        %v7204 = vpack.c.b16 %v4350, %v4348
        %v7205 = vpack.c.b16 %v4353, %v4351
        %v7206 = vpack.c.b16 %v4354, %v4352
        %v7207 = vpack.c.b16 %v4357, %v4355
        %v7208 = vpack.c.b16 %v4358, %v4356
        %v7209 = vpack.c.b16 %v4361, %v4359
        %v7210 = vpack.c.b16 %v4362, %v4360
        %v7211 = vpack.c.b16 %v4365, %v4363
        %v7212 = vpack.c.b16 %v4366, %v4364
        %v7213 = vpack.c.b16 %v4369, %v4367
        %v7214 = vpack.c.b16 %v4370, %v4368
        %v7215 = vpack.c.b16 %v4373, %v4371
        %v7216 = vpack.c.b16 %v4374, %v4372
        %v7217 = vpack.c.b16 %v4377, %v4375
        %v7218 = vpack.c.b16 %v4378, %v4376
        %v7219 = vpack.c.b16 %v4381, %v4379
        %v7220 = vpack.c.b16 %v4382, %v4380
        %v7221 = vpack.c.b16 %v4385, %v4383
        %v7222 = vpack.c.b16 %v4386, %v4384
        %v7223 = vpack.c.b16 %v4389, %v4387
        %v7224 = vpack.c.b16 %v4390, %v4388
        %v7225 = vpack.c.b16 %v4393, %v4391
        %v7226 = vpack.c.b16 %v4394, %v4392
        %v7227 = vpack.c.b16 %v4397, %v4395
        %v7228 = vpack.c.b16 %v4398, %v4396
        %v7229 = vpack.c.b16 %v4401, %v4399
        %v7230 = vpack.c.b16 %v4402, %v4400
        %v7231 = vpack.c.b16 %v4405, %v4403
        %v7232 = vpack.c.b16 %v4406, %v4404
        %v7233 = vpack.c.b16 %v4409, %v4407
        %v7234 = vpack.c.b16 %v4410, %v4408
        %v7235 = vpack.c.b16 %v4413, %v4411
        %v7236 = vpack.c.b16 %v4414, %v4412
        %v7237 = vpack.c.b16 %v4417, %v4415
        %v7238 = vpack.c.b16 %v4418, %v4416
        %v7239 = vpack.c.b16 %v4421, %v4419
        %v7240 = vpack.c.b16 %v4422, %v4420
        %v7241 = vpack.c.b16 %v4425, %v4423
        %v7242 = vpack.c.b16 %v4426, %v4424
        %v7243 = vpack.c.b16 %v4429, %v4427
        %v7244 = vpack.c.b16 %v4430, %v4428
        %v7245 = vpack.c.b16 %v4433, %v4431
        %v7246 = vpack.c.b16 %v4434, %v4432
        %v7247 = vpack.c.b16 %v4437, %v4435
        %v7248 = vpack.c.b16 %v4438, %v4436
        %v7249 = vpack.c.b16 %v4441, %v4439
        %v7250 = vpack.c.b16 %v4442, %v4440
        %v7251 = vpack.c.b16 %v4445, %v4443
        %v7252 = vpack.c.b16 %v4446, %v4444
        %v7253 = vpack.c.b16 %v4449, %v4447
        %v7254 = vpack.c.b16 %v4450, %v4448
        %v7255 = vpack.c.b16 %v4453, %v4451
        %v7256 = vpack.c.b16 %v4454, %v4452
        %v7257 = vpack.c.b16 %v4457, %v4455
        %v7258 = vpack.c.b16 %v4458, %v4456
        %v7259 = vpack.c.b16 %v4461, %v4459
        %v7260 = vpack.c.b16 %v4462, %v4460
        %v7261 = vpack.c.b16 %v4465, %v4463
        %v7262 = vpack.c.b16 %v4466, %v4464
        %v7263 = vpack.c.b16 %v4469, %v4467
        %v7264 = vpack.c.b16 %v4470, %v4468
        %v7265 = vpack.c.b16 %v4473, %v4471
        %v7266 = vpack.c.b16 %v4474, %v4472
        %v7267 = vpack.c.b16 %v4477, %v4475
        %v7268 = vpack.c.b16 %v4478, %v4476
        %v7269 = vpack.c.b16 %v4481, %v4479
        %v7270 = vpack.c.b16 %v4482, %v4480
        %v7271 = vpack.c.b16 %v4485, %v4483
        %v7272 = vpack.c.b16 %v4486, %v4484
        %v7273 = vpack.c.b16 %v4489, %v4487
        %v7274 = vpack.c.b16 %v4490, %v4488
        %v7275 = vpack.c.b16 %v4493, %v4491
        %v7276 = vpack.c.b16 %v4494, %v4492
        %v7277 = vpack.c.b16 %v4497, %v4495
        %v7278 = vpack.c.b16 %v4498, %v4496
        %v7279 = vpack.c.b16 %v4501, %v4499
        %v7280 = vpack.c.b16 %v4502, %v4500
        %v7281 = vpack.c.b16 %v4505, %v4503
        %v7282 = vpack.c.b16 %v4506, %v4504
        %v7283 = vpack.c.b16 %v4509, %v4507
        %v7284 = vpack.c.b16 %v4510, %v4508
        %v7285 = vpack.c.b16 %v4513, %v4511
        %v7286 = vpack.c.b16 %v4514, %v4512
        %v7287 = vpack.c.b16 %v4517, %v4515
        %v7288 = vpack.c.b16 %v4518, %v4516
        %v7289 = vpack.c.b16 %v4521, %v4519
        %v7290 = vpack.c.b16 %v4522, %v4520
        %v7291 = vpack.c.b16 %v4525, %v4523
        %v7292 = vpack.c.b16 %v4526, %v4524
        %v7293 = vpack.c.b16 %v4529, %v4527
        %v7294 = vpack.c.b16 %v4530, %v4528
        %v7295 = vpack.c.b16 %v4533, %v4531
        %v7296 = vpack.c.b16 %v4534, %v4532
        %v7297 = vpack.c.b16 %v4537, %v4535
        %v7298 = vpack.c.b16 %v4538, %v4536
        %v7299 = vpack.c.b16 %v4541, %v4539
        %v7300 = vpack.c.b16 %v4542, %v4540
        %v7301 = vpack.c.b16 %v4545, %v4543
        %v7302 = vpack.c.b16 %v4546, %v4544
        %v7303 = vpack.c.b16 %v4549, %v4547
        %v7304 = vpack.c.b16 %v4550, %v4548
        %v7305 = vpack.c.b16 %v4553, %v4551
        %v7306 = vpack.c.b16 %v4554, %v4552
        %v7307 = vpack.c.b16 %v4557, %v4555
        %v7308 = vpack.c.b16 %v4558, %v4556
        %v7309 = vpack.c.b16 %v4561, %v4559
        %v7310 = vpack.c.b16 %v4562, %v4560
        %v7311 = vpack.c.b16 %v4565, %v4563
        %v7312 = vpack.c.b16 %v4566, %v4564
        %v7313 = vpack.c.b16 %v4569, %v4567
        %v7314 = vpack.c.b16 %v4570, %v4568
        %v7315 = vpack.c.b16 %v4573, %v4571
        %v7316 = vpack.c.b16 %v4574, %v4572
        %v7317 = vpack.c.b16 %v4577, %v4575
        %v7318 = vpack.c.b16 %v4578, %v4576
        %v7319 = vpack.c.b16 %v4581, %v4579
        %v7320 = vpack.c.b16 %v4582, %v4580
        %v7321 = vpack.c.b16 %v4585, %v4583
        %v7322 = vpack.c.b16 %v4586, %v4584
        %v7323 = vpack.c.b16 %v4589, %v4587
        %v7324 = vpack.c.b16 %v4590, %v4588
        %v7325 = vpack.c.b16 %v4593, %v4591
        %v7326 = vpack.c.b16 %v4594, %v4592
        %v7327 = vpack.c.b16 %v4597, %v4595
        %v7328 = vpack.c.b16 %v4598, %v4596
        %v7329 = vpack.c.b16 %v4601, %v4599
        %v7330 = vpack.c.b16 %v4602, %v4600
        %v7331 = vpack.c.b16 %v4605, %v4603
        %v7332 = vpack.c.b16 %v4606, %v4604
        %v7333 = vpack.c.b16 %v4609, %v4607
        %v7334 = vpack.c.b16 %v4610, %v4608
        %v7335 = vpack.c.b16 %v4613, %v4611
        %v7336 = vpack.c.b16 %v4614, %v4612
        %v7337 = vpack.c.b16 %v4617, %v4615
        %v7338 = vpack.c.b16 %v4618, %v4616
        %v7339 = vpack.c.b16 %v4621, %v4619
        %v7340 = vpack.c.b16 %v4622, %v4620
        %v7341 = vpack.c.b16 %v4625, %v4623
        %v7342 = vpack.c.b16 %v4626, %v4624
        %v7343 = vpack.c.b16 %v4629, %v4627
        %v7344 = vpack.c.b16 %v4630, %v4628
        %v7345 = vpack.c.b16 %v4633, %v4631
        %v7346 = vpack.c.b16 %v4634, %v4632
        %v7347 = vpack.c.b16 %v4637, %v4635
        %v7348 = vpack.c.b16 %v4638, %v4636
        %v7349 = vpack.c.b16 %v4641, %v4639
        %v7350 = vpack.c.b16 %v4642, %v4640
        %v7351 = vpack.c.b16 %v4645, %v4643
        %v7352 = vpack.c.b16 %v4646, %v4644
        %v7353 = vpack.c.b16 %v4649, %v4647
        %v7354 = vpack.c.b16 %v4650, %v4648
        %v7355 = vpack.c.b16 %v4653, %v4651
        %v7356 = vpack.c.b16 %v4654, %v4652
        %v7357 = vpack.c.b16 %v4657, %v4655
        %v7358 = vpack.c.b16 %v4658, %v4656
        %v7359 = vpack.c.b16 %v4661, %v4659
        %v7360 = vpack.c.b16 %v4662, %v4660
        %v7361 = vpack.c.b16 %v4665, %v4663
        %v7362 = vpack.c.b16 %v4666, %v4664
        %v7363 = vpack.c.b16 %v4669, %v4667
        %v7364 = vpack.c.b16 %v4670, %v4668
        %v7365 = vpack.c.b16 %v4673, %v4671
        %v7366 = vpack.c.b16 %v4674, %v4672
        %v7367 = vpack.c.b16 %v4677, %v4675
        %v7368 = vpack.c.b16 %v4678, %v4676
        %v7369 = vpack.c.b16 %v4681, %v4679
        %v7370 = vpack.c.b16 %v4682, %v4680
        %v7371 = vpack.c.b16 %v4685, %v4683
        %v7372 = vpack.c.b16 %v4686, %v4684
        %v7373 = vpack.c.b16 %v4689, %v4687
        %v7374 = vpack.c.b16 %v4690, %v4688
        %v7375 = vpack.c.b16 %v4693, %v4691
        %v7376 = vpack.c.b16 %v4694, %v4692
        %v7377 = vpack.c.b16 %v4697, %v4695
        %v7378 = vpack.c.b16 %v4698, %v4696
        %v7379 = vpack.c.b16 %v4701, %v4699
        %v7380 = vpack.c.b16 %v4702, %v4700
        %v7381 = vpack.c.b16 %v4705, %v4703
        %v7382 = vpack.c.b16 %v4706, %v4704
        %v7383 = vpack.c.b16 %v4709, %v4707
        %v7384 = vpack.c.b16 %v4710, %v4708
        %v7385 = vpack.c.b16 %v4713, %v4711
        %v7386 = vpack.c.b16 %v4714, %v4712
        %v7387 = vpack.c.b16 %v4717, %v4715
        %v7388 = vpack.c.b16 %v4718, %v4716
        %v7389 = vpack.c.b16 %v4721, %v4719
        %v7390 = vpack.c.b16 %v4722, %v4720
        %v7391 = vpack.c.b16 %v4725, %v4723
        %v7392 = vpack.c.b16 %v4726, %v4724
        %v7393 = vpack.c.b16 %v4729, %v4727
        %v7394 = vpack.c.b16 %v4730, %v4728
        %v7395 = vpack.c.b16 %v4733, %v4731
        %v7396 = vpack.c.b16 %v4734, %v4732
        %v7397 = vpack.c.b16 %v4737, %v4735
        %v7398 = vpack.c.b16 %v4738, %v4736
        %v7399 = vpack.c.b16 %v4741, %v4739
        %v7400 = vpack.c.b16 %v4742, %v4740
        %v7401 = vpack.c.b16 %v4745, %v4743
        %v7402 = vpack.c.b16 %v4746, %v4744
        %v7403 = vpack.c.b16 %v4749, %v4747
        %v7404 = vpack.c.b16 %v4750, %v4748
        %v7405 = vpack.c.b16 %v4753, %v4751
        %v7406 = vpack.c.b16 %v4754, %v4752
        %v7407 = vpack.c.b16 %v4757, %v4755
        %v7408 = vpack.c.b16 %v4758, %v4756
        %v7409 = vpack.c.b16 %v4761, %v4759
        %v7410 = vpack.c.b16 %v4762, %v4760
        %v7411 = vpack.c.b16 %v4765, %v4763
        %v7412 = vpack.c.b16 %v4766, %v4764
        %v7413 = vpack.c.b16 %v4769, %v4767
        %v7414 = vpack.c.b16 %v4770, %v4768
        %v7415 = vpack.c.b16 %v4773, %v4771
        %v7416 = vpack.c.b16 %v4774, %v4772
        %v7417 = vpack.c.b16 %v4777, %v4775
        %v7418 = vpack.c.b16 %v4778, %v4776
        %v7419 = vpack.c.b16 %v4781, %v4779
        %v7420 = vpack.c.b16 %v4782, %v4780
        %v7421 = vpack.c.b16 %v4785, %v4783
        %v7422 = vpack.c.b16 %v4786, %v4784
        %v7423 = vpack.c.b16 %v4789, %v4787
        %v7424 = vpack.c.b16 %v4790, %v4788
        %v7425 = vpack.c.b16 %v4793, %v4791
        %v7426 = vpack.c.b16 %v4794, %v4792
        %v7427 = vpack.c.b16 %v4797, %v4795
        %v7428 = vpack.c.b16 %v4798, %v4796
        %v7429 = vpack.c.b16 %v4801, %v4799
        %v7430 = vpack.c.b16 %v4802, %v4800
        %v7431 = vpack.c.b16 %v4805, %v4803
        %v7432 = vpack.c.b16 %v4806, %v4804
        %v7433 = vpack.c.b16 %v4809, %v4807
        %v7434 = vpack.c.b16 %v4810, %v4808
        %v7435 = vpack.c.b16 %v4813, %v4811
        %v7436 = vpack.c.b16 %v4814, %v4812
        %v7437 = vpack.c.b16 %v4817, %v4815
        %v7438 = vpack.c.b16 %v4818, %v4816
        %v7439 = vpack.c.b16 %v4821, %v4819
        %v7440 = vpack.c.b16 %v4822, %v4820
        %v7441 = vpack.c.b16 %v4825, %v4823
        %v7442 = vpack.c.b16 %v4826, %v4824
        %v7443 = vpack.c.b16 %v4829, %v4827
        %v7444 = vpack.c.b16 %v4830, %v4828
        %v7445 = vpack.c.b16 %v4833, %v4831
        %v7446 = vpack.c.b16 %v4834, %v4832
        %v7447 = vpack.c.b16 %v4837, %v4835
        %v7448 = vpack.c.b16 %v4838, %v4836
        %v7449 = vpack.c.b16 %v4841, %v4839
        %v7450 = vpack.c.b16 %v4842, %v4840
        %v7451 = vpack.c.b16 %v4845, %v4843
        %v7452 = vpack.c.b16 %v4846, %v4844
        %v7453 = vpack.c.b16 %v4849, %v4847
        %v7454 = vpack.c.b16 %v4850, %v4848
        %v7455 = vpack.c.b16 %v4853, %v4851
        %v7456 = vpack.c.b16 %v4854, %v4852
        %v7457 = vpack.c.b16 %v4857, %v4855
        %v7458 = vpack.c.b16 %v4858, %v4856
        %v7459 = vpack.c.b16 %v4861, %v4859
        %v7460 = vpack.c.b16 %v4862, %v4860
        %v7461 = vpack.c.b16 %v4865, %v4863
        %v7462 = vpack.c.b16 %v4866, %v4864
        %v7463 = vpack.c.b16 %v4869, %v4867
        %v7464 = vpack.c.b16 %v4870, %v4868
        %v7465 = vpack.c.b16 %v4873, %v4871
        %v7466 = vpack.c.b16 %v4874, %v4872
        %v7467 = vpack.c.b16 %v4877, %v4875
        %v7468 = vpack.c.b16 %v4878, %v4876
        %v7469 = vpack.c.b16 %v4881, %v4879
        %v7470 = vpack.c.b16 %v4882, %v4880
        %v7471 = vpack.c.b16 %v4885, %v4883
        %v7472 = vpack.c.b16 %v4886, %v4884
        %v7473 = vpack.c.b16 %v4889, %v4887
        %v7474 = vpack.c.b16 %v4890, %v4888
        %v7475 = vpack.c.b16 %v4893, %v4891
        %v7476 = vpack.c.b16 %v4894, %v4892
        %v7477 = vpack.c.b16 %v4897, %v4895
        %v7478 = vpack.c.b16 %v4898, %v4896
        %v7479 = vpack.c.b16 %v4901, %v4899
        %v7480 = vpack.c.b16 %v4902, %v4900
        %v7481 = vpack.c.b16 %v4905, %v4903
        %v7482 = vpack.c.b16 %v4906, %v4904
        %v7483 = vpack.c.b16 %v4909, %v4907
        %v7484 = vpack.c.b16 %v4910, %v4908
        %v7485 = vpack.c.b16 %v4913, %v4911
        %v7486 = vpack.c.b16 %v4914, %v4912
        %v7487 = vpack.c.b16 %v4917, %v4915
        %v7488 = vpack.c.b16 %v4918, %v4916
        %v7489 = vpack.c.b16 %v4921, %v4919
        %v7490 = vpack.c.b16 %v4922, %v4920
        %v7491 = vpack.c.b16 %v4925, %v4923
        %v7492 = vpack.c.b16 %v4926, %v4924
        %v7493 = vpack.c.b16 %v4929, %v4927
        %v7494 = vpack.c.b16 %v4930, %v4928
        %v7495 = vpack.c.b16 %v4933, %v4931
        %v7496 = vpack.c.b16 %v4934, %v4932
        %v7497 = vpack.c.b16 %v4937, %v4935
        %v7498 = vpack.c.b16 %v4938, %v4936
        %v7499 = vpack.c.b16 %v4941, %v4939
        %v7500 = vpack.c.b16 %v4942, %v4940
        %v7501 = vpack.c.b16 %v4945, %v4943
        %v7502 = vpack.c.b16 %v4946, %v4944
        %v7503 = vpack.c.b16 %v4949, %v4947
        %v7504 = vpack.c.b16 %v4950, %v4948
        %v7505 = vpack.c.b16 %v4953, %v4951
        %v7506 = vpack.c.b16 %v4954, %v4952
        %v7507 = vpack.c.b16 %v4957, %v4955
        %v7508 = vpack.c.b16 %v4958, %v4956
        %v7509 = vpack.c.b16 %v4961, %v4959
        %v7510 = vpack.c.b16 %v4962, %v4960
        %v7511 = vpack.c.b16 %v4965, %v4963
        %v7512 = vpack.c.b16 %v4966, %v4964
        %v7513 = vpack.c.b16 %v4969, %v4967
        %v7514 = vpack.c.b16 %v4970, %v4968
        %v7515 = vpack.c.b16 %v4973, %v4971
        %v7516 = vpack.c.b16 %v4974, %v4972
        %v7517 = vpack.c.b16 %v4977, %v4975
        %v7518 = vpack.c.b16 %v4978, %v4976
        %v7519 = vpack.c.b16 %v4981, %v4979
        %v7520 = vpack.c.b16 %v4982, %v4980
        %v7521 = vpack.c.b16 %v4985, %v4983
        %v7522 = vpack.c.b16 %v4986, %v4984
        %v7523 = vpack.c.b16 %v4989, %v4987
        %v7524 = vpack.c.b16 %v4990, %v4988
        %v7525 = vpack.c.b16 %v4993, %v4991
        %v7526 = vpack.c.b16 %v4994, %v4992
        %v7527 = vpack.c.b16 %v4997, %v4995
        %v7528 = vpack.c.b16 %v4998, %v4996
        %v7529 = vpack.c.b16 %v5001, %v4999
        %v7530 = vpack.c.b16 %v5002, %v5000
        %v7531 = vpack.c.b16 %v5005, %v5003
        %v7532 = vpack.c.b16 %v5006, %v5004
        %v7533 = vpack.c.b16 %v5009, %v5007
        %v7534 = vpack.c.b16 %v5010, %v5008
        %v7535 = vpack.c.b16 %v5013, %v5011
        %v7536 = vpack.c.b16 %v5014, %v5012
        %v7537 = vpack.c.b16 %v5017, %v5015
        %v7538 = vpack.c.b16 %v5018, %v5016
        %v7539 = vpack.c.b16 %v5021, %v5019
        %v7540 = vpack.c.b16 %v5022, %v5020
        %v7541 = vpack.c.b16 %v5025, %v5023
        %v7542 = vpack.c.b16 %v5026, %v5024
        %v7543 = vpack.c.b16 %v5029, %v5027
        %v7544 = vpack.c.b16 %v5030, %v5028
        %v7545 = vpack.c.b16 %v5033, %v5031
        %v7546 = vpack.c.b16 %v5034, %v5032
        %v7547 = vpack.c.b16 %v5037, %v5035
        %v7548 = vpack.c.b16 %v5038, %v5036
        %v7549 = vpack.c.b16 %v5041, %v5039
        %v7550 = vpack.c.b16 %v5042, %v5040
        %v7551 = vpack.c.b16 %v5045, %v5043
        %v7552 = vpack.c.b16 %v5046, %v5044
        %v7553 = vpack.c.b16 %v5049, %v5047
        %v7554 = vpack.c.b16 %v5050, %v5048
        %v7555 = vpack.c.b16 %v5053, %v5051
        %v7556 = vpack.c.b16 %v5054, %v5052
        %v7557 = vpack.c.b16 %v5057, %v5055
        %v7558 = vpack.c.b16 %v5058, %v5056
        %v7559 = vpack.c.b16 %v5061, %v5059
        %v7560 = vpack.c.b16 %v5062, %v5060
        %v7561 = vpack.c.b16 %v5065, %v5063
        %v7562 = vpack.c.b16 %v5066, %v5064
        %v7563 = vpack.c.b16 %v5069, %v5067
        %v7564 = vpack.c.b16 %v5070, %v5068
        %v7565 = vpack.c.b16 %v5073, %v5071
        %v7566 = vpack.c.b16 %v5074, %v5072
        %v7567 = vpack.c.b16 %v5077, %v5075
        %v7568 = vpack.c.b16 %v5078, %v5076
        %v7569 = vpack.c.b16 %v5081, %v5079
        %v7570 = vpack.c.b16 %v5082, %v5080
        %v7571 = vpack.c.b16 %v5085, %v5083
        %v7572 = vpack.c.b16 %v5086, %v5084
        %v7573 = vpack.c.b16 %v5089, %v5087
        %v7574 = vpack.c.b16 %v5090, %v5088
        %v7575 = vpack.c.b16 %v5093, %v5091
        %v7576 = vpack.c.b16 %v5094, %v5092
        %v7577 = vpack.c.b16 %v5097, %v5095
        %v7578 = vpack.c.b16 %v5098, %v5096
        %v7579 = vpack.c.b16 %v5101, %v5099
        %v7580 = vpack.c.b16 %v5102, %v5100
        %v7581 = vpack.c.b16 %v5105, %v5103
        %v7582 = vpack.c.b16 %v5106, %v5104
        %v7583 = vpack.c.b16 %v5109, %v5107
        %v7584 = vpack.c.b16 %v5110, %v5108
        %v7585 = vpack.c.b16 %v5113, %v5111
        %v7586 = vpack.c.b16 %v5114, %v5112
        %v7587 = vpack.c.b16 %v5117, %v5115
        %v7588 = vpack.c.b16 %v5118, %v5116
        %v7589 = vpack.c.b16 %v5121, %v5119
        %v7590 = vpack.c.b16 %v5122, %v5120
        %v7591 = vpack.c.b16 %v5125, %v5123
        %v7592 = vpack.c.b16 %v5126, %v5124
        %v7593 = vpack.c.b16 %v5129, %v5127
        %v7594 = vpack.c.b16 %v5130, %v5128
        %v7595 = vpack.c.b16 %v5133, %v5131
        %v7596 = vpack.c.b16 %v5134, %v5132
        %v7597 = vpack.c.b16 %v5137, %v5135
        %v7598 = vpack.c.b16 %v5138, %v5136
        %v7599 = vpack.c.b16 %v5141, %v5139
        %v7600 = vpack.c.b16 %v5142, %v5140
        %v7601 = vpack.c.b16 %v5145, %v5143
        %v7602 = vpack.c.b16 %v5146, %v5144
        %v7603 = vpack.c.b16 %v5149, %v5147
        %v7604 = vpack.c.b16 %v5150, %v5148
        %v7605 = vpack.c.b16 %v5153, %v5151
        %v7606 = vpack.c.b16 %v5154, %v5152
        %v7607 = vpack.c.b16 %v5157, %v5155
        %v7608 = vpack.c.b16 %v5158, %v5156
        %v7609 = vpack.c.b16 %v5161, %v5159
        %v7610 = vpack.c.b16 %v5162, %v5160
        %v7611 = vpack.c.b16 %v5165, %v5163
        %v7612 = vpack.c.b16 %v5166, %v5164
        %v7613 = vpack.c.b16 %v5169, %v5167
        %v7614 = vpack.c.b16 %v5170, %v5168
        %v7615 = vpack.c.b16 %v5173, %v5171
        %v7616 = vpack.c.b16 %v5174, %v5172
        %v7617 = vpack.c.b16 %v5177, %v5175
        %v7618 = vpack.c.b16 %v5178, %v5176
        %v7619 = vpack.c.b16 %v5181, %v5179
        %v7620 = vpack.c.b16 %v5182, %v5180
        %v7621 = vpack.c.b16 %v5185, %v5183
        %v7622 = vpack.c.b16 %v5186, %v5184
        %v7623 = vpack.c.b16 %v5189, %v5187
        %v7624 = vpack.c.b16 %v5190, %v5188
        %v7625 = vpack.c.b16 %v5193, %v5191
        %v7626 = vpack.c.b16 %v5194, %v5192
        %v7627 = vpack.c.b16 %v5197, %v5195
        %v7628 = vpack.c.b16 %v5198, %v5196
        %v7629 = vpack.c.b16 %v5201, %v5199
        %v7630 = vpack.c.b16 %v5202, %v5200
        %v7631 = vpack.c.b16 %v5205, %v5203
        %v7632 = vpack.c.b16 %v5206, %v5204
        %v7633 = vpack.c.b16 %v5209, %v5207
        %v7634 = vpack.c.b16 %v5210, %v5208
        %v7635 = vpack.c.b16 %v5213, %v5211
        %v7636 = vpack.c.b16 %v5214, %v5212
        %v7637 = vpack.c.b16 %v5217, %v5215
        %v7638 = vpack.c.b16 %v5218, %v5216
        %v7639 = vpack.c.b16 %v5221, %v5219
        %v7640 = vpack.c.b16 %v5222, %v5220
        %v7641 = vpack.c.b16 %v5225, %v5223
        %v7642 = vpack.c.b16 %v5226, %v5224
        %v7643 = vpack.c.b16 %v5229, %v5227
        %v7644 = vpack.c.b16 %v5230, %v5228
        %v7645 = vpack.c.b16 %v5233, %v5231
        %v7646 = vpack.c.b16 %v5234, %v5232
        %v7647 = vpack.c.b16 %v5237, %v5235
        %v7648 = vpack.c.b16 %v5238, %v5236
        %v7649 = vpack.c.b16 %v5241, %v5239
        %v7650 = vpack.c.b16 %v5242, %v5240
        %v7651 = vpack.c.b16 %v5245, %v5243
        %v7652 = vpack.c.b16 %v5246, %v5244
        %v7653 = vpack.c.b16 %v5249, %v5247
        %v7654 = vpack.c.b16 %v5250, %v5248
        %v7655 = vpack.c.b16 %v5253, %v5251
        %v7656 = vpack.c.b16 %v5254, %v5252
        %v7657 = vpack.c.b16 %v5257, %v5255
        %v7658 = vpack.c.b16 %v5258, %v5256
        %v7659 = vpack.c.b16 %v5261, %v5259
        %v7660 = vpack.c.b16 %v5262, %v5260
        %v7661 = vpack.c.b16 %v5265, %v5263
        %v7662 = vpack.c.b16 %v5266, %v5264
        %v7663 = vpack.c.b16 %v5269, %v5267
        %v7664 = vpack.c.b16 %v5270, %v5268
        %v7665 = vpack.c.b16 %v5273, %v5271
        %v7666 = vpack.c.b16 %v5274, %v5272
        %v7667 = vpack.c.b16 %v5277, %v5275
        %v7668 = vpack.c.b16 %v5278, %v5276
        %v7669 = vpack.c.b16 %v5281, %v5279
        %v7670 = vpack.c.b16 %v5282, %v5280
        %v7671 = vpack.c.b16 %v5285, %v5283
        %v7672 = vpack.c.b16 %v5286, %v5284
        %v7673 = vpack.c.b16 %v5289, %v5287
        %v7674 = vpack.c.b16 %v5290, %v5288
        %v7675 = vpack.c.b16 %v5293, %v5291
        %v7676 = vpack.c.b16 %v5294, %v5292
        %v7677 = vpack.c.b16 %v5297, %v5295
        %v7678 = vpack.c.b16 %v5298, %v5296
        %v7679 = vpack.c.b16 %v5301, %v5299
        %v7680 = vpack.c.b16 %v5302, %v5300
        %v7681 = vpack.c.b16 %v5305, %v5303
        %v7682 = vpack.c.b16 %v5306, %v5304
        %v7683 = vpack.c.b16 %v5309, %v5307
        %v7684 = vpack.c.b16 %v5310, %v5308
        %v7685 = vpack.c.b16 %v5313, %v5311
        %v7686 = vpack.c.b16 %v5314, %v5312
        %v7687 = vpack.c.b16 %v5317, %v5315
        %v7688 = vpack.c.b16 %v5318, %v5316
        %v7689 = vpack.c.b16 %v5321, %v5319
        %v7690 = vpack.c.b16 %v5322, %v5320
        %v7691 = vpack.c.b16 %v5325, %v5323
        %v7692 = vpack.c.b16 %v5326, %v5324
        %v7693 = vpack.c.b16 %v5329, %v5327
        %v7694 = vpack.c.b16 %v5330, %v5328
        %v7695 = vpack.c.b16 %v5333, %v5331
        %v7696 = vpack.c.b16 %v5334, %v5332
        %v7697 = vpack.c.b16 %v5337, %v5335
        %v7698 = vpack.c.b16 %v5338, %v5336
        %v7699 = vpack.c.b16 %v5341, %v5339
        %v7700 = vpack.c.b16 %v5342, %v5340
        %v7701 = vpack.c.b16 %v5345, %v5343
        %v7702 = vpack.c.b16 %v5346, %v5344
        %v7703 = vpack.c.b16 %v5349, %v5347
        %v7704 = vpack.c.b16 %v5350, %v5348
        %v7705 = vpack.c.b16 %v5353, %v5351
        %v7706 = vpack.c.b16 %v5354, %v5352
        %v7707 = vpack.c.b16 %v5357, %v5355
        %v7708 = vpack.c.b16 %v5358, %v5356
        %v7709 = vpack.c.b16 %v5361, %v5359
        %v7710 = vpack.c.b16 %v5362, %v5360
        %v7711 = vpack.c.b16 %v5365, %v5363
        %v7712 = vpack.c.b16 %v5366, %v5364
        %v7713 = vpack.c.b16 %v5369, %v5367
        %v7714 = vpack.c.b16 %v5370, %v5368
        %v7715 = vpack.c.b16 %v5373, %v5371
        %v7716 = vpack.c.b16 %v5374, %v5372
        %v7717 = vpack.c.b16 %v5377, %v5375
        %v7718 = vpack.c.b16 %v5378, %v5376
        %v7719 = vpack.c.b16 %v5381, %v5379
        %v7720 = vpack.c.b16 %v5382, %v5380
        %v7721 = vpack.c.b16 %v5385, %v5383
        %v7722 = vpack.c.b16 %v5386, %v5384
        %v7723 = vpack.c.b16 %v5389, %v5387
        %v7724 = vpack.c.b16 %v5390, %v5388
        %v7725 = vpack.c.b16 %v5393, %v5391
        %v7726 = vpack.c.b16 %v5394, %v5392
        %v7727 = vpack.c.b16 %v5397, %v5395
        %v7728 = vpack.c.b16 %v5398, %v5396
        %v7729 = vpack.c.b16 %v5401, %v5399
        %v7730 = vpack.c.b16 %v5402, %v5400
        %v7731 = vpack.c.b16 %v5405, %v5403
        %v7732 = vpack.c.b16 %v5406, %v5404
        %v7733 = vpack.c.b16 %v5409, %v5407
        %v7734 = vpack.c.b16 %v5410, %v5408
        %v7735 = vpack.c.b16 %v5413, %v5411
        %v7736 = vpack.c.b16 %v5414, %v5412
        %v7737 = vpack.c.b16 %v5417, %v5415
        %v7738 = vpack.c.b16 %v5418, %v5416
        %v7739 = vpack.c.b16 %v5421, %v5419
        %v7740 = vpack.c.b16 %v5422, %v5420
        %v7741 = vpack.c.b16 %v5425, %v5423
        %v7742 = vpack.c.b16 %v5426, %v5424
        %v7743 = vpack.c.b16 %v5429, %v5427
        %v7744 = vpack.c.b16 %v5430, %v5428
        %v7745 = vpack.c.b16 %v5433, %v5431
        %v7746 = vpack.c.b16 %v5434, %v5432
        %v7747 = vpack.c.b16 %v5437, %v5435
        %v7748 = vpack.c.b16 %v5438, %v5436
        %v7749 = vpack.c.b16 %v5441, %v5439
        %v7750 = vpack.c.b16 %v5442, %v5440
        %v7751 = vpack.c.b16 %v5445, %v5443
        %v7752 = vpack.c.b16 %v5446, %v5444
        %v7753 = vpack.c.b16 %v5449, %v5447
        %v7754 = vpack.c.b16 %v5450, %v5448
        %v7755 = vpack.c.b16 %v5453, %v5451
        %v7756 = vpack.c.b16 %v5454, %v5452
        %v7757 = vpack.c.b16 %v5457, %v5455
        %v7758 = vpack.c.b16 %v5458, %v5456
        %v7759 = vpack.c.b16 %v5461, %v5459
        %v7760 = vpack.c.b16 %v5462, %v5460
        %v7761 = vpack.c.b16 %v5465, %v5463
        %v7762 = vpack.c.b16 %v5466, %v5464
        %v7763 = vpack.c.b16 %v5469, %v5467
        %v7764 = vpack.c.b16 %v5470, %v5468
        %v7765 = vpack.c.b16 %v5473, %v5471
        %v7766 = vpack.c.b16 %v5474, %v5472
        %v7767 = vpack.c.b16 %v5477, %v5475
        %v7768 = vpack.c.b16 %v5478, %v5476
        %v7769 = vpack.c.b16 %v5481, %v5479
        %v7770 = vpack.c.b16 %v5482, %v5480
        %v7771 = vpack.c.b16 %v5485, %v5483
        %v7772 = vpack.c.b16 %v5486, %v5484
        %v7773 = vpack.c.b16 %v5489, %v5487
        %v7774 = vpack.c.b16 %v5490, %v5488
        %v7775 = vpack.c.b16 %v5493, %v5491
        %v7776 = vpack.c.b16 %v5494, %v5492
        %v7777 = vpack.c.b16 %v5497, %v5495
        %v7778 = vpack.c.b16 %v5498, %v5496
        %v7779 = vpack.c.b16 %v5501, %v5499
        %v7780 = vpack.c.b16 %v5502, %v5500
        %v7781 = vpack.c.b16 %v5505, %v5503
        %v7782 = vpack.c.b16 %v5506, %v5504
        %v7783 = vpack.c.b16 %v5509, %v5507
        %v7784 = vpack.c.b16 %v5510, %v5508
        %v7785 = vpack.c.b16 %v5513, %v5511
        %v7786 = vpack.c.b16 %v5514, %v5512
        %v7787 = vpack.c.b16 %v5517, %v5515
        %v7788 = vpack.c.b16 %v5518, %v5516
        %v7789 = vpack.c.b16 %v5521, %v5519
        %v7790 = vpack.c.b16 %v5522, %v5520
        %v7791 = vpack.c.b16 %v5525, %v5523
        %v7792 = vpack.c.b16 %v5526, %v5524
        %v7793 = vpack.c.b16 %v5529, %v5527
        %v7794 = vpack.c.b16 %v5530, %v5528
        %v7795 = vpack.c.b16 %v5533, %v5531
        %v7796 = vpack.c.b16 %v5534, %v5532
        %v7797 = vpack.c.b16 %v5537, %v5535
        %v7798 = vpack.c.b16 %v5538, %v5536
        %v7799 = vpack.c.b16 %v5541, %v5539
        %v7800 = vpack.c.b16 %v5542, %v5540
        %v7801 = vpack.c.b16 %v5545, %v5543
        %v7802 = vpack.c.b16 %v5546, %v5544
        %v7803 = vpack.c.b16 %v5549, %v5547
        %v7804 = vpack.c.b16 %v5550, %v5548
        %v7805 = vpack.c.b16 %v5553, %v5551
        %v7806 = vpack.c.b16 %v5554, %v5552
        %v7807 = vpack.c.b16 %v5557, %v5555
        %v7808 = vpack.c.b16 %v5558, %v5556
        %v7809 = vpack.c.b16 %v5561, %v5559
        %v7810 = vpack.c.b16 %v5562, %v5560
        %v7811 = vpack.c.b16 %v5565, %v5563
        %v7812 = vpack.c.b16 %v5566, %v5564
        %v7813 = vpack.c.b16 %v5569, %v5567
        %v7814 = vpack.c.b16 %v5570, %v5568
        %v7815 = vpack.c.b16 %v5573, %v5571
        %v7816 = vpack.c.b16 %v5574, %v5572
        %v7817 = vpack.c.b16 %v5577, %v5575
        %v7818 = vpack.c.b16 %v5578, %v5576
        %v7819 = vpack.c.b16 %v5581, %v5579
        %v7820 = vpack.c.b16 %v5582, %v5580
        %v7821 = vpack.c.b16 %v5585, %v5583
        %v7822 = vpack.c.b16 %v5586, %v5584
        %v7823 = vpack.c.b16 %v5589, %v5587
        %v7824 = vpack.c.b16 %v5590, %v5588
        %v7825 = vpack.c.b16 %v5593, %v5591
        %v7826 = vpack.c.b16 %v5594, %v5592
        %v7827 = vpack.c.b16 %v5597, %v5595
        %v7828 = vpack.c.b16 %v5598, %v5596
        %v7829 = vpack.c.b16 %v5601, %v5599
        %v7830 = vpack.c.b16 %v5602, %v5600
        %v7831 = vpack.c.b16 %v5605, %v5603
        %v7832 = vpack.c.b16 %v5606, %v5604
        %v7833 = vpack.c.b16 %v5609, %v5607
        %v7834 = vpack.c.b16 %v5610, %v5608
        %v7835 = vpack.c.b16 %v5613, %v5611
        %v7836 = vpack.c.b16 %v5614, %v5612
        %v7837 = vpack.c.b16 %v5617, %v5615
        %v7838 = vpack.c.b16 %v5618, %v5616
        %v7839 = vpack.c.b16 %v5621, %v5619
        %v7840 = vpack.c.b16 %v5622, %v5620
        %v7841 = vpack.c.b16 %v5625, %v5623
        %v7842 = vpack.c.b16 %v5626, %v5624
        %v7843 = vpack.c.b16 %v5629, %v5627
        %v7844 = vpack.c.b16 %v5630, %v5628
        %v7845 = vpack.c.b16 %v5633, %v5631
        %v7846 = vpack.c.b16 %v5634, %v5632
        %v7847 = vpack.c.b16 %v5637, %v5635
        %v7848 = vpack.c.b16 %v5638, %v5636
        %v7849 = vpack.c.b16 %v5641, %v5639
        %v7850 = vpack.c.b16 %v5642, %v5640
        %v7851 = vpack.c.b16 %v5645, %v5643
        %v7852 = vpack.c.b16 %v5646, %v5644
        %v7853 = vpack.c.b16 %v5649, %v5647
        %v7854 = vpack.c.b16 %v5650, %v5648
        %v7855 = vpack.c.b16 %v5653, %v5651
        %v7856 = vpack.c.b16 %v5654, %v5652
        %v7857 = vpack.c.b16 %v5657, %v5655
        %v7858 = vpack.c.b16 %v5658, %v5656
        %v7859 = vpack.c.b16 %v5661, %v5659
        %v7860 = vpack.c.b16 %v5662, %v5660
        %v7861 = vpack.c.b16 %v5665, %v5663
        %v7862 = vpack.c.b16 %v5666, %v5664
        %v7863 = vpack.c.b16 %v5669, %v5667
        %v7864 = vpack.c.b16 %v5670, %v5668
        %v7865 = vpack.c.b16 %v5673, %v5671
        %v7866 = vpack.c.b16 %v5674, %v5672
        %v7867 = vpack.c.b16 %v5677, %v5675
        %v7868 = vpack.c.b16 %v5678, %v5676
        %v7869 = vpack.c.b16 %v5681, %v5679
        %v7870 = vpack.c.b16 %v5682, %v5680
        %v7871 = vpack.c.b16 %v5685, %v5683
        %v7872 = vpack.c.b16 %v5686, %v5684
        %v7873 = vpack.c.b16 %v5689, %v5687
        %v7874 = vpack.c.b16 %v5690, %v5688
        %v7875 = vpack.c.b16 %v5693, %v5691
        %v7876 = vpack.c.b16 %v5694, %v5692
        %v7877 = vpack.c.b16 %v5697, %v5695
        %v7878 = vpack.c.b16 %v5698, %v5696
        %v7879 = vpack.c.b16 %v5701, %v5699
        %v7880 = vpack.c.b16 %v5702, %v5700
        %v7881 = vpack.c.b16 %v5705, %v5703
        %v7882 = vpack.c.b16 %v5706, %v5704
        %v7883 = vpack.c.b16 %v5709, %v5707
        %v7884 = vpack.c.b16 %v5710, %v5708
        %v7885 = vpack.c.b16 %v5713, %v5711
        %v7886 = vpack.c.b16 %v5714, %v5712
        %v7887 = vpack.c.b16 %v5717, %v5715
        %v7888 = vpack.c.b16 %v5718, %v5716
        %v7889 = vpack.c.b16 %v5721, %v5719
        %v7890 = vpack.c.b16 %v5722, %v5720
        %v7891 = vpack.c.b16 %v5725, %v5723
        %v7892 = vpack.c.b16 %v5726, %v5724
        %v7893 = vpack.c.b16 %v5729, %v5727
        %v7894 = vpack.c.b16 %v5730, %v5728
        %v7895 = vpack.c.b16 %v5733, %v5731
        %v7896 = vpack.c.b16 %v5734, %v5732
        %v7897 = vpack.c.b16 %v5737, %v5735
        %v7898 = vpack.c.b16 %v5738, %v5736
        %v7899 = vpack.c.b16 %v5741, %v5739
        %v7900 = vpack.c.b16 %v5742, %v5740
        %v7901 = vpack.c.b16 %v5745, %v5743
        %v7902 = vpack.c.b16 %v5746, %v5744
        %v7903 = vpack.c.b16 %v5749, %v5747
        %v7904 = vpack.c.b16 %v5750, %v5748
        %v7905 = vpack.c.b16 %v5753, %v5751
        %v7906 = vpack.c.b16 %v5754, %v5752
        %v7907 = vpack.c.b16 %v5757, %v5755
        %v7908 = vpack.c.b16 %v5758, %v5756
        %v7909 = vpack.c.b16 %v5761, %v5759
        %v7910 = vpack.c.b16 %v5762, %v5760
        %v7911 = vpack.c.b16 %v5765, %v5763
        %v7912 = vpack.c.b16 %v5766, %v5764
        %v7913 = vpack.c.b16 %v5769, %v5767
        %v7914 = vpack.c.b16 %v5770, %v5768
        %v7915 = vpack.c.b16 %v5773, %v5771
        %v7916 = vpack.c.b16 %v5774, %v5772
        %v7917 = vpack.c.b16 %v5777, %v5775
        %v7918 = vpack.c.b16 %v5778, %v5776
        %v7919 = vpack.c.b16 %v5781, %v5779
        %v7920 = vpack.c.b16 %v5782, %v5780
        %v7921 = vpack.c.b16 %v5785, %v5783
        %v7922 = vpack.c.b16 %v5786, %v5784
        %v7923 = vpack.c.b16 %v5789, %v5787
        %v7924 = vpack.c.b16 %v5790, %v5788
        %v7925 = vpack.c.b16 %v5793, %v5791
        %v7926 = vpack.c.b16 %v5794, %v5792
        %v7927 = vpack.c.b16 %v5797, %v5795
        %v7928 = vpack.c.b16 %v5798, %v5796
        %v7929 = vpack.c.b16 %v5801, %v5799
        %v7930 = vpack.c.b16 %v5802, %v5800
        %v7931 = vpack.c.b16 %v5805, %v5803
        %v7932 = vpack.c.b16 %v5806, %v5804
        %v7933 = vpack.c.b16 %v5809, %v5807
        %v7934 = vpack.c.b16 %v5810, %v5808
        %v7935 = vpack.c.b16 %v5813, %v5811
        %v7936 = vpack.c.b16 %v5814, %v5812
        %v7937 = vpack.c.b16 %v5817, %v5815
        %v7938 = vpack.c.b16 %v5818, %v5816
        %v7939 = vpack.c.b16 %v5821, %v5819
        %v7940 = vpack.c.b16 %v5822, %v5820
        %v7941 = vpack.c.b16 %v5825, %v5823
        %v7942 = vpack.c.b16 %v5826, %v5824
        %v7943 = vpack.c.b16 %v5829, %v5827
        %v7944 = vpack.c.b16 %v5830, %v5828
        %v7945 = vpack.c.b16 %v5833, %v5831
        %v7946 = vpack.c.b16 %v5834, %v5832
        %v7947 = vpack.c.b16 %v5837, %v5835
        %v7948 = vpack.c.b16 %v5838, %v5836
        %v7949 = vpack.c.b16 %v5841, %v5839
        %v7950 = vpack.c.b16 %v5842, %v5840
        %v7951 = vpack.c.b16 %v5845, %v5843
        %v7952 = vpack.c.b16 %v5846, %v5844
        %v7953 = vpack.c.b16 %v5849, %v5847
        %v7954 = vpack.c.b16 %v5850, %v5848
        %v7955 = vpack.c.b16 %v5853, %v5851
        %v7956 = vpack.c.b16 %v5854, %v5852
        %v7957 = vpack.c.b16 %v5857, %v5855
        %v7958 = vpack.c.b16 %v5858, %v5856
        %v7959 = vpack.c.b16 %v5861, %v5859
        %v7960 = vpack.c.b16 %v5862, %v5860
        %v7961 = vpack.c.b16 %v5865, %v5863
        %v7962 = vpack.c.b16 %v5866, %v5864
        %v7963 = vpack.c.b16 %v5869, %v5867
        %v7964 = vpack.c.b16 %v5870, %v5868
        %v7965 = vpack.c.b16 %v5873, %v5871
        %v7966 = vpack.c.b16 %v5874, %v5872
        %v7967 = vpack.c.b16 %v5877, %v5875
        %v7968 = vpack.c.b16 %v5878, %v5876
        %v7969 = vpack.c.b16 %v5881, %v5879
        %v7970 = vpack.c.b16 %v5882, %v5880
        %v7971 = vpack.c.b16 %v5885, %v5883
        %v7972 = vpack.c.b16 %v5886, %v5884
        %v7973 = vpack.c.b16 %v5889, %v5887
        %v7974 = vpack.c.b16 %v5890, %v5888
        %v7975 = vpack.c.b16 %v5893, %v5891
        %v7976 = vpack.c.b16 %v5894, %v5892
        %v7977 = vpack.c.b16 %v5897, %v5895
        %v7978 = vpack.c.b16 %v5898, %v5896
        %v7979 = vpack.c.b16 %v5901, %v5899
        %v7980 = vpack.c.b16 %v5902, %v5900
        %v7981 = vpack.c.b16 %v5905, %v5903
        %v7982 = vpack.c.b16 %v5906, %v5904
        %v7983 = vpack.c.b16 %v5909, %v5907
        %v7984 = vpack.c.b16 %v5910, %v5908
        %v7985 = vpack.c.b16 %v5913, %v5911
        %v7986 = vpack.c.b16 %v5914, %v5912
        %v7987 = vpack.c.b16 %v5917, %v5915
        %v7988 = vpack.c.b16 %v5918, %v5916
        %v7989 = vpack.c.b16 %v5921, %v5919
        %v7990 = vpack.c.b16 %v5922, %v5920
        %v7991 = vpack.c.b16 %v5925, %v5923
        %v7992 = vpack.c.b16 %v5926, %v5924
        %v7993 = vpack.c.b16 %v5929, %v5927
        %v7994 = vpack.c.b16 %v5930, %v5928
        %v7995 = vpack.c.b16 %v5933, %v5931
        %v7996 = vpack.c.b16 %v5934, %v5932
        %v7997 = vpack.c.b16 %v5937, %v5935
        %v7998 = vpack.c.b16 %v5938, %v5936
        %v7999 = vpack.c.b16 %v5941, %v5939
        %v8000 = vpack.c.b16 %v5942, %v5940
        %v8001 = vpack.c.b16 %v5945, %v5943
        %v8002 = vpack.c.b16 %v5946, %v5944
        %v8003 = vpack.c.b16 %v5949, %v5947
        %v8004 = vpack.c.b16 %v5950, %v5948
        %v8005 = vpack.c.b16 %v5953, %v5951
        %v8006 = vpack.c.b16 %v5954, %v5952
        %v8007 = vpack.c.b16 %v5957, %v5955
        %v8008 = vpack.c.b16 %v5958, %v5956
        %v8009 = vpack.c.b16 %v5961, %v5959
        %v8010 = vpack.c.b16 %v5962, %v5960
        %v8011 = vpack.c.b16 %v5965, %v5963
        %v8012 = vpack.c.b16 %v5966, %v5964
        %v8013 = vpack.c.b16 %v5969, %v5967
        %v8014 = vpack.c.b16 %v5970, %v5968
        %v8015 = vpack.c.b16 %v5973, %v5971
        %v8016 = vpack.c.b16 %v5974, %v5972
        %v8017 = vpack.c.b16 %v5977, %v5975
        %v8018 = vpack.c.b16 %v5978, %v5976
        %v8019 = vpack.c.b16 %v5981, %v5979
        %v8020 = vpack.c.b16 %v5982, %v5980
        %v8021 = vpack.c.b16 %v5985, %v5983
        %v8022 = vpack.c.b16 %v5986, %v5984
        %v8023 = vpack.c.b16 %v5989, %v5987
        %v8024 = vpack.c.b16 %v5990, %v5988
        %v8025 = vpack.c.b16 %v5993, %v5991
        %v8026 = vpack.c.b16 %v5994, %v5992
        %v8027 = vpack.c.b16 %v5997, %v5995
        %v8028 = vpack.c.b16 %v5998, %v5996
        %v8029 = vpack.c.b16 %v6001, %v5999
        %v8030 = vpack.c.b16 %v6002, %v6000
        %v8031 = vpack.c.b16 %v6005, %v6003
        %v8032 = vpack.c.b16 %v6006, %v6004
        %v8033 = vpack.c.b16 %v6009, %v6007
        %v8034 = vpack.c.b16 %v6010, %v6008
        %v8035 = vpack.c.b16 %v6013, %v6011
        %v8036 = vpack.c.b16 %v6014, %v6012
        %v8037 = vpack.c.b16 %v6017, %v6015
        %v8038 = vpack.c.b16 %v6018, %v6016
        %v8039 = vpack.c.b16 %v6021, %v6019
        %v8040 = vpack.c.b16 %v6022, %v6020
        %v8041 = vpack.c.b16 %v6025, %v6023
        %v8042 = vpack.c.b16 %v6026, %v6024
        %v8043 = vpack.c.b16 %v6029, %v6027
        %v8044 = vpack.c.b16 %v6030, %v6028
        %v8045 = vpack.c.b16 %v6033, %v6031
        %v8046 = vpack.c.b16 %v6034, %v6032
        %v8047 = vpack.c.b16 %v6037, %v6035
        %v8048 = vpack.c.b16 %v6038, %v6036
        %v8049 = vpack.c.b16 %v6041, %v6039
        %v8050 = vpack.c.b16 %v6042, %v6040
        %v8051 = vpack.c.b16 %v6045, %v6043
        %v8052 = vpack.c.b16 %v6046, %v6044
        %v8053 = vpack.c.b16 %v6049, %v6047
        %v8054 = vpack.c.b16 %v6050, %v6048
        %v8055 = vpack.c.b16 %v6053, %v6051
        %v8056 = vpack.c.b16 %v6054, %v6052
        %v8057 = vpack.c.b16 %v6057, %v6055
        %v8058 = vpack.c.b16 %v6058, %v6056
        %v8059 = vpack.c.b16 %v6061, %v6059
        %v8060 = vpack.c.b16 %v6062, %v6060
        %v8061 = vpack.c.b16 %v6065, %v6063
        %v8062 = vpack.c.b16 %v6066, %v6064
        %v8063 = vpack.c.b16 %v6069, %v6067
        %v8064 = vpack.c.b16 %v6070, %v6068
        %v8065 = vpack.c.b16 %v6073, %v6071
        %v8066 = vpack.c.b16 %v6074, %v6072
        %v8067 = vpack.c.b16 %v6077, %v6075
        %v8068 = vpack.c.b16 %v6078, %v6076
        %v8069 = vpack.c.b16 %v6081, %v6079
        %v8070 = vpack.c.b16 %v6082, %v6080
        %v8071 = vpack.c.b16 %v6085, %v6083
        %v8072 = vpack.c.b16 %v6086, %v6084
        %v8073 = vpack.c.b16 %v6089, %v6087
        %v8074 = vpack.c.b16 %v6090, %v6088
        %v8075 = vpack.c.b16 %v6093, %v6091
        %v8076 = vpack.c.b16 %v6094, %v6092
        %v8077 = vpack.c.b16 %v6097, %v6095
        %v8078 = vpack.c.b16 %v6098, %v6096
        %v8079 = vpack.c.b16 %v6101, %v6099
        %v8080 = vpack.c.b16 %v6102, %v6100
        %v8081 = vpack.c.b16 %v6105, %v6103
        %v8082 = vpack.c.b16 %v6106, %v6104
        %v8083 = vpack.c.b16 %v6109, %v6107
        %v8084 = vpack.c.b16 %v6110, %v6108
        %v8085 = vpack.c.b16 %v6113, %v6111
        %v8086 = vpack.c.b16 %v6114, %v6112
        %v8087 = vpack.c.b16 %v6117, %v6115
        %v8088 = vpack.c.b16 %v6118, %v6116
        %v8089 = vpack.c.b16 %v6121, %v6119
        %v8090 = vpack.c.b16 %v6122, %v6120
        %v8091 = vpack.c.b16 %v6125, %v6123
        %v8092 = vpack.c.b16 %v6126, %v6124
        %v8093 = vpack.c.b16 %v6129, %v6127
        %v8094 = vpack.c.b16 %v6130, %v6128
        %v8095 = vpack.c.b16 %v6133, %v6131
        %v8096 = vpack.c.b16 %v6134, %v6132
        %v8097 = vpack.c.b16 %v6137, %v6135
        %v8098 = vpack.c.b16 %v6138, %v6136
        %v8099 = vpack.c.b16 %v6141, %v6139
        %v8100 = vpack.c.b16 %v6142, %v6140
        %v8101 = vpack.c.b16 %v6145, %v6143
        %v8102 = vpack.c.b16 %v6146, %v6144
        %v8103 = vpack.c.b16 %v6149, %v6147
        %v8104 = vpack.c.b16 %v6150, %v6148
        %v8105 = vpack.c.b16 %v6153, %v6151
        %v8106 = vpack.c.b16 %v6154, %v6152
        %v8107 = vpack.c.b16 %v6157, %v6155
        %v8108 = vpack.c.b16 %v6158, %v6156
        %v8109 = vpack.c.b16 %v6161, %v6159
        %v8110 = vpack.c.b16 %v6162, %v6160
        %v8111 = vpack.c.b16 %v6165, %v6163
        %v8112 = vpack.c.b16 %v6166, %v6164
        %v8113 = vpack.c.b16 %v6169, %v6167
        %v8114 = vpack.c.b16 %v6170, %v6168
        %v8115 = vpack.c.b16 %v6173, %v6171
        %v8116 = vpack.c.b16 %v6174, %v6172
        %v8117 = vpack.c.b16 %v6177, %v6175
        %v8118 = vpack.c.b16 %v6178, %v6176
        %v8119 = vpack.c.b16 %v6181, %v6179
        %v8120 = vpack.c.b16 %v6182, %v6180
        %v8121 = vpack.c.b16 %v6185, %v6183
        %v8122 = vpack.c.b16 %v6186, %v6184
        %v8123 = vpack.c.b16 %v6189, %v6187
        %v8124 = vpack.c.b16 %v6190, %v6188
        %v8125 = vpack.c.b16 %v6193, %v6191
        %v8126 = vpack.c.b16 %v6194, %v6192
        %v8127 = vpack.c.b16 %v6197, %v6195
        %v8128 = vpack.c.b16 %v6198, %v6196
        %v8129 = vpack.c.b16 %v6201, %v6199
        %v8130 = vpack.c.b16 %v6202, %v6200
        %v8131 = vpack.c.b16 %v6205, %v6203
        %v8132 = vpack.c.b16 %v6206, %v6204
        %v8133 = vpack.c.b16 %v6209, %v6207
        %v8134 = vpack.c.b16 %v6210, %v6208
        %v8135 = vpack.c.b16 %v6213, %v6211
        %v8136 = vpack.c.b16 %v6214, %v6212
        %v8137 = vpack.c.b16 %v6217, %v6215
        %v8138 = vpack.c.b16 %v6218, %v6216
        %v8139 = vpack.c.b16 %v6221, %v6219
        %v8140 = vpack.c.b16 %v6222, %v6220
        %v8141 = vpack.c.b16 %v6225, %v6223
        %v8142 = vpack.c.b16 %v6226, %v6224
        %v8143 = vpack.c.b16 %v6229, %v6227
        %v8144 = vpack.c.b16 %v6230, %v6228
        %v8145 = vpack.c.b16 %v6233, %v6231
        %v8146 = vpack.c.b16 %v6234, %v6232
        %v8147 = vpack.c.b16 %v6237, %v6235
        %v8148 = vpack.c.b16 %v6238, %v6236
        %v8149 = vpack.c.b16 %v6241, %v6239
        %v8150 = vpack.c.b16 %v6242, %v6240
        %v8151 = vpack.c.b16 %v6245, %v6243
        %v8152 = vpack.c.b16 %v6246, %v6244
        %v8153 = vpack.c.b16 %v6249, %v6247
        %v8154 = vpack.c.b16 %v6250, %v6248
        %v8155 = vpack.c.b16 %v6253, %v6251
        %v8156 = vpack.c.b16 %v6254, %v6252
        %v8157 = vpack.c.b16 %v6257, %v6255
        %v8158 = vpack.c.b16 %v6258, %v6256
        %v8159 = vpack.c.b16 %v6261, %v6259
        %v8160 = vpack.c.b16 %v6262, %v6260
        %v8161 = vpack.c.b16 %v6265, %v6263
        %v8162 = vpack.c.b16 %v6266, %v6264
        %v8163 = vpack.c.b16 %v6269, %v6267
        %v8164 = vpack.c.b16 %v6270, %v6268
        %v8165 = vpack.c.b16 %v6273, %v6271
        %v8166 = vpack.c.b16 %v6274, %v6272
        %v8167 = vpack.c.b16 %v6277, %v6275
        %v8168 = vpack.c.b16 %v6278, %v6276
        %v8169 = vpack.c.b16 %v6281, %v6279
        %v8170 = vpack.c.b16 %v6282, %v6280
        %v8171 = vpack.c.b16 %v6285, %v6283
        %v8172 = vpack.c.b16 %v6286, %v6284
        %v8173 = vpack.c.b16 %v6289, %v6287
        %v8174 = vpack.c.b16 %v6290, %v6288
        %v8175 = vpack.c.b16 %v6293, %v6291
        %v8176 = vpack.c.b16 %v6294, %v6292
        %v8177 = vpack.c.b16 %v6297, %v6295
        %v8178 = vpack.c.b16 %v6298, %v6296
        %v8179 = vpack.c.b16 %v6301, %v6299
        %v8180 = vpack.c.b16 %v6302, %v6300
        %v8181 = vpack.c.b16 %v6305, %v6303
        %v8182 = vpack.c.b16 %v6306, %v6304
        %v8183 = vpack.c.b16 %v6309, %v6307
        %v8184 = vpack.c.b16 %v6310, %v6308
        %v8185 = vpack.c.b16 %v6313, %v6311
        %v8186 = vpack.c.b16 %v6314, %v6312
        %v8187 = vpack.c.b16 %v6317, %v6315
        %v8188 = vpack.c.b16 %v6318, %v6316
        %v8189 = vpack.c.b16 %v6321, %v6319
        %v8190 = vpack.c.b16 %v6322, %v6320
        %v8191 = vpack.c.b16 %v6325, %v6323
        %v8192 = vpack.c.b16 %v6326, %v6324
        %v8193 = vpack.c.b16 %v6329, %v6327
        %v8194 = vpack.c.b16 %v6330, %v6328
        %v8195 = vpack.c.b16 %v6333, %v6331
        %v8196 = vpack.c.b16 %v6334, %v6332
        %v8197 = vpack.c.b16 %v6337, %v6335
        %v8198 = vpack.c.b16 %v6338, %v6336
        %v8199 = vpack.c.b16 %v6341, %v6339
        %v8200 = vpack.c.b16 %v6342, %v6340
        %v8201 = vpack.c.b16 %v6345, %v6343
        %v8202 = vpack.c.b16 %v6346, %v6344
        %v8203 = vpack.c.b16 %v6349, %v6347
        %v8204 = vpack.c.b16 %v6350, %v6348
        %v8205 = vpack.c.b16 %v6353, %v6351
        %v8206 = vpack.c.b16 %v6354, %v6352
        %v8207 = vpack.c.b16 %v6357, %v6355
        %v8208 = vpack.c.b16 %v6358, %v6356
        %v8209 = vpack.c.b16 %v6361, %v6359
        %v8210 = vpack.c.b16 %v6362, %v6360
        %v8211 = vpack.c.b16 %v6365, %v6363
        %v8212 = vpack.c.b16 %v6366, %v6364
        %v8213 = vpack.c.b16 %v6369, %v6367
        %v8214 = vpack.c.b16 %v6370, %v6368
        %v8215 = vpack.c.b16 %v6373, %v6371
        %v8216 = vpack.c.b16 %v6374, %v6372
        %v8217 = vpack.c.b16 %v6377, %v6375
        %v8218 = vpack.c.b16 %v6378, %v6376
        %v8219 = vpack.c.b16 %v6381, %v6379
        %v8220 = vpack.c.b16 %v6382, %v6380
        %v8221 = vpack.c.b16 %v6385, %v6383
        %v8222 = vpack.c.b16 %v6386, %v6384
        %v8223 = vpack.c.b16 %v6389, %v6387
        %v8224 = vpack.c.b16 %v6390, %v6388
        %v8225 = vpack.c.b16 %v6393, %v6391
        %v8226 = vpack.c.b16 %v6394, %v6392
        %v8227 = vpack.c.b16 %v6397, %v6395
        %v8228 = vpack.c.b16 %v6398, %v6396
        %v8229 = vpack.c.b16 %v6401, %v6399
        %v8230 = vpack.c.b16 %v6402, %v6400
        %v8231 = vpack.c.b16 %v6405, %v6403
        %v8232 = vpack.c.b16 %v6406, %v6404
        %v8233 = vpack.c.b16 %v6409, %v6407
        %v8234 = vpack.c.b16 %v6410, %v6408
        %v8235 = vpack.c.b16 %v6413, %v6411
        %v8236 = vpack.c.b16 %v6414, %v6412
        %v8237 = vpack.c.b16 %v6417, %v6415
        %v8238 = vpack.c.b16 %v6418, %v6416
        %v8239 = vpack.c.b16 %v6421, %v6419
        %v8240 = vpack.c.b16 %v6422, %v6420
        %v8241 = vpack.c.b16 %v6425, %v6423
        %v8242 = vpack.c.b16 %v6426, %v6424
        %v8243 = vpack.c.b16 %v6429, %v6427
        %v8244 = vpack.c.b16 %v6430, %v6428
        %v8245 = vpack.c.b16 %v6433, %v6431
        %v8246 = vpack.c.b16 %v6434, %v6432
        %v8247 = vpack.c.b16 %v6437, %v6435
        %v8248 = vpack.c.b16 %v6438, %v6436
        %v8249 = vpack.c.b16 %v6441, %v6439
        %v8250 = vpack.c.b16 %v6442, %v6440
        %v8251 = vpack.c.b16 %v6445, %v6443
        %v8252 = vpack.c.b16 %v6446, %v6444
        %v8253 = vpack.c.b16 %v6449, %v6447
        %v8254 = vpack.c.b16 %v6450, %v6448
        %v8255 = vpack.c.b16 %v6453, %v6451
        %v8256 = vpack.c.b16 %v6454, %v6452
        %v8257 = vpack.c.b16 %v6457, %v6455
        %v8258 = vpack.c.b16 %v6458, %v6456
        %v8259 = vpack.c.b16 %v6461, %v6459
        %v8260 = vpack.c.b16 %v6462, %v6460
        %v8261 = vpack.c.b16 %v6465, %v6463
        %v8262 = vpack.c.b16 %v6466, %v6464
        %v8263 = vpack.c.b16 %v6469, %v6467
        %v8264 = vpack.c.b16 %v6470, %v6468
        %v8265 = vpack.c.b16 %v6473, %v6471
        %v8266 = vpack.c.b16 %v6474, %v6472
        %v8267 = vpack.c.b16 %v6477, %v6475
        %v8268 = vpack.c.b16 %v6478, %v6476
        %v8269 = vpack.c.b16 %v6481, %v6479
        %v8270 = vpack.c.b16 %v6482, %v6480
        %v8271 = vpack.c.b16 %v6485, %v6483
        %v8272 = vpack.c.b16 %v6486, %v6484
        %v8273 = vpack.c.b16 %v6489, %v6487
        %v8274 = vpack.c.b16 %v6490, %v6488
        %v8275 = vpack.c.b16 %v6493, %v6491
        %v8276 = vpack.c.b16 %v6494, %v6492
        %v8277 = vpack.c.b16 %v6497, %v6495
        %v8278 = vpack.c.b16 %v6498, %v6496
        %v8279 = vpack.c.b16 %v6501, %v6499
        %v8280 = vpack.c.b16 %v6502, %v6500
        %v8281 = vpack.c.b16 %v6505, %v6503
        %v8282 = vpack.c.b16 %v6506, %v6504
        %v8283 = vpack.c.b16 %v6509, %v6507
        %v8284 = vpack.c.b16 %v6510, %v6508
        %v8285 = vpack.c.b16 %v6513, %v6511
        %v8286 = vpack.c.b16 %v6514, %v6512
        %v8287 = vpack.c.b16 %v6517, %v6515
        %v8288 = vpack.c.b16 %v6518, %v6516
        %v8289 = vpack.c.b16 %v6521, %v6519
        %v8290 = vpack.c.b16 %v6522, %v6520
        %v8291 = vpack.c.b16 %v6525, %v6523
        %v8292 = vpack.c.b16 %v6526, %v6524
        %v8293 = vpack.c.b16 %v6529, %v6527
        %v8294 = vpack.c.b16 %v6530, %v6528
        %v8295 = vpack.c.b16 %v6533, %v6531
        %v8296 = vpack.c.b16 %v6534, %v6532
        %v8297 = vpack.c.b16 %v6537, %v6535
        %v8298 = vpack.c.b16 %v6538, %v6536
        %v8299 = vpack.c.b16 %v6541, %v6539
        %v8300 = vpack.c.b16 %v6542, %v6540
        %v8301 = vpack.c.b16 %v6545, %v6543
        %v8302 = vpack.c.b16 %v6546, %v6544
        %v8303 = vpack.c.b16 %v6549, %v6547
        %v8304 = vpack.c.b16 %v6550, %v6548
        %v8305 = vpack.c.b16 %v6553, %v6551
        %v8306 = vpack.c.b16 %v6554, %v6552
        %v8307 = vpack.c.b16 %v6557, %v6555
        %v8308 = vpack.c.b16 %v6558, %v6556
        %v8309 = vpack.c.b16 %v6561, %v6559
        %v8310 = vpack.c.b16 %v6562, %v6560
        %v8311 = vpack.c.b16 %v6565, %v6563
        %v8312 = vpack.c.b16 %v6566, %v6564
        %v8313 = vpack.c.b16 %v6569, %v6567
        %v8314 = vpack.c.b16 %v6570, %v6568
        %v8315 = vpack.c.b16 %v6573, %v6571
        %v8316 = vpack.c.b16 %v6574, %v6572
        %v8317 = vpack.c.b16 %v6577, %v6575
        %v8318 = vpack.c.b16 %v6578, %v6576
        %v8319 = vpack.c.b16 %v6581, %v6579
        %v8320 = vpack.c.b16 %v6582, %v6580
        %v8321 = vpack.c.b16 %v6585, %v6583
        %v8322 = vpack.c.b16 %v6586, %v6584
        %v8323 = vpack.c.b16 %v6589, %v6587
        %v8324 = vpack.c.b16 %v6590, %v6588
        %v8325 = vpack.c.b16 %v6593, %v6591
        %v8326 = vpack.c.b16 %v6594, %v6592
        %v8327 = vpack.c.b16 %v6597, %v6595
        %v8328 = vpack.c.b16 %v6598, %v6596
        %v8329 = vpack.c.b16 %v6601, %v6599
        %v8330 = vpack.c.b16 %v6602, %v6600
        %v8331 = vpack.c.b16 %v6605, %v6603
        %v8332 = vpack.c.b16 %v6606, %v6604
        %v8333 = vpack.c.b16 %v6609, %v6607
        %v8334 = vpack.c.b16 %v6610, %v6608
        %v8335 = vpack.c.b16 %v6613, %v6611
        %v8336 = vpack.c.b16 %v6614, %v6612
        %v8337 = vpack.c.b16 %v6617, %v6615
        %v8338 = vpack.c.b16 %v6618, %v6616
        %v8339 = vpack.c.b16 %v6621, %v6619
        %v8340 = vpack.c.b16 %v6622, %v6620
        %v8341 = vpack.c.b16 %v6625, %v6623
        %v8342 = vpack.c.b16 %v6626, %v6624
        %v8343 = vpack.c.b16 %v6629, %v6627
        %v8344 = vpack.c.b16 %v6630, %v6628
        %v8345 = vpack.c.b16 %v6633, %v6631
        %v8346 = vpack.c.b16 %v6634, %v6632
        %v8347 = vpack.c.b16 %v6637, %v6635
        %v8348 = vpack.c.b16 %v6638, %v6636
        %v8349 = vpack.c.b16 %v6641, %v6639
        %v8350 = vpack.c.b16 %v6642, %v6640
        %v8351 = vpack.c.b16 %v6645, %v6643
        %v8352 = vpack.c.b16 %v6646, %v6644
        %v8353 = vpack.c.b16 %v6649, %v6647
        %v8354 = vpack.c.b16 %v6650, %v6648
        %v8355 = vpack.c.b16 %v6653, %v6651
        %v8356 = vpack.c.b16 %v6654, %v6652
        %v8357 = vpack.c.b16 %v6657, %v6655
        %v8358 = vpack.c.b16 %v6658, %v6656
        %v8359 = vpack.c.b16 %v6661, %v6659
        %v8360 = vpack.c.b16 %v6662, %v6660
        %v8361 = vpack.c.b16 %v6665, %v6663
        %v8362 = vpack.c.b16 %v6666, %v6664
        %v8363 = vpack.c.b16 %v6669, %v6667
        %v8364 = vpack.c.b16 %v6670, %v6668
        %v8365 = vpack.c.b16 %v6673, %v6671
        %v8366 = vpack.c.b16 %v6674, %v6672
        %v8367 = vpack.c.b16 %v6677, %v6675
        %v8368 = vpack.c.b16 %v6678, %v6676
        %v8369 = vpack.c.b16 %v6681, %v6679
        %v8370 = vpack.c.b16 %v6682, %v6680
        %v8371 = vpack.c.b16 %v6685, %v6683
        %v8372 = vpack.c.b16 %v6686, %v6684
        %v8373 = vpack.c.b16 %v6689, %v6687
        %v8374 = vpack.c.b16 %v6690, %v6688
        %v8375 = vpack.c.b16 %v6693, %v6691
        %v8376 = vpack.c.b16 %v6694, %v6692
        %v8377 = vpack.c.b16 %v6697, %v6695
        %v8378 = vpack.c.b16 %v6698, %v6696
        %v8379 = vpack.c.b16 %v6701, %v6699
        %v8380 = vpack.c.b16 %v6702, %v6700
        %v8381 = vpack.c.b16 %v6705, %v6703
        %v8382 = vpack.c.b16 %v6706, %v6704
        %v8383 = vpack.c.b16 %v6709, %v6707
        %v8384 = vpack.c.b16 %v6710, %v6708
        %v8385 = vpack.c.b16 %v6713, %v6711
        %v8386 = vpack.c.b16 %v6714, %v6712
        %v8387 = vpack.c.b16 %v6717, %v6715
        %v8388 = vpack.c.b16 %v6718, %v6716
        %v8389 = vpack.c.b16 %v6721, %v6719
        %v8390 = vpack.c.b16 %v6722, %v6720
        %v8391 = vpack.c.b16 %v6725, %v6723
        %v8392 = vpack.c.b16 %v6726, %v6724
        %v8393 = vpack.c.b16 %v6729, %v6727
        %v8394 = vpack.c.b16 %v6730, %v6728
        %v8395 = vpack.c.b16 %v6733, %v6731
        %v8396 = vpack.c.b16 %v6734, %v6732
        %v8397 = vpack.c.b16 %v6737, %v6735
        %v8398 = vpack.c.b16 %v6738, %v6736
        %v8399 = vpack.c.b16 %v6741, %v6739
        %v8400 = vpack.c.b16 %v6742, %v6740
        %v8401 = vpack.c.b16 %v6745, %v6743
        %v8402 = vpack.c.b16 %v6746, %v6744
        %v8403 = vpack.c.b16 %v6749, %v6747
        %v8404 = vpack.c.b16 %v6750, %v6748
        %v8405 = vpack.c.b16 %v6753, %v6751
        %v8406 = vpack.c.b16 %v6754, %v6752
        %v8407 = vpack.c.b16 %v6757, %v6755
        %v8408 = vpack.c.b16 %v6758, %v6756
        %v8409 = vpack.c.b16 %v6761, %v6759
        %v8410 = vpack.c.b16 %v6762, %v6760
        %v8411 = vpack.c.b16 %v6765, %v6763
        %v8412 = vpack.c.b16 %v6766, %v6764
        %v8413 = vpack.c.b16 %v6769, %v6767
        %v8414 = vpack.c.b16 %v6770, %v6768
        %v8415 = vpack.c.b16 %v6773, %v6771
        %v8416 = vpack.c.b16 %v6774, %v6772
        %v8417 = vpack.c.b16 %v6777, %v6775
        %v8418 = vpack.c.b16 %v6778, %v6776
        %v8419 = vpack.c.b16 %v6781, %v6779
        %v8420 = vpack.c.b16 %v6782, %v6780
        %v8421 = vpack.c.b16 %v6785, %v6783
        %v8422 = vpack.c.b16 %v6786, %v6784
        %v8423 = vpack.c.b16 %v6789, %v6787
        %v8424 = vpack.c.b16 %v6790, %v6788
        %v8425 = vpack.c.b16 %v6793, %v6791
        %v8426 = vpack.c.b16 %v6794, %v6792
        %v8427 = vpack.c.b16 %v6797, %v6795
        %v8428 = vpack.c.b16 %v6798, %v6796
        %v8429 = vpack.c.b16 %v6801, %v6799
        %v8430 = vpack.c.b16 %v6802, %v6800
        %v8431 = vpack.c.b16 %v6805, %v6803
        %v8432 = vpack.c.b16 %v6806, %v6804
        %v8433 = vpack.c.b16 %v6809, %v6807
        %v8434 = vpack.c.b16 %v6810, %v6808
        %v8435 = vpack.c.b16 %v6813, %v6811
        %v8436 = vpack.c.b16 %v6814, %v6812
        %v8437 = vpack.c.b16 %v6817, %v6815
        %v8438 = vpack.c.b16 %v6818, %v6816
        %v8439 = vpack.c.b16 %v6821, %v6819
        %v8440 = vpack.c.b16 %v6822, %v6820
        %v8441 = vpack.c.b16 %v6825, %v6823
        %v8442 = vpack.c.b16 %v6826, %v6824
        %v8443 = vpack.c.b16 %v6829, %v6827
        %v8444 = vpack.c.b16 %v6830, %v6828
        %v8445 = vpack.c.b16 %v6833, %v6831
        %v8446 = vpack.c.b16 %v6834, %v6832
        %v8447 = vpack.c.b16 %v6837, %v6835
        %v8448 = vpack.c.b16 %v6838, %v6836
        %v8449 = vpack.c.b16 %v6841, %v6839
        %v8450 = vpack.c.b16 %v6842, %v6840
        %v8451 = vpack.c.b16 %v6845, %v6843
        %v8452 = vpack.c.b16 %v6846, %v6844
        %v8453 = vpack.c.b16 %v6849, %v6847
        %v8454 = vpack.c.b16 %v6850, %v6848
        %v8455 = vpack.c.b16 %v6853, %v6851
        %v8456 = vpack.c.b16 %v6854, %v6852
        %v8457 = vpack.c.b16 %v6857, %v6855
        %v8458 = vpack.c.b16 %v6858, %v6856
        %v8459 = vpack.c.b16 %v6861, %v6859
        %v8460 = vpack.c.b16 %v6862, %v6860
        %v8461 = vpack.c.b16 %v6865, %v6863
        %v8462 = vpack.c.b16 %v6866, %v6864
        %v8463 = vpack.c.b16 %v6869, %v6867
        %v8464 = vpack.c.b16 %v6870, %v6868
        %v8465 = vpack.c.b16 %v6873, %v6871
        %v8466 = vpack.c.b16 %v6874, %v6872
        %v8467 = vpack.c.b16 %v6877, %v6875
        %v8468 = vpack.c.b16 %v6878, %v6876
        %v8469 = vpack.c.b16 %v6881, %v6879
        %v8470 = vpack.c.b16 %v6882, %v6880
        %v8471 = vpack.c.b16 %v6885, %v6883
        %v8472 = vpack.c.b16 %v6886, %v6884
        %v8473 = vpack.c.b16 %v6889, %v6887
        %v8474 = vpack.c.b16 %v6890, %v6888
        %v8475 = vpack.c.b16 %v6893, %v6891
        %v8476 = vpack.c.b16 %v6894, %v6892
        %v8477 = vpack.c.b16 %v6897, %v6895
        %v8478 = vpack.c.b16 %v6898, %v6896
        %v8479 = vpack.c.b16 %v6901, %v6899
        %v8480 = vpack.c.b16 %v6902, %v6900
        %v8481 = vpack.c.b16 %v6905, %v6903
        %v8482 = vpack.c.b16 %v6906, %v6904
        %v8483 = vpack.c.b16 %v6909, %v6907
        %v8484 = vpack.c.b16 %v6910, %v6908
        %v8485 = vpack.c.b16 %v6913, %v6911
        %v8486 = vpack.c.b16 %v6914, %v6912
        %v8487 = vpack.c.b16 %v6917, %v6915
        %v8488 = vpack.c.b16 %v6918, %v6916
        %v8489 = vpack.c.b16 %v6921, %v6919
        %v8490 = vpack.c.b16 %v6922, %v6920
        %10059 = vmatpush.bf16.msra.mxu0 %v6937
        %10060 = vmatpush.bf16.msra.mxu0 %v6935
        %10061 = vmatpush.bf16.msra.mxu0 %v6933
        %10062 = vmatpush.bf16.msra.mxu0 %v6931
        %10063 = vmatpush.bf16.msra.mxu0 %v6929
        %10064 = vmatpush.bf16.msra.mxu0 %v6927
        %10065 = vmatpush.bf16.msra.mxu0 %v6925
        %10066 = vmatpush.bf16.msra.mxu0 %v6923
        %10067 = vmatmul.bf16.gmra.mxu0 %v553
        %v10068 = vpop.f32.mrf.mxu0
        %v10069 = vadd.f32 0.0, %v10068
        %v10070 = vpop.f32.mrf.mxu0
        %10071 = vdwg.mxu0
        %10072 = vmatpush.bf16.msra.mxu0 %v6953
        %10073 = vmatpush.bf16.msra.mxu0 %v6951
        %10074 = vmatpush.bf16.msra.mxu0 %v6949
        %10075 = vmatpush.bf16.msra.mxu0 %v6947
        %10076 = vmatpush.bf16.msra.mxu0 %v6945
        %10077 = vmatpush.bf16.msra.mxu0 %v6943
        %10078 = vmatpush.bf16.msra.mxu0 %v6941
        %10079 = vmatpush.bf16.msra.mxu0 %v6939
        %10080 = vmatmul.bf16.gmra.mxu0 %v554
        %v10081 = vpop.f32.mrf.mxu0
        %v10082 = vadd.f32 %v10069, %v10081
        %v10083 = vpop.f32.mrf.mxu0
        %10084 = vdwg.mxu0
        %10085 = vmatpush.bf16.msra.mxu0 %v6969
        %10086 = vmatpush.bf16.msra.mxu0 %v6967
        %10087 = vmatpush.bf16.msra.mxu0 %v6965
        %10088 = vmatpush.bf16.msra.mxu0 %v6963
        %10089 = vmatpush.bf16.msra.mxu0 %v6961
        %10090 = vmatpush.bf16.msra.mxu0 %v6959
        %10091 = vmatpush.bf16.msra.mxu0 %v6957
        %10092 = vmatpush.bf16.msra.mxu0 %v6955
        %10093 = vmatmul.bf16.gmra.mxu0 %v555
        %v10094 = vpop.f32.mrf.mxu0
        %v10095 = vadd.f32 %v10082, %v10094
        %v10096 = vpop.f32.mrf.mxu0
        %10097 = vdwg.mxu0
        %10098 = vmatpush.bf16.msra.mxu0 %v6985
        %10099 = vmatpush.bf16.msra.mxu0 %v6983
        %10100 = vmatpush.bf16.msra.mxu0 %v6981
        %10101 = vmatpush.bf16.msra.mxu0 %v6979
        %10102 = vmatpush.bf16.msra.mxu0 %v6977
        %10103 = vmatpush.bf16.msra.mxu0 %v6975
        %10104 = vmatpush.bf16.msra.mxu0 %v6973
        %10105 = vmatpush.bf16.msra.mxu0 %v6971
        %10106 = vmatmul.bf16.gmra.mxu0 %v556
        %v10107 = vpop.f32.mrf.mxu0
        %v10108 = vadd.f32 %v10095, %v10107
        %v10109 = vpop.f32.mrf.mxu0
        %10110 = vdwg.mxu0
        %10111 = vmatpush.bf16.msra.mxu0 %v7001
        %10112 = vmatpush.bf16.msra.mxu0 %v6999
        %10113 = vmatpush.bf16.msra.mxu0 %v6997
        %10114 = vmatpush.bf16.msra.mxu0 %v6995
        %10115 = vmatpush.bf16.msra.mxu0 %v6993
        %10116 = vmatpush.bf16.msra.mxu0 %v6991
        %10117 = vmatpush.bf16.msra.mxu0 %v6989
        %10118 = vmatpush.bf16.msra.mxu0 %v6987
        %10119 = vmatmul.bf16.gmra.mxu0 %v557
        %v10120 = vpop.f32.mrf.mxu0
        %v10121 = vadd.f32 %v10108, %v10120
        %v10122 = vpop.f32.mrf.mxu0
        %10123 = vdwg.mxu0
        %10124 = vmatpush.bf16.msra.mxu0 %v7017
        %10125 = vmatpush.bf16.msra.mxu0 %v7015
        %10126 = vmatpush.bf16.msra.mxu0 %v7013
        %10127 = vmatpush.bf16.msra.mxu0 %v7011
        %10128 = vmatpush.bf16.msra.mxu0 %v7009
        %10129 = vmatpush.bf16.msra.mxu0 %v7007
        %10130 = vmatpush.bf16.msra.mxu0 %v7005
        %10131 = vmatpush.bf16.msra.mxu0 %v7003
        %10132 = vmatmul.bf16.gmra.mxu0 %v558
        %v10133 = vpop.f32.mrf.mxu0
        %v10134 = vadd.f32 %v10121, %v10133
        %v10135 = vpop.f32.mrf.mxu0
        %10136 = vdwg.mxu0
        %10137 = vmatpush.bf16.msra.mxu0 %v7033
        %10138 = vmatpush.bf16.msra.mxu0 %v7031
        %10139 = vmatpush.bf16.msra.mxu0 %v7029
        %10140 = vmatpush.bf16.msra.mxu0 %v7027
        %10141 = vmatpush.bf16.msra.mxu0 %v7025
        %10142 = vmatpush.bf16.msra.mxu0 %v7023
        %10143 = vmatpush.bf16.msra.mxu0 %v7021
        %10144 = vmatpush.bf16.msra.mxu0 %v7019
        %10145 = vmatmul.bf16.gmra.mxu0 %v559
        %v10146 = vpop.f32.mrf.mxu0
        %v10147 = vadd.f32 %v10134, %v10146
        %v10148 = vpop.f32.mrf.mxu0
        %10149 = vdwg.mxu0
        %10150 = vmatpush.bf16.msra.mxu0 %v7049
        %10151 = vmatpush.bf16.msra.mxu0 %v7047
        %10152 = vmatpush.bf16.msra.mxu0 %v7045
        %10153 = vmatpush.bf16.msra.mxu0 %v7043
        %10154 = vmatpush.bf16.msra.mxu0 %v7041
        %10155 = vmatpush.bf16.msra.mxu0 %v7039
        %10156 = vmatpush.bf16.msra.mxu0 %v7037
        %10157 = vmatpush.bf16.msra.mxu0 %v7035
        %10158 = vmatmul.bf16.gmra.mxu0 %v560
        %v10159 = vpop.f32.mrf.mxu0
        %v10160 = vadd.f32 %v10147, %v10159
        %v10161 = vpop.f32.mrf.mxu0
        %10162 = vdwg.mxu0
        %10163 = vmatpush.bf16.msra.mxu0 %v7065
        %10164 = vmatpush.bf16.msra.mxu0 %v7063
        %10165 = vmatpush.bf16.msra.mxu0 %v7061
        %10166 = vmatpush.bf16.msra.mxu0 %v7059
        %10167 = vmatpush.bf16.msra.mxu0 %v7057
        %10168 = vmatpush.bf16.msra.mxu0 %v7055
        %10169 = vmatpush.bf16.msra.mxu0 %v7053
        %10170 = vmatpush.bf16.msra.mxu0 %v7051
        %10171 = vmatmul.bf16.gmra.mxu0 %v561
        %v10172 = vpop.f32.mrf.mxu0
        %v10173 = vadd.f32 %v10160, %v10172
        %v10174 = vpop.f32.mrf.mxu0
        %10175 = vdwg.mxu0
        %10176 = vmatpush.bf16.msra.mxu0 %v7081
        %10177 = vmatpush.bf16.msra.mxu0 %v7079
        %10178 = vmatpush.bf16.msra.mxu0 %v7077
        %10179 = vmatpush.bf16.msra.mxu0 %v7075
        %10180 = vmatpush.bf16.msra.mxu0 %v7073
        %10181 = vmatpush.bf16.msra.mxu0 %v7071
        %10182 = vmatpush.bf16.msra.mxu0 %v7069
        %10183 = vmatpush.bf16.msra.mxu0 %v7067
        %10184 = vmatmul.bf16.gmra.mxu0 %v562
        %v10185 = vpop.f32.mrf.mxu0
        %v10186 = vadd.f32 %v10173, %v10185
        %v10187 = vpop.f32.mrf.mxu0
        %10188 = vdwg.mxu0
        %10189 = vmatpush.bf16.msra.mxu0 %v7097
        %10190 = vmatpush.bf16.msra.mxu0 %v7095
        %10191 = vmatpush.bf16.msra.mxu0 %v7093
        %10192 = vmatpush.bf16.msra.mxu0 %v7091
        %10193 = vmatpush.bf16.msra.mxu0 %v7089
        %10194 = vmatpush.bf16.msra.mxu0 %v7087
        %10195 = vmatpush.bf16.msra.mxu0 %v7085
        %10196 = vmatpush.bf16.msra.mxu0 %v7083
        %10197 = vmatmul.bf16.gmra.mxu0 %v563
        %v10198 = vpop.f32.mrf.mxu0
        %v10199 = vadd.f32 %v10186, %v10198
        %v10200 = vpop.f32.mrf.mxu0
        %10201 = vdwg.mxu0
        %10202 = vmatpush.bf16.msra.mxu0 %v7113
        %10203 = vmatpush.bf16.msra.mxu0 %v7111
        %10204 = vmatpush.bf16.msra.mxu0 %v7109
        %10205 = vmatpush.bf16.msra.mxu0 %v7107
        %10206 = vmatpush.bf16.msra.mxu0 %v7105
        %10207 = vmatpush.bf16.msra.mxu0 %v7103
        %10208 = vmatpush.bf16.msra.mxu0 %v7101
        %10209 = vmatpush.bf16.msra.mxu0 %v7099
        %10210 = vmatmul.bf16.gmra.mxu0 %v564
        %v10211 = vpop.f32.mrf.mxu0
        %v10212 = vadd.f32 %v10199, %v10211
        %v10213 = vpop.f32.mrf.mxu0
        %10214 = vdwg.mxu0
        %10215 = vmatpush.bf16.msra.mxu0 %v7129
        %10216 = vmatpush.bf16.msra.mxu0 %v7127
        %10217 = vmatpush.bf16.msra.mxu0 %v7125
        %10218 = vmatpush.bf16.msra.mxu0 %v7123
        %10219 = vmatpush.bf16.msra.mxu0 %v7121
        %10220 = vmatpush.bf16.msra.mxu0 %v7119
        %10221 = vmatpush.bf16.msra.mxu0 %v7117
        %10222 = vmatpush.bf16.msra.mxu0 %v7115
        %10223 = vmatmul.bf16.gmra.mxu0 %v565
        %v10224 = vpop.f32.mrf.mxu0
        %v10225 = vadd.f32 %v10212, %v10224
        %v10226 = vpop.f32.mrf.mxu0
        %10227 = vdwg.mxu0
        %10228 = vmatpush.bf16.msra.mxu0 %v7145
        %10229 = vmatpush.bf16.msra.mxu0 %v7143
        %10230 = vmatpush.bf16.msra.mxu0 %v7141
        %10231 = vmatpush.bf16.msra.mxu0 %v7139
        %10232 = vmatpush.bf16.msra.mxu0 %v7137
        %10233 = vmatpush.bf16.msra.mxu0 %v7135
        %10234 = vmatpush.bf16.msra.mxu0 %v7133
        %10235 = vmatpush.bf16.msra.mxu0 %v7131
        %10236 = vmatmul.bf16.gmra.mxu0 %v566
        %v10237 = vpop.f32.mrf.mxu0
        %v10238 = vadd.f32 %v10225, %v10237
        %v10239 = vpop.f32.mrf.mxu0
        %10240 = vdwg.mxu0
        %10241 = vmatpush.bf16.msra.mxu0 %v7161
        %10242 = vmatpush.bf16.msra.mxu0 %v7159
        %10243 = vmatpush.bf16.msra.mxu0 %v7157
        %10244 = vmatpush.bf16.msra.mxu0 %v7155
        %10245 = vmatpush.bf16.msra.mxu0 %v7153
        %10246 = vmatpush.bf16.msra.mxu0 %v7151
        %10247 = vmatpush.bf16.msra.mxu0 %v7149
        %10248 = vmatpush.bf16.msra.mxu0 %v7147
        %10249 = vmatmul.bf16.gmra.mxu0 %v567
        %v10250 = vpop.f32.mrf.mxu0
        %v10251 = vadd.f32 %v10238, %v10250
        %v10252 = vpop.f32.mrf.mxu0
        %10253 = vdwg.mxu0
        %10254 = vmatpush.bf16.msra.mxu0 %v7177
        %10255 = vmatpush.bf16.msra.mxu0 %v7175
        %10256 = vmatpush.bf16.msra.mxu0 %v7173
        %10257 = vmatpush.bf16.msra.mxu0 %v7171
        %10258 = vmatpush.bf16.msra.mxu0 %v7169
        %10259 = vmatpush.bf16.msra.mxu0 %v7167
        %10260 = vmatpush.bf16.msra.mxu0 %v7165
        %10261 = vmatpush.bf16.msra.mxu0 %v7163
        %10262 = vmatmul.bf16.gmra.mxu0 %v568
        %v10263 = vpop.f32.mrf.mxu0
        %v10264 = vadd.f32 %v10251, %v10263
        %v10265 = vpop.f32.mrf.mxu0
        %10266 = vdwg.mxu0
        %10267 = vmatpush.bf16.msra.mxu0 %v7193
        %10268 = vmatpush.bf16.msra.mxu0 %v7191
        %10269 = vmatpush.bf16.msra.mxu0 %v7189
        %10270 = vmatpush.bf16.msra.mxu0 %v7187
        %10271 = vmatpush.bf16.msra.mxu0 %v7185
        %10272 = vmatpush.bf16.msra.mxu0 %v7183
        %10273 = vmatpush.bf16.msra.mxu0 %v7181
        %10274 = vmatpush.bf16.msra.mxu0 %v7179
        %10275 = vmatmul.bf16.gmra.mxu0 %v569
        %v10276 = vpop.f32.mrf.mxu0
        %v10277 = vadd.f32 %v10264, %v10276
        %v10278 = vpop.f32.mrf.mxu0
        %10279 = vdwg.mxu0
        %10280 = vmatpush.bf16.msra.mxu0 %v7209
        %10281 = vmatpush.bf16.msra.mxu0 %v7207
        %10282 = vmatpush.bf16.msra.mxu0 %v7205
        %10283 = vmatpush.bf16.msra.mxu0 %v7203
        %10284 = vmatpush.bf16.msra.mxu0 %v7201
        %10285 = vmatpush.bf16.msra.mxu0 %v7199
        %10286 = vmatpush.bf16.msra.mxu0 %v7197
        %10287 = vmatpush.bf16.msra.mxu0 %v7195
        %10288 = vmatmul.bf16.gmra.mxu0 %v570
        %v10289 = vpop.f32.mrf.mxu0
        %v10290 = vadd.f32 %v10277, %v10289
        %v10291 = vpop.f32.mrf.mxu0
        %10292 = vdwg.mxu0
        %10293 = vmatpush.bf16.msra.mxu0 %v7225
        %10294 = vmatpush.bf16.msra.mxu0 %v7223
        %10295 = vmatpush.bf16.msra.mxu0 %v7221
        %10296 = vmatpush.bf16.msra.mxu0 %v7219
        %10297 = vmatpush.bf16.msra.mxu0 %v7217
        %10298 = vmatpush.bf16.msra.mxu0 %v7215
        %10299 = vmatpush.bf16.msra.mxu0 %v7213
        %10300 = vmatpush.bf16.msra.mxu0 %v7211
        %10301 = vmatmul.bf16.gmra.mxu0 %v571
        %v10302 = vpop.f32.mrf.mxu0
        %v10303 = vadd.f32 %v10290, %v10302
        %v10304 = vpop.f32.mrf.mxu0
        %10305 = vdwg.mxu0
        %10306 = vmatpush.bf16.msra.mxu0 %v7241
        %10307 = vmatpush.bf16.msra.mxu0 %v7239
        %10308 = vmatpush.bf16.msra.mxu0 %v7237
        %10309 = vmatpush.bf16.msra.mxu0 %v7235
        %10310 = vmatpush.bf16.msra.mxu0 %v7233
        %10311 = vmatpush.bf16.msra.mxu0 %v7231
        %10312 = vmatpush.bf16.msra.mxu0 %v7229
        %10313 = vmatpush.bf16.msra.mxu0 %v7227
        %10314 = vmatmul.bf16.gmra.mxu0 %v572
        %v10315 = vpop.f32.mrf.mxu0
        %v10316 = vadd.f32 %v10303, %v10315
        %v10317 = vpop.f32.mrf.mxu0
        %10318 = vdwg.mxu0
        %10319 = vmatpush.bf16.msra.mxu0 %v7257
        %10320 = vmatpush.bf16.msra.mxu0 %v7255
        %10321 = vmatpush.bf16.msra.mxu0 %v7253
        %10322 = vmatpush.bf16.msra.mxu0 %v7251
        %10323 = vmatpush.bf16.msra.mxu0 %v7249
        %10324 = vmatpush.bf16.msra.mxu0 %v7247
        %10325 = vmatpush.bf16.msra.mxu0 %v7245
        %10326 = vmatpush.bf16.msra.mxu0 %v7243
        %10327 = vmatmul.bf16.gmra.mxu0 %v573
        %v10328 = vpop.f32.mrf.mxu0
        %v10329 = vadd.f32 %v10316, %v10328
        %v10330 = vpop.f32.mrf.mxu0
        %10331 = vdwg.mxu0
        %10332 = vmatpush.bf16.msra.mxu0 %v7273
        %10333 = vmatpush.bf16.msra.mxu0 %v7271
        %10334 = vmatpush.bf16.msra.mxu0 %v7269
        %10335 = vmatpush.bf16.msra.mxu0 %v7267
        %10336 = vmatpush.bf16.msra.mxu0 %v7265
        %10337 = vmatpush.bf16.msra.mxu0 %v7263
        %10338 = vmatpush.bf16.msra.mxu0 %v7261
        %10339 = vmatpush.bf16.msra.mxu0 %v7259
        %10340 = vmatmul.bf16.gmra.mxu0 %v574
        %v10341 = vpop.f32.mrf.mxu0
        %v10342 = vadd.f32 %v10329, %v10341
        %v10343 = vpop.f32.mrf.mxu0
        %10344 = vdwg.mxu0
        %10345 = vmatpush.bf16.msra.mxu0 %v7289
        %10346 = vmatpush.bf16.msra.mxu0 %v7287
        %10347 = vmatpush.bf16.msra.mxu0 %v7285
        %10348 = vmatpush.bf16.msra.mxu0 %v7283
        %10349 = vmatpush.bf16.msra.mxu0 %v7281
        %10350 = vmatpush.bf16.msra.mxu0 %v7279
        %10351 = vmatpush.bf16.msra.mxu0 %v7277
        %10352 = vmatpush.bf16.msra.mxu0 %v7275
        %10353 = vmatmul.bf16.gmra.mxu0 %v575
        %v10354 = vpop.f32.mrf.mxu0
        %v10355 = vadd.f32 %v10342, %v10354
        %v10356 = vpop.f32.mrf.mxu0
        %10357 = vdwg.mxu0
        %10358 = vmatpush.bf16.msra.mxu0 %v7305
        %10359 = vmatpush.bf16.msra.mxu0 %v7303
        %10360 = vmatpush.bf16.msra.mxu0 %v7301
        %10361 = vmatpush.bf16.msra.mxu0 %v7299
        %10362 = vmatpush.bf16.msra.mxu0 %v7297
        %10363 = vmatpush.bf16.msra.mxu0 %v7295
        %10364 = vmatpush.bf16.msra.mxu0 %v7293
        %10365 = vmatpush.bf16.msra.mxu0 %v7291
        %10366 = vmatmul.bf16.gmra.mxu0 %v576
        %v10367 = vpop.f32.mrf.mxu0
        %v10368 = vadd.f32 %v10355, %v10367
        %v10369 = vpop.f32.mrf.mxu0
        %10370 = vdwg.mxu0
        %10371 = vmatpush.bf16.msra.mxu0 %v7321
        %10372 = vmatpush.bf16.msra.mxu0 %v7319
        %10373 = vmatpush.bf16.msra.mxu0 %v7317
        %10374 = vmatpush.bf16.msra.mxu0 %v7315
        %10375 = vmatpush.bf16.msra.mxu0 %v7313
        %10376 = vmatpush.bf16.msra.mxu0 %v7311
        %10377 = vmatpush.bf16.msra.mxu0 %v7309
        %10378 = vmatpush.bf16.msra.mxu0 %v7307
        %10379 = vmatmul.bf16.gmra.mxu0 %v577
        %v10380 = vpop.f32.mrf.mxu0
        %v10381 = vadd.f32 %v10368, %v10380
        %v10382 = vpop.f32.mrf.mxu0
        %10383 = vdwg.mxu0
        %10384 = vmatpush.bf16.msra.mxu0 %v7337
        %10385 = vmatpush.bf16.msra.mxu0 %v7335
        %10386 = vmatpush.bf16.msra.mxu0 %v7333
        %10387 = vmatpush.bf16.msra.mxu0 %v7331
        %10388 = vmatpush.bf16.msra.mxu0 %v7329
        %10389 = vmatpush.bf16.msra.mxu0 %v7327
        %10390 = vmatpush.bf16.msra.mxu0 %v7325
        %10391 = vmatpush.bf16.msra.mxu0 %v7323
        %10392 = vmatmul.bf16.gmra.mxu0 %v578
        %v10393 = vpop.f32.mrf.mxu0
        %v10394 = vadd.f32 %v10381, %v10393
        %v10395 = vpop.f32.mrf.mxu0
        %10396 = vdwg.mxu0
        %10397 = vmatpush.bf16.msra.mxu0 %v7353
        %10398 = vmatpush.bf16.msra.mxu0 %v7351
        %10399 = vmatpush.bf16.msra.mxu0 %v7349
        %10400 = vmatpush.bf16.msra.mxu0 %v7347
        %10401 = vmatpush.bf16.msra.mxu0 %v7345
        %10402 = vmatpush.bf16.msra.mxu0 %v7343
        %10403 = vmatpush.bf16.msra.mxu0 %v7341
        %10404 = vmatpush.bf16.msra.mxu0 %v7339
        %10405 = vmatmul.bf16.gmra.mxu0 %v579
        %v10406 = vpop.f32.mrf.mxu0
        %v10407 = vadd.f32 %v10394, %v10406
        %v10408 = vpop.f32.mrf.mxu0
        %10409 = vdwg.mxu0
        %10410 = vmatpush.bf16.msra.mxu0 %v7369
        %10411 = vmatpush.bf16.msra.mxu0 %v7367
        %10412 = vmatpush.bf16.msra.mxu0 %v7365
        %10413 = vmatpush.bf16.msra.mxu0 %v7363
        %10414 = vmatpush.bf16.msra.mxu0 %v7361
        %10415 = vmatpush.bf16.msra.mxu0 %v7359
        %10416 = vmatpush.bf16.msra.mxu0 %v7357
        %10417 = vmatpush.bf16.msra.mxu0 %v7355
        %10418 = vmatmul.bf16.gmra.mxu0 %v580
        %v10419 = vpop.f32.mrf.mxu0
        %v10420 = vadd.f32 %v10407, %v10419
        %v10421 = vpop.f32.mrf.mxu0
        %10422 = vdwg.mxu0
        %10423 = vmatpush.bf16.msra.mxu0 %v7385
        %10424 = vmatpush.bf16.msra.mxu0 %v7383
        %10425 = vmatpush.bf16.msra.mxu0 %v7381
        %10426 = vmatpush.bf16.msra.mxu0 %v7379
        %10427 = vmatpush.bf16.msra.mxu0 %v7377
        %10428 = vmatpush.bf16.msra.mxu0 %v7375
        %10429 = vmatpush.bf16.msra.mxu0 %v7373
        %10430 = vmatpush.bf16.msra.mxu0 %v7371
        %10431 = vmatmul.bf16.gmra.mxu0 %v581
        %v10432 = vpop.f32.mrf.mxu0
        %v10433 = vadd.f32 %v10420, %v10432
        %v10434 = vpop.f32.mrf.mxu0
        %10435 = vdwg.mxu0
        %10436 = vmatpush.bf16.msra.mxu0 %v7401
        %10437 = vmatpush.bf16.msra.mxu0 %v7399
        %10438 = vmatpush.bf16.msra.mxu0 %v7397
        %10439 = vmatpush.bf16.msra.mxu0 %v7395
        %10440 = vmatpush.bf16.msra.mxu0 %v7393
        %10441 = vmatpush.bf16.msra.mxu0 %v7391
        %10442 = vmatpush.bf16.msra.mxu0 %v7389
        %10443 = vmatpush.bf16.msra.mxu0 %v7387
        %10444 = vmatmul.bf16.gmra.mxu0 %v582
        %v10445 = vpop.f32.mrf.mxu0
        %v10446 = vadd.f32 %v10433, %v10445
        %v10447 = vpop.f32.mrf.mxu0
        %10448 = vdwg.mxu0
        %10449 = vmatpush.bf16.msra.mxu0 %v7417
        %10450 = vmatpush.bf16.msra.mxu0 %v7415
        %10451 = vmatpush.bf16.msra.mxu0 %v7413
        %10452 = vmatpush.bf16.msra.mxu0 %v7411
        %10453 = vmatpush.bf16.msra.mxu0 %v7409
        %10454 = vmatpush.bf16.msra.mxu0 %v7407
        %10455 = vmatpush.bf16.msra.mxu0 %v7405
        %10456 = vmatpush.bf16.msra.mxu0 %v7403
        %10457 = vmatmul.bf16.gmra.mxu0 %v583
        %v10458 = vpop.f32.mrf.mxu0
        %v10459 = vadd.f32 %v10446, %v10458
        %v10460 = vpop.f32.mrf.mxu0
        %10461 = vdwg.mxu0
        %10462 = vmatpush.bf16.msra.mxu0 %v7433
        %10463 = vmatpush.bf16.msra.mxu0 %v7431
        %10464 = vmatpush.bf16.msra.mxu0 %v7429
        %10465 = vmatpush.bf16.msra.mxu0 %v7427
        %10466 = vmatpush.bf16.msra.mxu0 %v7425
        %10467 = vmatpush.bf16.msra.mxu0 %v7423
        %10468 = vmatpush.bf16.msra.mxu0 %v7421
        %10469 = vmatpush.bf16.msra.mxu0 %v7419
        %10470 = vmatmul.bf16.gmra.mxu0 %v584
        %v10471 = vpop.f32.mrf.mxu0
        %v10472 = vadd.f32 %v10459, %v10471
        %v10473 = vpop.f32.mrf.mxu0
        %10474 = vdwg.mxu0
        %10475 = vmatpush.bf16.msra.mxu0 %v7449
        %10476 = vmatpush.bf16.msra.mxu0 %v7447
        %10477 = vmatpush.bf16.msra.mxu0 %v7445
        %10478 = vmatpush.bf16.msra.mxu0 %v7443
        %10479 = vmatpush.bf16.msra.mxu0 %v7441
        %10480 = vmatpush.bf16.msra.mxu0 %v7439
        %10481 = vmatpush.bf16.msra.mxu0 %v7437
        %10482 = vmatpush.bf16.msra.mxu0 %v7435
        %10483 = vmatmul.bf16.gmra.mxu0 %v585
        %v10484 = vpop.f32.mrf.mxu0
        %v10485 = vadd.f32 %v10472, %v10484
        %v10486 = vpop.f32.mrf.mxu0
        %10487 = vdwg.mxu0
        %10488 = vmatpush.bf16.msra.mxu0 %v7465
        %10489 = vmatpush.bf16.msra.mxu0 %v7463
        %10490 = vmatpush.bf16.msra.mxu0 %v7461
        %10491 = vmatpush.bf16.msra.mxu0 %v7459
        %10492 = vmatpush.bf16.msra.mxu0 %v7457
        %10493 = vmatpush.bf16.msra.mxu0 %v7455
        %10494 = vmatpush.bf16.msra.mxu0 %v7453
        %10495 = vmatpush.bf16.msra.mxu0 %v7451
        %10496 = vmatmul.bf16.gmra.mxu0 %v586
        %v10497 = vpop.f32.mrf.mxu0
        %v10498 = vadd.f32 %v10485, %v10497
        %v10499 = vpop.f32.mrf.mxu0
        %10500 = vdwg.mxu0
        %10501 = vmatpush.bf16.msra.mxu0 %v7481
        %10502 = vmatpush.bf16.msra.mxu0 %v7479
        %10503 = vmatpush.bf16.msra.mxu0 %v7477
        %10504 = vmatpush.bf16.msra.mxu0 %v7475
        %10505 = vmatpush.bf16.msra.mxu0 %v7473
        %10506 = vmatpush.bf16.msra.mxu0 %v7471
        %10507 = vmatpush.bf16.msra.mxu0 %v7469
        %10508 = vmatpush.bf16.msra.mxu0 %v7467
        %10509 = vmatmul.bf16.gmra.mxu0 %v587
        %v10510 = vpop.f32.mrf.mxu0
        %v10511 = vadd.f32 %v10498, %v10510
        %v10512 = vpop.f32.mrf.mxu0
        %10513 = vdwg.mxu0
        %10514 = vmatpush.bf16.msra.mxu0 %v7497
        %10515 = vmatpush.bf16.msra.mxu0 %v7495
        %10516 = vmatpush.bf16.msra.mxu0 %v7493
        %10517 = vmatpush.bf16.msra.mxu0 %v7491
        %10518 = vmatpush.bf16.msra.mxu0 %v7489
        %10519 = vmatpush.bf16.msra.mxu0 %v7487
        %10520 = vmatpush.bf16.msra.mxu0 %v7485
        %10521 = vmatpush.bf16.msra.mxu0 %v7483
        %10522 = vmatmul.bf16.gmra.mxu0 %v588
        %v10523 = vpop.f32.mrf.mxu0
        %v10524 = vadd.f32 %v10511, %v10523
        %v10525 = vpop.f32.mrf.mxu0
        %10526 = vdwg.mxu0
        %10527 = vmatpush.bf16.msra.mxu0 %v7513
        %10528 = vmatpush.bf16.msra.mxu0 %v7511
        %10529 = vmatpush.bf16.msra.mxu0 %v7509
        %10530 = vmatpush.bf16.msra.mxu0 %v7507
        %10531 = vmatpush.bf16.msra.mxu0 %v7505
        %10532 = vmatpush.bf16.msra.mxu0 %v7503
        %10533 = vmatpush.bf16.msra.mxu0 %v7501
        %10534 = vmatpush.bf16.msra.mxu0 %v7499
        %10535 = vmatmul.bf16.gmra.mxu0 %v589
        %v10536 = vpop.f32.mrf.mxu0
        %v10537 = vadd.f32 %v10524, %v10536
        %v10538 = vpop.f32.mrf.mxu0
        %10539 = vdwg.mxu0
        %10540 = vmatpush.bf16.msra.mxu0 %v7529
        %10541 = vmatpush.bf16.msra.mxu0 %v7527
        %10542 = vmatpush.bf16.msra.mxu0 %v7525
        %10543 = vmatpush.bf16.msra.mxu0 %v7523
        %10544 = vmatpush.bf16.msra.mxu0 %v7521
        %10545 = vmatpush.bf16.msra.mxu0 %v7519
        %10546 = vmatpush.bf16.msra.mxu0 %v7517
        %10547 = vmatpush.bf16.msra.mxu0 %v7515
        %10548 = vmatmul.bf16.gmra.mxu0 %v590
        %v10549 = vpop.f32.mrf.mxu0
        %v10550 = vadd.f32 %v10537, %v10549
        %v10551 = vpop.f32.mrf.mxu0
        %10552 = vdwg.mxu0
        %10553 = vmatpush.bf16.msra.mxu0 %v7545
        %10554 = vmatpush.bf16.msra.mxu0 %v7543
        %10555 = vmatpush.bf16.msra.mxu0 %v7541
        %10556 = vmatpush.bf16.msra.mxu0 %v7539
        %10557 = vmatpush.bf16.msra.mxu0 %v7537
        %10558 = vmatpush.bf16.msra.mxu0 %v7535
        %10559 = vmatpush.bf16.msra.mxu0 %v7533
        %10560 = vmatpush.bf16.msra.mxu0 %v7531
        %10561 = vmatmul.bf16.gmra.mxu0 %v591
        %v10562 = vpop.f32.mrf.mxu0
        %v10563 = vadd.f32 %v10550, %v10562
        %v10564 = vpop.f32.mrf.mxu0
        %10565 = vdwg.mxu0
        %10566 = vmatpush.bf16.msra.mxu0 %v7561
        %10567 = vmatpush.bf16.msra.mxu0 %v7559
        %10568 = vmatpush.bf16.msra.mxu0 %v7557
        %10569 = vmatpush.bf16.msra.mxu0 %v7555
        %10570 = vmatpush.bf16.msra.mxu0 %v7553
        %10571 = vmatpush.bf16.msra.mxu0 %v7551
        %10572 = vmatpush.bf16.msra.mxu0 %v7549
        %10573 = vmatpush.bf16.msra.mxu0 %v7547
        %10574 = vmatmul.bf16.gmra.mxu0 %v592
        %v10575 = vpop.f32.mrf.mxu0
        %v10576 = vadd.f32 %v10563, %v10575
        %v10577 = vpop.f32.mrf.mxu0
        %10578 = vdwg.mxu0
        %10579 = vmatpush.bf16.msra.mxu0 %v7577
        %10580 = vmatpush.bf16.msra.mxu0 %v7575
        %10581 = vmatpush.bf16.msra.mxu0 %v7573
        %10582 = vmatpush.bf16.msra.mxu0 %v7571
        %10583 = vmatpush.bf16.msra.mxu0 %v7569
        %10584 = vmatpush.bf16.msra.mxu0 %v7567
        %10585 = vmatpush.bf16.msra.mxu0 %v7565
        %10586 = vmatpush.bf16.msra.mxu0 %v7563
        %10587 = vmatmul.bf16.gmra.mxu0 %v593
        %v10588 = vpop.f32.mrf.mxu0
        %v10589 = vadd.f32 %v10576, %v10588
        %v10590 = vpop.f32.mrf.mxu0
        %10591 = vdwg.mxu0
        %10592 = vmatpush.bf16.msra.mxu0 %v7593
        %10593 = vmatpush.bf16.msra.mxu0 %v7591
        %10594 = vmatpush.bf16.msra.mxu0 %v7589
        %10595 = vmatpush.bf16.msra.mxu0 %v7587
        %10596 = vmatpush.bf16.msra.mxu0 %v7585
        %10597 = vmatpush.bf16.msra.mxu0 %v7583
        %10598 = vmatpush.bf16.msra.mxu0 %v7581
        %10599 = vmatpush.bf16.msra.mxu0 %v7579
        %10600 = vmatmul.bf16.gmra.mxu0 %v594
        %v10601 = vpop.f32.mrf.mxu0
        %v10602 = vadd.f32 %v10589, %v10601
        %v10603 = vpop.f32.mrf.mxu0
        %10604 = vdwg.mxu0
        %10605 = vmatpush.bf16.msra.mxu0 %v7609
        %10606 = vmatpush.bf16.msra.mxu0 %v7607
        %10607 = vmatpush.bf16.msra.mxu0 %v7605
        %10608 = vmatpush.bf16.msra.mxu0 %v7603
        %10609 = vmatpush.bf16.msra.mxu0 %v7601
        %10610 = vmatpush.bf16.msra.mxu0 %v7599
        %10611 = vmatpush.bf16.msra.mxu0 %v7597
        %10612 = vmatpush.bf16.msra.mxu0 %v7595
        %10613 = vmatmul.bf16.gmra.mxu0 %v595
        %v10614 = vpop.f32.mrf.mxu0
        %v10615 = vadd.f32 %v10602, %v10614
        %v10616 = vpop.f32.mrf.mxu0
        %10617 = vdwg.mxu0
        %10618 = vmatpush.bf16.msra.mxu0 %v7625
        %10619 = vmatpush.bf16.msra.mxu0 %v7623
        %10620 = vmatpush.bf16.msra.mxu0 %v7621
        %10621 = vmatpush.bf16.msra.mxu0 %v7619
        %10622 = vmatpush.bf16.msra.mxu0 %v7617
        %10623 = vmatpush.bf16.msra.mxu0 %v7615
        %10624 = vmatpush.bf16.msra.mxu0 %v7613
        %10625 = vmatpush.bf16.msra.mxu0 %v7611
        %10626 = vmatmul.bf16.gmra.mxu0 %v596
        %v10627 = vpop.f32.mrf.mxu0
        %v10628 = vadd.f32 %v10615, %v10627
        %v10629 = vpop.f32.mrf.mxu0
        %10630 = vdwg.mxu0
        %10631 = vmatpush.bf16.msra.mxu0 %v7641
        %10632 = vmatpush.bf16.msra.mxu0 %v7639
        %10633 = vmatpush.bf16.msra.mxu0 %v7637
        %10634 = vmatpush.bf16.msra.mxu0 %v7635
        %10635 = vmatpush.bf16.msra.mxu0 %v7633
        %10636 = vmatpush.bf16.msra.mxu0 %v7631
        %10637 = vmatpush.bf16.msra.mxu0 %v7629
        %10638 = vmatpush.bf16.msra.mxu0 %v7627
        %10639 = vmatmul.bf16.gmra.mxu0 %v597
        %v10640 = vpop.f32.mrf.mxu0
        %v10641 = vadd.f32 %v10628, %v10640
        %v10642 = vpop.f32.mrf.mxu0
        %10643 = vdwg.mxu0
        %10644 = vmatpush.bf16.msra.mxu0 %v7657
        %10645 = vmatpush.bf16.msra.mxu0 %v7655
        %10646 = vmatpush.bf16.msra.mxu0 %v7653
        %10647 = vmatpush.bf16.msra.mxu0 %v7651
        %10648 = vmatpush.bf16.msra.mxu0 %v7649
        %10649 = vmatpush.bf16.msra.mxu0 %v7647
        %10650 = vmatpush.bf16.msra.mxu0 %v7645
        %10651 = vmatpush.bf16.msra.mxu0 %v7643
        %10652 = vmatmul.bf16.gmra.mxu0 %v598
        %v10653 = vpop.f32.mrf.mxu0
        %v10654 = vadd.f32 %v10641, %v10653
        %v10655 = vpop.f32.mrf.mxu0
        %10656 = vdwg.mxu0
        %10657 = vmatpush.bf16.msra.mxu0 %v7673
        %10658 = vmatpush.bf16.msra.mxu0 %v7671
        %10659 = vmatpush.bf16.msra.mxu0 %v7669
        %10660 = vmatpush.bf16.msra.mxu0 %v7667
        %10661 = vmatpush.bf16.msra.mxu0 %v7665
        %10662 = vmatpush.bf16.msra.mxu0 %v7663
        %10663 = vmatpush.bf16.msra.mxu0 %v7661
        %10664 = vmatpush.bf16.msra.mxu0 %v7659
        %10665 = vmatmul.bf16.gmra.mxu0 %v599
        %v10666 = vpop.f32.mrf.mxu0
        %v10667 = vadd.f32 %v10654, %v10666
        %v10668 = vpop.f32.mrf.mxu0
        %10669 = vdwg.mxu0
        %10670 = vmatpush.bf16.msra.mxu0 %v7689
        %10671 = vmatpush.bf16.msra.mxu0 %v7687
        %10672 = vmatpush.bf16.msra.mxu0 %v7685
        %10673 = vmatpush.bf16.msra.mxu0 %v7683
        %10674 = vmatpush.bf16.msra.mxu0 %v7681
        %10675 = vmatpush.bf16.msra.mxu0 %v7679
        %10676 = vmatpush.bf16.msra.mxu0 %v7677
        %10677 = vmatpush.bf16.msra.mxu0 %v7675
        %10678 = vmatmul.bf16.gmra.mxu0 %v600
        %v10679 = vpop.f32.mrf.mxu0
        %v10680 = vadd.f32 %v10667, %v10679
        %v10681 = vpop.f32.mrf.mxu0
        %10682 = vdwg.mxu0
        %10683 = vmatpush.bf16.msra.mxu0 %v7705
        %10684 = vmatpush.bf16.msra.mxu0 %v7703
        %10685 = vmatpush.bf16.msra.mxu0 %v7701
        %10686 = vmatpush.bf16.msra.mxu0 %v7699
        %10687 = vmatpush.bf16.msra.mxu0 %v7697
        %10688 = vmatpush.bf16.msra.mxu0 %v7695
        %10689 = vmatpush.bf16.msra.mxu0 %v7693
        %10690 = vmatpush.bf16.msra.mxu0 %v7691
        %10691 = vmatmul.bf16.gmra.mxu0 %v601
        %v10692 = vpop.f32.mrf.mxu0
        %v10693 = vadd.f32 %v10680, %v10692
        %v10694 = vpop.f32.mrf.mxu0
        %10695 = vdwg.mxu0
        %10696 = vmatpush.bf16.msra.mxu0 %v7721
        %10697 = vmatpush.bf16.msra.mxu0 %v7719
        %10698 = vmatpush.bf16.msra.mxu0 %v7717
        %10699 = vmatpush.bf16.msra.mxu0 %v7715
        %10700 = vmatpush.bf16.msra.mxu0 %v7713
        %10701 = vmatpush.bf16.msra.mxu0 %v7711
        %10702 = vmatpush.bf16.msra.mxu0 %v7709
        %10703 = vmatpush.bf16.msra.mxu0 %v7707
        %10704 = vmatmul.bf16.gmra.mxu0 %v602
        %v10705 = vpop.f32.mrf.mxu0
        %v10706 = vadd.f32 %v10693, %v10705
        %v10707 = vpop.f32.mrf.mxu0
        %10708 = vdwg.mxu0
        %10709 = vmatpush.bf16.msra.mxu0 %v7737
        %10710 = vmatpush.bf16.msra.mxu0 %v7735
        %10711 = vmatpush.bf16.msra.mxu0 %v7733
        %10712 = vmatpush.bf16.msra.mxu0 %v7731
        %10713 = vmatpush.bf16.msra.mxu0 %v7729
        %10714 = vmatpush.bf16.msra.mxu0 %v7727
        %10715 = vmatpush.bf16.msra.mxu0 %v7725
        %10716 = vmatpush.bf16.msra.mxu0 %v7723
        %10717 = vmatmul.bf16.gmra.mxu0 %v603
        %v10718 = vpop.f32.mrf.mxu0
        %v10719 = vadd.f32 %v10706, %v10718
        %v10720 = vpop.f32.mrf.mxu0
        %10721 = vdwg.mxu0
        %10722 = vmatpush.bf16.msra.mxu0 %v7753
        %10723 = vmatpush.bf16.msra.mxu0 %v7751
        %10724 = vmatpush.bf16.msra.mxu0 %v7749
        %10725 = vmatpush.bf16.msra.mxu0 %v7747
        %10726 = vmatpush.bf16.msra.mxu0 %v7745
        %10727 = vmatpush.bf16.msra.mxu0 %v7743
        %10728 = vmatpush.bf16.msra.mxu0 %v7741
        %10729 = vmatpush.bf16.msra.mxu0 %v7739
        %10730 = vmatmul.bf16.gmra.mxu0 %v604
        %v10731 = vpop.f32.mrf.mxu0
        %v10732 = vadd.f32 %v10719, %v10731
        %v10733 = vpop.f32.mrf.mxu0
        %10734 = vdwg.mxu0
        %10735 = vmatpush.bf16.msra.mxu0 %v7769
        %10736 = vmatpush.bf16.msra.mxu0 %v7767
        %10737 = vmatpush.bf16.msra.mxu0 %v7765
        %10738 = vmatpush.bf16.msra.mxu0 %v7763
        %10739 = vmatpush.bf16.msra.mxu0 %v7761
        %10740 = vmatpush.bf16.msra.mxu0 %v7759
        %10741 = vmatpush.bf16.msra.mxu0 %v7757
        %10742 = vmatpush.bf16.msra.mxu0 %v7755
        %10743 = vmatmul.bf16.gmra.mxu0 %v605
        %v10744 = vpop.f32.mrf.mxu0
        %v10745 = vadd.f32 %v10732, %v10744
        %v10746 = vpop.f32.mrf.mxu0
        %10747 = vdwg.mxu0
        %10748 = vmatpush.bf16.msra.mxu0 %v7785
        %10749 = vmatpush.bf16.msra.mxu0 %v7783
        %10750 = vmatpush.bf16.msra.mxu0 %v7781
        %10751 = vmatpush.bf16.msra.mxu0 %v7779
        %10752 = vmatpush.bf16.msra.mxu0 %v7777
        %10753 = vmatpush.bf16.msra.mxu0 %v7775
        %10754 = vmatpush.bf16.msra.mxu0 %v7773
        %10755 = vmatpush.bf16.msra.mxu0 %v7771
        %10756 = vmatmul.bf16.gmra.mxu0 %v606
        %v10757 = vpop.f32.mrf.mxu0
        %v10758 = vadd.f32 %v10745, %v10757
        %v10759 = vpop.f32.mrf.mxu0
        %10760 = vdwg.mxu0
        %10761 = vmatpush.bf16.msra.mxu0 %v7801
        %10762 = vmatpush.bf16.msra.mxu0 %v7799
        %10763 = vmatpush.bf16.msra.mxu0 %v7797
        %10764 = vmatpush.bf16.msra.mxu0 %v7795
        %10765 = vmatpush.bf16.msra.mxu0 %v7793
        %10766 = vmatpush.bf16.msra.mxu0 %v7791
        %10767 = vmatpush.bf16.msra.mxu0 %v7789
        %10768 = vmatpush.bf16.msra.mxu0 %v7787
        %10769 = vmatmul.bf16.gmra.mxu0 %v607
        %v10770 = vpop.f32.mrf.mxu0
        %v10771 = vadd.f32 %v10758, %v10770
        %v10772 = vpop.f32.mrf.mxu0
        %10773 = vdwg.mxu0
        %10774 = vmatpush.bf16.msra.mxu0 %v7817
        %10775 = vmatpush.bf16.msra.mxu0 %v7815
        %10776 = vmatpush.bf16.msra.mxu0 %v7813
        %10777 = vmatpush.bf16.msra.mxu0 %v7811
        %10778 = vmatpush.bf16.msra.mxu0 %v7809
        %10779 = vmatpush.bf16.msra.mxu0 %v7807
        %10780 = vmatpush.bf16.msra.mxu0 %v7805
        %10781 = vmatpush.bf16.msra.mxu0 %v7803
        %10782 = vmatmul.bf16.gmra.mxu0 %v608
        %v10783 = vpop.f32.mrf.mxu0
        %v10784 = vadd.f32 %v10771, %v10783
        %v10785 = vpop.f32.mrf.mxu0
        %10786 = vdwg.mxu0
        %10787 = vmatpush.bf16.msra.mxu0 %v7833
        %10788 = vmatpush.bf16.msra.mxu0 %v7831
        %10789 = vmatpush.bf16.msra.mxu0 %v7829
        %10790 = vmatpush.bf16.msra.mxu0 %v7827
        %10791 = vmatpush.bf16.msra.mxu0 %v7825
        %10792 = vmatpush.bf16.msra.mxu0 %v7823
        %10793 = vmatpush.bf16.msra.mxu0 %v7821
        %10794 = vmatpush.bf16.msra.mxu0 %v7819
        %10795 = vmatmul.bf16.gmra.mxu0 %v609
        %v10796 = vpop.f32.mrf.mxu0
        %v10797 = vadd.f32 %v10784, %v10796
        %v10798 = vpop.f32.mrf.mxu0
        %10799 = vdwg.mxu0
        %10800 = vmatpush.bf16.msra.mxu0 %v7849
        %10801 = vmatpush.bf16.msra.mxu0 %v7847
        %10802 = vmatpush.bf16.msra.mxu0 %v7845
        %10803 = vmatpush.bf16.msra.mxu0 %v7843
        %10804 = vmatpush.bf16.msra.mxu0 %v7841
        %10805 = vmatpush.bf16.msra.mxu0 %v7839
        %10806 = vmatpush.bf16.msra.mxu0 %v7837
        %10807 = vmatpush.bf16.msra.mxu0 %v7835
        %10808 = vmatmul.bf16.gmra.mxu0 %v610
        %v10809 = vpop.f32.mrf.mxu0
        %v10810 = vadd.f32 %v10797, %v10809
        %v10811 = vpop.f32.mrf.mxu0
        %10812 = vdwg.mxu0
        %10813 = vmatpush.bf16.msra.mxu0 %v7865
        %10814 = vmatpush.bf16.msra.mxu0 %v7863
        %10815 = vmatpush.bf16.msra.mxu0 %v7861
        %10816 = vmatpush.bf16.msra.mxu0 %v7859
        %10817 = vmatpush.bf16.msra.mxu0 %v7857
        %10818 = vmatpush.bf16.msra.mxu0 %v7855
        %10819 = vmatpush.bf16.msra.mxu0 %v7853
        %10820 = vmatpush.bf16.msra.mxu0 %v7851
        %10821 = vmatmul.bf16.gmra.mxu0 %v611
        %v10822 = vpop.f32.mrf.mxu0
        %v10823 = vadd.f32 %v10810, %v10822
        %v10824 = vpop.f32.mrf.mxu0
        %10825 = vdwg.mxu0
        %10826 = vmatpush.bf16.msra.mxu0 %v7881
        %10827 = vmatpush.bf16.msra.mxu0 %v7879
        %10828 = vmatpush.bf16.msra.mxu0 %v7877
        %10829 = vmatpush.bf16.msra.mxu0 %v7875
        %10830 = vmatpush.bf16.msra.mxu0 %v7873
        %10831 = vmatpush.bf16.msra.mxu0 %v7871
        %10832 = vmatpush.bf16.msra.mxu0 %v7869
        %10833 = vmatpush.bf16.msra.mxu0 %v7867
        %10834 = vmatmul.bf16.gmra.mxu0 %v612
        %v10835 = vpop.f32.mrf.mxu0
        %v10836 = vadd.f32 %v10823, %v10835
        %v10837 = vpop.f32.mrf.mxu0
        %10838 = vdwg.mxu0
        %10839 = vmatpush.bf16.msra.mxu0 %v7897
        %10840 = vmatpush.bf16.msra.mxu0 %v7895
        %10841 = vmatpush.bf16.msra.mxu0 %v7893
        %10842 = vmatpush.bf16.msra.mxu0 %v7891
        %10843 = vmatpush.bf16.msra.mxu0 %v7889
        %10844 = vmatpush.bf16.msra.mxu0 %v7887
        %10845 = vmatpush.bf16.msra.mxu0 %v7885
        %10846 = vmatpush.bf16.msra.mxu0 %v7883
        %10847 = vmatmul.bf16.gmra.mxu0 %v613
        %v10848 = vpop.f32.mrf.mxu0
        %v10849 = vadd.f32 %v10836, %v10848
        %v10850 = vpop.f32.mrf.mxu0
        %10851 = vdwg.mxu0
        %10852 = vmatpush.bf16.msra.mxu0 %v7913
        %10853 = vmatpush.bf16.msra.mxu0 %v7911
        %10854 = vmatpush.bf16.msra.mxu0 %v7909
        %10855 = vmatpush.bf16.msra.mxu0 %v7907
        %10856 = vmatpush.bf16.msra.mxu0 %v7905
        %10857 = vmatpush.bf16.msra.mxu0 %v7903
        %10858 = vmatpush.bf16.msra.mxu0 %v7901
        %10859 = vmatpush.bf16.msra.mxu0 %v7899
        %10860 = vmatmul.bf16.gmra.mxu0 %v614
        %v10861 = vpop.f32.mrf.mxu0
        %v10862 = vadd.f32 %v10849, %v10861
        %v10863 = vpop.f32.mrf.mxu0
        %10864 = vdwg.mxu0
        %10865 = vmatpush.bf16.msra.mxu0 %v7929
        %10866 = vmatpush.bf16.msra.mxu0 %v7927
        %10867 = vmatpush.bf16.msra.mxu0 %v7925
        %10868 = vmatpush.bf16.msra.mxu0 %v7923
        %10869 = vmatpush.bf16.msra.mxu0 %v7921
        %10870 = vmatpush.bf16.msra.mxu0 %v7919
        %10871 = vmatpush.bf16.msra.mxu0 %v7917
        %10872 = vmatpush.bf16.msra.mxu0 %v7915
        %10873 = vmatmul.bf16.gmra.mxu0 %v615
        %v10874 = vpop.f32.mrf.mxu0
        %v10875 = vadd.f32 %v10862, %v10874
        %v10876 = vpop.f32.mrf.mxu0
        %10877 = vdwg.mxu0
        %10878 = vmatpush.bf16.msra.mxu0 %v7945
        %10879 = vmatpush.bf16.msra.mxu0 %v7943
        %10880 = vmatpush.bf16.msra.mxu0 %v7941
        %10881 = vmatpush.bf16.msra.mxu0 %v7939
        %10882 = vmatpush.bf16.msra.mxu0 %v7937
        %10883 = vmatpush.bf16.msra.mxu0 %v7935
        %10884 = vmatpush.bf16.msra.mxu0 %v7933
        %10885 = vmatpush.bf16.msra.mxu0 %v7931
        %10886 = vmatmul.bf16.gmra.mxu0 %v616
        %v10887 = vpop.f32.mrf.mxu0
        %v10888 = vadd.f32 %v10875, %v10887
        %v10889 = vpop.f32.mrf.mxu0
        %10890 = vdwg.mxu0
        %10891 = vmatpush.bf16.msra.mxu0 %v7961
        %10892 = vmatpush.bf16.msra.mxu0 %v7959
        %10893 = vmatpush.bf16.msra.mxu0 %v7957
        %10894 = vmatpush.bf16.msra.mxu0 %v7955
        %10895 = vmatpush.bf16.msra.mxu0 %v7953
        %10896 = vmatpush.bf16.msra.mxu0 %v7951
        %10897 = vmatpush.bf16.msra.mxu0 %v7949
        %10898 = vmatpush.bf16.msra.mxu0 %v7947
        %10899 = vmatmul.bf16.gmra.mxu0 %v617
        %v10900 = vpop.f32.mrf.mxu0
        %v10901 = vadd.f32 %v10888, %v10900
        %v10902 = vpop.f32.mrf.mxu0
        %10903 = vdwg.mxu0
        %10904 = vmatpush.bf16.msra.mxu0 %v7977
        %10905 = vmatpush.bf16.msra.mxu0 %v7975
        %10906 = vmatpush.bf16.msra.mxu0 %v7973
        %10907 = vmatpush.bf16.msra.mxu0 %v7971
        %10908 = vmatpush.bf16.msra.mxu0 %v7969
        %10909 = vmatpush.bf16.msra.mxu0 %v7967
        %10910 = vmatpush.bf16.msra.mxu0 %v7965
        %10911 = vmatpush.bf16.msra.mxu0 %v7963
        %10912 = vmatmul.bf16.gmra.mxu0 %v618
        %v10913 = vpop.f32.mrf.mxu0
        %v10914 = vadd.f32 %v10901, %v10913
        %v10915 = vpop.f32.mrf.mxu0
        %10916 = vdwg.mxu0
        %10917 = vmatpush.bf16.msra.mxu0 %v7993
        %10918 = vmatpush.bf16.msra.mxu0 %v7991
        %10919 = vmatpush.bf16.msra.mxu0 %v7989
        %10920 = vmatpush.bf16.msra.mxu0 %v7987
        %10921 = vmatpush.bf16.msra.mxu0 %v7985
        %10922 = vmatpush.bf16.msra.mxu0 %v7983
        %10923 = vmatpush.bf16.msra.mxu0 %v7981
        %10924 = vmatpush.bf16.msra.mxu0 %v7979
        %10925 = vmatmul.bf16.gmra.mxu0 %v619
        %v10926 = vpop.f32.mrf.mxu0
        %v10927 = vadd.f32 %v10914, %v10926
        %v10928 = vpop.f32.mrf.mxu0
        %10929 = vdwg.mxu0
        %10930 = vmatpush.bf16.msra.mxu0 %v8009
        %10931 = vmatpush.bf16.msra.mxu0 %v8007
        %10932 = vmatpush.bf16.msra.mxu0 %v8005
        %10933 = vmatpush.bf16.msra.mxu0 %v8003
        %10934 = vmatpush.bf16.msra.mxu0 %v8001
        %10935 = vmatpush.bf16.msra.mxu0 %v7999
        %10936 = vmatpush.bf16.msra.mxu0 %v7997
        %10937 = vmatpush.bf16.msra.mxu0 %v7995
        %10938 = vmatmul.bf16.gmra.mxu0 %v620
        %v10939 = vpop.f32.mrf.mxu0
        %v10940 = vadd.f32 %v10927, %v10939
        %v10941 = vpop.f32.mrf.mxu0
        %10942 = vdwg.mxu0
        %10943 = vmatpush.bf16.msra.mxu0 %v8025
        %10944 = vmatpush.bf16.msra.mxu0 %v8023
        %10945 = vmatpush.bf16.msra.mxu0 %v8021
        %10946 = vmatpush.bf16.msra.mxu0 %v8019
        %10947 = vmatpush.bf16.msra.mxu0 %v8017
        %10948 = vmatpush.bf16.msra.mxu0 %v8015
        %10949 = vmatpush.bf16.msra.mxu0 %v8013
        %10950 = vmatpush.bf16.msra.mxu0 %v8011
        %10951 = vmatmul.bf16.gmra.mxu0 %v621
        %v10952 = vpop.f32.mrf.mxu0
        %v10953 = vadd.f32 %v10940, %v10952
        %v10954 = vpop.f32.mrf.mxu0
        %10955 = vdwg.mxu0
        %10956 = vmatpush.bf16.msra.mxu0 %v8041
        %10957 = vmatpush.bf16.msra.mxu0 %v8039
        %10958 = vmatpush.bf16.msra.mxu0 %v8037
        %10959 = vmatpush.bf16.msra.mxu0 %v8035
        %10960 = vmatpush.bf16.msra.mxu0 %v8033
        %10961 = vmatpush.bf16.msra.mxu0 %v8031
        %10962 = vmatpush.bf16.msra.mxu0 %v8029
        %10963 = vmatpush.bf16.msra.mxu0 %v8027
        %10964 = vmatmul.bf16.gmra.mxu0 %v622
        %v10965 = vpop.f32.mrf.mxu0
        %v10966 = vadd.f32 %v10953, %v10965
        %v10967 = vpop.f32.mrf.mxu0
        %10968 = vdwg.mxu0
        %10969 = vmatpush.bf16.msra.mxu0 %v8057
        %10970 = vmatpush.bf16.msra.mxu0 %v8055
        %10971 = vmatpush.bf16.msra.mxu0 %v8053
        %10972 = vmatpush.bf16.msra.mxu0 %v8051
        %10973 = vmatpush.bf16.msra.mxu0 %v8049
        %10974 = vmatpush.bf16.msra.mxu0 %v8047
        %10975 = vmatpush.bf16.msra.mxu0 %v8045
        %10976 = vmatpush.bf16.msra.mxu0 %v8043
        %10977 = vmatmul.bf16.gmra.mxu0 %v623
        %v10978 = vpop.f32.mrf.mxu0
        %v10979 = vadd.f32 %v10966, %v10978
        %v10980 = vpop.f32.mrf.mxu0
        %10981 = vdwg.mxu0
        %10982 = vmatpush.bf16.msra.mxu0 %v8073
        %10983 = vmatpush.bf16.msra.mxu0 %v8071
        %10984 = vmatpush.bf16.msra.mxu0 %v8069
        %10985 = vmatpush.bf16.msra.mxu0 %v8067
        %10986 = vmatpush.bf16.msra.mxu0 %v8065
        %10987 = vmatpush.bf16.msra.mxu0 %v8063
        %10988 = vmatpush.bf16.msra.mxu0 %v8061
        %10989 = vmatpush.bf16.msra.mxu0 %v8059
        %10990 = vmatmul.bf16.gmra.mxu0 %v624
        %v10991 = vpop.f32.mrf.mxu0
        %v10992 = vadd.f32 %v10979, %v10991
        %v10993 = vpop.f32.mrf.mxu0
        %10994 = vdwg.mxu0
        %10995 = vmatpush.bf16.msra.mxu0 %v8089
        %10996 = vmatpush.bf16.msra.mxu0 %v8087
        %10997 = vmatpush.bf16.msra.mxu0 %v8085
        %10998 = vmatpush.bf16.msra.mxu0 %v8083
        %10999 = vmatpush.bf16.msra.mxu0 %v8081
        %11000 = vmatpush.bf16.msra.mxu0 %v8079
        %11001 = vmatpush.bf16.msra.mxu0 %v8077
        %11002 = vmatpush.bf16.msra.mxu0 %v8075
        %11003 = vmatmul.bf16.gmra.mxu0 %v625
        %v11004 = vpop.f32.mrf.mxu0
        %v11005 = vadd.f32 %v10992, %v11004
        %v11006 = vpop.f32.mrf.mxu0
        %11007 = vdwg.mxu0
        %11008 = vmatpush.bf16.msra.mxu0 %v8105
        %11009 = vmatpush.bf16.msra.mxu0 %v8103
        %11010 = vmatpush.bf16.msra.mxu0 %v8101
        %11011 = vmatpush.bf16.msra.mxu0 %v8099
        %11012 = vmatpush.bf16.msra.mxu0 %v8097
        %11013 = vmatpush.bf16.msra.mxu0 %v8095
        %11014 = vmatpush.bf16.msra.mxu0 %v8093
        %11015 = vmatpush.bf16.msra.mxu0 %v8091
        %11016 = vmatmul.bf16.gmra.mxu0 %v626
        %v11017 = vpop.f32.mrf.mxu0
        %v11018 = vadd.f32 %v11005, %v11017
        %v11019 = vpop.f32.mrf.mxu0
        %11020 = vdwg.mxu0
        %11021 = vmatpush.bf16.msra.mxu0 %v8121
        %11022 = vmatpush.bf16.msra.mxu0 %v8119
        %11023 = vmatpush.bf16.msra.mxu0 %v8117
        %11024 = vmatpush.bf16.msra.mxu0 %v8115
        %11025 = vmatpush.bf16.msra.mxu0 %v8113
        %11026 = vmatpush.bf16.msra.mxu0 %v8111
        %11027 = vmatpush.bf16.msra.mxu0 %v8109
        %11028 = vmatpush.bf16.msra.mxu0 %v8107
        %11029 = vmatmul.bf16.gmra.mxu0 %v627
        %v11030 = vpop.f32.mrf.mxu0
        %v11031 = vadd.f32 %v11018, %v11030
        %v11032 = vpop.f32.mrf.mxu0
        %11033 = vdwg.mxu0
        %11034 = vmatpush.bf16.msra.mxu0 %v8137
        %11035 = vmatpush.bf16.msra.mxu0 %v8135
        %11036 = vmatpush.bf16.msra.mxu0 %v8133
        %11037 = vmatpush.bf16.msra.mxu0 %v8131
        %11038 = vmatpush.bf16.msra.mxu0 %v8129
        %11039 = vmatpush.bf16.msra.mxu0 %v8127
        %11040 = vmatpush.bf16.msra.mxu0 %v8125
        %11041 = vmatpush.bf16.msra.mxu0 %v8123
        %11042 = vmatmul.bf16.gmra.mxu0 %v628
        %v11043 = vpop.f32.mrf.mxu0
        %v11044 = vadd.f32 %v11031, %v11043
        %v11045 = vpop.f32.mrf.mxu0
        %11046 = vdwg.mxu0
        %11047 = vmatpush.bf16.msra.mxu0 %v8153
        %11048 = vmatpush.bf16.msra.mxu0 %v8151
        %11049 = vmatpush.bf16.msra.mxu0 %v8149
        %11050 = vmatpush.bf16.msra.mxu0 %v8147
        %11051 = vmatpush.bf16.msra.mxu0 %v8145
        %11052 = vmatpush.bf16.msra.mxu0 %v8143
        %11053 = vmatpush.bf16.msra.mxu0 %v8141
        %11054 = vmatpush.bf16.msra.mxu0 %v8139
        %11055 = vmatmul.bf16.gmra.mxu0 %v629
        %v11056 = vpop.f32.mrf.mxu0
        %v11057 = vadd.f32 %v11044, %v11056
        %v11058 = vpop.f32.mrf.mxu0
        %11059 = vdwg.mxu0
        %11060 = vmatpush.bf16.msra.mxu0 %v8169
        %11061 = vmatpush.bf16.msra.mxu0 %v8167
        %11062 = vmatpush.bf16.msra.mxu0 %v8165
        %11063 = vmatpush.bf16.msra.mxu0 %v8163
        %11064 = vmatpush.bf16.msra.mxu0 %v8161
        %11065 = vmatpush.bf16.msra.mxu0 %v8159
        %11066 = vmatpush.bf16.msra.mxu0 %v8157
        %11067 = vmatpush.bf16.msra.mxu0 %v8155
        %11068 = vmatmul.bf16.gmra.mxu0 %v630
        %v11069 = vpop.f32.mrf.mxu0
        %v11070 = vadd.f32 %v11057, %v11069
        %v11071 = vpop.f32.mrf.mxu0
        %11072 = vdwg.mxu0
        %11073 = vmatpush.bf16.msra.mxu0 %v8185
        %11074 = vmatpush.bf16.msra.mxu0 %v8183
        %11075 = vmatpush.bf16.msra.mxu0 %v8181
        %11076 = vmatpush.bf16.msra.mxu0 %v8179
        %11077 = vmatpush.bf16.msra.mxu0 %v8177
        %11078 = vmatpush.bf16.msra.mxu0 %v8175
        %11079 = vmatpush.bf16.msra.mxu0 %v8173
        %11080 = vmatpush.bf16.msra.mxu0 %v8171
        %11081 = vmatmul.bf16.gmra.mxu0 %v631
        %v11082 = vpop.f32.mrf.mxu0
        %v11083 = vadd.f32 %v11070, %v11082
        %v11084 = vpop.f32.mrf.mxu0
        %11085 = vdwg.mxu0
        %11086 = vmatpush.bf16.msra.mxu0 %v8201
        %11087 = vmatpush.bf16.msra.mxu0 %v8199
        %11088 = vmatpush.bf16.msra.mxu0 %v8197
        %11089 = vmatpush.bf16.msra.mxu0 %v8195
        %11090 = vmatpush.bf16.msra.mxu0 %v8193
        %11091 = vmatpush.bf16.msra.mxu0 %v8191
        %11092 = vmatpush.bf16.msra.mxu0 %v8189
        %11093 = vmatpush.bf16.msra.mxu0 %v8187
        %11094 = vmatmul.bf16.gmra.mxu0 %v632
        %v11095 = vpop.f32.mrf.mxu0
        %v11096 = vadd.f32 %v11083, %v11095
        %v11097 = vpop.f32.mrf.mxu0
        %11098 = vdwg.mxu0
        %11099 = vmatpush.bf16.msra.mxu0 %v8217
        %11100 = vmatpush.bf16.msra.mxu0 %v8215
        %11101 = vmatpush.bf16.msra.mxu0 %v8213
        %11102 = vmatpush.bf16.msra.mxu0 %v8211
        %11103 = vmatpush.bf16.msra.mxu0 %v8209
        %11104 = vmatpush.bf16.msra.mxu0 %v8207
        %11105 = vmatpush.bf16.msra.mxu0 %v8205
        %11106 = vmatpush.bf16.msra.mxu0 %v8203
        %11107 = vmatmul.bf16.gmra.mxu0 %v633
        %v11108 = vpop.f32.mrf.mxu0
        %v11109 = vadd.f32 %v11096, %v11108
        %v11110 = vpop.f32.mrf.mxu0
        %11111 = vdwg.mxu0
        %11112 = vmatpush.bf16.msra.mxu0 %v8233
        %11113 = vmatpush.bf16.msra.mxu0 %v8231
        %11114 = vmatpush.bf16.msra.mxu0 %v8229
        %11115 = vmatpush.bf16.msra.mxu0 %v8227
        %11116 = vmatpush.bf16.msra.mxu0 %v8225
        %11117 = vmatpush.bf16.msra.mxu0 %v8223
        %11118 = vmatpush.bf16.msra.mxu0 %v8221
        %11119 = vmatpush.bf16.msra.mxu0 %v8219
        %11120 = vmatmul.bf16.gmra.mxu0 %v634
        %v11121 = vpop.f32.mrf.mxu0
        %v11122 = vadd.f32 %v11109, %v11121
        %v11123 = vpop.f32.mrf.mxu0
        %11124 = vdwg.mxu0
        %11125 = vmatpush.bf16.msra.mxu0 %v8249
        %11126 = vmatpush.bf16.msra.mxu0 %v8247
        %11127 = vmatpush.bf16.msra.mxu0 %v8245
        %11128 = vmatpush.bf16.msra.mxu0 %v8243
        %11129 = vmatpush.bf16.msra.mxu0 %v8241
        %11130 = vmatpush.bf16.msra.mxu0 %v8239
        %11131 = vmatpush.bf16.msra.mxu0 %v8237
        %11132 = vmatpush.bf16.msra.mxu0 %v8235
        %11133 = vmatmul.bf16.gmra.mxu0 %v635
        %v11134 = vpop.f32.mrf.mxu0
        %v11135 = vadd.f32 %v11122, %v11134
        %v11136 = vpop.f32.mrf.mxu0
        %11137 = vdwg.mxu0
        %11138 = vmatpush.bf16.msra.mxu0 %v8265
        %11139 = vmatpush.bf16.msra.mxu0 %v8263
        %11140 = vmatpush.bf16.msra.mxu0 %v8261
        %11141 = vmatpush.bf16.msra.mxu0 %v8259
        %11142 = vmatpush.bf16.msra.mxu0 %v8257
        %11143 = vmatpush.bf16.msra.mxu0 %v8255
        %11144 = vmatpush.bf16.msra.mxu0 %v8253
        %11145 = vmatpush.bf16.msra.mxu0 %v8251
        %11146 = vmatmul.bf16.gmra.mxu0 %v636
        %v11147 = vpop.f32.mrf.mxu0
        %v11148 = vadd.f32 %v11135, %v11147
        %v11149 = vpop.f32.mrf.mxu0
        %11150 = vdwg.mxu0
        %11151 = vmatpush.bf16.msra.mxu0 %v8281
        %11152 = vmatpush.bf16.msra.mxu0 %v8279
        %11153 = vmatpush.bf16.msra.mxu0 %v8277
        %11154 = vmatpush.bf16.msra.mxu0 %v8275
        %11155 = vmatpush.bf16.msra.mxu0 %v8273
        %11156 = vmatpush.bf16.msra.mxu0 %v8271
        %11157 = vmatpush.bf16.msra.mxu0 %v8269
        %11158 = vmatpush.bf16.msra.mxu0 %v8267
        %11159 = vmatmul.bf16.gmra.mxu0 %v637
        %v11160 = vpop.f32.mrf.mxu0
        %v11161 = vadd.f32 %v11148, %v11160
        %v11162 = vpop.f32.mrf.mxu0
        %11163 = vdwg.mxu0
        %11164 = vmatpush.bf16.msra.mxu0 %v8297
        %11165 = vmatpush.bf16.msra.mxu0 %v8295
        %11166 = vmatpush.bf16.msra.mxu0 %v8293
        %11167 = vmatpush.bf16.msra.mxu0 %v8291
        %11168 = vmatpush.bf16.msra.mxu0 %v8289
        %11169 = vmatpush.bf16.msra.mxu0 %v8287
        %11170 = vmatpush.bf16.msra.mxu0 %v8285
        %11171 = vmatpush.bf16.msra.mxu0 %v8283
        %11172 = vmatmul.bf16.gmra.mxu0 %v638
        %v11173 = vpop.f32.mrf.mxu0
        %v11174 = vadd.f32 %v11161, %v11173
        %v11175 = vpop.f32.mrf.mxu0
        %11176 = vdwg.mxu0
        %11177 = vmatpush.bf16.msra.mxu0 %v8313
        %11178 = vmatpush.bf16.msra.mxu0 %v8311
        %11179 = vmatpush.bf16.msra.mxu0 %v8309
        %11180 = vmatpush.bf16.msra.mxu0 %v8307
        %11181 = vmatpush.bf16.msra.mxu0 %v8305
        %11182 = vmatpush.bf16.msra.mxu0 %v8303
        %11183 = vmatpush.bf16.msra.mxu0 %v8301
        %11184 = vmatpush.bf16.msra.mxu0 %v8299
        %11185 = vmatmul.bf16.gmra.mxu0 %v639
        %v11186 = vpop.f32.mrf.mxu0
        %v11187 = vadd.f32 %v11174, %v11186
        %v11188 = vpop.f32.mrf.mxu0
        %11189 = vdwg.mxu0
        %11190 = vmatpush.bf16.msra.mxu0 %v8329
        %11191 = vmatpush.bf16.msra.mxu0 %v8327
        %11192 = vmatpush.bf16.msra.mxu0 %v8325
        %11193 = vmatpush.bf16.msra.mxu0 %v8323
        %11194 = vmatpush.bf16.msra.mxu0 %v8321
        %11195 = vmatpush.bf16.msra.mxu0 %v8319
        %11196 = vmatpush.bf16.msra.mxu0 %v8317
        %11197 = vmatpush.bf16.msra.mxu0 %v8315
        %11198 = vmatmul.bf16.gmra.mxu0 %v640
        %v11199 = vpop.f32.mrf.mxu0
        %v11200 = vadd.f32 %v11187, %v11199
        %v11201 = vpop.f32.mrf.mxu0
        %11202 = vdwg.mxu0
        %11203 = vmatpush.bf16.msra.mxu0 %v8345
        %11204 = vmatpush.bf16.msra.mxu0 %v8343
        %11205 = vmatpush.bf16.msra.mxu0 %v8341
        %11206 = vmatpush.bf16.msra.mxu0 %v8339
        %11207 = vmatpush.bf16.msra.mxu0 %v8337
        %11208 = vmatpush.bf16.msra.mxu0 %v8335
        %11209 = vmatpush.bf16.msra.mxu0 %v8333
        %11210 = vmatpush.bf16.msra.mxu0 %v8331
        %11211 = vmatmul.bf16.gmra.mxu0 %v641
        %v11212 = vpop.f32.mrf.mxu0
        %v11213 = vadd.f32 %v11200, %v11212
        %v11214 = vpop.f32.mrf.mxu0
        %11215 = vdwg.mxu0
        %11216 = vmatpush.bf16.msra.mxu0 %v8361
        %11217 = vmatpush.bf16.msra.mxu0 %v8359
        %11218 = vmatpush.bf16.msra.mxu0 %v8357
        %11219 = vmatpush.bf16.msra.mxu0 %v8355
        %11220 = vmatpush.bf16.msra.mxu0 %v8353
        %11221 = vmatpush.bf16.msra.mxu0 %v8351
        %11222 = vmatpush.bf16.msra.mxu0 %v8349
        %11223 = vmatpush.bf16.msra.mxu0 %v8347
        %11224 = vmatmul.bf16.gmra.mxu0 %v642
        %v11225 = vpop.f32.mrf.mxu0
        %v11226 = vadd.f32 %v11213, %v11225
        %v11227 = vpop.f32.mrf.mxu0
        %11228 = vdwg.mxu0
        %11229 = vmatpush.bf16.msra.mxu0 %v8377
        %11230 = vmatpush.bf16.msra.mxu0 %v8375
        %11231 = vmatpush.bf16.msra.mxu0 %v8373
        %11232 = vmatpush.bf16.msra.mxu0 %v8371
        %11233 = vmatpush.bf16.msra.mxu0 %v8369
        %11234 = vmatpush.bf16.msra.mxu0 %v8367
        %11235 = vmatpush.bf16.msra.mxu0 %v8365
        %11236 = vmatpush.bf16.msra.mxu0 %v8363
        %11237 = vmatmul.bf16.gmra.mxu0 %v643
        %v11238 = vpop.f32.mrf.mxu0
        %v11239 = vadd.f32 %v11226, %v11238
        %v11240 = vpop.f32.mrf.mxu0
        %11241 = vdwg.mxu0
        %11242 = vmatpush.bf16.msra.mxu0 %v8393
        %11243 = vmatpush.bf16.msra.mxu0 %v8391
        %11244 = vmatpush.bf16.msra.mxu0 %v8389
        %11245 = vmatpush.bf16.msra.mxu0 %v8387
        %11246 = vmatpush.bf16.msra.mxu0 %v8385
        %11247 = vmatpush.bf16.msra.mxu0 %v8383
        %11248 = vmatpush.bf16.msra.mxu0 %v8381
        %11249 = vmatpush.bf16.msra.mxu0 %v8379
        %11250 = vmatmul.bf16.gmra.mxu0 %v644
        %v11251 = vpop.f32.mrf.mxu0
        %v11252 = vadd.f32 %v11239, %v11251
        %v11253 = vpop.f32.mrf.mxu0
        %11254 = vdwg.mxu0
        %11255 = vmatpush.bf16.msra.mxu0 %v8409
        %11256 = vmatpush.bf16.msra.mxu0 %v8407
        %11257 = vmatpush.bf16.msra.mxu0 %v8405
        %11258 = vmatpush.bf16.msra.mxu0 %v8403
        %11259 = vmatpush.bf16.msra.mxu0 %v8401
        %11260 = vmatpush.bf16.msra.mxu0 %v8399
        %11261 = vmatpush.bf16.msra.mxu0 %v8397
        %11262 = vmatpush.bf16.msra.mxu0 %v8395
        %11263 = vmatmul.bf16.gmra.mxu0 %v645
        %v11264 = vpop.f32.mrf.mxu0
        %v11265 = vadd.f32 %v11252, %v11264
        %v11266 = vpop.f32.mrf.mxu0
        %11267 = vdwg.mxu0
        %11268 = vmatpush.bf16.msra.mxu0 %v8425
        %11269 = vmatpush.bf16.msra.mxu0 %v8423
        %11270 = vmatpush.bf16.msra.mxu0 %v8421
        %11271 = vmatpush.bf16.msra.mxu0 %v8419
        %11272 = vmatpush.bf16.msra.mxu0 %v8417
        %11273 = vmatpush.bf16.msra.mxu0 %v8415
        %11274 = vmatpush.bf16.msra.mxu0 %v8413
        %11275 = vmatpush.bf16.msra.mxu0 %v8411
        %11276 = vmatmul.bf16.gmra.mxu0 %v646
        %v11277 = vpop.f32.mrf.mxu0
        %v11278 = vadd.f32 %v11265, %v11277
        %v11279 = vpop.f32.mrf.mxu0
        %11280 = vdwg.mxu0
        %11281 = vmatpush.bf16.msra.mxu0 %v8441
        %11282 = vmatpush.bf16.msra.mxu0 %v8439
        %11283 = vmatpush.bf16.msra.mxu0 %v8437
        %11284 = vmatpush.bf16.msra.mxu0 %v8435
        %11285 = vmatpush.bf16.msra.mxu0 %v8433
        %11286 = vmatpush.bf16.msra.mxu0 %v8431
        %11287 = vmatpush.bf16.msra.mxu0 %v8429
        %11288 = vmatpush.bf16.msra.mxu0 %v8427
        %11289 = vmatmul.bf16.gmra.mxu0 %v647
        %v11290 = vpop.f32.mrf.mxu0
        %v11291 = vadd.f32 %v11278, %v11290
        %v11292 = vpop.f32.mrf.mxu0
        %11293 = vdwg.mxu0
        %11294 = vmatpush.bf16.msra.mxu0 %v8457
        %11295 = vmatpush.bf16.msra.mxu0 %v8455
        %11296 = vmatpush.bf16.msra.mxu0 %v8453
        %11297 = vmatpush.bf16.msra.mxu0 %v8451
        %11298 = vmatpush.bf16.msra.mxu0 %v8449
        %11299 = vmatpush.bf16.msra.mxu0 %v8447
        %11300 = vmatpush.bf16.msra.mxu0 %v8445
        %11301 = vmatpush.bf16.msra.mxu0 %v8443
        %11302 = vmatmul.bf16.gmra.mxu0 %v648
        %v11303 = vpop.f32.mrf.mxu0
        %v11304 = vadd.f32 %v11291, %v11303
        %v11305 = vpop.f32.mrf.mxu0
        %11306 = vdwg.mxu0
        %11307 = vmatpush.bf16.msra.mxu0 %v8473
        %11308 = vmatpush.bf16.msra.mxu0 %v8471
        %11309 = vmatpush.bf16.msra.mxu0 %v8469
        %11310 = vmatpush.bf16.msra.mxu0 %v8467
        %11311 = vmatpush.bf16.msra.mxu0 %v8465
        %11312 = vmatpush.bf16.msra.mxu0 %v8463
        %11313 = vmatpush.bf16.msra.mxu0 %v8461
        %11314 = vmatpush.bf16.msra.mxu0 %v8459
        %11315 = vmatmul.bf16.gmra.mxu0 %v649
        %v11316 = vpop.f32.mrf.mxu0
        %v11317 = vadd.f32 %v11304, %v11316
        %v11318 = vpop.f32.mrf.mxu0
        %11319 = vdwg.mxu0
        %11320 = vmatpush.bf16.msra.mxu0 %v8489
        %11321 = vmatpush.bf16.msra.mxu0 %v8487
        %11322 = vmatpush.bf16.msra.mxu0 %v8485
        %11323 = vmatpush.bf16.msra.mxu0 %v8483
        %11324 = vmatpush.bf16.msra.mxu0 %v8481
        %11325 = vmatpush.bf16.msra.mxu0 %v8479
        %11326 = vmatpush.bf16.msra.mxu0 %v8477
        %11327 = vmatpush.bf16.msra.mxu0 %v8475
        %11328 = vmatmul.bf16.gmra.mxu0 %v650
        %v11329 = vpop.f32.mrf.mxu0
        %v11330 = vadd.f32 %v11317, %v11329
        %v11331 = vpop.f32.mrf.mxu0
        %11332 = vdwg.mxu0
        %11333 = vmatpush.bf16.msra.mxu0 %v6938
        %11334 = vmatpush.bf16.msra.mxu0 %v6936
        %11335 = vmatpush.bf16.msra.mxu0 %v6934
        %11336 = vmatpush.bf16.msra.mxu0 %v6932
        %11337 = vmatpush.bf16.msra.mxu0 %v6930
        %11338 = vmatpush.bf16.msra.mxu0 %v6928
        %11339 = vmatpush.bf16.msra.mxu0 %v6926
        %11340 = vmatpush.bf16.msra.mxu0 %v6924
        %11341 = vmatmul.bf16.gmra.mxu0 %v553
        %v11342 = vpop.f32.mrf.mxu0
        %v11343 = vadd.f32 0.0, %v11342
        %v11344 = vpop.f32.mrf.mxu0
        %11345 = vdwg.mxu0
        %11346 = vmatpush.bf16.msra.mxu0 %v6954
        %11347 = vmatpush.bf16.msra.mxu0 %v6952
        %11348 = vmatpush.bf16.msra.mxu0 %v6950
        %11349 = vmatpush.bf16.msra.mxu0 %v6948
        %11350 = vmatpush.bf16.msra.mxu0 %v6946
        %11351 = vmatpush.bf16.msra.mxu0 %v6944
        %11352 = vmatpush.bf16.msra.mxu0 %v6942
        %11353 = vmatpush.bf16.msra.mxu0 %v6940
        %11354 = vmatmul.bf16.gmra.mxu0 %v554
        %v11355 = vpop.f32.mrf.mxu0
        %v11356 = vadd.f32 %v11343, %v11355
        %v11357 = vpop.f32.mrf.mxu0
        %11358 = vdwg.mxu0
        %11359 = vmatpush.bf16.msra.mxu0 %v6970
        %11360 = vmatpush.bf16.msra.mxu0 %v6968
        %11361 = vmatpush.bf16.msra.mxu0 %v6966
        %11362 = vmatpush.bf16.msra.mxu0 %v6964
        %11363 = vmatpush.bf16.msra.mxu0 %v6962
        %11364 = vmatpush.bf16.msra.mxu0 %v6960
        %11365 = vmatpush.bf16.msra.mxu0 %v6958
        %11366 = vmatpush.bf16.msra.mxu0 %v6956
        %11367 = vmatmul.bf16.gmra.mxu0 %v555
        %v11368 = vpop.f32.mrf.mxu0
        %v11369 = vadd.f32 %v11356, %v11368
        %v11370 = vpop.f32.mrf.mxu0
        %11371 = vdwg.mxu0
        %11372 = vmatpush.bf16.msra.mxu0 %v6986
        %11373 = vmatpush.bf16.msra.mxu0 %v6984
        %11374 = vmatpush.bf16.msra.mxu0 %v6982
        %11375 = vmatpush.bf16.msra.mxu0 %v6980
        %11376 = vmatpush.bf16.msra.mxu0 %v6978
        %11377 = vmatpush.bf16.msra.mxu0 %v6976
        %11378 = vmatpush.bf16.msra.mxu0 %v6974
        %11379 = vmatpush.bf16.msra.mxu0 %v6972
        %11380 = vmatmul.bf16.gmra.mxu0 %v556
        %v11381 = vpop.f32.mrf.mxu0
        %v11382 = vadd.f32 %v11369, %v11381
        %v11383 = vpop.f32.mrf.mxu0
        %11384 = vdwg.mxu0
        %11385 = vmatpush.bf16.msra.mxu0 %v7002
        %11386 = vmatpush.bf16.msra.mxu0 %v7000
        %11387 = vmatpush.bf16.msra.mxu0 %v6998
        %11388 = vmatpush.bf16.msra.mxu0 %v6996
        %11389 = vmatpush.bf16.msra.mxu0 %v6994
        %11390 = vmatpush.bf16.msra.mxu0 %v6992
        %11391 = vmatpush.bf16.msra.mxu0 %v6990
        %11392 = vmatpush.bf16.msra.mxu0 %v6988
        %11393 = vmatmul.bf16.gmra.mxu0 %v557
        %v11394 = vpop.f32.mrf.mxu0
        %v11395 = vadd.f32 %v11382, %v11394
        %v11396 = vpop.f32.mrf.mxu0
        %11397 = vdwg.mxu0
        %11398 = vmatpush.bf16.msra.mxu0 %v7018
        %11399 = vmatpush.bf16.msra.mxu0 %v7016
        %11400 = vmatpush.bf16.msra.mxu0 %v7014
        %11401 = vmatpush.bf16.msra.mxu0 %v7012
        %11402 = vmatpush.bf16.msra.mxu0 %v7010
        %11403 = vmatpush.bf16.msra.mxu0 %v7008
        %11404 = vmatpush.bf16.msra.mxu0 %v7006
        %11405 = vmatpush.bf16.msra.mxu0 %v7004
        %11406 = vmatmul.bf16.gmra.mxu0 %v558
        %v11407 = vpop.f32.mrf.mxu0
        %v11408 = vadd.f32 %v11395, %v11407
        %v11409 = vpop.f32.mrf.mxu0
        %11410 = vdwg.mxu0
        %11411 = vmatpush.bf16.msra.mxu0 %v7034
        %11412 = vmatpush.bf16.msra.mxu0 %v7032
        %11413 = vmatpush.bf16.msra.mxu0 %v7030
        %11414 = vmatpush.bf16.msra.mxu0 %v7028
        %11415 = vmatpush.bf16.msra.mxu0 %v7026
        %11416 = vmatpush.bf16.msra.mxu0 %v7024
        %11417 = vmatpush.bf16.msra.mxu0 %v7022
        %11418 = vmatpush.bf16.msra.mxu0 %v7020
        %11419 = vmatmul.bf16.gmra.mxu0 %v559
        %v11420 = vpop.f32.mrf.mxu0
        %v11421 = vadd.f32 %v11408, %v11420
        %v11422 = vpop.f32.mrf.mxu0
        %11423 = vdwg.mxu0
        %11424 = vmatpush.bf16.msra.mxu0 %v7050
        %11425 = vmatpush.bf16.msra.mxu0 %v7048
        %11426 = vmatpush.bf16.msra.mxu0 %v7046
        %11427 = vmatpush.bf16.msra.mxu0 %v7044
        %11428 = vmatpush.bf16.msra.mxu0 %v7042
        %11429 = vmatpush.bf16.msra.mxu0 %v7040
        %11430 = vmatpush.bf16.msra.mxu0 %v7038
        %11431 = vmatpush.bf16.msra.mxu0 %v7036
        %11432 = vmatmul.bf16.gmra.mxu0 %v560
        %v11433 = vpop.f32.mrf.mxu0
        %v11434 = vadd.f32 %v11421, %v11433
        %v11435 = vpop.f32.mrf.mxu0
        %11436 = vdwg.mxu0
        %11437 = vmatpush.bf16.msra.mxu0 %v7066
        %11438 = vmatpush.bf16.msra.mxu0 %v7064
        %11439 = vmatpush.bf16.msra.mxu0 %v7062
        %11440 = vmatpush.bf16.msra.mxu0 %v7060
        %11441 = vmatpush.bf16.msra.mxu0 %v7058
        %11442 = vmatpush.bf16.msra.mxu0 %v7056
        %11443 = vmatpush.bf16.msra.mxu0 %v7054
        %11444 = vmatpush.bf16.msra.mxu0 %v7052
        %11445 = vmatmul.bf16.gmra.mxu0 %v561
        %v11446 = vpop.f32.mrf.mxu0
        %v11447 = vadd.f32 %v11434, %v11446
        %v11448 = vpop.f32.mrf.mxu0
        %11449 = vdwg.mxu0
        %11450 = vmatpush.bf16.msra.mxu0 %v7082
        %11451 = vmatpush.bf16.msra.mxu0 %v7080
        %11452 = vmatpush.bf16.msra.mxu0 %v7078
        %11453 = vmatpush.bf16.msra.mxu0 %v7076
        %11454 = vmatpush.bf16.msra.mxu0 %v7074
        %11455 = vmatpush.bf16.msra.mxu0 %v7072
        %11456 = vmatpush.bf16.msra.mxu0 %v7070
        %11457 = vmatpush.bf16.msra.mxu0 %v7068
        %11458 = vmatmul.bf16.gmra.mxu0 %v562
        %v11459 = vpop.f32.mrf.mxu0
        %v11460 = vadd.f32 %v11447, %v11459
        %v11461 = vpop.f32.mrf.mxu0
        %11462 = vdwg.mxu0
        %11463 = vmatpush.bf16.msra.mxu0 %v7098
        %11464 = vmatpush.bf16.msra.mxu0 %v7096
        %11465 = vmatpush.bf16.msra.mxu0 %v7094
        %11466 = vmatpush.bf16.msra.mxu0 %v7092
        %11467 = vmatpush.bf16.msra.mxu0 %v7090
        %11468 = vmatpush.bf16.msra.mxu0 %v7088
        %11469 = vmatpush.bf16.msra.mxu0 %v7086
        %11470 = vmatpush.bf16.msra.mxu0 %v7084
        %11471 = vmatmul.bf16.gmra.mxu0 %v563
        %v11472 = vpop.f32.mrf.mxu0
        %v11473 = vadd.f32 %v11460, %v11472
        %v11474 = vpop.f32.mrf.mxu0
        %11475 = vdwg.mxu0
        %11476 = vmatpush.bf16.msra.mxu0 %v7114
        %11477 = vmatpush.bf16.msra.mxu0 %v7112
        %11478 = vmatpush.bf16.msra.mxu0 %v7110
        %11479 = vmatpush.bf16.msra.mxu0 %v7108
        %11480 = vmatpush.bf16.msra.mxu0 %v7106
        %11481 = vmatpush.bf16.msra.mxu0 %v7104
        %11482 = vmatpush.bf16.msra.mxu0 %v7102
        %11483 = vmatpush.bf16.msra.mxu0 %v7100
        %11484 = vmatmul.bf16.gmra.mxu0 %v564
        %v11485 = vpop.f32.mrf.mxu0
        %v11486 = vadd.f32 %v11473, %v11485
        %v11487 = vpop.f32.mrf.mxu0
        %11488 = vdwg.mxu0
        %11489 = vmatpush.bf16.msra.mxu0 %v7130
        %11490 = vmatpush.bf16.msra.mxu0 %v7128
        %11491 = vmatpush.bf16.msra.mxu0 %v7126
        %11492 = vmatpush.bf16.msra.mxu0 %v7124
        %11493 = vmatpush.bf16.msra.mxu0 %v7122
        %11494 = vmatpush.bf16.msra.mxu0 %v7120
        %11495 = vmatpush.bf16.msra.mxu0 %v7118
        %11496 = vmatpush.bf16.msra.mxu0 %v7116
        %11497 = vmatmul.bf16.gmra.mxu0 %v565
        %v11498 = vpop.f32.mrf.mxu0
        %v11499 = vadd.f32 %v11486, %v11498
        %v11500 = vpop.f32.mrf.mxu0
        %11501 = vdwg.mxu0
        %11502 = vmatpush.bf16.msra.mxu0 %v7146
        %11503 = vmatpush.bf16.msra.mxu0 %v7144
        %11504 = vmatpush.bf16.msra.mxu0 %v7142
        %11505 = vmatpush.bf16.msra.mxu0 %v7140
        %11506 = vmatpush.bf16.msra.mxu0 %v7138
        %11507 = vmatpush.bf16.msra.mxu0 %v7136
        %11508 = vmatpush.bf16.msra.mxu0 %v7134
        %11509 = vmatpush.bf16.msra.mxu0 %v7132
        %11510 = vmatmul.bf16.gmra.mxu0 %v566
        %v11511 = vpop.f32.mrf.mxu0
        %v11512 = vadd.f32 %v11499, %v11511
        %v11513 = vpop.f32.mrf.mxu0
        %11514 = vdwg.mxu0
        %11515 = vmatpush.bf16.msra.mxu0 %v7162
        %11516 = vmatpush.bf16.msra.mxu0 %v7160
        %11517 = vmatpush.bf16.msra.mxu0 %v7158
        %11518 = vmatpush.bf16.msra.mxu0 %v7156
        %11519 = vmatpush.bf16.msra.mxu0 %v7154
        %11520 = vmatpush.bf16.msra.mxu0 %v7152
        %11521 = vmatpush.bf16.msra.mxu0 %v7150
        %11522 = vmatpush.bf16.msra.mxu0 %v7148
        %11523 = vmatmul.bf16.gmra.mxu0 %v567
        %v11524 = vpop.f32.mrf.mxu0
        %v11525 = vadd.f32 %v11512, %v11524
        %v11526 = vpop.f32.mrf.mxu0
        %11527 = vdwg.mxu0
        %11528 = vmatpush.bf16.msra.mxu0 %v7178
        %11529 = vmatpush.bf16.msra.mxu0 %v7176
        %11530 = vmatpush.bf16.msra.mxu0 %v7174
        %11531 = vmatpush.bf16.msra.mxu0 %v7172
        %11532 = vmatpush.bf16.msra.mxu0 %v7170
        %11533 = vmatpush.bf16.msra.mxu0 %v7168
        %11534 = vmatpush.bf16.msra.mxu0 %v7166
        %11535 = vmatpush.bf16.msra.mxu0 %v7164
        %11536 = vmatmul.bf16.gmra.mxu0 %v568
        %v11537 = vpop.f32.mrf.mxu0
        %v11538 = vadd.f32 %v11525, %v11537
        %v11539 = vpop.f32.mrf.mxu0
        %11540 = vdwg.mxu0
        %11541 = vmatpush.bf16.msra.mxu0 %v7194
        %11542 = vmatpush.bf16.msra.mxu0 %v7192
        %11543 = vmatpush.bf16.msra.mxu0 %v7190
        %11544 = vmatpush.bf16.msra.mxu0 %v7188
        %11545 = vmatpush.bf16.msra.mxu0 %v7186
        %11546 = vmatpush.bf16.msra.mxu0 %v7184
        %11547 = vmatpush.bf16.msra.mxu0 %v7182
        %11548 = vmatpush.bf16.msra.mxu0 %v7180
        %11549 = vmatmul.bf16.gmra.mxu0 %v569
        %v11550 = vpop.f32.mrf.mxu0
        %v11551 = vadd.f32 %v11538, %v11550
        %v11552 = vpop.f32.mrf.mxu0
        %11553 = vdwg.mxu0
        %11554 = vmatpush.bf16.msra.mxu0 %v7210
        %11555 = vmatpush.bf16.msra.mxu0 %v7208
        %11556 = vmatpush.bf16.msra.mxu0 %v7206
        %11557 = vmatpush.bf16.msra.mxu0 %v7204
        %11558 = vmatpush.bf16.msra.mxu0 %v7202
        %11559 = vmatpush.bf16.msra.mxu0 %v7200
        %11560 = vmatpush.bf16.msra.mxu0 %v7198
        %11561 = vmatpush.bf16.msra.mxu0 %v7196
        %11562 = vmatmul.bf16.gmra.mxu0 %v570
        %v11563 = vpop.f32.mrf.mxu0
        %v11564 = vadd.f32 %v11551, %v11563
        %v11565 = vpop.f32.mrf.mxu0
        %11566 = vdwg.mxu0
        %11567 = vmatpush.bf16.msra.mxu0 %v7226
        %11568 = vmatpush.bf16.msra.mxu0 %v7224
        %11569 = vmatpush.bf16.msra.mxu0 %v7222
        %11570 = vmatpush.bf16.msra.mxu0 %v7220
        %11571 = vmatpush.bf16.msra.mxu0 %v7218
        %11572 = vmatpush.bf16.msra.mxu0 %v7216
        %11573 = vmatpush.bf16.msra.mxu0 %v7214
        %11574 = vmatpush.bf16.msra.mxu0 %v7212
        %11575 = vmatmul.bf16.gmra.mxu0 %v571
        %v11576 = vpop.f32.mrf.mxu0
        %v11577 = vadd.f32 %v11564, %v11576
        %v11578 = vpop.f32.mrf.mxu0
        %11579 = vdwg.mxu0
        %11580 = vmatpush.bf16.msra.mxu0 %v7242
        %11581 = vmatpush.bf16.msra.mxu0 %v7240
        %11582 = vmatpush.bf16.msra.mxu0 %v7238
        %11583 = vmatpush.bf16.msra.mxu0 %v7236
        %11584 = vmatpush.bf16.msra.mxu0 %v7234
        %11585 = vmatpush.bf16.msra.mxu0 %v7232
        %11586 = vmatpush.bf16.msra.mxu0 %v7230
        %11587 = vmatpush.bf16.msra.mxu0 %v7228
        %11588 = vmatmul.bf16.gmra.mxu0 %v572
        %v11589 = vpop.f32.mrf.mxu0
        %v11590 = vadd.f32 %v11577, %v11589
        %v11591 = vpop.f32.mrf.mxu0
        %11592 = vdwg.mxu0
        %11593 = vmatpush.bf16.msra.mxu0 %v7258
        %11594 = vmatpush.bf16.msra.mxu0 %v7256
        %11595 = vmatpush.bf16.msra.mxu0 %v7254
        %11596 = vmatpush.bf16.msra.mxu0 %v7252
        %11597 = vmatpush.bf16.msra.mxu0 %v7250
        %11598 = vmatpush.bf16.msra.mxu0 %v7248
        %11599 = vmatpush.bf16.msra.mxu0 %v7246
        %11600 = vmatpush.bf16.msra.mxu0 %v7244
        %11601 = vmatmul.bf16.gmra.mxu0 %v573
        %v11602 = vpop.f32.mrf.mxu0
        %v11603 = vadd.f32 %v11590, %v11602
        %v11604 = vpop.f32.mrf.mxu0
        %11605 = vdwg.mxu0
        %11606 = vmatpush.bf16.msra.mxu0 %v7274
        %11607 = vmatpush.bf16.msra.mxu0 %v7272
        %11608 = vmatpush.bf16.msra.mxu0 %v7270
        %11609 = vmatpush.bf16.msra.mxu0 %v7268
        %11610 = vmatpush.bf16.msra.mxu0 %v7266
        %11611 = vmatpush.bf16.msra.mxu0 %v7264
        %11612 = vmatpush.bf16.msra.mxu0 %v7262
        %11613 = vmatpush.bf16.msra.mxu0 %v7260
        %11614 = vmatmul.bf16.gmra.mxu0 %v574
        %v11615 = vpop.f32.mrf.mxu0
        %v11616 = vadd.f32 %v11603, %v11615
        %v11617 = vpop.f32.mrf.mxu0
        %11618 = vdwg.mxu0
        %11619 = vmatpush.bf16.msra.mxu0 %v7290
        %11620 = vmatpush.bf16.msra.mxu0 %v7288
        %11621 = vmatpush.bf16.msra.mxu0 %v7286
        %11622 = vmatpush.bf16.msra.mxu0 %v7284
        %11623 = vmatpush.bf16.msra.mxu0 %v7282
        %11624 = vmatpush.bf16.msra.mxu0 %v7280
        %11625 = vmatpush.bf16.msra.mxu0 %v7278
        %11626 = vmatpush.bf16.msra.mxu0 %v7276
        %11627 = vmatmul.bf16.gmra.mxu0 %v575
        %v11628 = vpop.f32.mrf.mxu0
        %v11629 = vadd.f32 %v11616, %v11628
        %v11630 = vpop.f32.mrf.mxu0
        %11631 = vdwg.mxu0
        %11632 = vmatpush.bf16.msra.mxu0 %v7306
        %11633 = vmatpush.bf16.msra.mxu0 %v7304
        %11634 = vmatpush.bf16.msra.mxu0 %v7302
        %11635 = vmatpush.bf16.msra.mxu0 %v7300
        %11636 = vmatpush.bf16.msra.mxu0 %v7298
        %11637 = vmatpush.bf16.msra.mxu0 %v7296
        %11638 = vmatpush.bf16.msra.mxu0 %v7294
        %11639 = vmatpush.bf16.msra.mxu0 %v7292
        %11640 = vmatmul.bf16.gmra.mxu0 %v576
        %v11641 = vpop.f32.mrf.mxu0
        %v11642 = vadd.f32 %v11629, %v11641
        %v11643 = vpop.f32.mrf.mxu0
        %11644 = vdwg.mxu0
        %11645 = vmatpush.bf16.msra.mxu0 %v7322
        %11646 = vmatpush.bf16.msra.mxu0 %v7320
        %11647 = vmatpush.bf16.msra.mxu0 %v7318
        %11648 = vmatpush.bf16.msra.mxu0 %v7316
        %11649 = vmatpush.bf16.msra.mxu0 %v7314
        %11650 = vmatpush.bf16.msra.mxu0 %v7312
        %11651 = vmatpush.bf16.msra.mxu0 %v7310
        %11652 = vmatpush.bf16.msra.mxu0 %v7308
        %11653 = vmatmul.bf16.gmra.mxu0 %v577
        %v11654 = vpop.f32.mrf.mxu0
        %v11655 = vadd.f32 %v11642, %v11654
        %v11656 = vpop.f32.mrf.mxu0
        %11657 = vdwg.mxu0
        %11658 = vmatpush.bf16.msra.mxu0 %v7338
        %11659 = vmatpush.bf16.msra.mxu0 %v7336
        %11660 = vmatpush.bf16.msra.mxu0 %v7334
        %11661 = vmatpush.bf16.msra.mxu0 %v7332
        %11662 = vmatpush.bf16.msra.mxu0 %v7330
        %11663 = vmatpush.bf16.msra.mxu0 %v7328
        %11664 = vmatpush.bf16.msra.mxu0 %v7326
        %11665 = vmatpush.bf16.msra.mxu0 %v7324
        %11666 = vmatmul.bf16.gmra.mxu0 %v578
        %v11667 = vpop.f32.mrf.mxu0
        %v11668 = vadd.f32 %v11655, %v11667
        %v11669 = vpop.f32.mrf.mxu0
        %11670 = vdwg.mxu0
        %11671 = vmatpush.bf16.msra.mxu0 %v7354
        %11672 = vmatpush.bf16.msra.mxu0 %v7352
        %11673 = vmatpush.bf16.msra.mxu0 %v7350
        %11674 = vmatpush.bf16.msra.mxu0 %v7348
        %11675 = vmatpush.bf16.msra.mxu0 %v7346
        %11676 = vmatpush.bf16.msra.mxu0 %v7344
        %11677 = vmatpush.bf16.msra.mxu0 %v7342
        %11678 = vmatpush.bf16.msra.mxu0 %v7340
        %11679 = vmatmul.bf16.gmra.mxu0 %v579
        %v11680 = vpop.f32.mrf.mxu0
        %v11681 = vadd.f32 %v11668, %v11680
        %v11682 = vpop.f32.mrf.mxu0
        %11683 = vdwg.mxu0
        %11684 = vmatpush.bf16.msra.mxu0 %v7370
        %11685 = vmatpush.bf16.msra.mxu0 %v7368
        %11686 = vmatpush.bf16.msra.mxu0 %v7366
        %11687 = vmatpush.bf16.msra.mxu0 %v7364
        %11688 = vmatpush.bf16.msra.mxu0 %v7362
        %11689 = vmatpush.bf16.msra.mxu0 %v7360
        %11690 = vmatpush.bf16.msra.mxu0 %v7358
        %11691 = vmatpush.bf16.msra.mxu0 %v7356
        %11692 = vmatmul.bf16.gmra.mxu0 %v580
        %v11693 = vpop.f32.mrf.mxu0
        %v11694 = vadd.f32 %v11681, %v11693
        %v11695 = vpop.f32.mrf.mxu0
        %11696 = vdwg.mxu0
        %11697 = vmatpush.bf16.msra.mxu0 %v7386
        %11698 = vmatpush.bf16.msra.mxu0 %v7384
        %11699 = vmatpush.bf16.msra.mxu0 %v7382
        %11700 = vmatpush.bf16.msra.mxu0 %v7380
        %11701 = vmatpush.bf16.msra.mxu0 %v7378
        %11702 = vmatpush.bf16.msra.mxu0 %v7376
        %11703 = vmatpush.bf16.msra.mxu0 %v7374
        %11704 = vmatpush.bf16.msra.mxu0 %v7372
        %11705 = vmatmul.bf16.gmra.mxu0 %v581
        %v11706 = vpop.f32.mrf.mxu0
        %v11707 = vadd.f32 %v11694, %v11706
        %v11708 = vpop.f32.mrf.mxu0
        %11709 = vdwg.mxu0
        %11710 = vmatpush.bf16.msra.mxu0 %v7402
        %11711 = vmatpush.bf16.msra.mxu0 %v7400
        %11712 = vmatpush.bf16.msra.mxu0 %v7398
        %11713 = vmatpush.bf16.msra.mxu0 %v7396
        %11714 = vmatpush.bf16.msra.mxu0 %v7394
        %11715 = vmatpush.bf16.msra.mxu0 %v7392
        %11716 = vmatpush.bf16.msra.mxu0 %v7390
        %11717 = vmatpush.bf16.msra.mxu0 %v7388
        %11718 = vmatmul.bf16.gmra.mxu0 %v582
        %v11719 = vpop.f32.mrf.mxu0
        %v11720 = vadd.f32 %v11707, %v11719
        %v11721 = vpop.f32.mrf.mxu0
        %11722 = vdwg.mxu0
        %11723 = vmatpush.bf16.msra.mxu0 %v7418
        %11724 = vmatpush.bf16.msra.mxu0 %v7416
        %11725 = vmatpush.bf16.msra.mxu0 %v7414
        %11726 = vmatpush.bf16.msra.mxu0 %v7412
        %11727 = vmatpush.bf16.msra.mxu0 %v7410
        %11728 = vmatpush.bf16.msra.mxu0 %v7408
        %11729 = vmatpush.bf16.msra.mxu0 %v7406
        %11730 = vmatpush.bf16.msra.mxu0 %v7404
        %11731 = vmatmul.bf16.gmra.mxu0 %v583
        %v11732 = vpop.f32.mrf.mxu0
        %v11733 = vadd.f32 %v11720, %v11732
        %v11734 = vpop.f32.mrf.mxu0
        %11735 = vdwg.mxu0
        %11736 = vmatpush.bf16.msra.mxu0 %v7434
        %11737 = vmatpush.bf16.msra.mxu0 %v7432
        %11738 = vmatpush.bf16.msra.mxu0 %v7430
        %11739 = vmatpush.bf16.msra.mxu0 %v7428
        %11740 = vmatpush.bf16.msra.mxu0 %v7426
        %11741 = vmatpush.bf16.msra.mxu0 %v7424
        %11742 = vmatpush.bf16.msra.mxu0 %v7422
        %11743 = vmatpush.bf16.msra.mxu0 %v7420
        %11744 = vmatmul.bf16.gmra.mxu0 %v584
        %v11745 = vpop.f32.mrf.mxu0
        %v11746 = vadd.f32 %v11733, %v11745
        %v11747 = vpop.f32.mrf.mxu0
        %11748 = vdwg.mxu0
        %11749 = vmatpush.bf16.msra.mxu0 %v7450
        %11750 = vmatpush.bf16.msra.mxu0 %v7448
        %11751 = vmatpush.bf16.msra.mxu0 %v7446
        %11752 = vmatpush.bf16.msra.mxu0 %v7444
        %11753 = vmatpush.bf16.msra.mxu0 %v7442
        %11754 = vmatpush.bf16.msra.mxu0 %v7440
        %11755 = vmatpush.bf16.msra.mxu0 %v7438
        %11756 = vmatpush.bf16.msra.mxu0 %v7436
        %11757 = vmatmul.bf16.gmra.mxu0 %v585
        %v11758 = vpop.f32.mrf.mxu0
        %v11759 = vadd.f32 %v11746, %v11758
        %v11760 = vpop.f32.mrf.mxu0
        %11761 = vdwg.mxu0
        %11762 = vmatpush.bf16.msra.mxu0 %v7466
        %11763 = vmatpush.bf16.msra.mxu0 %v7464
        %11764 = vmatpush.bf16.msra.mxu0 %v7462
        %11765 = vmatpush.bf16.msra.mxu0 %v7460
        %11766 = vmatpush.bf16.msra.mxu0 %v7458
        %11767 = vmatpush.bf16.msra.mxu0 %v7456
        %11768 = vmatpush.bf16.msra.mxu0 %v7454
        %11769 = vmatpush.bf16.msra.mxu0 %v7452
        %11770 = vmatmul.bf16.gmra.mxu0 %v586
        %v11771 = vpop.f32.mrf.mxu0
        %v11772 = vadd.f32 %v11759, %v11771
        %v11773 = vpop.f32.mrf.mxu0
        %11774 = vdwg.mxu0
        %11775 = vmatpush.bf16.msra.mxu0 %v7482
        %11776 = vmatpush.bf16.msra.mxu0 %v7480
        %11777 = vmatpush.bf16.msra.mxu0 %v7478
        %11778 = vmatpush.bf16.msra.mxu0 %v7476
        %11779 = vmatpush.bf16.msra.mxu0 %v7474
        %11780 = vmatpush.bf16.msra.mxu0 %v7472
        %11781 = vmatpush.bf16.msra.mxu0 %v7470
        %11782 = vmatpush.bf16.msra.mxu0 %v7468
        %11783 = vmatmul.bf16.gmra.mxu0 %v587
        %v11784 = vpop.f32.mrf.mxu0
        %v11785 = vadd.f32 %v11772, %v11784
        %v11786 = vpop.f32.mrf.mxu0
        %11787 = vdwg.mxu0
        %11788 = vmatpush.bf16.msra.mxu0 %v7498
        %11789 = vmatpush.bf16.msra.mxu0 %v7496
        %11790 = vmatpush.bf16.msra.mxu0 %v7494
        %11791 = vmatpush.bf16.msra.mxu0 %v7492
        %11792 = vmatpush.bf16.msra.mxu0 %v7490
        %11793 = vmatpush.bf16.msra.mxu0 %v7488
        %11794 = vmatpush.bf16.msra.mxu0 %v7486
        %11795 = vmatpush.bf16.msra.mxu0 %v7484
        %11796 = vmatmul.bf16.gmra.mxu0 %v588
        %v11797 = vpop.f32.mrf.mxu0
        %v11798 = vadd.f32 %v11785, %v11797
        %v11799 = vpop.f32.mrf.mxu0
        %11800 = vdwg.mxu0
        %11801 = vmatpush.bf16.msra.mxu0 %v7514
        %11802 = vmatpush.bf16.msra.mxu0 %v7512
        %11803 = vmatpush.bf16.msra.mxu0 %v7510
        %11804 = vmatpush.bf16.msra.mxu0 %v7508
        %11805 = vmatpush.bf16.msra.mxu0 %v7506
        %11806 = vmatpush.bf16.msra.mxu0 %v7504
        %11807 = vmatpush.bf16.msra.mxu0 %v7502
        %11808 = vmatpush.bf16.msra.mxu0 %v7500
        %11809 = vmatmul.bf16.gmra.mxu0 %v589
        %v11810 = vpop.f32.mrf.mxu0
        %v11811 = vadd.f32 %v11798, %v11810
        %v11812 = vpop.f32.mrf.mxu0
        %11813 = vdwg.mxu0
        %11814 = vmatpush.bf16.msra.mxu0 %v7530
        %11815 = vmatpush.bf16.msra.mxu0 %v7528
        %11816 = vmatpush.bf16.msra.mxu0 %v7526
        %11817 = vmatpush.bf16.msra.mxu0 %v7524
        %11818 = vmatpush.bf16.msra.mxu0 %v7522
        %11819 = vmatpush.bf16.msra.mxu0 %v7520
        %11820 = vmatpush.bf16.msra.mxu0 %v7518
        %11821 = vmatpush.bf16.msra.mxu0 %v7516
        %11822 = vmatmul.bf16.gmra.mxu0 %v590
        %v11823 = vpop.f32.mrf.mxu0
        %v11824 = vadd.f32 %v11811, %v11823
        %v11825 = vpop.f32.mrf.mxu0
        %11826 = vdwg.mxu0
        %11827 = vmatpush.bf16.msra.mxu0 %v7546
        %11828 = vmatpush.bf16.msra.mxu0 %v7544
        %11829 = vmatpush.bf16.msra.mxu0 %v7542
        %11830 = vmatpush.bf16.msra.mxu0 %v7540
        %11831 = vmatpush.bf16.msra.mxu0 %v7538
        %11832 = vmatpush.bf16.msra.mxu0 %v7536
        %11833 = vmatpush.bf16.msra.mxu0 %v7534
        %11834 = vmatpush.bf16.msra.mxu0 %v7532
        %11835 = vmatmul.bf16.gmra.mxu0 %v591
        %v11836 = vpop.f32.mrf.mxu0
        %v11837 = vadd.f32 %v11824, %v11836
        %v11838 = vpop.f32.mrf.mxu0
        %11839 = vdwg.mxu0
        %11840 = vmatpush.bf16.msra.mxu0 %v7562
        %11841 = vmatpush.bf16.msra.mxu0 %v7560
        %11842 = vmatpush.bf16.msra.mxu0 %v7558
        %11843 = vmatpush.bf16.msra.mxu0 %v7556
        %11844 = vmatpush.bf16.msra.mxu0 %v7554
        %11845 = vmatpush.bf16.msra.mxu0 %v7552
        %11846 = vmatpush.bf16.msra.mxu0 %v7550
        %11847 = vmatpush.bf16.msra.mxu0 %v7548
        %11848 = vmatmul.bf16.gmra.mxu0 %v592
        %v11849 = vpop.f32.mrf.mxu0
        %v11850 = vadd.f32 %v11837, %v11849
        %v11851 = vpop.f32.mrf.mxu0
        %11852 = vdwg.mxu0
        %11853 = vmatpush.bf16.msra.mxu0 %v7578
        %11854 = vmatpush.bf16.msra.mxu0 %v7576
        %11855 = vmatpush.bf16.msra.mxu0 %v7574
        %11856 = vmatpush.bf16.msra.mxu0 %v7572
        %11857 = vmatpush.bf16.msra.mxu0 %v7570
        %11858 = vmatpush.bf16.msra.mxu0 %v7568
        %11859 = vmatpush.bf16.msra.mxu0 %v7566
        %11860 = vmatpush.bf16.msra.mxu0 %v7564
        %11861 = vmatmul.bf16.gmra.mxu0 %v593
        %v11862 = vpop.f32.mrf.mxu0
        %v11863 = vadd.f32 %v11850, %v11862
        %v11864 = vpop.f32.mrf.mxu0
        %11865 = vdwg.mxu0
        %11866 = vmatpush.bf16.msra.mxu0 %v7594
        %11867 = vmatpush.bf16.msra.mxu0 %v7592
        %11868 = vmatpush.bf16.msra.mxu0 %v7590
        %11869 = vmatpush.bf16.msra.mxu0 %v7588
        %11870 = vmatpush.bf16.msra.mxu0 %v7586
        %11871 = vmatpush.bf16.msra.mxu0 %v7584
        %11872 = vmatpush.bf16.msra.mxu0 %v7582
        %11873 = vmatpush.bf16.msra.mxu0 %v7580
        %11874 = vmatmul.bf16.gmra.mxu0 %v594
        %v11875 = vpop.f32.mrf.mxu0
        %v11876 = vadd.f32 %v11863, %v11875
        %v11877 = vpop.f32.mrf.mxu0
        %11878 = vdwg.mxu0
        %11879 = vmatpush.bf16.msra.mxu0 %v7610
        %11880 = vmatpush.bf16.msra.mxu0 %v7608
        %11881 = vmatpush.bf16.msra.mxu0 %v7606
        %11882 = vmatpush.bf16.msra.mxu0 %v7604
        %11883 = vmatpush.bf16.msra.mxu0 %v7602
        %11884 = vmatpush.bf16.msra.mxu0 %v7600
        %11885 = vmatpush.bf16.msra.mxu0 %v7598
        %11886 = vmatpush.bf16.msra.mxu0 %v7596
        %11887 = vmatmul.bf16.gmra.mxu0 %v595
        %v11888 = vpop.f32.mrf.mxu0
        %v11889 = vadd.f32 %v11876, %v11888
        %v11890 = vpop.f32.mrf.mxu0
        %11891 = vdwg.mxu0
        %11892 = vmatpush.bf16.msra.mxu0 %v7626
        %11893 = vmatpush.bf16.msra.mxu0 %v7624
        %11894 = vmatpush.bf16.msra.mxu0 %v7622
        %11895 = vmatpush.bf16.msra.mxu0 %v7620
        %11896 = vmatpush.bf16.msra.mxu0 %v7618
        %11897 = vmatpush.bf16.msra.mxu0 %v7616
        %11898 = vmatpush.bf16.msra.mxu0 %v7614
        %11899 = vmatpush.bf16.msra.mxu0 %v7612
        %11900 = vmatmul.bf16.gmra.mxu0 %v596
        %v11901 = vpop.f32.mrf.mxu0
        %v11902 = vadd.f32 %v11889, %v11901
        %v11903 = vpop.f32.mrf.mxu0
        %11904 = vdwg.mxu0
        %11905 = vmatpush.bf16.msra.mxu0 %v7642
        %11906 = vmatpush.bf16.msra.mxu0 %v7640
        %11907 = vmatpush.bf16.msra.mxu0 %v7638
        %11908 = vmatpush.bf16.msra.mxu0 %v7636
        %11909 = vmatpush.bf16.msra.mxu0 %v7634
        %11910 = vmatpush.bf16.msra.mxu0 %v7632
        %11911 = vmatpush.bf16.msra.mxu0 %v7630
        %11912 = vmatpush.bf16.msra.mxu0 %v7628
        %11913 = vmatmul.bf16.gmra.mxu0 %v597
        %v11914 = vpop.f32.mrf.mxu0
        %v11915 = vadd.f32 %v11902, %v11914
        %v11916 = vpop.f32.mrf.mxu0
        %11917 = vdwg.mxu0
        %11918 = vmatpush.bf16.msra.mxu0 %v7658
        %11919 = vmatpush.bf16.msra.mxu0 %v7656
        %11920 = vmatpush.bf16.msra.mxu0 %v7654
        %11921 = vmatpush.bf16.msra.mxu0 %v7652
        %11922 = vmatpush.bf16.msra.mxu0 %v7650
        %11923 = vmatpush.bf16.msra.mxu0 %v7648
        %11924 = vmatpush.bf16.msra.mxu0 %v7646
        %11925 = vmatpush.bf16.msra.mxu0 %v7644
        %11926 = vmatmul.bf16.gmra.mxu0 %v598
        %v11927 = vpop.f32.mrf.mxu0
        %v11928 = vadd.f32 %v11915, %v11927
        %v11929 = vpop.f32.mrf.mxu0
        %11930 = vdwg.mxu0
        %11931 = vmatpush.bf16.msra.mxu0 %v7674
        %11932 = vmatpush.bf16.msra.mxu0 %v7672
        %11933 = vmatpush.bf16.msra.mxu0 %v7670
        %11934 = vmatpush.bf16.msra.mxu0 %v7668
        %11935 = vmatpush.bf16.msra.mxu0 %v7666
        %11936 = vmatpush.bf16.msra.mxu0 %v7664
        %11937 = vmatpush.bf16.msra.mxu0 %v7662
        %11938 = vmatpush.bf16.msra.mxu0 %v7660
        %11939 = vmatmul.bf16.gmra.mxu0 %v599
        %v11940 = vpop.f32.mrf.mxu0
        %v11941 = vadd.f32 %v11928, %v11940
        %v11942 = vpop.f32.mrf.mxu0
        %11943 = vdwg.mxu0
        %11944 = vmatpush.bf16.msra.mxu0 %v7690
        %11945 = vmatpush.bf16.msra.mxu0 %v7688
        %11946 = vmatpush.bf16.msra.mxu0 %v7686
        %11947 = vmatpush.bf16.msra.mxu0 %v7684
        %11948 = vmatpush.bf16.msra.mxu0 %v7682
        %11949 = vmatpush.bf16.msra.mxu0 %v7680
        %11950 = vmatpush.bf16.msra.mxu0 %v7678
        %11951 = vmatpush.bf16.msra.mxu0 %v7676
        %11952 = vmatmul.bf16.gmra.mxu0 %v600
        %v11953 = vpop.f32.mrf.mxu0
        %v11954 = vadd.f32 %v11941, %v11953
        %v11955 = vpop.f32.mrf.mxu0
        %11956 = vdwg.mxu0
        %11957 = vmatpush.bf16.msra.mxu0 %v7706
        %11958 = vmatpush.bf16.msra.mxu0 %v7704
        %11959 = vmatpush.bf16.msra.mxu0 %v7702
        %11960 = vmatpush.bf16.msra.mxu0 %v7700
        %11961 = vmatpush.bf16.msra.mxu0 %v7698
        %11962 = vmatpush.bf16.msra.mxu0 %v7696
        %11963 = vmatpush.bf16.msra.mxu0 %v7694
        %11964 = vmatpush.bf16.msra.mxu0 %v7692
        %11965 = vmatmul.bf16.gmra.mxu0 %v601
        %v11966 = vpop.f32.mrf.mxu0
        %v11967 = vadd.f32 %v11954, %v11966
        %v11968 = vpop.f32.mrf.mxu0
        %11969 = vdwg.mxu0
        %11970 = vmatpush.bf16.msra.mxu0 %v7722
        %11971 = vmatpush.bf16.msra.mxu0 %v7720
        %11972 = vmatpush.bf16.msra.mxu0 %v7718
        %11973 = vmatpush.bf16.msra.mxu0 %v7716
        %11974 = vmatpush.bf16.msra.mxu0 %v7714
        %11975 = vmatpush.bf16.msra.mxu0 %v7712
        %11976 = vmatpush.bf16.msra.mxu0 %v7710
        %11977 = vmatpush.bf16.msra.mxu0 %v7708
        %11978 = vmatmul.bf16.gmra.mxu0 %v602
        %v11979 = vpop.f32.mrf.mxu0
        %v11980 = vadd.f32 %v11967, %v11979
        %v11981 = vpop.f32.mrf.mxu0
        %11982 = vdwg.mxu0
        %11983 = vmatpush.bf16.msra.mxu0 %v7738
        %11984 = vmatpush.bf16.msra.mxu0 %v7736
        %11985 = vmatpush.bf16.msra.mxu0 %v7734
        %11986 = vmatpush.bf16.msra.mxu0 %v7732
        %11987 = vmatpush.bf16.msra.mxu0 %v7730
        %11988 = vmatpush.bf16.msra.mxu0 %v7728
        %11989 = vmatpush.bf16.msra.mxu0 %v7726
        %11990 = vmatpush.bf16.msra.mxu0 %v7724
        %11991 = vmatmul.bf16.gmra.mxu0 %v603
        %v11992 = vpop.f32.mrf.mxu0
        %v11993 = vadd.f32 %v11980, %v11992
        %v11994 = vpop.f32.mrf.mxu0
        %11995 = vdwg.mxu0
        %11996 = vmatpush.bf16.msra.mxu0 %v7754
        %11997 = vmatpush.bf16.msra.mxu0 %v7752
        %11998 = vmatpush.bf16.msra.mxu0 %v7750
        %11999 = vmatpush.bf16.msra.mxu0 %v7748
        %12000 = vmatpush.bf16.msra.mxu0 %v7746
        %12001 = vmatpush.bf16.msra.mxu0 %v7744
        %12002 = vmatpush.bf16.msra.mxu0 %v7742
        %12003 = vmatpush.bf16.msra.mxu0 %v7740
        %12004 = vmatmul.bf16.gmra.mxu0 %v604
        %v12005 = vpop.f32.mrf.mxu0
        %v12006 = vadd.f32 %v11993, %v12005
        %v12007 = vpop.f32.mrf.mxu0
        %12008 = vdwg.mxu0
        %12009 = vmatpush.bf16.msra.mxu0 %v7770
        %12010 = vmatpush.bf16.msra.mxu0 %v7768
        %12011 = vmatpush.bf16.msra.mxu0 %v7766
        %12012 = vmatpush.bf16.msra.mxu0 %v7764
        %12013 = vmatpush.bf16.msra.mxu0 %v7762
        %12014 = vmatpush.bf16.msra.mxu0 %v7760
        %12015 = vmatpush.bf16.msra.mxu0 %v7758
        %12016 = vmatpush.bf16.msra.mxu0 %v7756
        %12017 = vmatmul.bf16.gmra.mxu0 %v605
        %v12018 = vpop.f32.mrf.mxu0
        %v12019 = vadd.f32 %v12006, %v12018
        %v12020 = vpop.f32.mrf.mxu0
        %12021 = vdwg.mxu0
        %12022 = vmatpush.bf16.msra.mxu0 %v7786
        %12023 = vmatpush.bf16.msra.mxu0 %v7784
        %12024 = vmatpush.bf16.msra.mxu0 %v7782
        %12025 = vmatpush.bf16.msra.mxu0 %v7780
        %12026 = vmatpush.bf16.msra.mxu0 %v7778
        %12027 = vmatpush.bf16.msra.mxu0 %v7776
        %12028 = vmatpush.bf16.msra.mxu0 %v7774
        %12029 = vmatpush.bf16.msra.mxu0 %v7772
        %12030 = vmatmul.bf16.gmra.mxu0 %v606
        %v12031 = vpop.f32.mrf.mxu0
        %v12032 = vadd.f32 %v12019, %v12031
        %v12033 = vpop.f32.mrf.mxu0
        %12034 = vdwg.mxu0
        %12035 = vmatpush.bf16.msra.mxu0 %v7802
        %12036 = vmatpush.bf16.msra.mxu0 %v7800
        %12037 = vmatpush.bf16.msra.mxu0 %v7798
        %12038 = vmatpush.bf16.msra.mxu0 %v7796
        %12039 = vmatpush.bf16.msra.mxu0 %v7794
        %12040 = vmatpush.bf16.msra.mxu0 %v7792
        %12041 = vmatpush.bf16.msra.mxu0 %v7790
        %12042 = vmatpush.bf16.msra.mxu0 %v7788
        %12043 = vmatmul.bf16.gmra.mxu0 %v607
        %v12044 = vpop.f32.mrf.mxu0
        %v12045 = vadd.f32 %v12032, %v12044
        %v12046 = vpop.f32.mrf.mxu0
        %12047 = vdwg.mxu0
        %12048 = vmatpush.bf16.msra.mxu0 %v7818
        %12049 = vmatpush.bf16.msra.mxu0 %v7816
        %12050 = vmatpush.bf16.msra.mxu0 %v7814
        %12051 = vmatpush.bf16.msra.mxu0 %v7812
        %12052 = vmatpush.bf16.msra.mxu0 %v7810
        %12053 = vmatpush.bf16.msra.mxu0 %v7808
        %12054 = vmatpush.bf16.msra.mxu0 %v7806
        %12055 = vmatpush.bf16.msra.mxu0 %v7804
        %12056 = vmatmul.bf16.gmra.mxu0 %v608
        %v12057 = vpop.f32.mrf.mxu0
        %v12058 = vadd.f32 %v12045, %v12057
        %v12059 = vpop.f32.mrf.mxu0
        %12060 = vdwg.mxu0
        %12061 = vmatpush.bf16.msra.mxu0 %v7834
        %12062 = vmatpush.bf16.msra.mxu0 %v7832
        %12063 = vmatpush.bf16.msra.mxu0 %v7830
        %12064 = vmatpush.bf16.msra.mxu0 %v7828
        %12065 = vmatpush.bf16.msra.mxu0 %v7826
        %12066 = vmatpush.bf16.msra.mxu0 %v7824
        %12067 = vmatpush.bf16.msra.mxu0 %v7822
        %12068 = vmatpush.bf16.msra.mxu0 %v7820
        %12069 = vmatmul.bf16.gmra.mxu0 %v609
        %v12070 = vpop.f32.mrf.mxu0
        %v12071 = vadd.f32 %v12058, %v12070
        %v12072 = vpop.f32.mrf.mxu0
        %12073 = vdwg.mxu0
        %12074 = vmatpush.bf16.msra.mxu0 %v7850
        %12075 = vmatpush.bf16.msra.mxu0 %v7848
        %12076 = vmatpush.bf16.msra.mxu0 %v7846
        %12077 = vmatpush.bf16.msra.mxu0 %v7844
        %12078 = vmatpush.bf16.msra.mxu0 %v7842
        %12079 = vmatpush.bf16.msra.mxu0 %v7840
        %12080 = vmatpush.bf16.msra.mxu0 %v7838
        %12081 = vmatpush.bf16.msra.mxu0 %v7836
        %12082 = vmatmul.bf16.gmra.mxu0 %v610
        %v12083 = vpop.f32.mrf.mxu0
        %v12084 = vadd.f32 %v12071, %v12083
        %v12085 = vpop.f32.mrf.mxu0
        %12086 = vdwg.mxu0
        %12087 = vmatpush.bf16.msra.mxu0 %v7866
        %12088 = vmatpush.bf16.msra.mxu0 %v7864
        %12089 = vmatpush.bf16.msra.mxu0 %v7862
        %12090 = vmatpush.bf16.msra.mxu0 %v7860
        %12091 = vmatpush.bf16.msra.mxu0 %v7858
        %12092 = vmatpush.bf16.msra.mxu0 %v7856
        %12093 = vmatpush.bf16.msra.mxu0 %v7854
        %12094 = vmatpush.bf16.msra.mxu0 %v7852
        %12095 = vmatmul.bf16.gmra.mxu0 %v611
        %v12096 = vpop.f32.mrf.mxu0
        %v12097 = vadd.f32 %v12084, %v12096
        %v12098 = vpop.f32.mrf.mxu0
        %12099 = vdwg.mxu0
        %12100 = vmatpush.bf16.msra.mxu0 %v7882
        %12101 = vmatpush.bf16.msra.mxu0 %v7880
        %12102 = vmatpush.bf16.msra.mxu0 %v7878
        %12103 = vmatpush.bf16.msra.mxu0 %v7876
        %12104 = vmatpush.bf16.msra.mxu0 %v7874
        %12105 = vmatpush.bf16.msra.mxu0 %v7872
        %12106 = vmatpush.bf16.msra.mxu0 %v7870
        %12107 = vmatpush.bf16.msra.mxu0 %v7868
        %12108 = vmatmul.bf16.gmra.mxu0 %v612
        %v12109 = vpop.f32.mrf.mxu0
        %v12110 = vadd.f32 %v12097, %v12109
        %v12111 = vpop.f32.mrf.mxu0
        %12112 = vdwg.mxu0
        %12113 = vmatpush.bf16.msra.mxu0 %v7898
        %12114 = vmatpush.bf16.msra.mxu0 %v7896
        %12115 = vmatpush.bf16.msra.mxu0 %v7894
        %12116 = vmatpush.bf16.msra.mxu0 %v7892
        %12117 = vmatpush.bf16.msra.mxu0 %v7890
        %12118 = vmatpush.bf16.msra.mxu0 %v7888
        %12119 = vmatpush.bf16.msra.mxu0 %v7886
        %12120 = vmatpush.bf16.msra.mxu0 %v7884
        %12121 = vmatmul.bf16.gmra.mxu0 %v613
        %v12122 = vpop.f32.mrf.mxu0
        %v12123 = vadd.f32 %v12110, %v12122
        %v12124 = vpop.f32.mrf.mxu0
        %12125 = vdwg.mxu0
        %12126 = vmatpush.bf16.msra.mxu0 %v7914
        %12127 = vmatpush.bf16.msra.mxu0 %v7912
        %12128 = vmatpush.bf16.msra.mxu0 %v7910
        %12129 = vmatpush.bf16.msra.mxu0 %v7908
        %12130 = vmatpush.bf16.msra.mxu0 %v7906
        %12131 = vmatpush.bf16.msra.mxu0 %v7904
        %12132 = vmatpush.bf16.msra.mxu0 %v7902
        %12133 = vmatpush.bf16.msra.mxu0 %v7900
        %12134 = vmatmul.bf16.gmra.mxu0 %v614
        %v12135 = vpop.f32.mrf.mxu0
        %v12136 = vadd.f32 %v12123, %v12135
        %v12137 = vpop.f32.mrf.mxu0
        %12138 = vdwg.mxu0
        %12139 = vmatpush.bf16.msra.mxu0 %v7930
        %12140 = vmatpush.bf16.msra.mxu0 %v7928
        %12141 = vmatpush.bf16.msra.mxu0 %v7926
        %12142 = vmatpush.bf16.msra.mxu0 %v7924
        %12143 = vmatpush.bf16.msra.mxu0 %v7922
        %12144 = vmatpush.bf16.msra.mxu0 %v7920
        %12145 = vmatpush.bf16.msra.mxu0 %v7918
        %12146 = vmatpush.bf16.msra.mxu0 %v7916
        %12147 = vmatmul.bf16.gmra.mxu0 %v615
        %v12148 = vpop.f32.mrf.mxu0
        %v12149 = vadd.f32 %v12136, %v12148
        %v12150 = vpop.f32.mrf.mxu0
        %12151 = vdwg.mxu0
        %12152 = vmatpush.bf16.msra.mxu0 %v7946
        %12153 = vmatpush.bf16.msra.mxu0 %v7944
        %12154 = vmatpush.bf16.msra.mxu0 %v7942
        %12155 = vmatpush.bf16.msra.mxu0 %v7940
        %12156 = vmatpush.bf16.msra.mxu0 %v7938
        %12157 = vmatpush.bf16.msra.mxu0 %v7936
        %12158 = vmatpush.bf16.msra.mxu0 %v7934
        %12159 = vmatpush.bf16.msra.mxu0 %v7932
        %12160 = vmatmul.bf16.gmra.mxu0 %v616
        %v12161 = vpop.f32.mrf.mxu0
        %v12162 = vadd.f32 %v12149, %v12161
        %v12163 = vpop.f32.mrf.mxu0
        %12164 = vdwg.mxu0
        %12165 = vmatpush.bf16.msra.mxu0 %v7962
        %12166 = vmatpush.bf16.msra.mxu0 %v7960
        %12167 = vmatpush.bf16.msra.mxu0 %v7958
        %12168 = vmatpush.bf16.msra.mxu0 %v7956
        %12169 = vmatpush.bf16.msra.mxu0 %v7954
        %12170 = vmatpush.bf16.msra.mxu0 %v7952
        %12171 = vmatpush.bf16.msra.mxu0 %v7950
        %12172 = vmatpush.bf16.msra.mxu0 %v7948
        %12173 = vmatmul.bf16.gmra.mxu0 %v617
        %v12174 = vpop.f32.mrf.mxu0
        %v12175 = vadd.f32 %v12162, %v12174
        %v12176 = vpop.f32.mrf.mxu0
        %12177 = vdwg.mxu0
        %12178 = vmatpush.bf16.msra.mxu0 %v7978
        %12179 = vmatpush.bf16.msra.mxu0 %v7976
        %12180 = vmatpush.bf16.msra.mxu0 %v7974
        %12181 = vmatpush.bf16.msra.mxu0 %v7972
        %12182 = vmatpush.bf16.msra.mxu0 %v7970
        %12183 = vmatpush.bf16.msra.mxu0 %v7968
        %12184 = vmatpush.bf16.msra.mxu0 %v7966
        %12185 = vmatpush.bf16.msra.mxu0 %v7964
        %12186 = vmatmul.bf16.gmra.mxu0 %v618
        %v12187 = vpop.f32.mrf.mxu0
        %v12188 = vadd.f32 %v12175, %v12187
        %v12189 = vpop.f32.mrf.mxu0
        %12190 = vdwg.mxu0
        %12191 = vmatpush.bf16.msra.mxu0 %v7994
        %12192 = vmatpush.bf16.msra.mxu0 %v7992
        %12193 = vmatpush.bf16.msra.mxu0 %v7990
        %12194 = vmatpush.bf16.msra.mxu0 %v7988
        %12195 = vmatpush.bf16.msra.mxu0 %v7986
        %12196 = vmatpush.bf16.msra.mxu0 %v7984
        %12197 = vmatpush.bf16.msra.mxu0 %v7982
        %12198 = vmatpush.bf16.msra.mxu0 %v7980
        %12199 = vmatmul.bf16.gmra.mxu0 %v619
        %v12200 = vpop.f32.mrf.mxu0
        %v12201 = vadd.f32 %v12188, %v12200
        %v12202 = vpop.f32.mrf.mxu0
        %12203 = vdwg.mxu0
        %12204 = vmatpush.bf16.msra.mxu0 %v8010
        %12205 = vmatpush.bf16.msra.mxu0 %v8008
        %12206 = vmatpush.bf16.msra.mxu0 %v8006
        %12207 = vmatpush.bf16.msra.mxu0 %v8004
        %12208 = vmatpush.bf16.msra.mxu0 %v8002
        %12209 = vmatpush.bf16.msra.mxu0 %v8000
        %12210 = vmatpush.bf16.msra.mxu0 %v7998
        %12211 = vmatpush.bf16.msra.mxu0 %v7996
        %12212 = vmatmul.bf16.gmra.mxu0 %v620
        %v12213 = vpop.f32.mrf.mxu0
        %v12214 = vadd.f32 %v12201, %v12213
        %v12215 = vpop.f32.mrf.mxu0
        %12216 = vdwg.mxu0
        %12217 = vmatpush.bf16.msra.mxu0 %v8026
        %12218 = vmatpush.bf16.msra.mxu0 %v8024
        %12219 = vmatpush.bf16.msra.mxu0 %v8022
        %12220 = vmatpush.bf16.msra.mxu0 %v8020
        %12221 = vmatpush.bf16.msra.mxu0 %v8018
        %12222 = vmatpush.bf16.msra.mxu0 %v8016
        %12223 = vmatpush.bf16.msra.mxu0 %v8014
        %12224 = vmatpush.bf16.msra.mxu0 %v8012
        %12225 = vmatmul.bf16.gmra.mxu0 %v621
        %v12226 = vpop.f32.mrf.mxu0
        %v12227 = vadd.f32 %v12214, %v12226
        %v12228 = vpop.f32.mrf.mxu0
        %12229 = vdwg.mxu0
        %12230 = vmatpush.bf16.msra.mxu0 %v8042
        %12231 = vmatpush.bf16.msra.mxu0 %v8040
        %12232 = vmatpush.bf16.msra.mxu0 %v8038
        %12233 = vmatpush.bf16.msra.mxu0 %v8036
        %12234 = vmatpush.bf16.msra.mxu0 %v8034
        %12235 = vmatpush.bf16.msra.mxu0 %v8032
        %12236 = vmatpush.bf16.msra.mxu0 %v8030
        %12237 = vmatpush.bf16.msra.mxu0 %v8028
        %12238 = vmatmul.bf16.gmra.mxu0 %v622
        %v12239 = vpop.f32.mrf.mxu0
        %v12240 = vadd.f32 %v12227, %v12239
        %v12241 = vpop.f32.mrf.mxu0
        %12242 = vdwg.mxu0
        %12243 = vmatpush.bf16.msra.mxu0 %v8058
        %12244 = vmatpush.bf16.msra.mxu0 %v8056
        %12245 = vmatpush.bf16.msra.mxu0 %v8054
        %12246 = vmatpush.bf16.msra.mxu0 %v8052
        %12247 = vmatpush.bf16.msra.mxu0 %v8050
        %12248 = vmatpush.bf16.msra.mxu0 %v8048
        %12249 = vmatpush.bf16.msra.mxu0 %v8046
        %12250 = vmatpush.bf16.msra.mxu0 %v8044
        %12251 = vmatmul.bf16.gmra.mxu0 %v623
        %v12252 = vpop.f32.mrf.mxu0
        %v12253 = vadd.f32 %v12240, %v12252
        %v12254 = vpop.f32.mrf.mxu0
        %12255 = vdwg.mxu0
        %12256 = vmatpush.bf16.msra.mxu0 %v8074
        %12257 = vmatpush.bf16.msra.mxu0 %v8072
        %12258 = vmatpush.bf16.msra.mxu0 %v8070
        %12259 = vmatpush.bf16.msra.mxu0 %v8068
        %12260 = vmatpush.bf16.msra.mxu0 %v8066
        %12261 = vmatpush.bf16.msra.mxu0 %v8064
        %12262 = vmatpush.bf16.msra.mxu0 %v8062
        %12263 = vmatpush.bf16.msra.mxu0 %v8060
        %12264 = vmatmul.bf16.gmra.mxu0 %v624
        %v12265 = vpop.f32.mrf.mxu0
        %v12266 = vadd.f32 %v12253, %v12265
        %v12267 = vpop.f32.mrf.mxu0
        %12268 = vdwg.mxu0
        %12269 = vmatpush.bf16.msra.mxu0 %v8090
        %12270 = vmatpush.bf16.msra.mxu0 %v8088
        %12271 = vmatpush.bf16.msra.mxu0 %v8086
        %12272 = vmatpush.bf16.msra.mxu0 %v8084
        %12273 = vmatpush.bf16.msra.mxu0 %v8082
        %12274 = vmatpush.bf16.msra.mxu0 %v8080
        %12275 = vmatpush.bf16.msra.mxu0 %v8078
        %12276 = vmatpush.bf16.msra.mxu0 %v8076
        %12277 = vmatmul.bf16.gmra.mxu0 %v625
        %v12278 = vpop.f32.mrf.mxu0
        %v12279 = vadd.f32 %v12266, %v12278
        %v12280 = vpop.f32.mrf.mxu0
        %12281 = vdwg.mxu0
        %12282 = vmatpush.bf16.msra.mxu0 %v8106
        %12283 = vmatpush.bf16.msra.mxu0 %v8104
        %12284 = vmatpush.bf16.msra.mxu0 %v8102
        %12285 = vmatpush.bf16.msra.mxu0 %v8100
        %12286 = vmatpush.bf16.msra.mxu0 %v8098
        %12287 = vmatpush.bf16.msra.mxu0 %v8096
        %12288 = vmatpush.bf16.msra.mxu0 %v8094
        %12289 = vmatpush.bf16.msra.mxu0 %v8092
        %12290 = vmatmul.bf16.gmra.mxu0 %v626
        %v12291 = vpop.f32.mrf.mxu0
        %v12292 = vadd.f32 %v12279, %v12291
        %v12293 = vpop.f32.mrf.mxu0
        %12294 = vdwg.mxu0
        %12295 = vmatpush.bf16.msra.mxu0 %v8122
        %12296 = vmatpush.bf16.msra.mxu0 %v8120
        %12297 = vmatpush.bf16.msra.mxu0 %v8118
        %12298 = vmatpush.bf16.msra.mxu0 %v8116
        %12299 = vmatpush.bf16.msra.mxu0 %v8114
        %12300 = vmatpush.bf16.msra.mxu0 %v8112
        %12301 = vmatpush.bf16.msra.mxu0 %v8110
        %12302 = vmatpush.bf16.msra.mxu0 %v8108
        %12303 = vmatmul.bf16.gmra.mxu0 %v627
        %v12304 = vpop.f32.mrf.mxu0
        %v12305 = vadd.f32 %v12292, %v12304
        %v12306 = vpop.f32.mrf.mxu0
        %12307 = vdwg.mxu0
        %12308 = vmatpush.bf16.msra.mxu0 %v8138
        %12309 = vmatpush.bf16.msra.mxu0 %v8136
        %12310 = vmatpush.bf16.msra.mxu0 %v8134
        %12311 = vmatpush.bf16.msra.mxu0 %v8132
        %12312 = vmatpush.bf16.msra.mxu0 %v8130
        %12313 = vmatpush.bf16.msra.mxu0 %v8128
        %12314 = vmatpush.bf16.msra.mxu0 %v8126
        %12315 = vmatpush.bf16.msra.mxu0 %v8124
        %12316 = vmatmul.bf16.gmra.mxu0 %v628
        %v12317 = vpop.f32.mrf.mxu0
        %v12318 = vadd.f32 %v12305, %v12317
        %v12319 = vpop.f32.mrf.mxu0
        %12320 = vdwg.mxu0
        %12321 = vmatpush.bf16.msra.mxu0 %v8154
        %12322 = vmatpush.bf16.msra.mxu0 %v8152
        %12323 = vmatpush.bf16.msra.mxu0 %v8150
        %12324 = vmatpush.bf16.msra.mxu0 %v8148
        %12325 = vmatpush.bf16.msra.mxu0 %v8146
        %12326 = vmatpush.bf16.msra.mxu0 %v8144
        %12327 = vmatpush.bf16.msra.mxu0 %v8142
        %12328 = vmatpush.bf16.msra.mxu0 %v8140
        %12329 = vmatmul.bf16.gmra.mxu0 %v629
        %v12330 = vpop.f32.mrf.mxu0
        %v12331 = vadd.f32 %v12318, %v12330
        %v12332 = vpop.f32.mrf.mxu0
        %12333 = vdwg.mxu0
        %12334 = vmatpush.bf16.msra.mxu0 %v8170
        %12335 = vmatpush.bf16.msra.mxu0 %v8168
        %12336 = vmatpush.bf16.msra.mxu0 %v8166
        %12337 = vmatpush.bf16.msra.mxu0 %v8164
        %12338 = vmatpush.bf16.msra.mxu0 %v8162
        %12339 = vmatpush.bf16.msra.mxu0 %v8160
        %12340 = vmatpush.bf16.msra.mxu0 %v8158
        %12341 = vmatpush.bf16.msra.mxu0 %v8156
        %12342 = vmatmul.bf16.gmra.mxu0 %v630
        %v12343 = vpop.f32.mrf.mxu0
        %v12344 = vadd.f32 %v12331, %v12343
        %v12345 = vpop.f32.mrf.mxu0
        %12346 = vdwg.mxu0
        %12347 = vmatpush.bf16.msra.mxu0 %v8186
        %12348 = vmatpush.bf16.msra.mxu0 %v8184
        %12349 = vmatpush.bf16.msra.mxu0 %v8182
        %12350 = vmatpush.bf16.msra.mxu0 %v8180
        %12351 = vmatpush.bf16.msra.mxu0 %v8178
        %12352 = vmatpush.bf16.msra.mxu0 %v8176
        %12353 = vmatpush.bf16.msra.mxu0 %v8174
        %12354 = vmatpush.bf16.msra.mxu0 %v8172
        %12355 = vmatmul.bf16.gmra.mxu0 %v631
        %v12356 = vpop.f32.mrf.mxu0
        %v12357 = vadd.f32 %v12344, %v12356
        %v12358 = vpop.f32.mrf.mxu0
        %12359 = vdwg.mxu0
        %12360 = vmatpush.bf16.msra.mxu0 %v8202
        %12361 = vmatpush.bf16.msra.mxu0 %v8200
        %12362 = vmatpush.bf16.msra.mxu0 %v8198
        %12363 = vmatpush.bf16.msra.mxu0 %v8196
        %12364 = vmatpush.bf16.msra.mxu0 %v8194
        %12365 = vmatpush.bf16.msra.mxu0 %v8192
        %12366 = vmatpush.bf16.msra.mxu0 %v8190
        %12367 = vmatpush.bf16.msra.mxu0 %v8188
        %12368 = vmatmul.bf16.gmra.mxu0 %v632
        %v12369 = vpop.f32.mrf.mxu0
        %v12370 = vadd.f32 %v12357, %v12369
        %v12371 = vpop.f32.mrf.mxu0
        %12372 = vdwg.mxu0
        %12373 = vmatpush.bf16.msra.mxu0 %v8218
        %12374 = vmatpush.bf16.msra.mxu0 %v8216
        %12375 = vmatpush.bf16.msra.mxu0 %v8214
        %12376 = vmatpush.bf16.msra.mxu0 %v8212
        %12377 = vmatpush.bf16.msra.mxu0 %v8210
        %12378 = vmatpush.bf16.msra.mxu0 %v8208
        %12379 = vmatpush.bf16.msra.mxu0 %v8206
        %12380 = vmatpush.bf16.msra.mxu0 %v8204
        %12381 = vmatmul.bf16.gmra.mxu0 %v633
        %v12382 = vpop.f32.mrf.mxu0
        %v12383 = vadd.f32 %v12370, %v12382
        %v12384 = vpop.f32.mrf.mxu0
        %12385 = vdwg.mxu0
        %12386 = vmatpush.bf16.msra.mxu0 %v8234
        %12387 = vmatpush.bf16.msra.mxu0 %v8232
        %12388 = vmatpush.bf16.msra.mxu0 %v8230
        %12389 = vmatpush.bf16.msra.mxu0 %v8228
        %12390 = vmatpush.bf16.msra.mxu0 %v8226
        %12391 = vmatpush.bf16.msra.mxu0 %v8224
        %12392 = vmatpush.bf16.msra.mxu0 %v8222
        %12393 = vmatpush.bf16.msra.mxu0 %v8220
        %12394 = vmatmul.bf16.gmra.mxu0 %v634
        %v12395 = vpop.f32.mrf.mxu0
        %v12396 = vadd.f32 %v12383, %v12395
        %v12397 = vpop.f32.mrf.mxu0
        %12398 = vdwg.mxu0
        %12399 = vmatpush.bf16.msra.mxu0 %v8250
        %12400 = vmatpush.bf16.msra.mxu0 %v8248
        %12401 = vmatpush.bf16.msra.mxu0 %v8246
        %12402 = vmatpush.bf16.msra.mxu0 %v8244
        %12403 = vmatpush.bf16.msra.mxu0 %v8242
        %12404 = vmatpush.bf16.msra.mxu0 %v8240
        %12405 = vmatpush.bf16.msra.mxu0 %v8238
        %12406 = vmatpush.bf16.msra.mxu0 %v8236
        %12407 = vmatmul.bf16.gmra.mxu0 %v635
        %v12408 = vpop.f32.mrf.mxu0
        %v12409 = vadd.f32 %v12396, %v12408
        %v12410 = vpop.f32.mrf.mxu0
        %12411 = vdwg.mxu0
        %12412 = vmatpush.bf16.msra.mxu0 %v8266
        %12413 = vmatpush.bf16.msra.mxu0 %v8264
        %12414 = vmatpush.bf16.msra.mxu0 %v8262
        %12415 = vmatpush.bf16.msra.mxu0 %v8260
        %12416 = vmatpush.bf16.msra.mxu0 %v8258
        %12417 = vmatpush.bf16.msra.mxu0 %v8256
        %12418 = vmatpush.bf16.msra.mxu0 %v8254
        %12419 = vmatpush.bf16.msra.mxu0 %v8252
        %12420 = vmatmul.bf16.gmra.mxu0 %v636
        %v12421 = vpop.f32.mrf.mxu0
        %v12422 = vadd.f32 %v12409, %v12421
        %v12423 = vpop.f32.mrf.mxu0
        %12424 = vdwg.mxu0
        %12425 = vmatpush.bf16.msra.mxu0 %v8282
        %12426 = vmatpush.bf16.msra.mxu0 %v8280
        %12427 = vmatpush.bf16.msra.mxu0 %v8278
        %12428 = vmatpush.bf16.msra.mxu0 %v8276
        %12429 = vmatpush.bf16.msra.mxu0 %v8274
        %12430 = vmatpush.bf16.msra.mxu0 %v8272
        %12431 = vmatpush.bf16.msra.mxu0 %v8270
        %12432 = vmatpush.bf16.msra.mxu0 %v8268
        %12433 = vmatmul.bf16.gmra.mxu0 %v637
        %v12434 = vpop.f32.mrf.mxu0
        %v12435 = vadd.f32 %v12422, %v12434
        %v12436 = vpop.f32.mrf.mxu0
        %12437 = vdwg.mxu0
        %12438 = vmatpush.bf16.msra.mxu0 %v8298
        %12439 = vmatpush.bf16.msra.mxu0 %v8296
        %12440 = vmatpush.bf16.msra.mxu0 %v8294
        %12441 = vmatpush.bf16.msra.mxu0 %v8292
        %12442 = vmatpush.bf16.msra.mxu0 %v8290
        %12443 = vmatpush.bf16.msra.mxu0 %v8288
        %12444 = vmatpush.bf16.msra.mxu0 %v8286
        %12445 = vmatpush.bf16.msra.mxu0 %v8284
        %12446 = vmatmul.bf16.gmra.mxu0 %v638
        %v12447 = vpop.f32.mrf.mxu0
        %v12448 = vadd.f32 %v12435, %v12447
        %v12449 = vpop.f32.mrf.mxu0
        %12450 = vdwg.mxu0
        %12451 = vmatpush.bf16.msra.mxu0 %v8314
        %12452 = vmatpush.bf16.msra.mxu0 %v8312
        %12453 = vmatpush.bf16.msra.mxu0 %v8310
        %12454 = vmatpush.bf16.msra.mxu0 %v8308
        %12455 = vmatpush.bf16.msra.mxu0 %v8306
        %12456 = vmatpush.bf16.msra.mxu0 %v8304
        %12457 = vmatpush.bf16.msra.mxu0 %v8302
        %12458 = vmatpush.bf16.msra.mxu0 %v8300
        %12459 = vmatmul.bf16.gmra.mxu0 %v639
        %v12460 = vpop.f32.mrf.mxu0
        %v12461 = vadd.f32 %v12448, %v12460
        %v12462 = vpop.f32.mrf.mxu0
        %12463 = vdwg.mxu0
        %12464 = vmatpush.bf16.msra.mxu0 %v8330
        %12465 = vmatpush.bf16.msra.mxu0 %v8328
        %12466 = vmatpush.bf16.msra.mxu0 %v8326
        %12467 = vmatpush.bf16.msra.mxu0 %v8324
        %12468 = vmatpush.bf16.msra.mxu0 %v8322
        %12469 = vmatpush.bf16.msra.mxu0 %v8320
        %12470 = vmatpush.bf16.msra.mxu0 %v8318
        %12471 = vmatpush.bf16.msra.mxu0 %v8316
        %12472 = vmatmul.bf16.gmra.mxu0 %v640
        %v12473 = vpop.f32.mrf.mxu0
        %v12474 = vadd.f32 %v12461, %v12473
        %v12475 = vpop.f32.mrf.mxu0
        %12476 = vdwg.mxu0
        %12477 = vmatpush.bf16.msra.mxu0 %v8346
        %12478 = vmatpush.bf16.msra.mxu0 %v8344
        %12479 = vmatpush.bf16.msra.mxu0 %v8342
        %12480 = vmatpush.bf16.msra.mxu0 %v8340
        %12481 = vmatpush.bf16.msra.mxu0 %v8338
        %12482 = vmatpush.bf16.msra.mxu0 %v8336
        %12483 = vmatpush.bf16.msra.mxu0 %v8334
        %12484 = vmatpush.bf16.msra.mxu0 %v8332
        %12485 = vmatmul.bf16.gmra.mxu0 %v641
        %v12486 = vpop.f32.mrf.mxu0
        %v12487 = vadd.f32 %v12474, %v12486
        %v12488 = vpop.f32.mrf.mxu0
        %12489 = vdwg.mxu0
        %12490 = vmatpush.bf16.msra.mxu0 %v8362
        %12491 = vmatpush.bf16.msra.mxu0 %v8360
        %12492 = vmatpush.bf16.msra.mxu0 %v8358
        %12493 = vmatpush.bf16.msra.mxu0 %v8356
        %12494 = vmatpush.bf16.msra.mxu0 %v8354
        %12495 = vmatpush.bf16.msra.mxu0 %v8352
        %12496 = vmatpush.bf16.msra.mxu0 %v8350
        %12497 = vmatpush.bf16.msra.mxu0 %v8348
        %12498 = vmatmul.bf16.gmra.mxu0 %v642
        %v12499 = vpop.f32.mrf.mxu0
        %v12500 = vadd.f32 %v12487, %v12499
        %v12501 = vpop.f32.mrf.mxu0
        %12502 = vdwg.mxu0
        %12503 = vmatpush.bf16.msra.mxu0 %v8378
        %12504 = vmatpush.bf16.msra.mxu0 %v8376
        %12505 = vmatpush.bf16.msra.mxu0 %v8374
        %12506 = vmatpush.bf16.msra.mxu0 %v8372
        %12507 = vmatpush.bf16.msra.mxu0 %v8370
        %12508 = vmatpush.bf16.msra.mxu0 %v8368
        %12509 = vmatpush.bf16.msra.mxu0 %v8366
        %12510 = vmatpush.bf16.msra.mxu0 %v8364
        %12511 = vmatmul.bf16.gmra.mxu0 %v643
        %v12512 = vpop.f32.mrf.mxu0
        %v12513 = vadd.f32 %v12500, %v12512
        %v12514 = vpop.f32.mrf.mxu0
        %12515 = vdwg.mxu0
        %12516 = vmatpush.bf16.msra.mxu0 %v8394
        %12517 = vmatpush.bf16.msra.mxu0 %v8392
        %12518 = vmatpush.bf16.msra.mxu0 %v8390
        %12519 = vmatpush.bf16.msra.mxu0 %v8388
        %12520 = vmatpush.bf16.msra.mxu0 %v8386
        %12521 = vmatpush.bf16.msra.mxu0 %v8384
        %12522 = vmatpush.bf16.msra.mxu0 %v8382
        %12523 = vmatpush.bf16.msra.mxu0 %v8380
        %12524 = vmatmul.bf16.gmra.mxu0 %v644
        %v12525 = vpop.f32.mrf.mxu0
        %v12526 = vadd.f32 %v12513, %v12525
        %v12527 = vpop.f32.mrf.mxu0
        %12528 = vdwg.mxu0
        %12529 = vmatpush.bf16.msra.mxu0 %v8410
        %12530 = vmatpush.bf16.msra.mxu0 %v8408
        %12531 = vmatpush.bf16.msra.mxu0 %v8406
        %12532 = vmatpush.bf16.msra.mxu0 %v8404
        %12533 = vmatpush.bf16.msra.mxu0 %v8402
        %12534 = vmatpush.bf16.msra.mxu0 %v8400
        %12535 = vmatpush.bf16.msra.mxu0 %v8398
        %12536 = vmatpush.bf16.msra.mxu0 %v8396
        %12537 = vmatmul.bf16.gmra.mxu0 %v645
        %v12538 = vpop.f32.mrf.mxu0
        %v12539 = vadd.f32 %v12526, %v12538
        %v12540 = vpop.f32.mrf.mxu0
        %12541 = vdwg.mxu0
        %12542 = vmatpush.bf16.msra.mxu0 %v8426
        %12543 = vmatpush.bf16.msra.mxu0 %v8424
        %12544 = vmatpush.bf16.msra.mxu0 %v8422
        %12545 = vmatpush.bf16.msra.mxu0 %v8420
        %12546 = vmatpush.bf16.msra.mxu0 %v8418
        %12547 = vmatpush.bf16.msra.mxu0 %v8416
        %12548 = vmatpush.bf16.msra.mxu0 %v8414
        %12549 = vmatpush.bf16.msra.mxu0 %v8412
        %12550 = vmatmul.bf16.gmra.mxu0 %v646
        %v12551 = vpop.f32.mrf.mxu0
        %v12552 = vadd.f32 %v12539, %v12551
        %v12553 = vpop.f32.mrf.mxu0
        %12554 = vdwg.mxu0
        %12555 = vmatpush.bf16.msra.mxu0 %v8442
        %12556 = vmatpush.bf16.msra.mxu0 %v8440
        %12557 = vmatpush.bf16.msra.mxu0 %v8438
        %12558 = vmatpush.bf16.msra.mxu0 %v8436
        %12559 = vmatpush.bf16.msra.mxu0 %v8434
        %12560 = vmatpush.bf16.msra.mxu0 %v8432
        %12561 = vmatpush.bf16.msra.mxu0 %v8430
        %12562 = vmatpush.bf16.msra.mxu0 %v8428
        %12563 = vmatmul.bf16.gmra.mxu0 %v647
        %v12564 = vpop.f32.mrf.mxu0
        %v12565 = vadd.f32 %v12552, %v12564
        %v12566 = vpop.f32.mrf.mxu0
        %12567 = vdwg.mxu0
        %12568 = vmatpush.bf16.msra.mxu0 %v8458
        %12569 = vmatpush.bf16.msra.mxu0 %v8456
        %12570 = vmatpush.bf16.msra.mxu0 %v8454
        %12571 = vmatpush.bf16.msra.mxu0 %v8452
        %12572 = vmatpush.bf16.msra.mxu0 %v8450
        %12573 = vmatpush.bf16.msra.mxu0 %v8448
        %12574 = vmatpush.bf16.msra.mxu0 %v8446
        %12575 = vmatpush.bf16.msra.mxu0 %v8444
        %12576 = vmatmul.bf16.gmra.mxu0 %v648
        %v12577 = vpop.f32.mrf.mxu0
        %v12578 = vadd.f32 %v12565, %v12577
        %v12579 = vpop.f32.mrf.mxu0
        %12580 = vdwg.mxu0
        %12581 = vmatpush.bf16.msra.mxu0 %v8474
        %12582 = vmatpush.bf16.msra.mxu0 %v8472
        %12583 = vmatpush.bf16.msra.mxu0 %v8470
        %12584 = vmatpush.bf16.msra.mxu0 %v8468
        %12585 = vmatpush.bf16.msra.mxu0 %v8466
        %12586 = vmatpush.bf16.msra.mxu0 %v8464
        %12587 = vmatpush.bf16.msra.mxu0 %v8462
        %12588 = vmatpush.bf16.msra.mxu0 %v8460
        %12589 = vmatmul.bf16.gmra.mxu0 %v649
        %v12590 = vpop.f32.mrf.mxu0
        %v12591 = vadd.f32 %v12578, %v12590
        %v12592 = vpop.f32.mrf.mxu0
        %12593 = vdwg.mxu0
        %12594 = vmatpush.bf16.msra.mxu0 %v8490
        %12595 = vmatpush.bf16.msra.mxu0 %v8488
        %12596 = vmatpush.bf16.msra.mxu0 %v8486
        %12597 = vmatpush.bf16.msra.mxu0 %v8484
        %12598 = vmatpush.bf16.msra.mxu0 %v8482
        %12599 = vmatpush.bf16.msra.mxu0 %v8480
        %12600 = vmatpush.bf16.msra.mxu0 %v8478
        %12601 = vmatpush.bf16.msra.mxu0 %v8476
        %12602 = vmatmul.bf16.gmra.mxu0 %v650
        %v12603 = vpop.f32.mrf.mxu0
        %v12604 = vadd.f32 %v12591, %v12603
        %v12605 = vpop.f32.mrf.mxu0
        %12606 = vdwg.mxu0
        %v12609 = vrot.slane %v12604, 6
        %vm12610 = vcmask 1041408
        %v12611 = vsel %vm12610, %v11330, %v12609
        %v12613 = vadd.f32 %v280, %v12611
        %12614 = vst [vmem:[#allocation2] sm:$0xf] %v12613
        %p12615 = scmp.eq.s32.totalorder %s25, 1
        // Predicated region
        $region45: #{model_forward.2} parent=31 // pred_check
          %p12616 = pneg %p12615
        $region46: #{model_forward.2} parent=31 // pred_check_branch
          %12618 = sbr.rel (%p12616) target = $region48
        $region47: #{model_forward.2} parent=31 // pred_region
          %v12619 = vld [vmem:[#allocation2] sm:$0xf]
          %v12620 = vld [vmem:[%s226] sm:$0x3]
          %v12622 = vperm.slane %v12620, 0
          %v12623 = vperm.slane %v12620, 1
          %v12624 = vrot.slane %v12623, 6
          %v12625 = vsel %vm12610, %v12622, %v12624
          %v12627 = vadd.f32 %v12619, %v12625
          %v12628 = vmax.f32 %v12627, 0.0
          %12629 = vst [vmem:[%s273] sm:$0xf] %v12628
        $region48: #{model_forward.2} parent=31 // pred_fallthru
          _
        %s12630 = smul.u32 2, %s24
        %p12631 = scmp.lt.s32.totalorder %s12630, 3
        %s12632 = scalar_select %p12631, %s12630, 3
        %s12633 = smul.addr %s12632, 2
        %s12634 = scalar_lea.vmem %s3, %s12633
        // Predicated region
        $region49: #{model_forward.2} parent=31 // pred_check
          %p12635 = pneg %p130
        $region50: #{model_forward.2} parent=31 // pred_check_branch
          %12637 = sbr.rel (%p12635) target = $region52
        $region51: #{model_forward.2} parent=31 // pred_region
          %s12638 = smul.u32 2, %s24
        $region52: #{model_forward.2} parent=31 // pred_fallthru
          _
      $region32: #{model_forward.2} parent=5 // pred_fallthru
        _
      %p12639 = scmp.le.s32.totalorder 2, %s15
      // Predicated region
      $region53: #{model_forward.2} parent=5 // pred_check
        %p12640 = pneg %p12639
      $region54: #{model_forward.2} parent=5 // pred_check_branch
        %12642 = sbr.rel (%p12640) target = $region56
      $region55: #{model_forward.2} parent=5 // pred_region
        %s12643 = ssub.s32 %s15, 2
        // Predicated region
        $region57: #{model_forward.2} parent=55 // pred_check
          %p12644 = pneg %p136
        $region58: #{model_forward.2} parent=55 // pred_check_branch
          %12646 = sbr.rel (%p12644) target = $region60
        $region59: #{model_forward.2} parent=55 // pred_region
          %s12647 = smul.u32 2, %s26
          %p12648 = scmp.lt.s32.totalorder %s12647, 3
          %s12649 = scalar_select %p12648, %s12647, 3
          %s12650 = smul.addr %s12649, 2
          %s12651 = scalar_lea.vmem %s3, %s12650
        $region60: #{model_forward.2} parent=55 // pred_fallthru
          _
      $region56: #{model_forward.2} parent=5 // pred_fallthru
        _
    $region6: #{model_forward.2} parent=1 // loop_footer
      %s19 = sadd.s32 1, %s15
    $region7: #{model_forward.2} parent=1 // loop_footer_branch
      %14 = sbr.rel target = $region3
    $region8: #{model_forward.2} parent=1 // loop_exit
      _
    %12652 = vsyncpa [#allocation4], 1
    %s12653 = scalar_lea.sflag [#allocation4], 1
    %12654 = vsyncpa %s12653, 1
    %12655 = vsyncpa [#allocation6], 1
    %s12656 = scalar_lea.sflag [#allocation6], 1
    %12657 = vsyncpa %s12656, 1

</llo_original>
